<compile_context>
chip_gen: v5e
topology: v5e:2x2
jax: 0.10.0
libtpu: 0.0.40
codegen_flags: <defaults>
</compile_context>

<pallas_src>
import numpy as np
import jax
import jax.numpy as jnp
from jax.experimental import pallas as pl
from jax.experimental.pallas import tpu as pltpu


# --------------------- host-built bilinear interpolation taps ----------------

def _linear_taps(n_in, n_out):
    """Per-output-index (i0, i1, w0, w1) for 1-D linear interpolation with
    align_corners=True (matches F.interpolate(mode='bilinear', align_corners=True)
    applied separably per axis)."""
    if n_in == 1 or n_out == 1:
        return [(0, 0, 1.0, 0.0)] * n_out
    scale = (n_in - 1) / (n_out - 1)
    taps = []
    for i in range(n_out):
        s = i * scale
        i0 = min(int(np.floor(s)), n_in - 1)
        i1 = min(i0 + 1, n_in - 1)
        f = float(s - i0)
        taps.append((i0, i1, 1.0 - f, f))
    return taps


# ------------------------------- fused kernel --------------------------------

def _make_unet_kernel(B, H, W, Cin, C1, C2, C3, Cout):
    HW = H * W
    M = B * HW
    Hh, Wh = H // 2, W // 2
    htaps = _linear_taps(Hh, H)
    wtaps = _linear_taps(Wh, W)

    def kernel(x_ref, w1_ref, b1_ref, w2_ref, b2_ref, w3_ref, b3_ref,
               w4_ref, b4_ref, o_ref, sp_e1, sp_up, sp_d1):
        # Re-zero the 1-px halo ring of every padded scratch each grid step.
        # Unconditional on purpose: a program_id==0 gate would leave the second
        # TensorCore's scratch halo uninitialized under a core-parallel grid.
        for sp in (sp_e1, sp_up, sp_d1):
            Bs, Hp, Wp, C = sp.shape
            sp[:, 0:1, :, :] = jnp.zeros((Bs, 1, Wp, C), sp.dtype)
            sp[:, Hp - 1:Hp, :, :] = jnp.zeros((Bs, 1, Wp, C), sp.dtype)
            sp[:, :, 0:1, :] = jnp.zeros((Bs, Hp, 1, C), sp.dtype)
            sp[:, :, Wp - 1:Wp, :] = jnp.zeros((Bs, Hp, 1, C), sp.dtype)

        def conv3x3(read_win, cin, w_ref, b_ref):
            # 9 accumulating MXU dots on the shifted windows (no im2col pack),
            # f32 accumulation, f32 bias.
            acc = None
            for t in range(9):
                dy, dx = t // 3, t % 3
                win = read_win(dy, dx)                        # (B, H, W, cin) f32
                win = win.reshape(M, cin).astype(jnp.bfloat16)
                d = jnp.dot(win, w_ref[t],                    # (cin, cout) bf16 tap
                            preferred_element_type=jnp.float32)
                acc = d if acc is None else acc + d
            return acc + b_ref[...]

        # ---- encoder --------------------------------------------------------
        # conv1 windows come straight from the host pre-padded input block.
        a1 = jnp.maximum(
            conv3x3(lambda dy, dx: x_ref[:, dy:dy + H, dx:dx + W, :],
                    Cin, w1_ref, b1_ref), 0.0)                # (M, C1) f32
        sp_e1[:, 1:H + 1, 1:W + 1, :] = a1.reshape(B, H, W, C1)

        a2 = jnp.maximum(
            conv3x3(lambda dy, dx: sp_e1[:, dy:dy + H, dx:dx + W, :],
                    C1, w2_ref, b2_ref), 0.0)                 # (M, C2) f32

        # ---- maxpool2x2 + separable bilinear x2 (align_corners=True), VPU ----
        # No halo is touched here (pooling reads only the conv2 value), so the
        # old pooling/upsample/halo coupling is gone.
        a2r = a2.reshape(B, H, W, C2)
        # pool along H: pairwise max of adjacent rows (leading-dim slices)
        ph = jnp.concatenate(
            [jnp.maximum(a2r[:, 2 * r:2 * r + 1], a2r[:, 2 * r + 1:2 * r + 2])
             for r in range(Hh)], axis=1)                     # (B, Hh, W, C2)
        # pool along W fused with the W-direction interpolation
        pc = [jnp.maximum(ph[:, :, 2 * s:2 * s + 1, :],
                          ph[:, :, 2 * s + 1:2 * s + 2, :])
              for s in range(Wh)]                             # Wh x (B, Hh, 1, C2)
        cols = []
        for (j0, j1, wa, wb) in wtaps:
            v = pc[j0] * wa
            if j1 != j0 and wb != 0.0:
                v = v + pc[j1] * wb
            cols.append(v)
        t_up = jnp.concatenate(cols, axis=2)                  # (B, Hh, W, C2)
        # H-direction interpolation
        rows = []
        for (i0, i1, wa, wb) in htaps:
            v = t_up[:, i0:i0 + 1] * wa
            if i1 != i0 and wb != 0.0:
                v = v + t_up[:, i1:i1 + 1] * wb
            rows.append(v)
        up = jnp.concatenate(rows, axis=1)                    # (B, H, W, C2) f32
        sp_up[:, 1:H + 1, 1:W + 1, :] = up

        # ---- decoder ---------------------------------------------------------
        a3 = jnp.maximum(
            conv3x3(lambda dy, dx: sp_up[:, dy:dy + H, dx:dx + W, :],
                    C2, w3_ref, b3_ref), 0.0)                 # (M, C3) f32
        sp_d1[:, 1:H + 1, 1:W + 1, :] = a3.reshape(B, H, W, C3)

        a4 = jax.nn.sigmoid(
            conv3x3(lambda dy, dx: sp_d1[:, dy:dy + H, dx:dx + W, :],
                    C3, w4_ref, b4_ref))                      # (M, Cout) f32

        # Lane-dense writeback: (B, Cout, H*W) with H*W on the 128-lane axis.
        o_ref[...] = jnp.transpose(a4.reshape(B, HW, Cout),
                                   (0, 2, 1)).astype(o_ref.dtype)

    return kernel


# ------------------------------- parameters ----------------------------------

def _conv_params(key, cin, cout):
    """PyTorch-style uniform init.  Weight returned as (9, cin, cout) bf16 taps
    (tap index = dy*3 + dx), bias as (1, cout) f32.
    NOTE: to load real PyTorch Conv2d weights (cout, cin, kh, kw), permute to
    (kh, kw, cin, cout) first, then reshape to (9, cin, cout)."""
    k1, k2 = jax.random.split(key)
    bound = 1.0 / np.sqrt(cin * 9)
    w = jax.random.uniform(k1, (3, 3, cin, cout), jnp.float32, -bound, bound)
    b = jax.random.uniform(k2, (1, cout), jnp.float32, -bound, bound)
    return w.reshape(9, cin, cout).astype(jnp.bfloat16), b


def init_unet_params(key, in_channels=3, out_channels=1):
    k1, k2, k3, k4 = jax.random.split(key, 4)
    return {
        "enc1": _conv_params(k1, in_channels, 64),
        "enc2": _conv_params(k2, 64, 128),
        "dec1": _conv_params(k3, 128, 64),
        "dec2": _conv_params(k4, 64, out_channels),
    }


def _pick_block_batch(n):
    """Largest B in {8,4,2,1} dividing N while keeping >= 2 grid steps so both
    v7x TensorCores stay busy (except the trivial N == 1 case)."""
    for b in (8, 4, 2, 1):
        if n % b == 0 and (n // b >= 2 or (n == 1 and b == 1)):
            return b
    return 1


# ------------------------------- forward pass ---------------------------------

def unet_forward(params, x_nchw):
    """x_nchw: (N, Cin, H, W) f32 -> (N, out_channels, H, W) f32."""
    N, Cin, H, W = x_nchw.shape
    assert H % 2 == 0 and W % 2 == 0
    w1, b1 = params["enc1"]
    w2, b2 = params["enc2"]
    w3, b3 = params["dec1"]
    w4, b4 = params["dec2"]
    C1, C2, C3, Cout = w1.shape[2], w2.shape[2], w3.shape[2], w4.shape[2]
    HW = H * W
    B = _pick_block_batch(N)

    # NHWC + 1-px spatial zero pad (the conv halo) done once host-side; the
    # kernel reads conv1 windows straight out of this block (no input scratch).
    xp = jnp.pad(jnp.transpose(x_nchw, (0, 2, 3, 1)),
                 ((0, 0), (1, 1), (1, 1), (0, 0)))

    cmap3 = lambda n: (0, 0, 0)
    cmap2 = lambda n: (0, 0)
    y = pl.pallas_call(
        _make_unet_kernel(B, H, W, Cin, C1, C2, C3, Cout),
        out_shape=jax.ShapeDtypeStruct((N, Cout, HW), jnp.float32),
        grid=(N // B,),
        in_specs=[
            pl.BlockSpec((B, H + 2, W + 2, Cin), lambda n: (n, 0, 0, 0)),
            pl.BlockSpec(w1.shape, cmap3), pl.BlockSpec(b1.shape, cmap2),
            pl.BlockSpec(w2.shape, cmap3), pl.BlockSpec(b2.shape, cmap2),
            pl.BlockSpec(w3.shape, cmap3), pl.BlockSpec(b3.shape, cmap2),
            pl.BlockSpec(w4.shape, cmap3), pl.BlockSpec(b4.shape, cmap2),
        ],
        out_specs=pl.BlockSpec((B, Cout, HW), lambda n: (n, 0, 0)),
        scratch_shapes=[
            pltpu.VMEM((B, H + 2, W + 2, C1), jnp.float32),   # padded enc1 out
            pltpu.VMEM((B, H + 2, W + 2, C2), jnp.float32),   # padded upsample
            pltpu.VMEM((B, H + 2, W + 2, C3), jnp.float32),   # padded dec1 out
        ],
        compiler_params=pltpu.CompilerParams(
            dimension_semantics=("parallel",),                # v7x: batch on 2 TCs
            vmem_limit_bytes=32 * 1024 * 1024),
    )(xp, w1, b1, w2, b2, w3, b3, w4, b4)

    # Lane-dense (N, Cout, H*W) -> NCHW is a free wrapper-side reshape.
    return y.reshape(N, Cout, H, W)


# ----------------------------------- main -------------------------------------

if __name__ == "__main__":
    key = jax.random.PRNGKey(0)
    k_param, k_input = jax.random.split(key)

    N, Cin, H, W = 2, 3, 16, 16
    x = jax.random.normal(k_input, (N, Cin, H, W), jnp.float32)
    params = init_unet_params(k_param, in_channels=Cin, out_channels=1)

    fwd = jax.jit(unet_forward)
    out = jax.block_until_ready(fwd(params, x))

    assert out.shape == (N, 1, H, W), out.shape
    assert bool(jnp.all(jnp.isfinite(out)))
    assert bool(jnp.all((out >= 0.0) & (out <= 1.0)))   # sigmoid range
    print("KERNEL_OK")
</pallas_src>

<mosaic_0001>
module attributes {stable_mosaic.version = 11 : i64} {
  func.func @kernel(%arg0: i32, %arg1: memref<1x18x18x3xf32, #tpu.memory_space<vmem>>, %arg2: memref<9x3x64xbf16, #tpu.memory_space<vmem>>, %arg3: memref<1x64xf32, #tpu.memory_space<vmem>>, %arg4: memref<9x64x128xbf16, #tpu.memory_space<vmem>>, %arg5: memref<1x128xf32, #tpu.memory_space<vmem>>, %arg6: memref<9x128x64xbf16, #tpu.memory_space<vmem>>, %arg7: memref<1x64xf32, #tpu.memory_space<vmem>>, %arg8: memref<9x64x1xbf16, #tpu.memory_space<vmem>>, %arg9: memref<1x1xf32, #tpu.memory_space<vmem>>, %arg10: memref<1x1x256xf32, #tpu.memory_space<vmem>>, %arg11: memref<1x18x18x64xf32, #tpu.memory_space<vmem>>, %arg12: memref<1x18x18x128xf32, #tpu.memory_space<vmem>>, %arg13: memref<1x18x18x64xf32, #tpu.memory_space<vmem>>) attributes {dimension_semantics = [#tpu.dimension_semantics<parallel>], iteration_bounds = array<i64: 2>, scalar_prefetch = 0 : i64, scratch_operands = 3 : i64, tpu.core_type = #tpu.core_type<tc>, window_params = [{transform_indices = @transform_0, window_bounds = array<i64: 1, 18, 18, 3>}, {pipeline_mode = #tpu.pipeline_mode<synchronous>, transform_indices = @transform_1, window_bounds = array<i64: 9, 3, 64>}, {pipeline_mode = #tpu.pipeline_mode<synchronous>, transform_indices = @transform_2, window_bounds = array<i64: 1, 64>}, {pipeline_mode = #tpu.pipeline_mode<synchronous>, transform_indices = @transform_3, window_bounds = array<i64: 9, 64, 128>}, {pipeline_mode = #tpu.pipeline_mode<synchronous>, transform_indices = @transform_4, window_bounds = array<i64: 1, 128>}, {pipeline_mode = #tpu.pipeline_mode<synchronous>, transform_indices = @transform_5, window_bounds = array<i64: 9, 128, 64>}, {pipeline_mode = #tpu.pipeline_mode<synchronous>, transform_indices = @transform_6, window_bounds = array<i64: 1, 64>}, {pipeline_mode = #tpu.pipeline_mode<synchronous>, transform_indices = @transform_7, window_bounds = array<i64: 9, 64, 1>}, {pipeline_mode = #tpu.pipeline_mode<synchronous>, transform_indices = @transform_8, window_bounds = array<i64: 1, 1>}, {transform_indices = @transform_9, window_bounds = array<i64: 1, 1, 256>}]} {
    %cst = arith.constant 0.000000e+00 : f32
    %0 = vector.broadcast %cst : f32 to vector<1x1x18x64xf32>
    %c0 = arith.constant 0 : index
    %c0_0 = arith.constant 0 : index
    %c0_1 = arith.constant 0 : index
    %c0_2 = arith.constant 0 : index
    %1 = vector.load %arg11[%c0, %c0_0, %c0_1, %c0_2] : memref<1x18x18x64xf32, #tpu.memory_space<vmem>>, vector<1x1x18x64xf32>
    tpu.vector_store %arg11[%c0, %c0_0, %c0_1, %c0_2], %0 {strides = array<i32>} : memref<1x18x18x64xf32, #tpu.memory_space<vmem>>, vector<1x1x18x64xf32>,
    %cst_3 = arith.constant 0.000000e+00 : f32
    %2 = vector.broadcast %cst_3 : f32 to vector<1x1x18x64xf32>
    %c0_4 = arith.constant 0 : index
    %c17 = arith.constant 17 : index
    %c0_5 = arith.constant 0 : index
    %c0_6 = arith.constant 0 : index
    %3 = vector.load %arg11[%c0_4, %c17, %c0_5, %c0_6] : memref<1x18x18x64xf32, #tpu.memory_space<vmem>>, vector<1x1x18x64xf32>
    tpu.vector_store %arg11[%c0_4, %c17, %c0_5, %c0_6], %2 {strides = array<i32>} : memref<1x18x18x64xf32, #tpu.memory_space<vmem>>, vector<1x1x18x64xf32>,
    %cst_7 = arith.constant 0.000000e+00 : f32
    %4 = vector.broadcast %cst_7 : f32 to vector<1x18x1x64xf32>
    %c0_8 = arith.constant 0 : index
    %c0_9 = arith.constant 0 : index
    %c0_10 = arith.constant 0 : index
    %c0_11 = arith.constant 0 : index
    %5 = vector.load %arg11[%c0_8, %c0_9, %c0_10, %c0_11] : memref<1x18x18x64xf32, #tpu.memory_space<vmem>>, vector<1x18x1x64xf32>
    tpu.vector_store %arg11[%c0_8, %c0_9, %c0_10, %c0_11], %4 {strides = array<i32>} : memref<1x18x18x64xf32, #tpu.memory_space<vmem>>, vector<1x18x1x64xf32>,
    %cst_12 = arith.constant 0.000000e+00 : f32
    %6 = vector.broadcast %cst_12 : f32 to vector<1x18x1x64xf32>
    %c0_13 = arith.constant 0 : index
    %c0_14 = arith.constant 0 : index
    %c17_15 = arith.constant 17 : index
    %c0_16 = arith.constant 0 : index
    %7 = vector.load %arg11[%c0_13, %c0_14, %c17_15, %c0_16] : memref<1x18x18x64xf32, #tpu.memory_space<vmem>>, vector<1x18x1x64xf32>
    tpu.vector_store %arg11[%c0_13, %c0_14, %c17_15, %c0_16], %6 {strides = array<i32>} : memref<1x18x18x64xf32, #tpu.memory_space<vmem>>, vector<1x18x1x64xf32>,
    %cst_17 = arith.constant 0.000000e+00 : f32
    %8 = vector.broadcast %cst_17 : f32 to vector<1x1x18x128xf32>
    %c0_18 = arith.constant 0 : index
    %c0_19 = arith.constant 0 : index
    %c0_20 = arith.constant 0 : index
    %c0_21 = arith.constant 0 : index
    %9 = vector.load %arg12[%c0_18, %c0_19, %c0_20, %c0_21] : memref<1x18x18x128xf32, #tpu.memory_space<vmem>>, vector<1x1x18x128xf32>
    tpu.vector_store %arg12[%c0_18, %c0_19, %c0_20, %c0_21], %8 {strides = array<i32>} : memref<1x18x18x128xf32, #tpu.memory_space<vmem>>, vector<1x1x18x128xf32>,
    %cst_22 = arith.constant 0.000000e+00 : f32
    %10 = vector.broadcast %cst_22 : f32 to vector<1x1x18x128xf32>
    %c0_23 = arith.constant 0 : index
    %c17_24 = arith.constant 17 : index
    %c0_25 = arith.constant 0 : index
    %c0_26 = arith.constant 0 : index
    %11 = vector.load %arg12[%c0_23, %c17_24, %c0_25, %c0_26] : memref<1x18x18x128xf32, #tpu.memory_space<vmem>>, vector<1x1x18x128xf32>
    tpu.vector_store %arg12[%c0_23, %c17_24, %c0_25, %c0_26], %10 {strides = array<i32>} : memref<1x18x18x128xf32, #tpu.memory_space<vmem>>, vector<1x1x18x128xf32>,
    %cst_27 = arith.constant 0.000000e+00 : f32
    %12 = vector.broadcast %cst_27 : f32 to vector<1x18x1x128xf32>
    %c0_28 = arith.constant 0 : index
    %c0_29 = arith.constant 0 : index
    %c0_30 = arith.constant 0 : index
    %c0_31 = arith.constant 0 : index
    %13 = vector.load %arg12[%c0_28, %c0_29, %c0_30, %c0_31] : memref<1x18x18x128xf32, #tpu.memory_space<vmem>>, vector<1x18x1x128xf32>
    tpu.vector_store %arg12[%c0_28, %c0_29, %c0_30, %c0_31], %12 {strides = array<i32>} : memref<1x18x18x128xf32, #tpu.memory_space<vmem>>, vector<1x18x1x128xf32>,
    %cst_32 = arith.constant 0.000000e+00 : f32
    %14 = vector.broadcast %cst_32 : f32 to vector<1x18x1x128xf32>
    %c0_33 = arith.constant 0 : index
    %c0_34 = arith.constant 0 : index
    %c17_35 = arith.constant 17 : index
    %c0_36 = arith.constant 0 : index
    %15 = vector.load %arg12[%c0_33, %c0_34, %c17_35, %c0_36] : memref<1x18x18x128xf32, #tpu.memory_space<vmem>>, vector<1x18x1x128xf32>
    tpu.vector_store %arg12[%c0_33, %c0_34, %c17_35, %c0_36], %14 {strides = array<i32>} : memref<1x18x18x128xf32, #tpu.memory_space<vmem>>, vector<1x18x1x128xf32>,
    %cst_37 = arith.constant 0.000000e+00 : f32
    %16 = vector.broadcast %cst_37 : f32 to vector<1x1x18x64xf32>
    %c0_38 = arith.constant 0 : index
    %c0_39 = arith.constant 0 : index
    %c0_40 = arith.constant 0 : index
    %c0_41 = arith.constant 0 : index
    %17 = vector.load %arg13[%c0_38, %c0_39, %c0_40, %c0_41] : memref<1x18x18x64xf32, #tpu.memory_space<vmem>>, vector<1x1x18x64xf32>
    tpu.vector_store %arg13[%c0_38, %c0_39, %c0_40, %c0_41], %16 {strides = array<i32>} : memref<1x18x18x64xf32, #tpu.memory_space<vmem>>, vector<1x1x18x64xf32>,
    %cst_42 = arith.constant 0.000000e+00 : f32
    %18 = vector.broadcast %cst_42 : f32 to vector<1x1x18x64xf32>
    %c0_43 = arith.constant 0 : index
    %c17_44 = arith.constant 17 : index
    %c0_45 = arith.constant 0 : index
    %c0_46 = arith.constant 0 : index
    %19 = vector.load %arg13[%c0_43, %c17_44, %c0_45, %c0_46] : memref<1x18x18x64xf32, #tpu.memory_space<vmem>>, vector<1x1x18x64xf32>
    tpu.vector_store %arg13[%c0_43, %c17_44, %c0_45, %c0_46], %18 {strides = array<i32>} : memref<1x18x18x64xf32, #tpu.memory_space<vmem>>, vector<1x1x18x64xf32>,
    %cst_47 = arith.constant 0.000000e+00 : f32
    %20 = vector.broadcast %cst_47 : f32 to vector<1x18x1x64xf32>
    %c0_48 = arith.constant 0 : index
    %c0_49 = arith.constant 0 : index
    %c0_50 = arith.constant 0 : index
    %c0_51 = arith.constant 0 : index
    %21 = vector.load %arg13[%c0_48, %c0_49, %c0_50, %c0_51] : memref<1x18x18x64xf32, #tpu.memory_space<vmem>>, vector<1x18x1x64xf32>
    tpu.vector_store %arg13[%c0_48, %c0_49, %c0_50, %c0_51], %20 {strides = array<i32>} : memref<1x18x18x64xf32, #tpu.memory_space<vmem>>, vector<1x18x1x64xf32>,
    %cst_52 = arith.constant 0.000000e+00 : f32
    %22 = vector.broadcast %cst_52 : f32 to vector<1x18x1x64xf32>
    %c0_53 = arith.constant 0 : index
    %c0_54 = arith.constant 0 : index
    %c17_55 = arith.constant 17 : index
    %c0_56 = arith.constant 0 : index
    %23 = vector.load %arg13[%c0_53, %c0_54, %c17_55, %c0_56] : memref<1x18x18x64xf32, #tpu.memory_space<vmem>>, vector<1x18x1x64xf32>
    tpu.vector_store %arg13[%c0_53, %c0_54, %c17_55, %c0_56], %22 {strides = array<i32>} : memref<1x18x18x64xf32, #tpu.memory_space<vmem>>, vector<1x18x1x64xf32>,
    %c0_57 = arith.constant 0 : index
    %c0_58 = arith.constant 0 : index
    %c0_59 = arith.constant 0 : index
    %c0_60 = arith.constant 0 : index
    %24 = vector.load %arg1[%c0_57, %c0_58, %c0_59, %c0_60] : memref<1x18x18x3xf32, #tpu.memory_space<vmem>>, vector<1x16x16x3xf32>
    %25 = vector.shape_cast %24 : vector<1x16x16x3xf32> to vector<256x3xf32>
    %26 = arith.truncf %25 : vector<256x3xf32> to vector<256x3xbf16>
    %c0_61 = arith.constant 0 : index
    %c0_62 = arith.constant 0 : index
    %c0_63 = arith.constant 0 : index
    %27 = vector.load %arg2[%c0_61, %c0_62, %c0_63] : memref<9x3x64xbf16, #tpu.memory_space<vmem>>, vector<1x3x64xbf16>
    %28 = vector.shape_cast %27 : vector<1x3x64xbf16> to vector<3x64xbf16>
    %cst_64 = arith.constant dense<0.000000e+00> : vector<256x64xf32>
    %29 = tpu.matmul %26, %28, %cst_64 {dimension_numbers = #tpu.dot_dimension_numbers<[1], [0], [0], [1], [0, 0, 1, 1], [], []>} : vector<256x3xbf16>, vector<3x64xbf16>, vector<256x64xf32> -> vector<256x64xf32>
    %c0_65 = arith.constant 0 : index
    %c0_66 = arith.constant 0 : index
    %c1 = arith.constant 1 : index
    %c0_67 = arith.constant 0 : index
    %30 = vector.load %arg1[%c0_65, %c0_66, %c1, %c0_67] : memref<1x18x18x3xf32, #tpu.memory_space<vmem>>, vector<1x16x16x3xf32>
    %31 = vector.shape_cast %30 : vector<1x16x16x3xf32> to vector<256x3xf32>
    %32 = arith.truncf %31 : vector<256x3xf32> to vector<256x3xbf16>
    %c1_68 = arith.constant 1 : index
    %c0_69 = arith.constant 0 : index
    %c0_70 = arith.constant 0 : index
    %33 = vector.load %arg2[%c1_68, %c0_69, %c0_70] : memref<9x3x64xbf16, #tpu.memory_space<vmem>>, vector<1x3x64xbf16>
    %34 = vector.shape_cast %33 : vector<1x3x64xbf16> to vector<3x64xbf16>
    %cst_71 = arith.constant dense<0.000000e+00> : vector<256x64xf32>
    %35 = tpu.matmul %32, %34, %cst_71 {dimension_numbers = #tpu.dot_dimension_numbers<[1], [0], [0], [1], [0, 0, 1, 1], [], []>} : vector<256x3xbf16>, vector<3x64xbf16>, vector<256x64xf32> -> vector<256x64xf32>
    %36 = arith.addf %29, %35 : vector<256x64xf32>
    %c0_72 = arith.constant 0 : index
    %c0_73 = arith.constant 0 : index
    %c2 = arith.constant 2 : index
    %c0_74 = arith.constant 0 : index
    %37 = vector.load %arg1[%c0_72, %c0_73, %c2, %c0_74] : memref<1x18x18x3xf32, #tpu.memory_space<vmem>>, vector<1x16x16x3xf32>
    %38 = vector.shape_cast %37 : vector<1x16x16x3xf32> to vector<256x3xf32>
    %39 = arith.truncf %38 : vector<256x3xf32> to vector<256x3xbf16>
    %c2_75 = arith.constant 2 : index
    %c0_76 = arith.constant 0 : index
    %c0_77 = arith.constant 0 : index
    %40 = vector.load %arg2[%c2_75, %c0_76, %c0_77] : memref<9x3x64xbf16, #tpu.memory_space<vmem>>, vector<1x3x64xbf16>
    %41 = vector.shape_cast %40 : vector<1x3x64xbf16> to vector<3x64xbf16>
    %cst_78 = arith.constant dense<0.000000e+00> : vector<256x64xf32>
    %42 = tpu.matmul %39, %41, %cst_78 {dimension_numbers = #tpu.dot_dimension_numbers<[1], [0], [0], [1], [0, 0, 1, 1], [], []>} : vector<256x3xbf16>, vector<3x64xbf16>, vector<256x64xf32> -> vector<256x64xf32>
    %43 = arith.addf %36, %42 : vector<256x64xf32>
    %c0_79 = arith.constant 0 : index
    %c1_80 = arith.constant 1 : index
    %c0_81 = arith.constant 0 : index
    %c0_82 = arith.constant 0 : index
    %44 = vector.load %arg1[%c0_79, %c1_80, %c0_81, %c0_82] : memref<1x18x18x3xf32, #tpu.memory_space<vmem>>, vector<1x16x16x3xf32>
    %45 = vector.shape_cast %44 : vector<1x16x16x3xf32> to vector<256x3xf32>
    %46 = arith.truncf %45 : vector<256x3xf32> to vector<256x3xbf16>
    %c3 = arith.constant 3 : index
    %c0_83 = arith.constant 0 : index
    %c0_84 = arith.constant 0 : index
    %47 = vector.load %arg2[%c3, %c0_83, %c0_84] : memref<9x3x64xbf16, #tpu.memory_space<vmem>>, vector<1x3x64xbf16>
    %48 = vector.shape_cast %47 : vector<1x3x64xbf16> to vector<3x64xbf16>
    %cst_85 = arith.constant dense<0.000000e+00> : vector<256x64xf32>
    %49 = tpu.matmul %46, %48, %cst_85 {dimension_numbers = #tpu.dot_dimension_numbers<[1], [0], [0], [1], [0, 0, 1, 1], [], []>} : vector<256x3xbf16>, vector<3x64xbf16>, vector<256x64xf32> -> vector<256x64xf32>
    %50 = arith.addf %43, %49 : vector<256x64xf32>
    %c0_86 = arith.constant 0 : index
    %c1_87 = arith.constant 1 : index
    %c1_88 = arith.constant 1 : index
    %c0_89 = arith.constant 0 : index
    %51 = vector.load %arg1[%c0_86, %c1_87, %c1_88, %c0_89] : memref<1x18x18x3xf32, #tpu.memory_space<vmem>>, vector<1x16x16x3xf32>
    %52 = vector.shape_cast %51 : vector<1x16x16x3xf32> to vector<256x3xf32>
    %53 = arith.truncf %52 : vector<256x3xf32> to vector<256x3xbf16>
    %c4 = arith.constant 4 : index
    %c0_90 = arith.constant 0 : index
    %c0_91 = arith.constant 0 : index
    %54 = vector.load %arg2[%c4, %c0_90, %c0_91] : memref<9x3x64xbf16, #tpu.memory_space<vmem>>, vector<1x3x64xbf16>
    %55 = vector.shape_cast %54 : vector<1x3x64xbf16> to vector<3x64xbf16>
    %cst_92 = arith.constant dense<0.000000e+00> : vector<256x64xf32>
    %56 = tpu.matmul %53, %55, %cst_92 {dimension_numbers = #tpu.dot_dimension_numbers<[1], [0], [0], [1], [0, 0, 1, 1], [], []>} : vector<256x3xbf16>, vector<3x64xbf16>, vector<256x64xf32> -> vector<256x64xf32>
    %57 = arith.addf %50, %56 : vector<256x64xf32>
    %c0_93 = arith.constant 0 : index
    %c1_94 = arith.constant 1 : index
    %c2_95 = arith.constant 2 : index
    %c0_96 = arith.constant 0 : index
    %58 = vector.load %arg1[%c0_93, %c1_94, %c2_95, %c0_96] : memref<1x18x18x3xf32, #tpu.memory_space<vmem>>, vector<1x16x16x3xf32>
    %59 = vector.shape_cast %58 : vector<1x16x16x3xf32> to vector<256x3xf32>
    %60 = arith.truncf %59 : vector<256x3xf32> to vector<256x3xbf16>
    %c5 = arith.constant 5 : index
    %c0_97 = arith.constant 0 : index
    %c0_98 = arith.constant 0 : index
    %61 = vector.load %arg2[%c5, %c0_97, %c0_98] : memref<9x3x64xbf16, #tpu.memory_space<vmem>>, vector<1x3x64xbf16>
    %62 = vector.shape_cast %61 : vector<1x3x64xbf16> to vector<3x64xbf16>
    %cst_99 = arith.constant dense<0.000000e+00> : vector<256x64xf32>
    %63 = tpu.matmul %60, %62, %cst_99 {dimension_numbers = #tpu.dot_dimension_numbers<[1], [0], [0], [1], [0, 0, 1, 1], [], []>} : vector<256x3xbf16>, vector<3x64xbf16>, vector<256x64xf32> -> vector<256x64xf32>
    %64 = arith.addf %57, %63 : vector<256x64xf32>
    %c0_100 = arith.constant 0 : index
    %c2_101 = arith.constant 2 : index
    %c0_102 = arith.constant 0 : index
    %c0_103 = arith.constant 0 : index
    %65 = vector.load %arg1[%c0_100, %c2_101, %c0_102, %c0_103] : memref<1x18x18x3xf32, #tpu.memory_space<vmem>>, vector<1x16x16x3xf32>
    %66 = vector.shape_cast %65 : vector<1x16x16x3xf32> to vector<256x3xf32>
    %67 = arith.truncf %66 : vector<256x3xf32> to vector<256x3xbf16>
    %c6 = arith.constant 6 : index
    %c0_104 = arith.constant 0 : index
    %c0_105 = arith.constant 0 : index
    %68 = vector.load %arg2[%c6, %c0_104, %c0_105] : memref<9x3x64xbf16, #tpu.memory_space<vmem>>, vector<1x3x64xbf16>
    %69 = vector.shape_cast %68 : vector<1x3x64xbf16> to vector<3x64xbf16>
    %cst_106 = arith.constant dense<0.000000e+00> : vector<256x64xf32>
    %70 = tpu.matmul %67, %69, %cst_106 {dimension_numbers = #tpu.dot_dimension_numbers<[1], [0], [0], [1], [0, 0, 1, 1], [], []>} : vector<256x3xbf16>, vector<3x64xbf16>, vector<256x64xf32> -> vector<256x64xf32>
    %71 = arith.addf %64, %70 : vector<256x64xf32>
    %c0_107 = arith.constant 0 : index
    %c2_108 = arith.constant 2 : index
    %c1_109 = arith.constant 1 : index
    %c0_110 = arith.constant 0 : index
    %72 = vector.load %arg1[%c0_107, %c2_108, %c1_109, %c0_110] : memref<1x18x18x3xf32, #tpu.memory_space<vmem>>, vector<1x16x16x3xf32>
    %73 = vector.shape_cast %72 : vector<1x16x16x3xf32> to vector<256x3xf32>
    %74 = arith.truncf %73 : vector<256x3xf32> to vector<256x3xbf16>
    %c7 = arith.constant 7 : index
    %c0_111 = arith.constant 0 : index
    %c0_112 = arith.constant 0 : index
    %75 = vector.load %arg2[%c7, %c0_111, %c0_112] : memref<9x3x64xbf16, #tpu.memory_space<vmem>>, vector<1x3x64xbf16>
    %76 = vector.shape_cast %75 : vector<1x3x64xbf16> to vector<3x64xbf16>
    %cst_113 = arith.constant dense<0.000000e+00> : vector<256x64xf32>
    %77 = tpu.matmul %74, %76, %cst_113 {dimension_numbers = #tpu.dot_dimension_numbers<[1], [0], [0], [1], [0, 0, 1, 1], [], []>} : vector<256x3xbf16>, vector<3x64xbf16>, vector<256x64xf32> -> vector<256x64xf32>
    %78 = arith.addf %71, %77 : vector<256x64xf32>
    %c0_114 = arith.constant 0 : index
    %c2_115 = arith.constant 2 : index
    %c2_116 = arith.constant 2 : index
    %c0_117 = arith.constant 0 : index
    %79 = vector.load %arg1[%c0_114, %c2_115, %c2_116, %c0_117] : memref<1x18x18x3xf32, #tpu.memory_space<vmem>>, vector<1x16x16x3xf32>
    %80 = vector.shape_cast %79 : vector<1x16x16x3xf32> to vector<256x3xf32>
    %81 = arith.truncf %80 : vector<256x3xf32> to vector<256x3xbf16>
    %c8 = arith.constant 8 : index
    %c0_118 = arith.constant 0 : index
    %c0_119 = arith.constant 0 : index
    %82 = vector.load %arg2[%c8, %c0_118, %c0_119] : memref<9x3x64xbf16, #tpu.memory_space<vmem>>, vector<1x3x64xbf16>
    %83 = vector.shape_cast %82 : vector<1x3x64xbf16> to vector<3x64xbf16>
    %cst_120 = arith.constant dense<0.000000e+00> : vector<256x64xf32>
    %84 = tpu.matmul %81, %83, %cst_120 {dimension_numbers = #tpu.dot_dimension_numbers<[1], [0], [0], [1], [0, 0, 1, 1], [], []>} : vector<256x3xbf16>, vector<3x64xbf16>, vector<256x64xf32> -> vector<256x64xf32>
    %85 = arith.addf %78, %84 : vector<256x64xf32>
    %c0_121 = arith.constant 0 : index
    %c0_122 = arith.constant 0 : index
    %86 = vector.load %arg3[%c0_121, %c0_122] : memref<1x64xf32, #tpu.memory_space<vmem>>, vector<1x64xf32>
    %87 = vector.broadcast %86 : vector<1x64xf32> to vector<256x64xf32>
    %88 = arith.addf %85, %87 : vector<256x64xf32>
    %cst_123 = arith.constant 0.000000e+00 : f32
    %89 = vector.broadcast %cst_123 : f32 to vector<256x64xf32>
    %90 = arith.maximumf %88, %89 : vector<256x64xf32>
    %91 = vector.shape_cast %90 : vector<256x64xf32> to vector<1x16x16x64xf32>
    %c0_124 = arith.constant 0 : index
    %c1_125 = arith.constant 1 : index
    %c1_126 = arith.constant 1 : index
    %c0_127 = arith.constant 0 : index
    %92 = vector.load %arg11[%c0_124, %c1_125, %c1_126, %c0_127] : memref<1x18x18x64xf32, #tpu.memory_space<vmem>>, vector<1x16x16x64xf32>
    tpu.vector_store %arg11[%c0_124, %c1_125, %c1_126, %c0_127], %91 {strides = array<i32>} : memref<1x18x18x64xf32, #tpu.memory_space<vmem>>, vector<1x16x16x64xf32>,
    %c0_128 = arith.constant 0 : index
    %c0_129 = arith.constant 0 : index
    %c0_130 = arith.constant 0 : index
    %c0_131 = arith.constant 0 : index
    %93 = vector.load %arg11[%c0_128, %c0_129, %c0_130, %c0_131] : memref<1x18x18x64xf32, #tpu.memory_space<vmem>>, vector<1x16x16x64xf32>
    %94 = vector.shape_cast %93 : vector<1x16x16x64xf32> to vector<256x64xf32>
    %95 = arith.truncf %94 : vector<256x64xf32> to vector<256x64xbf16>
    %c0_132 = arith.constant 0 : index
    %c0_133 = arith.constant 0 : index
    %c0_134 = arith.constant 0 : index
    %96 = vector.load %arg4[%c0_132, %c0_133, %c0_134] : memref<9x64x128xbf16, #tpu.memory_space<vmem>>, vector<1x64x128xbf16>
    %97 = vector.shape_cast %96 : vector<1x64x128xbf16> to vector<64x128xbf16>
    %cst_135 = arith.constant dense<0.000000e+00> : vector<256x128xf32>
    %98 = tpu.matmul %95, %97, %cst_135 {dimension_numbers = #tpu.dot_dimension_numbers<[1], [0], [0], [1], [0, 0, 1, 1], [], []>} : vector<256x64xbf16>, vector<64x128xbf16>, vector<256x128xf32> -> vector<256x128xf32>
    %c0_136 = arith.constant 0 : index
    %c0_137 = arith.constant 0 : index
    %c1_138 = arith.constant 1 : index
    %c0_139 = arith.constant 0 : index
    %99 = vector.load %arg11[%c0_136, %c0_137, %c1_138, %c0_139] : memref<1x18x18x64xf32, #tpu.memory_space<vmem>>, vector<1x16x16x64xf32>
    %100 = vector.shape_cast %99 : vector<1x16x16x64xf32> to vector<256x64xf32>
    %101 = arith.truncf %100 : vector<256x64xf32> to vector<256x64xbf16>
    %c1_140 = arith.constant 1 : index
    %c0_141 = arith.constant 0 : index
    %c0_142 = arith.constant 0 : index
    %102 = vector.load %arg4[%c1_140, %c0_141, %c0_142] : memref<9x64x128xbf16, #tpu.memory_space<vmem>>, vector<1x64x128xbf16>
    %103 = vector.shape_cast %102 : vector<1x64x128xbf16> to vector<64x128xbf16>
    %cst_143 = arith.constant dense<0.000000e+00> : vector<256x128xf32>
    %104 = tpu.matmul %101, %103, %cst_143 {dimension_numbers = #tpu.dot_dimension_numbers<[1], [0], [0], [1], [0, 0, 1, 1], [], []>} : vector<256x64xbf16>, vector<64x128xbf16>, vector<256x128xf32> -> vector<256x128xf32>
    %105 = arith.addf %98, %104 : vector<256x128xf32>
    %c0_144 = arith.constant 0 : index
    %c0_145 = arith.constant 0 : index
    %c2_146 = arith.constant 2 : index
    %c0_147 = arith.constant 0 : index
    %106 = vector.load %arg11[%c0_144, %c0_145, %c2_146, %c0_147] : memref<1x18x18x64xf32, #tpu.memory_space<vmem>>, vector<1x16x16x64xf32>
    %107 = vector.shape_cast %106 : vector<1x16x16x64xf32> to vector<256x64xf32>
    %108 = arith.truncf %107 : vector<256x64xf32> to vector<256x64xbf16>
    %c2_148 = arith.constant 2 : index
    %c0_149 = arith.constant 0 : index
    %c0_150 = arith.constant 0 : index
    %109 = vector.load %arg4[%c2_148, %c0_149, %c0_150] : memref<9x64x128xbf16, #tpu.memory_space<vmem>>, vector<1x64x128xbf16>
    %110 = vector.shape_cast %109 : vector<1x64x128xbf16> to vector<64x128xbf16>
    %cst_151 = arith.constant dense<0.000000e+00> : vector<256x128xf32>
    %111 = tpu.matmul %108, %110, %cst_151 {dimension_numbers = #tpu.dot_dimension_numbers<[1], [0], [0], [1], [0, 0, 1, 1], [], []>} : vector<256x64xbf16>, vector<64x128xbf16>, vector<256x128xf32> -> vector<256x128xf32>
    %112 = arith.addf %105, %111 : vector<256x128xf32>
    %c0_152 = arith.constant 0 : index
    %c1_153 = arith.constant 1 : index
    %c0_154 = arith.constant 0 : index
    %c0_155 = arith.constant 0 : index
    %113 = vector.load %arg11[%c0_152, %c1_153, %c0_154, %c0_155] : memref<1x18x18x64xf32, #tpu.memory_space<vmem>>, vector<1x16x16x64xf32>
    %114 = vector.shape_cast %113 : vector<1x16x16x64xf32> to vector<256x64xf32>
    %115 = arith.truncf %114 : vector<256x64xf32> to vector<256x64xbf16>
    %c3_156 = arith.constant 3 : index
    %c0_157 = arith.constant 0 : index
    %c0_158 = arith.constant 0 : index
    %116 = vector.load %arg4[%c3_156, %c0_157, %c0_158] : memref<9x64x128xbf16, #tpu.memory_space<vmem>>, vector<1x64x128xbf16>
    %117 = vector.shape_cast %116 : vector<1x64x128xbf16> to vector<64x128xbf16>
    %cst_159 = arith.constant dense<0.000000e+00> : vector<256x128xf32>
    %118 = tpu.matmul %115, %117, %cst_159 {dimension_numbers = #tpu.dot_dimension_numbers<[1], [0], [0], [1], [0, 0, 1, 1], [], []>} : vector<256x64xbf16>, vector<64x128xbf16>, vector<256x128xf32> -> vector<256x128xf32>
    %119 = arith.addf %112, %118 : vector<256x128xf32>
    %c0_160 = arith.constant 0 : index
    %c1_161 = arith.constant 1 : index
    %c1_162 = arith.constant 1 : index
    %c0_163 = arith.constant 0 : index
    %120 = vector.load %arg11[%c0_160, %c1_161, %c1_162, %c0_163] : memref<1x18x18x64xf32, #tpu.memory_space<vmem>>, vector<1x16x16x64xf32>
    %121 = vector.shape_cast %120 : vector<1x16x16x64xf32> to vector<256x64xf32>
    %122 = arith.truncf %121 : vector<256x64xf32> to vector<256x64xbf16>
    %c4_164 = arith.constant 4 : index
    %c0_165 = arith.constant 0 : index
    %c0_166 = arith.constant 0 : index
    %123 = vector.load %arg4[%c4_164, %c0_165, %c0_166] : memref<9x64x128xbf16, #tpu.memory_space<vmem>>, vector<1x64x128xbf16>
    %124 = vector.shape_cast %123 : vector<1x64x128xbf16> to vector<64x128xbf16>
    %cst_167 = arith.constant dense<0.000000e+00> : vector<256x128xf32>
    %125 = tpu.matmul %122, %124, %cst_167 {dimension_numbers = #tpu.dot_dimension_numbers<[1], [0], [0], [1], [0, 0, 1, 1], [], []>} : vector<256x64xbf16>, vector<64x128xbf16>, vector<256x128xf32> -> vector<256x128xf32>
    %126 = arith.addf %119, %125 : vector<256x128xf32>
    %c0_168 = arith.constant 0 : index
    %c1_169 = arith.constant 1 : index
    %c2_170 = arith.constant 2 : index
    %c0_171 = arith.constant 0 : index
    %127 = vector.load %arg11[%c0_168, %c1_169, %c2_170, %c0_171] : memref<1x18x18x64xf32, #tpu.memory_space<vmem>>, vector<1x16x16x64xf32>
    %128 = vector.shape_cast %127 : vector<1x16x16x64xf32> to vector<256x64xf32>
    %129 = arith.truncf %128 : vector<256x64xf32> to vector<256x64xbf16>
    %c5_172 = arith.constant 5 : index
    %c0_173 = arith.constant 0 : index
    %c0_174 = arith.constant 0 : index
    %130 = vector.load %arg4[%c5_172, %c0_173, %c0_174] : memref<9x64x128xbf16, #tpu.memory_space<vmem>>, vector<1x64x128xbf16>
    %131 = vector.shape_cast %130 : vector<1x64x128xbf16> to vector<64x128xbf16>
    %cst_175 = arith.constant dense<0.000000e+00> : vector<256x128xf32>
    %132 = tpu.matmul %129, %131, %cst_175 {dimension_numbers = #tpu.dot_dimension_numbers<[1], [0], [0], [1], [0, 0, 1, 1], [], []>} : vector<256x64xbf16>, vector<64x128xbf16>, vector<256x128xf32> -> vector<256x128xf32>
    %133 = arith.addf %126, %132 : vector<256x128xf32>
    %c0_176 = arith.constant 0 : index
    %c2_177 = arith.constant 2 : index
    %c0_178 = arith.constant 0 : index
    %c0_179 = arith.constant 0 : index
    %134 = vector.load %arg11[%c0_176, %c2_177, %c0_178, %c0_179] : memref<1x18x18x64xf32, #tpu.memory_space<vmem>>, vector<1x16x16x64xf32>
    %135 = vector.shape_cast %134 : vector<1x16x16x64xf32> to vector<256x64xf32>
    %136 = arith.truncf %135 : vector<256x64xf32> to vector<256x64xbf16>
    %c6_180 = arith.constant 6 : index
    %c0_181 = arith.constant 0 : index
    %c0_182 = arith.constant 0 : index
    %137 = vector.load %arg4[%c6_180, %c0_181, %c0_182] : memref<9x64x128xbf16, #tpu.memory_space<vmem>>, vector<1x64x128xbf16>
    %138 = vector.shape_cast %137 : vector<1x64x128xbf16> to vector<64x128xbf16>
    %cst_183 = arith.constant dense<0.000000e+00> : vector<256x128xf32>
    %139 = tpu.matmul %136, %138, %cst_183 {dimension_numbers = #tpu.dot_dimension_numbers<[1], [0], [0], [1], [0, 0, 1, 1], [], []>} : vector<256x64xbf16>, vector<64x128xbf16>, vector<256x128xf32> -> vector<256x128xf32>
    %140 = arith.addf %133, %139 : vector<256x128xf32>
    %c0_184 = arith.constant 0 : index
    %c2_185 = arith.constant 2 : index
    %c1_186 = arith.constant 1 : index
    %c0_187 = arith.constant 0 : index
    %141 = vector.load %arg11[%c0_184, %c2_185, %c1_186, %c0_187] : memref<1x18x18x64xf32, #tpu.memory_space<vmem>>, vector<1x16x16x64xf32>
    %142 = vector.shape_cast %141 : vector<1x16x16x64xf32> to vector<256x64xf32>
    %143 = arith.truncf %142 : vector<256x64xf32> to vector<256x64xbf16>
    %c7_188 = arith.constant 7 : index
    %c0_189 = arith.constant 0 : index
    %c0_190 = arith.constant 0 : index
    %144 = vector.load %arg4[%c7_188, %c0_189, %c0_190] : memref<9x64x128xbf16, #tpu.memory_space<vmem>>, vector<1x64x128xbf16>
    %145 = vector.shape_cast %144 : vector<1x64x128xbf16> to vector<64x128xbf16>
    %cst_191 = arith.constant dense<0.000000e+00> : vector<256x128xf32>
    %146 = tpu.matmul %143, %145, %cst_191 {dimension_numbers = #tpu.dot_dimension_numbers<[1], [0], [0], [1], [0, 0, 1, 1], [], []>} : vector<256x64xbf16>, vector<64x128xbf16>, vector<256x128xf32> -> vector<256x128xf32>
    %147 = arith.addf %140, %146 : vector<256x128xf32>
    %c0_192 = arith.constant 0 : index
    %c2_193 = arith.constant 2 : index
    %c2_194 = arith.constant 2 : index
    %c0_195 = arith.constant 0 : index
    %148 = vector.load %arg11[%c0_192, %c2_193, %c2_194, %c0_195] : memref<1x18x18x64xf32, #tpu.memory_space<vmem>>, vector<1x16x16x64xf32>
    %149 = vector.shape_cast %148 : vector<1x16x16x64xf32> to vector<256x64xf32>
    %150 = arith.truncf %149 : vector<256x64xf32> to vector<256x64xbf16>
    %c8_196 = arith.constant 8 : index
    %c0_197 = arith.constant 0 : index
    %c0_198 = arith.constant 0 : index
    %151 = vector.load %arg4[%c8_196, %c0_197, %c0_198] : memref<9x64x128xbf16, #tpu.memory_space<vmem>>, vector<1x64x128xbf16>
    %152 = vector.shape_cast %151 : vector<1x64x128xbf16> to vector<64x128xbf16>
    %cst_199 = arith.constant dense<0.000000e+00> : vector<256x128xf32>
    %153 = tpu.matmul %150, %152, %cst_199 {dimension_numbers = #tpu.dot_dimension_numbers<[1], [0], [0], [1], [0, 0, 1, 1], [], []>} : vector<256x64xbf16>, vector<64x128xbf16>, vector<256x128xf32> -> vector<256x128xf32>
    %154 = arith.addf %147, %153 : vector<256x128xf32>
    %c0_200 = arith.constant 0 : index
    %c0_201 = arith.constant 0 : index
    %155 = vector.load %arg5[%c0_200, %c0_201] : memref<1x128xf32, #tpu.memory_space<vmem>>, vector<1x128xf32>
    %156 = vector.broadcast %155 : vector<1x128xf32> to vector<256x128xf32>
    %157 = arith.addf %154, %156 : vector<256x128xf32>
    %cst_202 = arith.constant 0.000000e+00 : f32
    %158 = vector.broadcast %cst_202 : f32 to vector<256x128xf32>
    %159 = arith.maximumf %157, %158 : vector<256x128xf32>
    %160 = vector.shape_cast %159 : vector<256x128xf32> to vector<1x16x16x128xf32>
    %161 = vector.extract_strided_slice %160 {offsets = [0, 0, 0, 0], sizes = [1, 1, 16, 128], strides = [1, 1, 1, 1]} : vector<1x16x16x128xf32> to vector<1x1x16x128xf32>
    %162 = vector.extract_strided_slice %160 {offsets = [0, 1, 0, 0], sizes = [1, 1, 16, 128], strides = [1, 1, 1, 1]} : vector<1x16x16x128xf32> to vector<1x1x16x128xf32>
    %163 = arith.maximumf %161, %162 : vector<1x1x16x128xf32>
    %164 = vector.extract_strided_slice %160 {offsets = [0, 2, 0, 0], sizes = [1, 1, 16, 128], strides = [1, 1, 1, 1]} : vector<1x16x16x128xf32> to vector<1x1x16x128xf32>
    %165 = vector.extract_strided_slice %160 {offsets = [0, 3, 0, 0], sizes = [1, 1, 16, 128], strides = [1, 1, 1, 1]} : vector<1x16x16x128xf32> to vector<1x1x16x128xf32>
    %166 = arith.maximumf %164, %165 : vector<1x1x16x128xf32>
    %167 = vector.extract_strided_slice %160 {offsets = [0, 4, 0, 0], sizes = [1, 1, 16, 128], strides = [1, 1, 1, 1]} : vector<1x16x16x128xf32> to vector<1x1x16x128xf32>
    %168 = vector.extract_strided_slice %160 {offsets = [0, 5, 0, 0], sizes = [1, 1, 16, 128], strides = [1, 1, 1, 1]} : vector<1x16x16x128xf32> to vector<1x1x16x128xf32>
    %169 = arith.maximumf %167, %168 : vector<1x1x16x128xf32>
    %170 = vector.extract_strided_slice %160 {offsets = [0, 6, 0, 0], sizes = [1, 1, 16, 128], strides = [1, 1, 1, 1]} : vector<1x16x16x128xf32> to vector<1x1x16x128xf32>
    %171 = vector.extract_strided_slice %160 {offsets = [0, 7, 0, 0], sizes = [1, 1, 16, 128], strides = [1, 1, 1, 1]} : vector<1x16x16x128xf32> to vector<1x1x16x128xf32>
    %172 = arith.maximumf %170, %171 : vector<1x1x16x128xf32>
    %173 = vector.extract_strided_slice %160 {offsets = [0, 8, 0, 0], sizes = [1, 1, 16, 128], strides = [1, 1, 1, 1]} : vector<1x16x16x128xf32> to vector<1x1x16x128xf32>
    %174 = vector.extract_strided_slice %160 {offsets = [0, 9, 0, 0], sizes = [1, 1, 16, 128], strides = [1, 1, 1, 1]} : vector<1x16x16x128xf32> to vector<1x1x16x128xf32>
    %175 = arith.maximumf %173, %174 : vector<1x1x16x128xf32>
    %176 = vector.extract_strided_slice %160 {offsets = [0, 10, 0, 0], sizes = [1, 1, 16, 128], strides = [1, 1, 1, 1]} : vector<1x16x16x128xf32> to vector<1x1x16x128xf32>
    %177 = vector.extract_strided_slice %160 {offsets = [0, 11, 0, 0], sizes = [1, 1, 16, 128], strides = [1, 1, 1, 1]} : vector<1x16x16x128xf32> to vector<1x1x16x128xf32>
    %178 = arith.maximumf %176, %177 : vector<1x1x16x128xf32>
    %179 = vector.extract_strided_slice %160 {offsets = [0, 12, 0, 0], sizes = [1, 1, 16, 128], strides = [1, 1, 1, 1]} : vector<1x16x16x128xf32> to vector<1x1x16x128xf32>
    %180 = vector.extract_strided_slice %160 {offsets = [0, 13, 0, 0], sizes = [1, 1, 16, 128], strides = [1, 1, 1, 1]} : vector<1x16x16x128xf32> to vector<1x1x16x128xf32>
    %181 = arith.maximumf %179, %180 : vector<1x1x16x128xf32>
    %182 = vector.extract_strided_slice %160 {offsets = [0, 14, 0, 0], sizes = [1, 1, 16, 128], strides = [1, 1, 1, 1]} : vector<1x16x16x128xf32> to vector<1x1x16x128xf32>
    %183 = vector.extract_strided_slice %160 {offsets = [0, 15, 0, 0], sizes = [1, 1, 16, 128], strides = [1, 1, 1, 1]} : vector<1x16x16x128xf32> to vector<1x1x16x128xf32>
    %184 = arith.maximumf %182, %183 : vector<1x1x16x128xf32>
    %185 = tpu.concatenate %163, %166, %169, %172, %175, %178, %181, %184 in 1 : vector<1x1x16x128xf32>, vector<1x1x16x128xf32>, vector<1x1x16x128xf32>, vector<1x1x16x128xf32>, vector<1x1x16x128xf32>, vector<1x1x16x128xf32>, vector<1x1x16x128xf32>, vector<1x1x16x128xf32> -> vector<1x8x16x128xf32>
    %186 = vector.extract_strided_slice %185 {offsets = [0, 0, 0, 0], sizes = [1, 8, 1, 128], strides = [1, 1, 1, 1]} : vector<1x8x16x128xf32> to vector<1x8x1x128xf32>
    %187 = vector.extract_strided_slice %185 {offsets = [0, 0, 1, 0], sizes = [1, 8, 1, 128], strides = [1, 1, 1, 1]} : vector<1x8x16x128xf32> to vector<1x8x1x128xf32>
    %188 = arith.maximumf %186, %187 : vector<1x8x1x128xf32>
    %189 = vector.extract_strided_slice %185 {offsets = [0, 0, 2, 0], sizes = [1, 8, 1, 128], strides = [1, 1, 1, 1]} : vector<1x8x16x128xf32> to vector<1x8x1x128xf32>
    %190 = vector.extract_strided_slice %185 {offsets = [0, 0, 3, 0], sizes = [1, 8, 1, 128], strides = [1, 1, 1, 1]} : vector<1x8x16x128xf32> to vector<1x8x1x128xf32>
    %191 = arith.maximumf %189, %190 : vector<1x8x1x128xf32>
    %192 = vector.extract_strided_slice %185 {offsets = [0, 0, 4, 0], sizes = [1, 8, 1, 128], strides = [1, 1, 1, 1]} : vector<1x8x16x128xf32> to vector<1x8x1x128xf32>
    %193 = vector.extract_strided_slice %185 {offsets = [0, 0, 5, 0], sizes = [1, 8, 1, 128], strides = [1, 1, 1, 1]} : vector<1x8x16x128xf32> to vector<1x8x1x128xf32>
    %194 = arith.maximumf %192, %193 : vector<1x8x1x128xf32>
    %195 = vector.extract_strided_slice %185 {offsets = [0, 0, 6, 0], sizes = [1, 8, 1, 128], strides = [1, 1, 1, 1]} : vector<1x8x16x128xf32> to vector<1x8x1x128xf32>
    %196 = vector.extract_strided_slice %185 {offsets = [0, 0, 7, 0], sizes = [1, 8, 1, 128], strides = [1, 1, 1, 1]} : vector<1x8x16x128xf32> to vector<1x8x1x128xf32>
    %197 = arith.maximumf %195, %196 : vector<1x8x1x128xf32>
    %198 = vector.extract_strided_slice %185 {offsets = [0, 0, 8, 0], sizes = [1, 8, 1, 128], strides = [1, 1, 1, 1]} : vector<1x8x16x128xf32> to vector<1x8x1x128xf32>
    %199 = vector.extract_strided_slice %185 {offsets = [0, 0, 9, 0], sizes = [1, 8, 1, 128], strides = [1, 1, 1, 1]} : vector<1x8x16x128xf32> to vector<1x8x1x128xf32>
    %200 = arith.maximumf %198, %199 : vector<1x8x1x128xf32>
    %201 = vector.extract_strided_slice %185 {offsets = [0, 0, 10, 0], sizes = [1, 8, 1, 128], strides = [1, 1, 1, 1]} : vector<1x8x16x128xf32> to vector<1x8x1x128xf32>
    %202 = vector.extract_strided_slice %185 {offsets = [0, 0, 11, 0], sizes = [1, 8, 1, 128], strides = [1, 1, 1, 1]} : vector<1x8x16x128xf32> to vector<1x8x1x128xf32>
    %203 = arith.maximumf %201, %202 : vector<1x8x1x128xf32>
    %204 = vector.extract_strided_slice %185 {offsets = [0, 0, 12, 0], sizes = [1, 8, 1, 128], strides = [1, 1, 1, 1]} : vector<1x8x16x128xf32> to vector<1x8x1x128xf32>
    %205 = vector.extract_strided_slice %185 {offsets = [0, 0, 13, 0], sizes = [1, 8, 1, 128], strides = [1, 1, 1, 1]} : vector<1x8x16x128xf32> to vector<1x8x1x128xf32>
    %206 = arith.maximumf %204, %205 : vector<1x8x1x128xf32>
    %207 = vector.extract_strided_slice %185 {offsets = [0, 0, 14, 0], sizes = [1, 8, 1, 128], strides = [1, 1, 1, 1]} : vector<1x8x16x128xf32> to vector<1x8x1x128xf32>
    %208 = vector.extract_strided_slice %185 {offsets = [0, 0, 15, 0], sizes = [1, 8, 1, 128], strides = [1, 1, 1, 1]} : vector<1x8x16x128xf32> to vector<1x8x1x128xf32>
    %209 = arith.maximumf %207, %208 : vector<1x8x1x128xf32>
    %cst_203 = arith.constant 1.000000e+00 : f32
    %210 = vector.broadcast %cst_203 : f32 to vector<1x8x1x128xf32>
    %211 = arith.mulf %188, %210 : vector<1x8x1x128xf32>
    %cst_204 = arith.constant 0.533333361 : f32
    %212 = vector.broadcast %cst_204 : f32 to vector<1x8x1x128xf32>
    %213 = arith.mulf %188, %212 : vector<1x8x1x128xf32>
    %cst_205 = arith.constant 0.466666669 : f32
    %214 = vector.broadcast %cst_205 : f32 to vector<1x8x1x128xf32>
    %215 = arith.mulf %191, %214 : vector<1x8x1x128xf32>
    %216 = arith.addf %213, %215 : vector<1x8x1x128xf32>
    %cst_206 = arith.constant 0.0666666701 : f32
    %217 = vector.broadcast %cst_206 : f32 to vector<1x8x1x128xf32>
    %218 = arith.mulf %188, %217 : vector<1x8x1x128xf32>
    %cst_207 = arith.constant 0.933333337 : f32
    %219 = vector.broadcast %cst_207 : f32 to vector<1x8x1x128xf32>
    %220 = arith.mulf %191, %219 : vector<1x8x1x128xf32>
    %221 = arith.addf %218, %220 : vector<1x8x1x128xf32>
    %cst_208 = arith.constant 6.000000e-01 : f32
    %222 = vector.broadcast %cst_208 : f32 to vector<1x8x1x128xf32>
    %223 = arith.mulf %191, %222 : vector<1x8x1x128xf32>
    %cst_209 = arith.constant 4.000000e-01 : f32
    %224 = vector.broadcast %cst_209 : f32 to vector<1x8x1x128xf32>
    %225 = arith.mulf %194, %224 : vector<1x8x1x128xf32>
    %226 = arith.addf %223, %225 : vector<1x8x1x128xf32>
    %cst_210 = arith.constant 0.13333334 : f32
    %227 = vector.broadcast %cst_210 : f32 to vector<1x8x1x128xf32>
    %228 = arith.mulf %191, %227 : vector<1x8x1x128xf32>
    %cst_211 = arith.constant 0.866666674 : f32
    %229 = vector.broadcast %cst_211 : f32 to vector<1x8x1x128xf32>
    %230 = arith.mulf %194, %229 : vector<1x8x1x128xf32>
    %231 = arith.addf %228, %230 : vector<1x8x1x128xf32>
    %cst_212 = arith.constant 0.666666686 : f32
    %232 = vector.broadcast %cst_212 : f32 to vector<1x8x1x128xf32>
    %233 = arith.mulf %194, %232 : vector<1x8x1x128xf32>
    %cst_213 = arith.constant 0.333333343 : f32
    %234 = vector.broadcast %cst_213 : f32 to vector<1x8x1x128xf32>
    %235 = arith.mulf %197, %234 : vector<1x8x1x128xf32>
    %236 = arith.addf %233, %235 : vector<1x8x1x128xf32>
    %cst_214 = arith.constant 2.000000e-01 : f32
    %237 = vector.broadcast %cst_214 : f32 to vector<1x8x1x128xf32>
    %238 = arith.mulf %194, %237 : vector<1x8x1x128xf32>
    %cst_215 = arith.constant 8.000000e-01 : f32
    %239 = vector.broadcast %cst_215 : f32 to vector<1x8x1x128xf32>
    %240 = arith.mulf %197, %239 : vector<1x8x1x128xf32>
    %241 = arith.addf %238, %240 : vector<1x8x1x128xf32>
    %cst_216 = arith.constant 0.733333349 : f32
    %242 = vector.broadcast %cst_216 : f32 to vector<1x8x1x128xf32>
    %243 = arith.mulf %197, %242 : vector<1x8x1x128xf32>
    %cst_217 = arith.constant 0.266666681 : f32
    %244 = vector.broadcast %cst_217 : f32 to vector<1x8x1x128xf32>
    %245 = arith.mulf %200, %244 : vector<1x8x1x128xf32>
    %246 = arith.addf %243, %245 : vector<1x8x1x128xf32>
    %cst_218 = arith.constant 0.266666681 : f32
    %247 = vector.broadcast %cst_218 : f32 to vector<1x8x1x128xf32>
    %248 = arith.mulf %197, %247 : vector<1x8x1x128xf32>
    %cst_219 = arith.constant 0.733333349 : f32
    %249 = vector.broadcast %cst_219 : f32 to vector<1x8x1x128xf32>
    %250 = arith.mulf %200, %249 : vector<1x8x1x128xf32>
    %251 = arith.addf %248, %250 : vector<1x8x1x128xf32>
    %cst_220 = arith.constant 8.000000e-01 : f32
    %252 = vector.broadcast %cst_220 : f32 to vector<1x8x1x128xf32>
    %253 = arith.mulf %200, %252 : vector<1x8x1x128xf32>
    %cst_221 = arith.constant 2.000000e-01 : f32
    %254 = vector.broadcast %cst_221 : f32 to vector<1x8x1x128xf32>
    %255 = arith.mulf %203, %254 : vector<1x8x1x128xf32>
    %256 = arith.addf %253, %255 : vector<1x8x1x128xf32>
    %cst_222 = arith.constant 0.333333343 : f32
    %257 = vector.broadcast %cst_222 : f32 to vector<1x8x1x128xf32>
    %258 = arith.mulf %200, %257 : vector<1x8x1x128xf32>
    %cst_223 = arith.constant 0.666666686 : f32
    %259 = vector.broadcast %cst_223 : f32 to vector<1x8x1x128xf32>
    %260 = arith.mulf %203, %259 : vector<1x8x1x128xf32>
    %261 = arith.addf %258, %260 : vector<1x8x1x128xf32>
    %cst_224 = arith.constant 0.866666674 : f32
    %262 = vector.broadcast %cst_224 : f32 to vector<1x8x1x128xf32>
    %263 = arith.mulf %203, %262 : vector<1x8x1x128xf32>
    %cst_225 = arith.constant 0.13333334 : f32
    %264 = vector.broadcast %cst_225 : f32 to vector<1x8x1x128xf32>
    %265 = arith.mulf %206, %264 : vector<1x8x1x128xf32>
    %266 = arith.addf %263, %265 : vector<1x8x1x128xf32>
    %cst_226 = arith.constant 4.000000e-01 : f32
    %267 = vector.broadcast %cst_226 : f32 to vector<1x8x1x128xf32>
    %268 = arith.mulf %203, %267 : vector<1x8x1x128xf32>
    %cst_227 = arith.constant 6.000000e-01 : f32
    %269 = vector.broadcast %cst_227 : f32 to vector<1x8x1x128xf32>
    %270 = arith.mulf %206, %269 : vector<1x8x1x128xf32>
    %271 = arith.addf %268, %270 : vector<1x8x1x128xf32>
    %cst_228 = arith.constant 0.933333337 : f32
    %272 = vector.broadcast %cst_228 : f32 to vector<1x8x1x128xf32>
    %273 = arith.mulf %206, %272 : vector<1x8x1x128xf32>
    %cst_229 = arith.constant 0.0666666701 : f32
    %274 = vector.broadcast %cst_229 : f32 to vector<1x8x1x128xf32>
    %275 = arith.mulf %209, %274 : vector<1x8x1x128xf32>
    %276 = arith.addf %273, %275 : vector<1x8x1x128xf32>
    %cst_230 = arith.constant 0.466666669 : f32
    %277 = vector.broadcast %cst_230 : f32 to vector<1x8x1x128xf32>
    %278 = arith.mulf %206, %277 : vector<1x8x1x128xf32>
    %cst_231 = arith.constant 0.533333361 : f32
    %279 = vector.broadcast %cst_231 : f32 to vector<1x8x1x128xf32>
    %280 = arith.mulf %209, %279 : vector<1x8x1x128xf32>
    %281 = arith.addf %278, %280 : vector<1x8x1x128xf32>
    %cst_232 = arith.constant 1.000000e+00 : f32
    %282 = vector.broadcast %cst_232 : f32 to vector<1x8x1x128xf32>
    %283 = arith.mulf %209, %282 : vector<1x8x1x128xf32>
    %284 = tpu.concatenate %211, %216, %221, %226, %231, %236, %241, %246, %251, %256, %261, %266, %271, %276, %281, %283 in 2 : vector<1x8x1x128xf32>, vector<1x8x1x128xf32>, vector<1x8x1x128xf32>, vector<1x8x1x128xf32>, vector<1x8x1x128xf32>, vector<1x8x1x128xf32>, vector<1x8x1x128xf32>, vector<1x8x1x128xf32>, vector<1x8x1x128xf32>, vector<1x8x1x128xf32>, vector<1x8x1x128xf32>, vector<1x8x1x128xf32>, vector<1x8x1x128xf32>, vector<1x8x1x128xf32>, vector<1x8x1x128xf32>, vector<1x8x1x128xf32> -> vector<1x8x16x128xf32>
    %285 = vector.extract_strided_slice %284 {offsets = [0, 0, 0, 0], sizes = [1, 1, 16, 128], strides = [1, 1, 1, 1]} : vector<1x8x16x128xf32> to vector<1x1x16x128xf32>
    %cst_233 = arith.constant 1.000000e+00 : f32
    %286 = vector.broadcast %cst_233 : f32 to vector<1x1x16x128xf32>
    %287 = arith.mulf %285, %286 : vector<1x1x16x128xf32>
    %288 = vector.extract_strided_slice %284 {offsets = [0, 0, 0, 0], sizes = [1, 1, 16, 128], strides = [1, 1, 1, 1]} : vector<1x8x16x128xf32> to vector<1x1x16x128xf32>
    %cst_234 = arith.constant 0.533333361 : f32
    %289 = vector.broadcast %cst_234 : f32 to vector<1x1x16x128xf32>
    %290 = arith.mulf %288, %289 : vector<1x1x16x128xf32>
    %291 = vector.extract_strided_slice %284 {offsets = [0, 1, 0, 0], sizes = [1, 1, 16, 128], strides = [1, 1, 1, 1]} : vector<1x8x16x128xf32> to vector<1x1x16x128xf32>
    %cst_235 = arith.constant 0.466666669 : f32
    %292 = vector.broadcast %cst_235 : f32 to vector<1x1x16x128xf32>
    %293 = arith.mulf %291, %292 : vector<1x1x16x128xf32>
    %294 = arith.addf %290, %293 : vector<1x1x16x128xf32>
    %295 = vector.extract_strided_slice %284 {offsets = [0, 0, 0, 0], sizes = [1, 1, 16, 128], strides = [1, 1, 1, 1]} : vector<1x8x16x128xf32> to vector<1x1x16x128xf32>
    %cst_236 = arith.constant 0.0666666701 : f32
    %296 = vector.broadcast %cst_236 : f32 to vector<1x1x16x128xf32>
    %297 = arith.mulf %295, %296 : vector<1x1x16x128xf32>
    %298 = vector.extract_strided_slice %284 {offsets = [0, 1, 0, 0], sizes = [1, 1, 16, 128], strides = [1, 1, 1, 1]} : vector<1x8x16x128xf32> to vector<1x1x16x128xf32>
    %cst_237 = arith.constant 0.933333337 : f32
    %299 = vector.broadcast %cst_237 : f32 to vector<1x1x16x128xf32>
    %300 = arith.mulf %298, %299 : vector<1x1x16x128xf32>
    %301 = arith.addf %297, %300 : vector<1x1x16x128xf32>
    %302 = vector.extract_strided_slice %284 {offsets = [0, 1, 0, 0], sizes = [1, 1, 16, 128], strides = [1, 1, 1, 1]} : vector<1x8x16x128xf32> to vector<1x1x16x128xf32>
    %cst_238 = arith.constant 6.000000e-01 : f32
    %303 = vector.broadcast %cst_238 : f32 to vector<1x1x16x128xf32>
    %304 = arith.mulf %302, %303 : vector<1x1x16x128xf32>
    %305 = vector.extract_strided_slice %284 {offsets = [0, 2, 0, 0], sizes = [1, 1, 16, 128], strides = [1, 1, 1, 1]} : vector<1x8x16x128xf32> to vector<1x1x16x128xf32>
    %cst_239 = arith.constant 4.000000e-01 : f32
    %306 = vector.broadcast %cst_239 : f32 to vector<1x1x16x128xf32>
    %307 = arith.mulf %305, %306 : vector<1x1x16x128xf32>
    %308 = arith.addf %304, %307 : vector<1x1x16x128xf32>
    %309 = vector.extract_strided_slice %284 {offsets = [0, 1, 0, 0], sizes = [1, 1, 16, 128], strides = [1, 1, 1, 1]} : vector<1x8x16x128xf32> to vector<1x1x16x128xf32>
    %cst_240 = arith.constant 0.13333334 : f32
    %310 = vector.broadcast %cst_240 : f32 to vector<1x1x16x128xf32>
    %311 = arith.mulf %309, %310 : vector<1x1x16x128xf32>
    %312 = vector.extract_strided_slice %284 {offsets = [0, 2, 0, 0], sizes = [1, 1, 16, 128], strides = [1, 1, 1, 1]} : vector<1x8x16x128xf32> to vector<1x1x16x128xf32>
    %cst_241 = arith.constant 0.866666674 : f32
    %313 = vector.broadcast %cst_241 : f32 to vector<1x1x16x128xf32>
    %314 = arith.mulf %312, %313 : vector<1x1x16x128xf32>
    %315 = arith.addf %311, %314 : vector<1x1x16x128xf32>
    %316 = vector.extract_strided_slice %284 {offsets = [0, 2, 0, 0], sizes = [1, 1, 16, 128], strides = [1, 1, 1, 1]} : vector<1x8x16x128xf32> to vector<1x1x16x128xf32>
    %cst_242 = arith.constant 0.666666686 : f32
    %317 = vector.broadcast %cst_242 : f32 to vector<1x1x16x128xf32>
    %318 = arith.mulf %316, %317 : vector<1x1x16x128xf32>
    %319 = vector.extract_strided_slice %284 {offsets = [0, 3, 0, 0], sizes = [1, 1, 16, 128], strides = [1, 1, 1, 1]} : vector<1x8x16x128xf32> to vector<1x1x16x128xf32>
    %cst_243 = arith.constant 0.333333343 : f32
    %320 = vector.broadcast %cst_243 : f32 to vector<1x1x16x128xf32>
    %321 = arith.mulf %319, %320 : vector<1x1x16x128xf32>
    %322 = arith.addf %318, %321 : vector<1x1x16x128xf32>
    %323 = vector.extract_strided_slice %284 {offsets = [0, 2, 0, 0], sizes = [1, 1, 16, 128], strides = [1, 1, 1, 1]} : vector<1x8x16x128xf32> to vector<1x1x16x128xf32>
    %cst_244 = arith.constant 2.000000e-01 : f32
    %324 = vector.broadcast %cst_244 : f32 to vector<1x1x16x128xf32>
    %325 = arith.mulf %323, %324 : vector<1x1x16x128xf32>
    %326 = vector.extract_strided_slice %284 {offsets = [0, 3, 0, 0], sizes = [1, 1, 16, 128], strides = [1, 1, 1, 1]} : vector<1x8x16x128xf32> to vector<1x1x16x128xf32>
    %cst_245 = arith.constant 8.000000e-01 : f32
    %327 = vector.broadcast %cst_245 : f32 to vector<1x1x16x128xf32>
    %328 = arith.mulf %326, %327 : vector<1x1x16x128xf32>
    %329 = arith.addf %325, %328 : vector<1x1x16x128xf32>
    %330 = vector.extract_strided_slice %284 {offsets = [0, 3, 0, 0], sizes = [1, 1, 16, 128], strides = [1, 1, 1, 1]} : vector<1x8x16x128xf32> to vector<1x1x16x128xf32>
    %cst_246 = arith.constant 0.733333349 : f32
    %331 = vector.broadcast %cst_246 : f32 to vector<1x1x16x128xf32>
    %332 = arith.mulf %330, %331 : vector<1x1x16x128xf32>
    %333 = vector.extract_strided_slice %284 {offsets = [0, 4, 0, 0], sizes = [1, 1, 16, 128], strides = [1, 1, 1, 1]} : vector<1x8x16x128xf32> to vector<1x1x16x128xf32>
    %cst_247 = arith.constant 0.266666681 : f32
    %334 = vector.broadcast %cst_247 : f32 to vector<1x1x16x128xf32>
    %335 = arith.mulf %333, %334 : vector<1x1x16x128xf32>
    %336 = arith.addf %332, %335 : vector<1x1x16x128xf32>
    %337 = vector.extract_strided_slice %284 {offsets = [0, 3, 0, 0], sizes = [1, 1, 16, 128], strides = [1, 1, 1, 1]} : vector<1x8x16x128xf32> to vector<1x1x16x128xf32>
    %cst_248 = arith.constant 0.266666681 : f32
    %338 = vector.broadcast %cst_248 : f32 to vector<1x1x16x128xf32>
    %339 = arith.mulf %337, %338 : vector<1x1x16x128xf32>
    %340 = vector.extract_strided_slice %284 {offsets = [0, 4, 0, 0], sizes = [1, 1, 16, 128], strides = [1, 1, 1, 1]} : vector<1x8x16x128xf32> to vector<1x1x16x128xf32>
    %cst_249 = arith.constant 0.733333349 : f32
    %341 = vector.broadcast %cst_249 : f32 to vector<1x1x16x128xf32>
    %342 = arith.mulf %340, %341 : vector<1x1x16x128xf32>
    %343 = arith.addf %339, %342 : vector<1x1x16x128xf32>
    %344 = vector.extract_strided_slice %284 {offsets = [0, 4, 0, 0], sizes = [1, 1, 16, 128], strides = [1, 1, 1, 1]} : vector<1x8x16x128xf32> to vector<1x1x16x128xf32>
    %cst_250 = arith.constant 8.000000e-01 : f32
    %345 = vector.broadcast %cst_250 : f32 to vector<1x1x16x128xf32>
    %346 = arith.mulf %344, %345 : vector<1x1x16x128xf32>
    %347 = vector.extract_strided_slice %284 {offsets = [0, 5, 0, 0], sizes = [1, 1, 16, 128], strides = [1, 1, 1, 1]} : vector<1x8x16x128xf32> to vector<1x1x16x128xf32>
    %cst_251 = arith.constant 2.000000e-01 : f32
    %348 = vector.broadcast %cst_251 : f32 to vector<1x1x16x128xf32>
    %349 = arith.mulf %347, %348 : vector<1x1x16x128xf32>
    %350 = arith.addf %346, %349 : vector<1x1x16x128xf32>
    %351 = vector.extract_strided_slice %284 {offsets = [0, 4, 0, 0], sizes = [1, 1, 16, 128], strides = [1, 1, 1, 1]} : vector<1x8x16x128xf32> to vector<1x1x16x128xf32>
    %cst_252 = arith.constant 0.333333343 : f32
    %352 = vector.broadcast %cst_252 : f32 to vector<1x1x16x128xf32>
    %353 = arith.mulf %351, %352 : vector<1x1x16x128xf32>
    %354 = vector.extract_strided_slice %284 {offsets = [0, 5, 0, 0], sizes = [1, 1, 16, 128], strides = [1, 1, 1, 1]} : vector<1x8x16x128xf32> to vector<1x1x16x128xf32>
    %cst_253 = arith.constant 0.666666686 : f32
    %355 = vector.broadcast %cst_253 : f32 to vector<1x1x16x128xf32>
    %356 = arith.mulf %354, %355 : vector<1x1x16x128xf32>
    %357 = arith.addf %353, %356 : vector<1x1x16x128xf32>
    %358 = vector.extract_strided_slice %284 {offsets = [0, 5, 0, 0], sizes = [1, 1, 16, 128], strides = [1, 1, 1, 1]} : vector<1x8x16x128xf32> to vector<1x1x16x128xf32>
    %cst_254 = arith.constant 0.866666674 : f32
    %359 = vector.broadcast %cst_254 : f32 to vector<1x1x16x128xf32>
    %360 = arith.mulf %358, %359 : vector<1x1x16x128xf32>
    %361 = vector.extract_strided_slice %284 {offsets = [0, 6, 0, 0], sizes = [1, 1, 16, 128], strides = [1, 1, 1, 1]} : vector<1x8x16x128xf32> to vector<1x1x16x128xf32>
    %cst_255 = arith.constant 0.13333334 : f32
    %362 = vector.broadcast %cst_255 : f32 to vector<1x1x16x128xf32>
    %363 = arith.mulf %361, %362 : vector<1x1x16x128xf32>
    %364 = arith.addf %360, %363 : vector<1x1x16x128xf32>
    %365 = vector.extract_strided_slice %284 {offsets = [0, 5, 0, 0], sizes = [1, 1, 16, 128], strides = [1, 1, 1, 1]} : vector<1x8x16x128xf32> to vector<1x1x16x128xf32>
    %cst_256 = arith.constant 4.000000e-01 : f32
    %366 = vector.broadcast %cst_256 : f32 to vector<1x1x16x128xf32>
    %367 = arith.mulf %365, %366 : vector<1x1x16x128xf32>
    %368 = vector.extract_strided_slice %284 {offsets = [0, 6, 0, 0], sizes = [1, 1, 16, 128], strides = [1, 1, 1, 1]} : vector<1x8x16x128xf32> to vector<1x1x16x128xf32>
    %cst_257 = arith.constant 6.000000e-01 : f32
    %369 = vector.broadcast %cst_257 : f32 to vector<1x1x16x128xf32>
    %370 = arith.mulf %368, %369 : vector<1x1x16x128xf32>
    %371 = arith.addf %367, %370 : vector<1x1x16x128xf32>
    %372 = vector.extract_strided_slice %284 {offsets = [0, 6, 0, 0], sizes = [1, 1, 16, 128], strides = [1, 1, 1, 1]} : vector<1x8x16x128xf32> to vector<1x1x16x128xf32>
    %cst_258 = arith.constant 0.933333337 : f32
    %373 = vector.broadcast %cst_258 : f32 to vector<1x1x16x128xf32>
    %374 = arith.mulf %372, %373 : vector<1x1x16x128xf32>
    %375 = vector.extract_strided_slice %284 {offsets = [0, 7, 0, 0], sizes = [1, 1, 16, 128], strides = [1, 1, 1, 1]} : vector<1x8x16x128xf32> to vector<1x1x16x128xf32>
    %cst_259 = arith.constant 0.0666666701 : f32
    %376 = vector.broadcast %cst_259 : f32 to vector<1x1x16x128xf32>
    %377 = arith.mulf %375, %376 : vector<1x1x16x128xf32>
    %378 = arith.addf %374, %377 : vector<1x1x16x128xf32>
    %379 = vector.extract_strided_slice %284 {offsets = [0, 6, 0, 0], sizes = [1, 1, 16, 128], strides = [1, 1, 1, 1]} : vector<1x8x16x128xf32> to vector<1x1x16x128xf32>
    %cst_260 = arith.constant 0.466666669 : f32
    %380 = vector.broadcast %cst_260 : f32 to vector<1x1x16x128xf32>
    %381 = arith.mulf %379, %380 : vector<1x1x16x128xf32>
    %382 = vector.extract_strided_slice %284 {offsets = [0, 7, 0, 0], sizes = [1, 1, 16, 128], strides = [1, 1, 1, 1]} : vector<1x8x16x128xf32> to vector<1x1x16x128xf32>
    %cst_261 = arith.constant 0.533333361 : f32
    %383 = vector.broadcast %cst_261 : f32 to vector<1x1x16x128xf32>
    %384 = arith.mulf %382, %383 : vector<1x1x16x128xf32>
    %385 = arith.addf %381, %384 : vector<1x1x16x128xf32>
    %386 = vector.extract_strided_slice %284 {offsets = [0, 7, 0, 0], sizes = [1, 1, 16, 128], strides = [1, 1, 1, 1]} : vector<1x8x16x128xf32> to vector<1x1x16x128xf32>
    %cst_262 = arith.constant 1.000000e+00 : f32
    %387 = vector.broadcast %cst_262 : f32 to vector<1x1x16x128xf32>
    %388 = arith.mulf %386, %387 : vector<1x1x16x128xf32>
    %389 = tpu.concatenate %287, %294, %301, %308, %315, %322, %329, %336, %343, %350, %357, %364, %371, %378, %385, %388 in 1 : vector<1x1x16x128xf32>, vector<1x1x16x128xf32>, vector<1x1x16x128xf32>, vector<1x1x16x128xf32>, vector<1x1x16x128xf32>, vector<1x1x16x128xf32>, vector<1x1x16x128xf32>, vector<1x1x16x128xf32>, vector<1x1x16x128xf32>, vector<1x1x16x128xf32>, vector<1x1x16x128xf32>, vector<1x1x16x128xf32>, vector<1x1x16x128xf32>, vector<1x1x16x128xf32>, vector<1x1x16x128xf32>, vector<1x1x16x128xf32> -> vector<1x16x16x128xf32>
    %c0_263 = arith.constant 0 : index
    %c1_264 = arith.constant 1 : index
    %c1_265 = arith.constant 1 : index
    %c0_266 = arith.constant 0 : index
    %390 = vector.load %arg12[%c0_263, %c1_264, %c1_265, %c0_266] : memref<1x18x18x128xf32, #tpu.memory_space<vmem>>, vector<1x16x16x128xf32>
    tpu.vector_store %arg12[%c0_263, %c1_264, %c1_265, %c0_266], %389 {strides = array<i32>} : memref<1x18x18x128xf32, #tpu.memory_space<vmem>>, vector<1x16x16x128xf32>,
    %c0_267 = arith.constant 0 : index
    %c0_268 = arith.constant 0 : index
    %c0_269 = arith.constant 0 : index
    %c0_270 = arith.constant 0 : index
    %391 = vector.load %arg12[%c0_267, %c0_268, %c0_269, %c0_270] : memref<1x18x18x128xf32, #tpu.memory_space<vmem>>, vector<1x16x16x128xf32>
    %392 = vector.shape_cast %391 : vector<1x16x16x128xf32> to vector<256x128xf32>
    %393 = arith.truncf %392 : vector<256x128xf32> to vector<256x128xbf16>
    %c0_271 = arith.constant 0 : index
    %c0_272 = arith.constant 0 : index
    %c0_273 = arith.constant 0 : index
    %394 = vector.load %arg6[%c0_271, %c0_272, %c0_273] : memref<9x128x64xbf16, #tpu.memory_space<vmem>>, vector<1x128x64xbf16>
    %395 = vector.shape_cast %394 : vector<1x128x64xbf16> to vector<128x64xbf16>
    %cst_274 = arith.constant dense<0.000000e+00> : vector<256x64xf32>
    %396 = tpu.matmul %393, %395, %cst_274 {dimension_numbers = #tpu.dot_dimension_numbers<[1], [0], [0], [1], [0, 0, 1, 1], [], []>} : vector<256x128xbf16>, vector<128x64xbf16>, vector<256x64xf32> -> vector<256x64xf32>
    %c0_275 = arith.constant 0 : index
    %c0_276 = arith.constant 0 : index
    %c1_277 = arith.constant 1 : index
    %c0_278 = arith.constant 0 : index
    %397 = vector.load %arg12[%c0_275, %c0_276, %c1_277, %c0_278] : memref<1x18x18x128xf32, #tpu.memory_space<vmem>>, vector<1x16x16x128xf32>
    %398 = vector.shape_cast %397 : vector<1x16x16x128xf32> to vector<256x128xf32>
    %399 = arith.truncf %398 : vector<256x128xf32> to vector<256x128xbf16>
    %c1_279 = arith.constant 1 : index
    %c0_280 = arith.constant 0 : index
    %c0_281 = arith.constant 0 : index
    %400 = vector.load %arg6[%c1_279, %c0_280, %c0_281] : memref<9x128x64xbf16, #tpu.memory_space<vmem>>, vector<1x128x64xbf16>
    %401 = vector.shape_cast %400 : vector<1x128x64xbf16> to vector<128x64xbf16>
    %cst_282 = arith.constant dense<0.000000e+00> : vector<256x64xf32>
    %402 = tpu.matmul %399, %401, %cst_282 {dimension_numbers = #tpu.dot_dimension_numbers<[1], [0], [0], [1], [0, 0, 1, 1], [], []>} : vector<256x128xbf16>, vector<128x64xbf16>, vector<256x64xf32> -> vector<256x64xf32>
    %403 = arith.addf %396, %402 : vector<256x64xf32>
    %c0_283 = arith.constant 0 : index
    %c0_284 = arith.constant 0 : index
    %c2_285 = arith.constant 2 : index
    %c0_286 = arith.constant 0 : index
    %404 = vector.load %arg12[%c0_283, %c0_284, %c2_285, %c0_286] : memref<1x18x18x128xf32, #tpu.memory_space<vmem>>, vector<1x16x16x128xf32>
    %405 = vector.shape_cast %404 : vector<1x16x16x128xf32> to vector<256x128xf32>
    %406 = arith.truncf %405 : vector<256x128xf32> to vector<256x128xbf16>
    %c2_287 = arith.constant 2 : index
    %c0_288 = arith.constant 0 : index
    %c0_289 = arith.constant 0 : index
    %407 = vector.load %arg6[%c2_287, %c0_288, %c0_289] : memref<9x128x64xbf16, #tpu.memory_space<vmem>>, vector<1x128x64xbf16>
    %408 = vector.shape_cast %407 : vector<1x128x64xbf16> to vector<128x64xbf16>
    %cst_290 = arith.constant dense<0.000000e+00> : vector<256x64xf32>
    %409 = tpu.matmul %406, %408, %cst_290 {dimension_numbers = #tpu.dot_dimension_numbers<[1], [0], [0], [1], [0, 0, 1, 1], [], []>} : vector<256x128xbf16>, vector<128x64xbf16>, vector<256x64xf32> -> vector<256x64xf32>
    %410 = arith.addf %403, %409 : vector<256x64xf32>
    %c0_291 = arith.constant 0 : index
    %c1_292 = arith.constant 1 : index
    %c0_293 = arith.constant 0 : index
    %c0_294 = arith.constant 0 : index
    %411 = vector.load %arg12[%c0_291, %c1_292, %c0_293, %c0_294] : memref<1x18x18x128xf32, #tpu.memory_space<vmem>>, vector<1x16x16x128xf32>
    %412 = vector.shape_cast %411 : vector<1x16x16x128xf32> to vector<256x128xf32>
    %413 = arith.truncf %412 : vector<256x128xf32> to vector<256x128xbf16>
    %c3_295 = arith.constant 3 : index
    %c0_296 = arith.constant 0 : index
    %c0_297 = arith.constant 0 : index
    %414 = vector.load %arg6[%c3_295, %c0_296, %c0_297] : memref<9x128x64xbf16, #tpu.memory_space<vmem>>, vector<1x128x64xbf16>
    %415 = vector.shape_cast %414 : vector<1x128x64xbf16> to vector<128x64xbf16>
    %cst_298 = arith.constant dense<0.000000e+00> : vector<256x64xf32>
    %416 = tpu.matmul %413, %415, %cst_298 {dimension_numbers = #tpu.dot_dimension_numbers<[1], [0], [0], [1], [0, 0, 1, 1], [], []>} : vector<256x128xbf16>, vector<128x64xbf16>, vector<256x64xf32> -> vector<256x64xf32>
    %417 = arith.addf %410, %416 : vector<256x64xf32>
    %c0_299 = arith.constant 0 : index
    %c1_300 = arith.constant 1 : index
    %c1_301 = arith.constant 1 : index
    %c0_302 = arith.constant 0 : index
    %418 = vector.load %arg12[%c0_299, %c1_300, %c1_301, %c0_302] : memref<1x18x18x128xf32, #tpu.memory_space<vmem>>, vector<1x16x16x128xf32>
    %419 = vector.shape_cast %418 : vector<1x16x16x128xf32> to vector<256x128xf32>
    %420 = arith.truncf %419 : vector<256x128xf32> to vector<256x128xbf16>
    %c4_303 = arith.constant 4 : index
    %c0_304 = arith.constant 0 : index
    %c0_305 = arith.constant 0 : index
    %421 = vector.load %arg6[%c4_303, %c0_304, %c0_305] : memref<9x128x64xbf16, #tpu.memory_space<vmem>>, vector<1x128x64xbf16>
    %422 = vector.shape_cast %421 : vector<1x128x64xbf16> to vector<128x64xbf16>
    %cst_306 = arith.constant dense<0.000000e+00> : vector<256x64xf32>
    %423 = tpu.matmul %420, %422, %cst_306 {dimension_numbers = #tpu.dot_dimension_numbers<[1], [0], [0], [1], [0, 0, 1, 1], [], []>} : vector<256x128xbf16>, vector<128x64xbf16>, vector<256x64xf32> -> vector<256x64xf32>
    %424 = arith.addf %417, %423 : vector<256x64xf32>
    %c0_307 = arith.constant 0 : index
    %c1_308 = arith.constant 1 : index
    %c2_309 = arith.constant 2 : index
    %c0_310 = arith.constant 0 : index
    %425 = vector.load %arg12[%c0_307, %c1_308, %c2_309, %c0_310] : memref<1x18x18x128xf32, #tpu.memory_space<vmem>>, vector<1x16x16x128xf32>
    %426 = vector.shape_cast %425 : vector<1x16x16x128xf32> to vector<256x128xf32>
    %427 = arith.truncf %426 : vector<256x128xf32> to vector<256x128xbf16>
    %c5_311 = arith.constant 5 : index
    %c0_312 = arith.constant 0 : index
    %c0_313 = arith.constant 0 : index
    %428 = vector.load %arg6[%c5_311, %c0_312, %c0_313] : memref<9x128x64xbf16, #tpu.memory_space<vmem>>, vector<1x128x64xbf16>
    %429 = vector.shape_cast %428 : vector<1x128x64xbf16> to vector<128x64xbf16>
    %cst_314 = arith.constant dense<0.000000e+00> : vector<256x64xf32>
    %430 = tpu.matmul %427, %429, %cst_314 {dimension_numbers = #tpu.dot_dimension_numbers<[1], [0], [0], [1], [0, 0, 1, 1], [], []>} : vector<256x128xbf16>, vector<128x64xbf16>, vector<256x64xf32> -> vector<256x64xf32>
    %431 = arith.addf %424, %430 : vector<256x64xf32>
    %c0_315 = arith.constant 0 : index
    %c2_316 = arith.constant 2 : index
    %c0_317 = arith.constant 0 : index
    %c0_318 = arith.constant 0 : index
    %432 = vector.load %arg12[%c0_315, %c2_316, %c0_317, %c0_318] : memref<1x18x18x128xf32, #tpu.memory_space<vmem>>, vector<1x16x16x128xf32>
    %433 = vector.shape_cast %432 : vector<1x16x16x128xf32> to vector<256x128xf32>
    %434 = arith.truncf %433 : vector<256x128xf32> to vector<256x128xbf16>
    %c6_319 = arith.constant 6 : index
    %c0_320 = arith.constant 0 : index
    %c0_321 = arith.constant 0 : index
    %435 = vector.load %arg6[%c6_319, %c0_320, %c0_321] : memref<9x128x64xbf16, #tpu.memory_space<vmem>>, vector<1x128x64xbf16>
    %436 = vector.shape_cast %435 : vector<1x128x64xbf16> to vector<128x64xbf16>
    %cst_322 = arith.constant dense<0.000000e+00> : vector<256x64xf32>
    %437 = tpu.matmul %434, %436, %cst_322 {dimension_numbers = #tpu.dot_dimension_numbers<[1], [0], [0], [1], [0, 0, 1, 1], [], []>} : vector<256x128xbf16>, vector<128x64xbf16>, vector<256x64xf32> -> vector<256x64xf32>
    %438 = arith.addf %431, %437 : vector<256x64xf32>
    %c0_323 = arith.constant 0 : index
    %c2_324 = arith.constant 2 : index
    %c1_325 = arith.constant 1 : index
    %c0_326 = arith.constant 0 : index
    %439 = vector.load %arg12[%c0_323, %c2_324, %c1_325, %c0_326] : memref<1x18x18x128xf32, #tpu.memory_space<vmem>>, vector<1x16x16x128xf32>
    %440 = vector.shape_cast %439 : vector<1x16x16x128xf32> to vector<256x128xf32>
    %441 = arith.truncf %440 : vector<256x128xf32> to vector<256x128xbf16>
    %c7_327 = arith.constant 7 : index
    %c0_328 = arith.constant 0 : index
    %c0_329 = arith.constant 0 : index
    %442 = vector.load %arg6[%c7_327, %c0_328, %c0_329] : memref<9x128x64xbf16, #tpu.memory_space<vmem>>, vector<1x128x64xbf16>
    %443 = vector.shape_cast %442 : vector<1x128x64xbf16> to vector<128x64xbf16>
    %cst_330 = arith.constant dense<0.000000e+00> : vector<256x64xf32>
    %444 = tpu.matmul %441, %443, %cst_330 {dimension_numbers = #tpu.dot_dimension_numbers<[1], [0], [0], [1], [0, 0, 1, 1], [], []>} : vector<256x128xbf16>, vector<128x64xbf16>, vector<256x64xf32> -> vector<256x64xf32>
    %445 = arith.addf %438, %444 : vector<256x64xf32>
    %c0_331 = arith.constant 0 : index
    %c2_332 = arith.constant 2 : index
    %c2_333 = arith.constant 2 : index
    %c0_334 = arith.constant 0 : index
    %446 = vector.load %arg12[%c0_331, %c2_332, %c2_333, %c0_334] : memref<1x18x18x128xf32, #tpu.memory_space<vmem>>, vector<1x16x16x128xf32>
    %447 = vector.shape_cast %446 : vector<1x16x16x128xf32> to vector<256x128xf32>
    %448 = arith.truncf %447 : vector<256x128xf32> to vector<256x128xbf16>
    %c8_335 = arith.constant 8 : index
    %c0_336 = arith.constant 0 : index
    %c0_337 = arith.constant 0 : index
    %449 = vector.load %arg6[%c8_335, %c0_336, %c0_337] : memref<9x128x64xbf16, #tpu.memory_space<vmem>>, vector<1x128x64xbf16>
    %450 = vector.shape_cast %449 : vector<1x128x64xbf16> to vector<128x64xbf16>
    %cst_338 = arith.constant dense<0.000000e+00> : vector<256x64xf32>
    %451 = tpu.matmul %448, %450, %cst_338 {dimension_numbers = #tpu.dot_dimension_numbers<[1], [0], [0], [1], [0, 0, 1, 1], [], []>} : vector<256x128xbf16>, vector<128x64xbf16>, vector<256x64xf32> -> vector<256x64xf32>
    %452 = arith.addf %445, %451 : vector<256x64xf32>
    %c0_339 = arith.constant 0 : index
    %c0_340 = arith.constant 0 : index
    %453 = vector.load %arg7[%c0_339, %c0_340] : memref<1x64xf32, #tpu.memory_space<vmem>>, vector<1x64xf32>
    %454 = vector.broadcast %453 : vector<1x64xf32> to vector<256x64xf32>
    %455 = arith.addf %452, %454 : vector<256x64xf32>
    %cst_341 = arith.constant 0.000000e+00 : f32
    %456 = vector.broadcast %cst_341 : f32 to vector<256x64xf32>
    %457 = arith.maximumf %455, %456 : vector<256x64xf32>
    %458 = vector.shape_cast %457 : vector<256x64xf32> to vector<1x16x16x64xf32>
    %c0_342 = arith.constant 0 : index
    %c1_343 = arith.constant 1 : index
    %c1_344 = arith.constant 1 : index
    %c0_345 = arith.constant 0 : index
    %459 = vector.load %arg13[%c0_342, %c1_343, %c1_344, %c0_345] : memref<1x18x18x64xf32, #tpu.memory_space<vmem>>, vector<1x16x16x64xf32>
    tpu.vector_store %arg13[%c0_342, %c1_343, %c1_344, %c0_345], %458 {strides = array<i32>} : memref<1x18x18x64xf32, #tpu.memory_space<vmem>>, vector<1x16x16x64xf32>,
    %c0_346 = arith.constant 0 : index
    %c0_347 = arith.constant 0 : index
    %c0_348 = arith.constant 0 : index
    %c0_349 = arith.constant 0 : index
    %460 = vector.load %arg13[%c0_346, %c0_347, %c0_348, %c0_349] : memref<1x18x18x64xf32, #tpu.memory_space<vmem>>, vector<1x16x16x64xf32>
    %461 = vector.shape_cast %460 : vector<1x16x16x64xf32> to vector<256x64xf32>
    %462 = arith.truncf %461 : vector<256x64xf32> to vector<256x64xbf16>
    %c0_350 = arith.constant 0 : index
    %c0_351 = arith.constant 0 : index
    %c0_352 = arith.constant 0 : index
    %463 = vector.load %arg8[%c0_350, %c0_351, %c0_352] : memref<9x64x1xbf16, #tpu.memory_space<vmem>>, vector<1x64x1xbf16>
    %464 = vector.shape_cast %463 : vector<1x64x1xbf16> to vector<64x1xbf16>
    %cst_353 = arith.constant dense<0.000000e+00> : vector<256x1xf32>
    %465 = tpu.matmul %462, %464, %cst_353 {dimension_numbers = #tpu.dot_dimension_numbers<[1], [0], [0], [1], [0, 0, 1, 1], [], []>} : vector<256x64xbf16>, vector<64x1xbf16>, vector<256x1xf32> -> vector<256x1xf32>
    %c0_354 = arith.constant 0 : index
    %c0_355 = arith.constant 0 : index
    %c1_356 = arith.constant 1 : index
    %c0_357 = arith.constant 0 : index
    %466 = vector.load %arg13[%c0_354, %c0_355, %c1_356, %c0_357] : memref<1x18x18x64xf32, #tpu.memory_space<vmem>>, vector<1x16x16x64xf32>
    %467 = vector.shape_cast %466 : vector<1x16x16x64xf32> to vector<256x64xf32>
    %468 = arith.truncf %467 : vector<256x64xf32> to vector<256x64xbf16>
    %c1_358 = arith.constant 1 : index
    %c0_359 = arith.constant 0 : index
    %c0_360 = arith.constant 0 : index
    %469 = vector.load %arg8[%c1_358, %c0_359, %c0_360] : memref<9x64x1xbf16, #tpu.memory_space<vmem>>, vector<1x64x1xbf16>
    %470 = vector.shape_cast %469 : vector<1x64x1xbf16> to vector<64x1xbf16>
    %cst_361 = arith.constant dense<0.000000e+00> : vector<256x1xf32>
    %471 = tpu.matmul %468, %470, %cst_361 {dimension_numbers = #tpu.dot_dimension_numbers<[1], [0], [0], [1], [0, 0, 1, 1], [], []>} : vector<256x64xbf16>, vector<64x1xbf16>, vector<256x1xf32> -> vector<256x1xf32>
    %472 = arith.addf %465, %471 : vector<256x1xf32>
    %c0_362 = arith.constant 0 : index
    %c0_363 = arith.constant 0 : index
    %c2_364 = arith.constant 2 : index
    %c0_365 = arith.constant 0 : index
    %473 = vector.load %arg13[%c0_362, %c0_363, %c2_364, %c0_365] : memref<1x18x18x64xf32, #tpu.memory_space<vmem>>, vector<1x16x16x64xf32>
    %474 = vector.shape_cast %473 : vector<1x16x16x64xf32> to vector<256x64xf32>
    %475 = arith.truncf %474 : vector<256x64xf32> to vector<256x64xbf16>
    %c2_366 = arith.constant 2 : index
    %c0_367 = arith.constant 0 : index
    %c0_368 = arith.constant 0 : index
    %476 = vector.load %arg8[%c2_366, %c0_367, %c0_368] : memref<9x64x1xbf16, #tpu.memory_space<vmem>>, vector<1x64x1xbf16>
    %477 = vector.shape_cast %476 : vector<1x64x1xbf16> to vector<64x1xbf16>
    %cst_369 = arith.constant dense<0.000000e+00> : vector<256x1xf32>
    %478 = tpu.matmul %475, %477, %cst_369 {dimension_numbers = #tpu.dot_dimension_numbers<[1], [0], [0], [1], [0, 0, 1, 1], [], []>} : vector<256x64xbf16>, vector<64x1xbf16>, vector<256x1xf32> -> vector<256x1xf32>
    %479 = arith.addf %472, %478 : vector<256x1xf32>
    %c0_370 = arith.constant 0 : index
    %c1_371 = arith.constant 1 : index
    %c0_372 = arith.constant 0 : index
    %c0_373 = arith.constant 0 : index
    %480 = vector.load %arg13[%c0_370, %c1_371, %c0_372, %c0_373] : memref<1x18x18x64xf32, #tpu.memory_space<vmem>>, vector<1x16x16x64xf32>
    %481 = vector.shape_cast %480 : vector<1x16x16x64xf32> to vector<256x64xf32>
    %482 = arith.truncf %481 : vector<256x64xf32> to vector<256x64xbf16>
    %c3_374 = arith.constant 3 : index
    %c0_375 = arith.constant 0 : index
    %c0_376 = arith.constant 0 : index
    %483 = vector.load %arg8[%c3_374, %c0_375, %c0_376] : memref<9x64x1xbf16, #tpu.memory_space<vmem>>, vector<1x64x1xbf16>
    %484 = vector.shape_cast %483 : vector<1x64x1xbf16> to vector<64x1xbf16>
    %cst_377 = arith.constant dense<0.000000e+00> : vector<256x1xf32>
    %485 = tpu.matmul %482, %484, %cst_377 {dimension_numbers = #tpu.dot_dimension_numbers<[1], [0], [0], [1], [0, 0, 1, 1], [], []>} : vector<256x64xbf16>, vector<64x1xbf16>, vector<256x1xf32> -> vector<256x1xf32>
    %486 = arith.addf %479, %485 : vector<256x1xf32>
    %c0_378 = arith.constant 0 : index
    %c1_379 = arith.constant 1 : index
    %c1_380 = arith.constant 1 : index
    %c0_381 = arith.constant 0 : index
    %487 = vector.load %arg13[%c0_378, %c1_379, %c1_380, %c0_381] : memref<1x18x18x64xf32, #tpu.memory_space<vmem>>, vector<1x16x16x64xf32>
    %488 = vector.shape_cast %487 : vector<1x16x16x64xf32> to vector<256x64xf32>
    %489 = arith.truncf %488 : vector<256x64xf32> to vector<256x64xbf16>
    %c4_382 = arith.constant 4 : index
    %c0_383 = arith.constant 0 : index
    %c0_384 = arith.constant 0 : index
    %490 = vector.load %arg8[%c4_382, %c0_383, %c0_384] : memref<9x64x1xbf16, #tpu.memory_space<vmem>>, vector<1x64x1xbf16>
    %491 = vector.shape_cast %490 : vector<1x64x1xbf16> to vector<64x1xbf16>
    %cst_385 = arith.constant dense<0.000000e+00> : vector<256x1xf32>
    %492 = tpu.matmul %489, %491, %cst_385 {dimension_numbers = #tpu.dot_dimension_numbers<[1], [0], [0], [1], [0, 0, 1, 1], [], []>} : vector<256x64xbf16>, vector<64x1xbf16>, vector<256x1xf32> -> vector<256x1xf32>
    %493 = arith.addf %486, %492 : vector<256x1xf32>
    %c0_386 = arith.constant 0 : index
    %c1_387 = arith.constant 1 : index
    %c2_388 = arith.constant 2 : index
    %c0_389 = arith.constant 0 : index
    %494 = vector.load %arg13[%c0_386, %c1_387, %c2_388, %c0_389] : memref<1x18x18x64xf32, #tpu.memory_space<vmem>>, vector<1x16x16x64xf32>
    %495 = vector.shape_cast %494 : vector<1x16x16x64xf32> to vector<256x64xf32>
    %496 = arith.truncf %495 : vector<256x64xf32> to vector<256x64xbf16>
    %c5_390 = arith.constant 5 : index
    %c0_391 = arith.constant 0 : index
    %c0_392 = arith.constant 0 : index
    %497 = vector.load %arg8[%c5_390, %c0_391, %c0_392] : memref<9x64x1xbf16, #tpu.memory_space<vmem>>, vector<1x64x1xbf16>
    %498 = vector.shape_cast %497 : vector<1x64x1xbf16> to vector<64x1xbf16>
    %cst_393 = arith.constant dense<0.000000e+00> : vector<256x1xf32>
    %499 = tpu.matmul %496, %498, %cst_393 {dimension_numbers = #tpu.dot_dimension_numbers<[1], [0], [0], [1], [0, 0, 1, 1], [], []>} : vector<256x64xbf16>, vector<64x1xbf16>, vector<256x1xf32> -> vector<256x1xf32>
    %500 = arith.addf %493, %499 : vector<256x1xf32>
    %c0_394 = arith.constant 0 : index
    %c2_395 = arith.constant 2 : index
    %c0_396 = arith.constant 0 : index
    %c0_397 = arith.constant 0 : index
    %501 = vector.load %arg13[%c0_394, %c2_395, %c0_396, %c0_397] : memref<1x18x18x64xf32, #tpu.memory_space<vmem>>, vector<1x16x16x64xf32>
    %502 = vector.shape_cast %501 : vector<1x16x16x64xf32> to vector<256x64xf32>
    %503 = arith.truncf %502 : vector<256x64xf32> to vector<256x64xbf16>
    %c6_398 = arith.constant 6 : index
    %c0_399 = arith.constant 0 : index
    %c0_400 = arith.constant 0 : index
    %504 = vector.load %arg8[%c6_398, %c0_399, %c0_400] : memref<9x64x1xbf16, #tpu.memory_space<vmem>>, vector<1x64x1xbf16>
    %505 = vector.shape_cast %504 : vector<1x64x1xbf16> to vector<64x1xbf16>
    %cst_401 = arith.constant dense<0.000000e+00> : vector<256x1xf32>
    %506 = tpu.matmul %503, %505, %cst_401 {dimension_numbers = #tpu.dot_dimension_numbers<[1], [0], [0], [1], [0, 0, 1, 1], [], []>} : vector<256x64xbf16>, vector<64x1xbf16>, vector<256x1xf32> -> vector<256x1xf32>
    %507 = arith.addf %500, %506 : vector<256x1xf32>
    %c0_402 = arith.constant 0 : index
    %c2_403 = arith.constant 2 : index
    %c1_404 = arith.constant 1 : index
    %c0_405 = arith.constant 0 : index
    %508 = vector.load %arg13[%c0_402, %c2_403, %c1_404, %c0_405] : memref<1x18x18x64xf32, #tpu.memory_space<vmem>>, vector<1x16x16x64xf32>
    %509 = vector.shape_cast %508 : vector<1x16x16x64xf32> to vector<256x64xf32>
    %510 = arith.truncf %509 : vector<256x64xf32> to vector<256x64xbf16>
    %c7_406 = arith.constant 7 : index
    %c0_407 = arith.constant 0 : index
    %c0_408 = arith.constant 0 : index
    %511 = vector.load %arg8[%c7_406, %c0_407, %c0_408] : memref<9x64x1xbf16, #tpu.memory_space<vmem>>, vector<1x64x1xbf16>
    %512 = vector.shape_cast %511 : vector<1x64x1xbf16> to vector<64x1xbf16>
    %cst_409 = arith.constant dense<0.000000e+00> : vector<256x1xf32>
    %513 = tpu.matmul %510, %512, %cst_409 {dimension_numbers = #tpu.dot_dimension_numbers<[1], [0], [0], [1], [0, 0, 1, 1], [], []>} : vector<256x64xbf16>, vector<64x1xbf16>, vector<256x1xf32> -> vector<256x1xf32>
    %514 = arith.addf %507, %513 : vector<256x1xf32>
    %c0_410 = arith.constant 0 : index
    %c2_411 = arith.constant 2 : index
    %c2_412 = arith.constant 2 : index
    %c0_413 = arith.constant 0 : index
    %515 = vector.load %arg13[%c0_410, %c2_411, %c2_412, %c0_413] : memref<1x18x18x64xf32, #tpu.memory_space<vmem>>, vector<1x16x16x64xf32>
    %516 = vector.shape_cast %515 : vector<1x16x16x64xf32> to vector<256x64xf32>
    %517 = arith.truncf %516 : vector<256x64xf32> to vector<256x64xbf16>
    %c8_414 = arith.constant 8 : index
    %c0_415 = arith.constant 0 : index
    %c0_416 = arith.constant 0 : index
    %518 = vector.load %arg8[%c8_414, %c0_415, %c0_416] : memref<9x64x1xbf16, #tpu.memory_space<vmem>>, vector<1x64x1xbf16>
    %519 = vector.shape_cast %518 : vector<1x64x1xbf16> to vector<64x1xbf16>
    %cst_417 = arith.constant dense<0.000000e+00> : vector<256x1xf32>
    %520 = tpu.matmul %517, %519, %cst_417 {dimension_numbers = #tpu.dot_dimension_numbers<[1], [0], [0], [1], [0, 0, 1, 1], [], []>} : vector<256x64xbf16>, vector<64x1xbf16>, vector<256x1xf32> -> vector<256x1xf32>
    %521 = arith.addf %514, %520 : vector<256x1xf32>
    %c0_418 = arith.constant 0 : index
    %c0_419 = arith.constant 0 : index
    %522 = vector.load %arg9[%c0_418, %c0_419] : memref<1x1xf32, #tpu.memory_space<vmem>>, vector<1x1xf32>
    %523 = vector.broadcast %522 : vector<1x1xf32> to vector<256x1xf32>
    %524 = arith.addf %521, %523 : vector<256x1xf32>
    %525 = arith.negf %524 : vector<256x1xf32>
    %526 = math.exp %525 : vector<256x1xf32>
    %cst_420 = arith.constant 1.000000e+00 : f32
    %527 = vector.broadcast %cst_420 : f32 to vector<256x1xf32>
    %528 = arith.addf %527, %526 : vector<256x1xf32>
    %529 = arith.divf %527, %528 : vector<256x1xf32>
    %530 = vector.shape_cast %529 : vector<256x1xf32> to vector<1x256x1xf32>
    %531 = tpu.transpose %530, [0, 2, 1] : vector<1x256x1xf32> -> vector<1x1x256xf32>
    %c0_421 = arith.constant 0 : index
    %c0_422 = arith.constant 0 : index
    %c0_423 = arith.constant 0 : index
    %532 = vector.load %arg10[%c0_421, %c0_422, %c0_423] : memref<1x1x256xf32, #tpu.memory_space<vmem>>, vector<1x1x256xf32>
    tpu.vector_store %arg10[%c0_421, %c0_422, %c0_423], %531 {strides = array<i32>} : memref<1x1x256xf32, #tpu.memory_space<vmem>>, vector<1x1x256xf32>,
    return
  }
  func.func @transform_0(%arg0: i32) -> (i32, i32, i32, i32) {
    %c0_i32 = arith.constant 0 : i32
    %c0_i32_0 = arith.constant 0 : i32
    %c0_i32_1 = arith.constant 0 : i32
    %c0_i32_2 = arith.constant 0 : i32
    return %arg0, %c0_i32, %c0_i32_0, %c0_i32_1 : i32, i32, i32, i32
  }
  func.func @transform_1(%arg0: i32) -> (i32, i32, i32) {
    %c0_i32 = arith.constant 0 : i32
    %c0_i32_0 = arith.constant 0 : i32
    %c0_i32_1 = arith.constant 0 : i32
    %c0_i32_2 = arith.constant 0 : i32
    return %c0_i32, %c0_i32_0, %c0_i32_1 : i32, i32, i32
  }
  func.func @transform_2(%arg0: i32) -> (i32, i32) {
    %c0_i32 = arith.constant 0 : i32
    %c0_i32_0 = arith.constant 0 : i32
    %c0_i32_1 = arith.constant 0 : i32
    return %c0_i32, %c0_i32_0 : i32, i32
  }
  func.func @transform_3(%arg0: i32) -> (i32, i32, i32) {
    %c0_i32 = arith.constant 0 : i32
    %c0_i32_0 = arith.constant 0 : i32
    %c0_i32_1 = arith.constant 0 : i32
    %c0_i32_2 = arith.constant 0 : i32
    return %c0_i32, %c0_i32_0, %c0_i32_1 : i32, i32, i32
  }
  func.func @transform_4(%arg0: i32) -> (i32, i32) {
    %c0_i32 = arith.constant 0 : i32
    %c0_i32_0 = arith.constant 0 : i32
    %c0_i32_1 = arith.constant 0 : i32
    return %c0_i32, %c0_i32_0 : i32, i32
  }
  func.func @transform_5(%arg0: i32) -> (i32, i32, i32) {
    %c0_i32 = arith.constant 0 : i32
    %c0_i32_0 = arith.constant 0 : i32
    %c0_i32_1 = arith.constant 0 : i32
    %c0_i32_2 = arith.constant 0 : i32
    return %c0_i32, %c0_i32_0, %c0_i32_1 : i32, i32, i32
  }
  func.func @transform_6(%arg0: i32) -> (i32, i32) {
    %c0_i32 = arith.constant 0 : i32
    %c0_i32_0 = arith.constant 0 : i32
    %c0_i32_1 = arith.constant 0 : i32
    return %c0_i32, %c0_i32_0 : i32, i32
  }
  func.func @transform_7(%arg0: i32) -> (i32, i32, i32) {
    %c0_i32 = arith.constant 0 : i32
    %c0_i32_0 = arith.constant 0 : i32
    %c0_i32_1 = arith.constant 0 : i32
    %c0_i32_2 = arith.constant 0 : i32
    return %c0_i32, %c0_i32_0, %c0_i32_1 : i32, i32, i32
  }
  func.func @transform_8(%arg0: i32) -> (i32, i32) {
    %c0_i32 = arith.constant 0 : i32
    %c0_i32_0 = arith.constant 0 : i32
    %c0_i32_1 = arith.constant 0 : i32
    return %c0_i32, %c0_i32_0 : i32, i32
  }
  func.func @transform_9(%arg0: i32) -> (i32, i32, i32) {
    %c0_i32 = arith.constant 0 : i32
    %c0_i32_0 = arith.constant 0 : i32
    %c0_i32_1 = arith.constant 0 : i32
    return %arg0, %c0_i32, %c0_i32_0 : i32, i32, i32
  }
}

</mosaic_0001>

<llo_original>
// kernel: unet_forward.1
$region0: #{unet_forward.1}
  #allocation0 [shape = 'u32[]', space=smem, size = 0x4, offset = 0x4, fixed_abs, tag = 'smem constant byte address 0x4 - core index']
  #allocation1 [shape = 'u32[72,128]{1,0:T(1,128)}', space=vmem, size = 0x9000, scoped, tag = 'internal scratch']
  #allocation2 [shape = 'f32[1,18,18,64]{3,2,1,0:T(8,128)}', space=vmem, size = 0x36000, scoped, tag = 'scratch operand']
  #allocation3 [shape = 'f32[1,18,18,128]{3,2,1,0:T(8,128)}', space=vmem, size = 0x36000, scoped, tag = 'scratch operand']
  #allocation4 [shape = 'f32[1,18,18,64]{3,2,1,0:T(8,128)}', space=vmem, size = 0x36000, scoped, tag = 'scratch operand']
  #allocation5 [shape = 'f32[1,1]{1,0:T(1,128)S(1)}', space=vmem, size = 0x200, scoped, tag = 'scoped memory for unet_forward.1']
  %s0 = inlined_call_operand.vmem [shape: f32[2,18,18,3], index: 0, kind: input, shape index: {}]
  %s1 = inlined_call_operand.vmem [shape: bf16[9,3,64], index: 1, kind: input, shape index: {}]
  %s2 = inlined_call_operand.vmem [shape: f32[1,64], index: 2, kind: input, shape index: {}]
  %s3 = inlined_call_operand.vmem [shape: bf16[9,64,128], index: 3, kind: input, shape index: {}]
  %s4 = inlined_call_operand.vmem [shape: f32[1,128], index: 4, kind: input, shape index: {}]
  %s5 = inlined_call_operand.vmem [shape: bf16[9,128,64], index: 5, kind: input, shape index: {}]
  %s6 = inlined_call_operand.vmem [shape: f32[1,64], index: 6, kind: input, shape index: {}]
  %s7 = inlined_call_operand.vmem [shape: bf16[9,64,1], index: 7, kind: input, shape index: {}]
  %s8 = inlined_call_operand.<no memory space> [shape: f32[1,1], index: 8, kind: input, shape index: {}]
  %s9 = inlined_call_operand.vmem [shape: f32[2,1,256], index: 9, kind: output, shape index: {}]
  %s10 = sld [smem:[#allocation0]]
  $region69: #{unet_forward.1} parent=0
    _
  %s12 = ssub.s32 1, %s10
  %s13 = scalar_select 0, %s12, %s10
  %v14 = vstv %s8
  %15 = vst [vmem:[#allocation5] sm:$0x1] %v14
  loop: start=0, step=1, limit=4
  $region2: #{unet_forward.1} parent=0 // loop_pre_header
    _
  $region3: #{unet_forward.1} parent=0 // loop_header
    %s17 = sphi 0, %s21
    %p18 = scmp.ge.s32.totalorder %s17, 4
    %s27 = sphi 0, %s29
    %s30 = sphi 0, %s27
    %s31 = sphi 0, %s30
    %s47 = sphi 0, %s31
    %s51 = sphi 0, %s51
    %s53 = sphi 0, %s51
    %s54 = sphi 0, %s53
    %s68 = sphi 0, %s54
    %s72 = sphi 0, %s72
    %s74 = sphi 0, %s72
    %s75 = sphi 0, %s74
    %s89 = sphi 0, %s75
    %s93 = sphi 0, %s93
    %s95 = sphi 0, %s93
    %s96 = sphi 0, %s95
    %s110 = sphi 0, %s96
    %s114 = sphi 0, %s114
    %s116 = sphi 0, %s114
    %s117 = sphi 0, %s116
    %s131 = sphi 0, %s117
    %s135 = sphi 0, %s135
    %s137 = sphi 0, %s135
    %s138 = sphi 0, %s137
    %s152 = sphi 0, %s138
    %s156 = sphi 0, %s156
    %s158 = sphi 0, %s156
    %s159 = sphi 0, %s158
    %s173 = sphi 0, %s159
    %s177 = sphi 0, %s177
    %s179 = sphi 0, %s177
    %s180 = sphi 0, %s179
    %s194 = sphi 0, %s180
    %s198 = sphi 0, %s198
    %s200 = sphi 0, %s198
    %s201 = sphi 0, %s200
    %s215 = sphi 0, %s201
    %s221 = sphi 0, %s223
    %s224 = sphi 0, %s221
    %s225 = sphi 0, %s224
    %s241 = sphi 0, %s225
  $region4: #{unet_forward.1} parent=0 // loop_header_branch
    %20 = sbr.rel (%p18) target = $region8
  $region5: #{unet_forward.1} parent=0 // loop_body
    %s22 = ssub.s32 %s17, 1
    %s23 = ssub.s32 %s17, 2
    %s24 = sadd.s32 %s17, 1
    %s25 = ssub.s32 %s17, %s24
    %p26 = scmp.eq.s32.totalorder %s25, 0
    %s28 = sadd.s32 %s27, 1
    %s29 = scalar_select %p26, %s27, %s28
    %p32 = pneg %p26
    %p33 = scmp.eq.s32.totalorder %s17, 1
    %p34 = por %p32, %p33
    %p35 = scmp.ne.s32.totalorder %s27, %s30
    %p36 = scmp.eq.s32.totalorder %s17, 0
    %p37 = por %p35, %p36
    %p38 = scmp.ne.s32.totalorder %s27, %s30
    %p39 = scmp.eq.s32.totalorder %s22, 1
    %p40 = por %p38, %p39
    %p41 = scmp.ne.s32.totalorder %s30, %s31
    %p42 = scmp.eq.s32.totalorder %s22, 0
    %p43 = por %p41, %p42
    %p44 = scmp.ne.s32.totalorder %s30, %s31
    %p45 = scmp.eq.s32.totalorder %s23, 1
    %p46 = por %p44, %p45
    %p48 = scmp.ne.s32.totalorder %s31, %s47
    %p49 = scmp.eq.s32.totalorder %s23, 0
    %p50 = por %p48, %p49
    %s52 = sadd.s32 %s51, 1
    %p55 = scmp.eq.s32.totalorder %s17, 1
    %p56 = scmp.ne.s32.totalorder %s51, %s53
    %p57 = scmp.eq.s32.totalorder %s17, 0
    %p58 = por %p56, %p57
    %p59 = scmp.ne.s32.totalorder %s51, %s53
    %p60 = scmp.eq.s32.totalorder %s22, 1
    %p61 = por %p59, %p60
    %p62 = scmp.ne.s32.totalorder %s53, %s54
    %p63 = scmp.eq.s32.totalorder %s22, 0
    %p64 = por %p62, %p63
    %p65 = scmp.ne.s32.totalorder %s53, %s54
    %p66 = scmp.eq.s32.totalorder %s23, 1
    %p67 = por %p65, %p66
    %p69 = scmp.ne.s32.totalorder %s54, %s68
    %p70 = scmp.eq.s32.totalorder %s23, 0
    %p71 = por %p69, %p70
    %s73 = sadd.s32 %s72, 1
    %p76 = scmp.eq.s32.totalorder %s17, 1
    %p77 = scmp.ne.s32.totalorder %s72, %s74
    %p78 = scmp.eq.s32.totalorder %s17, 0
    %p79 = por %p77, %p78
    %p80 = scmp.ne.s32.totalorder %s72, %s74
    %p81 = scmp.eq.s32.totalorder %s22, 1
    %p82 = por %p80, %p81
    %p83 = scmp.ne.s32.totalorder %s74, %s75
    %p84 = scmp.eq.s32.totalorder %s22, 0
    %p85 = por %p83, %p84
    %p86 = scmp.ne.s32.totalorder %s74, %s75
    %p87 = scmp.eq.s32.totalorder %s23, 1
    %p88 = por %p86, %p87
    %p90 = scmp.ne.s32.totalorder %s75, %s89
    %p91 = scmp.eq.s32.totalorder %s23, 0
    %p92 = por %p90, %p91
    %s94 = sadd.s32 %s93, 1
    %p97 = scmp.eq.s32.totalorder %s17, 1
    %p98 = scmp.ne.s32.totalorder %s93, %s95
    %p99 = scmp.eq.s32.totalorder %s17, 0
    %p100 = por %p98, %p99
    %p101 = scmp.ne.s32.totalorder %s93, %s95
    %p102 = scmp.eq.s32.totalorder %s22, 1
    %p103 = por %p101, %p102
    %p104 = scmp.ne.s32.totalorder %s95, %s96
    %p105 = scmp.eq.s32.totalorder %s22, 0
    %p106 = por %p104, %p105
    %p107 = scmp.ne.s32.totalorder %s95, %s96
    %p108 = scmp.eq.s32.totalorder %s23, 1
    %p109 = por %p107, %p108
    %p111 = scmp.ne.s32.totalorder %s96, %s110
    %p112 = scmp.eq.s32.totalorder %s23, 0
    %p113 = por %p111, %p112
    %s115 = sadd.s32 %s114, 1
    %p118 = scmp.eq.s32.totalorder %s17, 1
    %p119 = scmp.ne.s32.totalorder %s114, %s116
    %p120 = scmp.eq.s32.totalorder %s17, 0
    %p121 = por %p119, %p120
    %p122 = scmp.ne.s32.totalorder %s114, %s116
    %p123 = scmp.eq.s32.totalorder %s22, 1
    %p124 = por %p122, %p123
    %p125 = scmp.ne.s32.totalorder %s116, %s117
    %p126 = scmp.eq.s32.totalorder %s22, 0
    %p127 = por %p125, %p126
    %p128 = scmp.ne.s32.totalorder %s116, %s117
    %p129 = scmp.eq.s32.totalorder %s23, 1
    %p130 = por %p128, %p129
    %p132 = scmp.ne.s32.totalorder %s117, %s131
    %p133 = scmp.eq.s32.totalorder %s23, 0
    %p134 = por %p132, %p133
    %s136 = sadd.s32 %s135, 1
    %p139 = scmp.eq.s32.totalorder %s17, 1
    %p140 = scmp.ne.s32.totalorder %s135, %s137
    %p141 = scmp.eq.s32.totalorder %s17, 0
    %p142 = por %p140, %p141
    %p143 = scmp.ne.s32.totalorder %s135, %s137
    %p144 = scmp.eq.s32.totalorder %s22, 1
    %p145 = por %p143, %p144
    %p146 = scmp.ne.s32.totalorder %s137, %s138
    %p147 = scmp.eq.s32.totalorder %s22, 0
    %p148 = por %p146, %p147
    %p149 = scmp.ne.s32.totalorder %s137, %s138
    %p150 = scmp.eq.s32.totalorder %s23, 1
    %p151 = por %p149, %p150
    %p153 = scmp.ne.s32.totalorder %s138, %s152
    %p154 = scmp.eq.s32.totalorder %s23, 0
    %p155 = por %p153, %p154
    %s157 = sadd.s32 %s156, 1
    %p160 = scmp.eq.s32.totalorder %s17, 1
    %p161 = scmp.ne.s32.totalorder %s156, %s158
    %p162 = scmp.eq.s32.totalorder %s17, 0
    %p163 = por %p161, %p162
    %p164 = scmp.ne.s32.totalorder %s156, %s158
    %p165 = scmp.eq.s32.totalorder %s22, 1
    %p166 = por %p164, %p165
    %p167 = scmp.ne.s32.totalorder %s158, %s159
    %p168 = scmp.eq.s32.totalorder %s22, 0
    %p169 = por %p167, %p168
    %p170 = scmp.ne.s32.totalorder %s158, %s159
    %p171 = scmp.eq.s32.totalorder %s23, 1
    %p172 = por %p170, %p171
    %p174 = scmp.ne.s32.totalorder %s159, %s173
    %p175 = scmp.eq.s32.totalorder %s23, 0
    %p176 = por %p174, %p175
    %s178 = sadd.s32 %s177, 1
    %p181 = scmp.eq.s32.totalorder %s17, 1
    %p182 = scmp.ne.s32.totalorder %s177, %s179
    %p183 = scmp.eq.s32.totalorder %s17, 0
    %p184 = por %p182, %p183
    %p185 = scmp.ne.s32.totalorder %s177, %s179
    %p186 = scmp.eq.s32.totalorder %s22, 1
    %p187 = por %p185, %p186
    %p188 = scmp.ne.s32.totalorder %s179, %s180
    %p189 = scmp.eq.s32.totalorder %s22, 0
    %p190 = por %p188, %p189
    %p191 = scmp.ne.s32.totalorder %s179, %s180
    %p192 = scmp.eq.s32.totalorder %s23, 1
    %p193 = por %p191, %p192
    %p195 = scmp.ne.s32.totalorder %s180, %s194
    %p196 = scmp.eq.s32.totalorder %s23, 0
    %p197 = por %p195, %p196
    %s199 = sadd.s32 %s198, 1
    %p202 = scmp.eq.s32.totalorder %s17, 1
    %p203 = scmp.ne.s32.totalorder %s198, %s200
    %p204 = scmp.eq.s32.totalorder %s17, 0
    %p205 = por %p203, %p204
    %p206 = scmp.ne.s32.totalorder %s198, %s200
    %p207 = scmp.eq.s32.totalorder %s22, 1
    %p208 = por %p206, %p207
    %p209 = scmp.ne.s32.totalorder %s200, %s201
    %p210 = scmp.eq.s32.totalorder %s22, 0
    %p211 = por %p209, %p210
    %p212 = scmp.ne.s32.totalorder %s200, %s201
    %p213 = scmp.eq.s32.totalorder %s23, 1
    %p214 = por %p212, %p213
    %p216 = scmp.ne.s32.totalorder %s201, %s215
    %p217 = scmp.eq.s32.totalorder %s23, 0
    %p218 = por %p216, %p217
    %s219 = ssub.s32 %s17, %s24
    %p220 = scmp.eq.s32.totalorder %s219, 0
    %s222 = sadd.s32 %s221, 1
    %s223 = scalar_select %p220, %s221, %s222
    %p226 = pneg %p220
    %p227 = scmp.eq.s32.totalorder %s17, 1
    %p228 = por %p226, %p227
    %p229 = scmp.ne.s32.totalorder %s221, %s224
    %p230 = scmp.eq.s32.totalorder %s17, 0
    %p231 = por %p229, %p230
    %p232 = scmp.ne.s32.totalorder %s221, %s224
    %p233 = scmp.eq.s32.totalorder %s22, 1
    %p234 = por %p232, %p233
    %p235 = scmp.ne.s32.totalorder %s224, %s225
    %p236 = scmp.eq.s32.totalorder %s22, 0
    %p237 = por %p235, %p236
    %p238 = scmp.ne.s32.totalorder %s224, %s225
    %p239 = scmp.eq.s32.totalorder %s23, 1
    %p240 = por %p238, %p239
    %p242 = scmp.ne.s32.totalorder %s225, %s241
    %p243 = scmp.eq.s32.totalorder %s23, 0
    %p244 = por %p242, %p243
    %p245 = scmp.le.s32.totalorder 1, %s17
    %p246 = scmp.lt.s32.totalorder %s17, 3
    %p247 = pnand %p245, %p246
    %p248 = pneg %p247
    // Predicated region
    $region9: #{unet_forward.1} parent=5 // pred_check
      _
    $region10: #{unet_forward.1} parent=5 // pred_check_branch
      %250 = sbr.rel (%p247) target = $region12
    $region11: #{unet_forward.1} parent=5 // pred_region
      %s251 = ssub.s32 %s17, 1
      // Predicated region
      $region13: #{unet_forward.1} parent=11 // pred_check
        %p252 = pneg %p64
      $region14: #{unet_forward.1} parent=11 // pred_check_branch
        %254 = sbr.rel (%p252) target = $region16
      $region15: #{unet_forward.1} parent=11 // pred_region
        _
      $region16: #{unet_forward.1} parent=11 // pred_fallthru
        _
      // Predicated region
      $region17: #{unet_forward.1} parent=11 // pred_check
        %p255 = pneg %p85
      $region18: #{unet_forward.1} parent=11 // pred_check_branch
        %257 = sbr.rel (%p255) target = $region20
      $region19: #{unet_forward.1} parent=11 // pred_region
        _
      $region20: #{unet_forward.1} parent=11 // pred_fallthru
        _
      // Predicated region
      $region21: #{unet_forward.1} parent=11 // pred_check
        %p258 = pneg %p106
      $region22: #{unet_forward.1} parent=11 // pred_check_branch
        %260 = sbr.rel (%p258) target = $region24
      $region23: #{unet_forward.1} parent=11 // pred_region
        _
      $region24: #{unet_forward.1} parent=11 // pred_fallthru
        _
      // Predicated region
      $region25: #{unet_forward.1} parent=11 // pred_check
        %p261 = pneg %p127
      $region26: #{unet_forward.1} parent=11 // pred_check_branch
        %263 = sbr.rel (%p261) target = $region28
      $region27: #{unet_forward.1} parent=11 // pred_region
        _
      $region28: #{unet_forward.1} parent=11 // pred_fallthru
        _
      // Predicated region
      $region29: #{unet_forward.1} parent=11 // pred_check
        %p264 = pneg %p148
      $region30: #{unet_forward.1} parent=11 // pred_check_branch
        %266 = sbr.rel (%p264) target = $region32
      $region31: #{unet_forward.1} parent=11 // pred_region
        _
      $region32: #{unet_forward.1} parent=11 // pred_fallthru
        _
      // Predicated region
      $region33: #{unet_forward.1} parent=11 // pred_check
        %p267 = pneg %p169
      $region34: #{unet_forward.1} parent=11 // pred_check_branch
        %269 = sbr.rel (%p267) target = $region36
      $region35: #{unet_forward.1} parent=11 // pred_region
        _
      $region36: #{unet_forward.1} parent=11 // pred_fallthru
        _
      // Predicated region
      $region37: #{unet_forward.1} parent=11 // pred_check
        %p270 = pneg %p190
      $region38: #{unet_forward.1} parent=11 // pred_check_branch
        %272 = sbr.rel (%p270) target = $region40
      $region39: #{unet_forward.1} parent=11 // pred_region
        _
      $region40: #{unet_forward.1} parent=11 // pred_fallthru
        _
      // Predicated region
      $region41: #{unet_forward.1} parent=11 // pred_check
        %p273 = pneg %p211
      $region42: #{unet_forward.1} parent=11 // pred_check_branch
        %275 = sbr.rel (%p273) target = $region44
      $region43: #{unet_forward.1} parent=11 // pred_region
        _
      $region44: #{unet_forward.1} parent=11 // pred_fallthru
        _
    $region12: #{unet_forward.1} parent=5 // pred_fallthru
      _
    %p276 = scmp.lt.s32.totalorder %s17, 2
    // Predicated region
    $region45: #{unet_forward.1} parent=5 // pred_check
      %p277 = pneg %p276
    $region46: #{unet_forward.1} parent=5 // pred_check_branch
      %279 = sbr.rel (%p277) target = $region48
    $region47: #{unet_forward.1} parent=5 // pred_region
      // Predicated region
      $region49: #{unet_forward.1} parent=47 // pred_check
        %p280 = pneg %p37
      $region50: #{unet_forward.1} parent=47 // pred_check_branch
        %282 = sbr.rel (%p280) target = $region52
      $region51: #{unet_forward.1} parent=47 // pred_region
        %p283 = scmp.lt.s32.totalorder %s17, 1
        %s284 = scalar_select %p283, %s17, 1
        %s285 = smul.addr %s284, 54
        %s286 = smul.addr %s285, 8
        %s287 = scalar_lea.vmem %s0, %s286
      $region52: #{unet_forward.1} parent=47 // pred_fallthru
        _
    $region48: #{unet_forward.1} parent=5 // pred_fallthru
      _
    %p288 = scmp.le.s32.totalorder 1, %s17
    %p289 = scmp.lt.s32.totalorder %s17, 3
    %p290 = pnand %p288, %p289
    %p291 = pneg %p290
    // Predicated region
    $region53: #{unet_forward.1} parent=5 // pred_check
      _
    $region54: #{unet_forward.1} parent=5 // pred_check_branch
      %293 = sbr.rel (%p290) target = $region56
    $region55: #{unet_forward.1} parent=5 // pred_region
      %s294 = ssub.s32 %s17, 1
      %p295 = scmp.lt.s32.totalorder %s22, 1
      %s296 = scalar_select %p295, %s22, 1
      %s297 = smul.addr %s296, 54
      %s298 = smul.addr %s297, 8
      %s299 = scalar_lea.vmem %s0, %s298
      %p300 = pneg %p43
      %p301 = pneg %p40
      %p302 = pneg %p64
      %p303 = pneg %p61
      %p304 = pneg %p85
      %p305 = pneg %p82
      %p306 = pneg %p106
      %p307 = pneg %p103
      %p308 = pneg %p127
      %p309 = pneg %p124
      %p310 = pneg %p148
      %p311 = pneg %p145
      %p312 = pneg %p169
      %p313 = pneg %p166
      %p314 = pneg %p190
      %p315 = pneg %p187
      %p316 = pneg %p211
      %p317 = pneg %p208
      %p318 = pneg %p237
      %p319 = pneg %p234
      %p320 = scmp.lt.s32.totalorder %s22, 1
      %s321 = scalar_select %p320, %s22, 1
      %s322 = smul.addr %s321, 2
      %s323 = scalar_lea.vmem %s9, %s322
      %p324 = scmp.lt.s32.totalorder %s22, 1
      %s325 = scalar_select %p324, %s22, 1
      %s326 = smul.addr %s325, 54
      %s327 = smul.addr %s326, 8
      %s328 = scalar_lea.vmem %s0, %s327
      %p329 = scmp.lt.s32.totalorder %s22, 1
      %s330 = scalar_select %p329, %s22, 1
      %s331 = smul.addr %s330, 2
      %s332 = scalar_lea.vmem %s9, %s331
      %vm334 = vcmask 523264
      %335 = vst.msk [vmem:[#allocation2] sm:$0xff] %vm334, 0.0
      %336 = vst.msk [vmem:[#allocation2 + $0x8] sm:$0xff] %vm334, 0.0
      %vm337 = vcmask 517120
      %338 = vst.msk [vmem:[#allocation2 + $0x10] sm:$0x3] %vm337, 0.0
      %s339 = scalar_lea.vmem [#allocation2], 408
      %340 = vst.msk [vmem:[%s339] sm:$0xff] %vm334, 0.0
      %341 = vst.msk [vmem:[%s339 + $0x8] sm:$0xff] %vm334, 0.0
      %342 = vst.msk [vmem:[%s339 + $0x10] sm:$0x3] %vm337, 0.0
      %vm343 = vcmask 516096
      %344 = vst.msk [vmem:[#allocation2] sm:$0x1] %vm343, 0.0
      %345 = vst.msk [vmem:[#allocation2 + $0x18] sm:$0x1] %vm343, 0.0
      %346 = vst.msk [vmem:[#allocation2 + $0x30] sm:$0x1] %vm343, 0.0
      %347 = vst.msk [vmem:[#allocation2 + $0x48] sm:$0x1] %vm343, 0.0
      %348 = vst.msk [vmem:[#allocation2 + $0x60] sm:$0x1] %vm343, 0.0
      %349 = vst.msk [vmem:[#allocation2 + $0x78] sm:$0x1] %vm343, 0.0
      %350 = vst.msk [vmem:[#allocation2 + $0x90] sm:$0x1] %vm343, 0.0
      %351 = vst.msk [vmem:[#allocation2 + $0xa8] sm:$0x1] %vm343, 0.0
      %352 = vst.msk [vmem:[#allocation2 + $0xc0] sm:$0x1] %vm343, 0.0
      %353 = vst.msk [vmem:[#allocation2 + $0xd8] sm:$0x1] %vm343, 0.0
      %354 = vst.msk [vmem:[#allocation2 + $0xf0] sm:$0x1] %vm343, 0.0
      %355 = vst.msk [vmem:[#allocation2 + $0x108] sm:$0x1] %vm343, 0.0
      %356 = vst.msk [vmem:[#allocation2 + $0x120] sm:$0x1] %vm343, 0.0
      %357 = vst.msk [vmem:[#allocation2 + $0x138] sm:$0x1] %vm343, 0.0
      %358 = vst.msk [vmem:[#allocation2 + $0x150] sm:$0x1] %vm343, 0.0
      %359 = vst.msk [vmem:[#allocation2 + $0x168] sm:$0x1] %vm343, 0.0
      %360 = vst.msk [vmem:[#allocation2 + $0x180] sm:$0x1] %vm343, 0.0
      %361 = vst.msk [vmem:[#allocation2 + $0x198] sm:$0x1] %vm343, 0.0
      %362 = vst.msk [vmem:[#allocation2 + $0x11] sm:$0x1] %vm343, 0.0
      %363 = vst.msk [vmem:[#allocation2 + $0x29] sm:$0x1] %vm343, 0.0
      %364 = vst.msk [vmem:[#allocation2 + $0x41] sm:$0x1] %vm343, 0.0
      %365 = vst.msk [vmem:[#allocation2 + $0x59] sm:$0x1] %vm343, 0.0
      %366 = vst.msk [vmem:[#allocation2 + $0x71] sm:$0x1] %vm343, 0.0
      %367 = vst.msk [vmem:[#allocation2 + $0x89] sm:$0x1] %vm343, 0.0
      %368 = vst.msk [vmem:[#allocation2 + $0xa1] sm:$0x1] %vm343, 0.0
      %369 = vst.msk [vmem:[#allocation2 + $0xb9] sm:$0x1] %vm343, 0.0
      %370 = vst.msk [vmem:[#allocation2 + $0xd1] sm:$0x1] %vm343, 0.0
      %371 = vst.msk [vmem:[#allocation2 + $0xe9] sm:$0x1] %vm343, 0.0
      %372 = vst.msk [vmem:[#allocation2 + $0x101] sm:$0x1] %vm343, 0.0
      %373 = vst.msk [vmem:[#allocation2 + $0x119] sm:$0x1] %vm343, 0.0
      %374 = vst.msk [vmem:[#allocation2 + $0x131] sm:$0x1] %vm343, 0.0
      %375 = vst.msk [vmem:[#allocation2 + $0x149] sm:$0x1] %vm343, 0.0
      %376 = vst.msk [vmem:[#allocation2 + $0x161] sm:$0x1] %vm343, 0.0
      %377 = vst.msk [vmem:[#allocation2 + $0x179] sm:$0x1] %vm343, 0.0
      %378 = vst.msk [vmem:[#allocation2 + $0x191] sm:$0x1] %vm343, 0.0
      %379 = vst.msk [vmem:[#allocation2 + $0x1a9] sm:$0x1] %vm343, 0.0
      %380 = vst [vmem:[#allocation3] sm:$0xff] 0.0
      %381 = vst [vmem:[#allocation3 + $0x8] sm:$0xff] 0.0
      %382 = vst [vmem:[#allocation3 + $0x10] sm:$0x3] 0.0
      %s383 = scalar_lea.vmem [#allocation3], 408
      %384 = vst [vmem:[%s383] sm:$0xff] 0.0
      %385 = vst [vmem:[%s383 + $0x8] sm:$0xff] 0.0
      %386 = vst [vmem:[%s383 + $0x10] sm:$0x3] 0.0
      %387 = vst [vmem:[#allocation3] sm:$0x1] 0.0
      %388 = vst [vmem:[#allocation3 + $0x18] sm:$0x1] 0.0
      %389 = vst [vmem:[#allocation3 + $0x30] sm:$0x1] 0.0
      %390 = vst [vmem:[#allocation3 + $0x48] sm:$0x1] 0.0
      %391 = vst [vmem:[#allocation3 + $0x60] sm:$0x1] 0.0
      %392 = vst [vmem:[#allocation3 + $0x78] sm:$0x1] 0.0
      %393 = vst [vmem:[#allocation3 + $0x90] sm:$0x1] 0.0
      %394 = vst [vmem:[#allocation3 + $0xa8] sm:$0x1] 0.0
      %395 = vst [vmem:[#allocation3 + $0xc0] sm:$0x1] 0.0
      %396 = vst [vmem:[#allocation3 + $0xd8] sm:$0x1] 0.0
      %397 = vst [vmem:[#allocation3 + $0xf0] sm:$0x1] 0.0
      %398 = vst [vmem:[#allocation3 + $0x108] sm:$0x1] 0.0
      %399 = vst [vmem:[#allocation3 + $0x120] sm:$0x1] 0.0
      %400 = vst [vmem:[#allocation3 + $0x138] sm:$0x1] 0.0
      %401 = vst [vmem:[#allocation3 + $0x150] sm:$0x1] 0.0
      %402 = vst [vmem:[#allocation3 + $0x168] sm:$0x1] 0.0
      %403 = vst [vmem:[#allocation3 + $0x180] sm:$0x1] 0.0
      %404 = vst [vmem:[#allocation3 + $0x198] sm:$0x1] 0.0
      %405 = vst [vmem:[#allocation3 + $0x11] sm:$0x1] 0.0
      %406 = vst [vmem:[#allocation3 + $0x29] sm:$0x1] 0.0
      %407 = vst [vmem:[#allocation3 + $0x41] sm:$0x1] 0.0
      %408 = vst [vmem:[#allocation3 + $0x59] sm:$0x1] 0.0
      %409 = vst [vmem:[#allocation3 + $0x71] sm:$0x1] 0.0
      %410 = vst [vmem:[#allocation3 + $0x89] sm:$0x1] 0.0
      %411 = vst [vmem:[#allocation3 + $0xa1] sm:$0x1] 0.0
      %412 = vst [vmem:[#allocation3 + $0xb9] sm:$0x1] 0.0
      %413 = vst [vmem:[#allocation3 + $0xd1] sm:$0x1] 0.0
      %414 = vst [vmem:[#allocation3 + $0xe9] sm:$0x1] 0.0
      %415 = vst [vmem:[#allocation3 + $0x101] sm:$0x1] 0.0
      %416 = vst [vmem:[#allocation3 + $0x119] sm:$0x1] 0.0
      %417 = vst [vmem:[#allocation3 + $0x131] sm:$0x1] 0.0
      %418 = vst [vmem:[#allocation3 + $0x149] sm:$0x1] 0.0
      %419 = vst [vmem:[#allocation3 + $0x161] sm:$0x1] 0.0
      %420 = vst [vmem:[#allocation3 + $0x179] sm:$0x1] 0.0
      %421 = vst [vmem:[#allocation3 + $0x191] sm:$0x1] 0.0
      %422 = vst [vmem:[#allocation3 + $0x1a9] sm:$0x1] 0.0
      %423 = vst.msk [vmem:[#allocation4] sm:$0xff] %vm334, 0.0
      %424 = vst.msk [vmem:[#allocation4 + $0x8] sm:$0xff] %vm334, 0.0
      %425 = vst.msk [vmem:[#allocation4 + $0x10] sm:$0x3] %vm337, 0.0
      %s426 = scalar_lea.vmem [#allocation4], 408
      %427 = vst.msk [vmem:[%s426] sm:$0xff] %vm334, 0.0
      %428 = vst.msk [vmem:[%s426 + $0x8] sm:$0xff] %vm334, 0.0
      %429 = vst.msk [vmem:[%s426 + $0x10] sm:$0x3] %vm337, 0.0
      %430 = vst.msk [vmem:[#allocation4] sm:$0x1] %vm343, 0.0
      %431 = vst.msk [vmem:[#allocation4 + $0x18] sm:$0x1] %vm343, 0.0
      %432 = vst.msk [vmem:[#allocation4 + $0x30] sm:$0x1] %vm343, 0.0
      %433 = vst.msk [vmem:[#allocation4 + $0x48] sm:$0x1] %vm343, 0.0
      %434 = vst.msk [vmem:[#allocation4 + $0x60] sm:$0x1] %vm343, 0.0
      %435 = vst.msk [vmem:[#allocation4 + $0x78] sm:$0x1] %vm343, 0.0
      %436 = vst.msk [vmem:[#allocation4 + $0x90] sm:$0x1] %vm343, 0.0
      %437 = vst.msk [vmem:[#allocation4 + $0xa8] sm:$0x1] %vm343, 0.0
      %438 = vst.msk [vmem:[#allocation4 + $0xc0] sm:$0x1] %vm343, 0.0
      %439 = vst.msk [vmem:[#allocation4 + $0xd8] sm:$0x1] %vm343, 0.0
      %440 = vst.msk [vmem:[#allocation4 + $0xf0] sm:$0x1] %vm343, 0.0
      %441 = vst.msk [vmem:[#allocation4 + $0x108] sm:$0x1] %vm343, 0.0
      %442 = vst.msk [vmem:[#allocation4 + $0x120] sm:$0x1] %vm343, 0.0
      %443 = vst.msk [vmem:[#allocation4 + $0x138] sm:$0x1] %vm343, 0.0
      %444 = vst.msk [vmem:[#allocation4 + $0x150] sm:$0x1] %vm343, 0.0
      %445 = vst.msk [vmem:[#allocation4 + $0x168] sm:$0x1] %vm343, 0.0
      %446 = vst.msk [vmem:[#allocation4 + $0x180] sm:$0x1] %vm343, 0.0
      %447 = vst.msk [vmem:[#allocation4 + $0x198] sm:$0x1] %vm343, 0.0
      %448 = vst.msk [vmem:[#allocation4 + $0x11] sm:$0x1] %vm343, 0.0
      %449 = vst.msk [vmem:[#allocation4 + $0x29] sm:$0x1] %vm343, 0.0
      %450 = vst.msk [vmem:[#allocation4 + $0x41] sm:$0x1] %vm343, 0.0
      %451 = vst.msk [vmem:[#allocation4 + $0x59] sm:$0x1] %vm343, 0.0
      %452 = vst.msk [vmem:[#allocation4 + $0x71] sm:$0x1] %vm343, 0.0
      %453 = vst.msk [vmem:[#allocation4 + $0x89] sm:$0x1] %vm343, 0.0
      %454 = vst.msk [vmem:[#allocation4 + $0xa1] sm:$0x1] %vm343, 0.0
      %455 = vst.msk [vmem:[#allocation4 + $0xb9] sm:$0x1] %vm343, 0.0
      %456 = vst.msk [vmem:[#allocation4 + $0xd1] sm:$0x1] %vm343, 0.0
      %457 = vst.msk [vmem:[#allocation4 + $0xe9] sm:$0x1] %vm343, 0.0
      %458 = vst.msk [vmem:[#allocation4 + $0x101] sm:$0x1] %vm343, 0.0
      %459 = vst.msk [vmem:[#allocation4 + $0x119] sm:$0x1] %vm343, 0.0
      %460 = vst.msk [vmem:[#allocation4 + $0x131] sm:$0x1] %vm343, 0.0
      %461 = vst.msk [vmem:[#allocation4 + $0x149] sm:$0x1] %vm343, 0.0
      %462 = vst.msk [vmem:[#allocation4 + $0x161] sm:$0x1] %vm343, 0.0
      %463 = vst.msk [vmem:[#allocation4 + $0x179] sm:$0x1] %vm343, 0.0
      %464 = vst.msk [vmem:[#allocation4 + $0x191] sm:$0x1] %vm343, 0.0
      %465 = vst.msk [vmem:[#allocation4 + $0x1a9] sm:$0x1] %vm343, 0.0
      %v466 = vld [vmem:[%s328] sm:$0xff]
      %v467 = vld [vmem:[%s328 + $0x8] sm:$0xff]
      %v468 = vld [vmem:[%s328 + $0x18] sm:$0xff]
      %v469 = vld [vmem:[%s328 + $0x20] sm:$0xff]
      %v470 = vld [vmem:[%s328 + $0x30] sm:$0xff]
      %v471 = vld [vmem:[%s328 + $0x38] sm:$0xff]
      %v472 = vld [vmem:[%s328 + $0x48] sm:$0xff]
      %v473 = vld [vmem:[%s328 + $0x50] sm:$0xff]
      %v474 = vld [vmem:[%s328 + $0x60] sm:$0xff]
      %v475 = vld [vmem:[%s328 + $0x68] sm:$0xff]
      %v476 = vld [vmem:[%s328 + $0x78] sm:$0xff]
      %v477 = vld [vmem:[%s328 + $0x80] sm:$0xff]
      %v478 = vld [vmem:[%s328 + $0x90] sm:$0xff]
      %v479 = vld [vmem:[%s328 + $0x98] sm:$0xff]
      %v480 = vld [vmem:[%s328 + $0xa8] sm:$0xff]
      %v481 = vld [vmem:[%s328 + $0xb0] sm:$0xff]
      %v482 = vld [vmem:[%s328 + $0xc0] sm:$0xff]
      %v483 = vld [vmem:[%s328 + $0xc8] sm:$0xff]
      %v484 = vld [vmem:[%s328 + $0xd8] sm:$0xff]
      %v485 = vld [vmem:[%s328 + $0xe0] sm:$0xff]
      %v486 = vld [vmem:[%s328 + $0xf0] sm:$0xff]
      %v487 = vld [vmem:[%s328 + $0xf8] sm:$0xff]
      %v488 = vld [vmem:[%s328 + $0x108] sm:$0xff]
      %v489 = vld [vmem:[%s328 + $0x110] sm:$0xff]
      %v490 = vld [vmem:[%s328 + $0x120] sm:$0xff]
      %v491 = vld [vmem:[%s328 + $0x128] sm:$0xff]
      %v492 = vld [vmem:[%s328 + $0x138] sm:$0xff]
      %v493 = vld [vmem:[%s328 + $0x140] sm:$0xff]
      %v494 = vld [vmem:[%s328 + $0x150] sm:$0xff]
      %v495 = vld [vmem:[%s328 + $0x158] sm:$0xff]
      %v496 = vld [vmem:[%s328 + $0x168] sm:$0xff]
      %v497 = vld [vmem:[%s328 + $0x170] sm:$0xff]
      %v498 = vpack.c.bf16 %v467, %v466
      %v499 = vpack.c.bf16 %v469, %v468
      %v500 = vpack.c.bf16 %v471, %v470
      %v501 = vpack.c.bf16 %v473, %v472
      %v502 = vpack.c.bf16 %v475, %v474
      %v503 = vpack.c.bf16 %v477, %v476
      %v504 = vpack.c.bf16 %v479, %v478
      %v505 = vpack.c.bf16 %v481, %v480
      %v506 = vpack.c.bf16 %v483, %v482
      %v507 = vpack.c.bf16 %v485, %v484
      %v508 = vpack.c.bf16 %v487, %v486
      %v509 = vpack.c.bf16 %v489, %v488
      %v510 = vpack.c.bf16 %v491, %v490
      %v511 = vpack.c.bf16 %v493, %v492
      %v512 = vpack.c.bf16 %v495, %v494
      %v513 = vpack.c.bf16 %v497, %v496
      %v514 = vld [vmem:[%s1] sm:$0x3]
      %v515 = vld [vmem:[%s328 + $0x1] sm:$0xff]
      %v516 = vld [vmem:[%s328 + $0x9] sm:$0xff]
      %v517 = vld [vmem:[%s328 + $0x19] sm:$0xff]
      %v518 = vld [vmem:[%s328 + $0x21] sm:$0xff]
      %v519 = vld [vmem:[%s328 + $0x31] sm:$0xff]
      %v520 = vld [vmem:[%s328 + $0x39] sm:$0xff]
      %v521 = vld [vmem:[%s328 + $0x49] sm:$0xff]
      %v522 = vld [vmem:[%s328 + $0x51] sm:$0xff]
      %v523 = vld [vmem:[%s328 + $0x61] sm:$0xff]
      %v524 = vld [vmem:[%s328 + $0x69] sm:$0xff]
      %v525 = vld [vmem:[%s328 + $0x79] sm:$0xff]
      %v526 = vld [vmem:[%s328 + $0x81] sm:$0xff]
      %v527 = vld [vmem:[%s328 + $0x91] sm:$0xff]
      %v528 = vld [vmem:[%s328 + $0x99] sm:$0xff]
      %v529 = vld [vmem:[%s328 + $0xa9] sm:$0xff]
      %v530 = vld [vmem:[%s328 + $0xb1] sm:$0xff]
      %v531 = vld [vmem:[%s328 + $0xc1] sm:$0xff]
      %v532 = vld [vmem:[%s328 + $0xc9] sm:$0xff]
      %v533 = vld [vmem:[%s328 + $0xd9] sm:$0xff]
      %v534 = vld [vmem:[%s328 + $0xe1] sm:$0xff]
      %v535 = vld [vmem:[%s328 + $0xf1] sm:$0xff]
      %v536 = vld [vmem:[%s328 + $0xf9] sm:$0xff]
      %v537 = vld [vmem:[%s328 + $0x109] sm:$0xff]
      %v538 = vld [vmem:[%s328 + $0x111] sm:$0xff]
      %v539 = vld [vmem:[%s328 + $0x121] sm:$0xff]
      %v540 = vld [vmem:[%s328 + $0x129] sm:$0xff]
      %v541 = vld [vmem:[%s328 + $0x139] sm:$0xff]
      %v542 = vld [vmem:[%s328 + $0x141] sm:$0xff]
      %v543 = vld [vmem:[%s328 + $0x151] sm:$0xff]
      %v544 = vld [vmem:[%s328 + $0x159] sm:$0xff]
      %v545 = vld [vmem:[%s328 + $0x169] sm:$0xff]
      %v546 = vld [vmem:[%s328 + $0x171] sm:$0xff]
      %v547 = vpack.c.bf16 %v516, %v515
      %v548 = vpack.c.bf16 %v518, %v517
      %v549 = vpack.c.bf16 %v520, %v519
      %v550 = vpack.c.bf16 %v522, %v521
      %v551 = vpack.c.bf16 %v524, %v523
      %v552 = vpack.c.bf16 %v526, %v525
      %v553 = vpack.c.bf16 %v528, %v527
      %v554 = vpack.c.bf16 %v530, %v529
      %v555 = vpack.c.bf16 %v532, %v531
      %v556 = vpack.c.bf16 %v534, %v533
      %v557 = vpack.c.bf16 %v536, %v535
      %v558 = vpack.c.bf16 %v538, %v537
      %v559 = vpack.c.bf16 %v540, %v539
      %v560 = vpack.c.bf16 %v542, %v541
      %v561 = vpack.c.bf16 %v544, %v543
      %v562 = vpack.c.bf16 %v546, %v545
      %s563 = scalar_lea.vmem %s1, 2
      %v564 = vld [vmem:[%s563] sm:$0x3]
      %vm565 = vcmask 23552
      %v567 = vsel %vm565, %v547, 0
      %v570 = vsel %vm565, %v548, 0
      %v573 = vsel %vm565, %v549, 0
      %v576 = vsel %vm565, %v550, 0
      %v579 = vsel %vm565, %v551, 0
      %v582 = vsel %vm565, %v552, 0
      %v585 = vsel %vm565, %v553, 0
      %v588 = vsel %vm565, %v554, 0
      %v591 = vsel %vm565, %v555, 0
      %v594 = vsel %vm565, %v556, 0
      %v597 = vsel %vm565, %v557, 0
      %v600 = vsel %vm565, %v558, 0
      %v603 = vsel %vm565, %v559, 0
      %v606 = vsel %vm565, %v560, 0
      %v609 = vsel %vm565, %v561, 0
      %v612 = vsel %vm565, %v562, 0
      %vm614 = vcmask 1040384
      %vm615 = vcmask 1041408
      %v616 = vsel %vm614, 4294967295, 65535
      %v617 = vsel %vm615, %v616, 0
      %v619 = vand.u32 %v564, %v617
      %621 = vmatpush.bf16.msra.mxu0 0
      %622 = vmatpush.bf16.msra.mxu0 0
      %623 = vmatpush.bf16.msra.mxu0 0
      %624 = vmatpush.bf16.msra.mxu0 0
      %625 = vmatpush.bf16.msra.mxu0 0
      %626 = vmatpush.bf16.msra.mxu0 0
      %627 = vmatpush.bf16.msra.mxu0 0
      %628 = vmatpush.bf16.msra.mxu0 %v619
      %629 = vmatmul.bf16.gmra.mxu0 %v567
      %v630 = vpop.f32.mrf.mxu0
      %v631 = vadd.f32 0.0, %v630
      %v632 = vpop.f32.mrf.mxu0
      %v633 = vadd.f32 0.0, %v632
      %634 = vmatmul.bf16.gmra.mxu0 %v570
      %v635 = vpop.f32.mrf.mxu0
      %v636 = vadd.f32 0.0, %v635
      %v637 = vpop.f32.mrf.mxu0
      %v638 = vadd.f32 0.0, %v637
      %639 = vmatmul.bf16.gmra.mxu0 %v573
      %v640 = vpop.f32.mrf.mxu0
      %v641 = vadd.f32 0.0, %v640
      %v642 = vpop.f32.mrf.mxu0
      %v643 = vadd.f32 0.0, %v642
      %644 = vmatmul.bf16.gmra.mxu0 %v576
      %v645 = vpop.f32.mrf.mxu0
      %v646 = vadd.f32 0.0, %v645
      %v647 = vpop.f32.mrf.mxu0
      %v648 = vadd.f32 0.0, %v647
      %649 = vmatmul.bf16.gmra.mxu0 %v579
      %v650 = vpop.f32.mrf.mxu0
      %v651 = vadd.f32 0.0, %v650
      %v652 = vpop.f32.mrf.mxu0
      %v653 = vadd.f32 0.0, %v652
      %654 = vmatmul.bf16.gmra.mxu0 %v582
      %v655 = vpop.f32.mrf.mxu0
      %v656 = vadd.f32 0.0, %v655
      %v657 = vpop.f32.mrf.mxu0
      %v658 = vadd.f32 0.0, %v657
      %659 = vmatmul.bf16.gmra.mxu0 %v585
      %v660 = vpop.f32.mrf.mxu0
      %v661 = vadd.f32 0.0, %v660
      %v662 = vpop.f32.mrf.mxu0
      %v663 = vadd.f32 0.0, %v662
      %664 = vmatmul.bf16.gmra.mxu0 %v588
      %v665 = vpop.f32.mrf.mxu0
      %v666 = vadd.f32 0.0, %v665
      %v667 = vpop.f32.mrf.mxu0
      %v668 = vadd.f32 0.0, %v667
      %669 = vmatmul.bf16.gmra.mxu0 %v591
      %v670 = vpop.f32.mrf.mxu0
      %v671 = vadd.f32 0.0, %v670
      %v672 = vpop.f32.mrf.mxu0
      %v673 = vadd.f32 0.0, %v672
      %674 = vmatmul.bf16.gmra.mxu0 %v594
      %v675 = vpop.f32.mrf.mxu0
      %v676 = vadd.f32 0.0, %v675
      %v677 = vpop.f32.mrf.mxu0
      %v678 = vadd.f32 0.0, %v677
      %679 = vmatmul.bf16.gmra.mxu0 %v597
      %v680 = vpop.f32.mrf.mxu0
      %v681 = vadd.f32 0.0, %v680
      %v682 = vpop.f32.mrf.mxu0
      %v683 = vadd.f32 0.0, %v682
      %684 = vmatmul.bf16.gmra.mxu0 %v600
      %v685 = vpop.f32.mrf.mxu0
      %v686 = vadd.f32 0.0, %v685
      %v687 = vpop.f32.mrf.mxu0
      %v688 = vadd.f32 0.0, %v687
      %689 = vmatmul.bf16.gmra.mxu0 %v603
      %v690 = vpop.f32.mrf.mxu0
      %v691 = vadd.f32 0.0, %v690
      %v692 = vpop.f32.mrf.mxu0
      %v693 = vadd.f32 0.0, %v692
      %694 = vmatmul.bf16.gmra.mxu0 %v606
      %v695 = vpop.f32.mrf.mxu0
      %v696 = vadd.f32 0.0, %v695
      %v697 = vpop.f32.mrf.mxu0
      %v698 = vadd.f32 0.0, %v697
      %699 = vmatmul.bf16.gmra.mxu0 %v609
      %v700 = vpop.f32.mrf.mxu0
      %v701 = vadd.f32 0.0, %v700
      %v702 = vpop.f32.mrf.mxu0
      %v703 = vadd.f32 0.0, %v702
      %704 = vmatmul.bf16.gmra.mxu0 %v612
      %v705 = vpop.f32.mrf.mxu0
      %v706 = vadd.f32 0.0, %v705
      %v707 = vpop.f32.mrf.mxu0
      %v708 = vadd.f32 0.0, %v707
      %709 = vdwg.mxu0
      %v711 = vsel %vm565, %v498, 0
      %v714 = vsel %vm565, %v499, 0
      %v717 = vsel %vm565, %v500, 0
      %v720 = vsel %vm565, %v501, 0
      %v723 = vsel %vm565, %v502, 0
      %v726 = vsel %vm565, %v503, 0
      %v729 = vsel %vm565, %v504, 0
      %v732 = vsel %vm565, %v505, 0
      %v735 = vsel %vm565, %v506, 0
      %v738 = vsel %vm565, %v507, 0
      %v741 = vsel %vm565, %v508, 0
      %v744 = vsel %vm565, %v509, 0
      %v747 = vsel %vm565, %v510, 0
      %v750 = vsel %vm565, %v511, 0
      %v753 = vsel %vm565, %v512, 0
      %v756 = vsel %vm565, %v513, 0
      %v759 = vand.u32 %v514, %v617
      %761 = vmatpush.bf16.msra.mxu0 0
      %762 = vmatpush.bf16.msra.mxu0 0
      %763 = vmatpush.bf16.msra.mxu0 0
      %764 = vmatpush.bf16.msra.mxu0 0
      %765 = vmatpush.bf16.msra.mxu0 0
      %766 = vmatpush.bf16.msra.mxu0 0
      %767 = vmatpush.bf16.msra.mxu0 0
      %768 = vmatpush.bf16.msra.mxu0 %v759
      %769 = vmatmul.bf16.gmra.mxu0 %v711
      %v770 = vpop.f32.mrf.mxu0
      %v771 = vadd.f32 %v631, %v770
      %v772 = vpop.f32.mrf.mxu0
      %v773 = vadd.f32 %v633, %v772
      %774 = vmatmul.bf16.gmra.mxu0 %v714
      %v775 = vpop.f32.mrf.mxu0
      %v776 = vadd.f32 %v636, %v775
      %v777 = vpop.f32.mrf.mxu0
      %v778 = vadd.f32 %v638, %v777
      %779 = vmatmul.bf16.gmra.mxu0 %v717
      %v780 = vpop.f32.mrf.mxu0
      %v781 = vadd.f32 %v641, %v780
      %v782 = vpop.f32.mrf.mxu0
      %v783 = vadd.f32 %v643, %v782
      %784 = vmatmul.bf16.gmra.mxu0 %v720
      %v785 = vpop.f32.mrf.mxu0
      %v786 = vadd.f32 %v646, %v785
      %v787 = vpop.f32.mrf.mxu0
      %v788 = vadd.f32 %v648, %v787
      %789 = vmatmul.bf16.gmra.mxu0 %v723
      %v790 = vpop.f32.mrf.mxu0
      %v791 = vadd.f32 %v651, %v790
      %v792 = vpop.f32.mrf.mxu0
      %v793 = vadd.f32 %v653, %v792
      %794 = vmatmul.bf16.gmra.mxu0 %v726
      %v795 = vpop.f32.mrf.mxu0
      %v796 = vadd.f32 %v656, %v795
      %v797 = vpop.f32.mrf.mxu0
      %v798 = vadd.f32 %v658, %v797
      %799 = vmatmul.bf16.gmra.mxu0 %v729
      %v800 = vpop.f32.mrf.mxu0
      %v801 = vadd.f32 %v661, %v800
      %v802 = vpop.f32.mrf.mxu0
      %v803 = vadd.f32 %v663, %v802
      %804 = vmatmul.bf16.gmra.mxu0 %v732
      %v805 = vpop.f32.mrf.mxu0
      %v806 = vadd.f32 %v666, %v805
      %v807 = vpop.f32.mrf.mxu0
      %v808 = vadd.f32 %v668, %v807
      %809 = vmatmul.bf16.gmra.mxu0 %v735
      %v810 = vpop.f32.mrf.mxu0
      %v811 = vadd.f32 %v671, %v810
      %v812 = vpop.f32.mrf.mxu0
      %v813 = vadd.f32 %v673, %v812
      %814 = vmatmul.bf16.gmra.mxu0 %v738
      %v815 = vpop.f32.mrf.mxu0
      %v816 = vadd.f32 %v676, %v815
      %v817 = vpop.f32.mrf.mxu0
      %v818 = vadd.f32 %v678, %v817
      %819 = vmatmul.bf16.gmra.mxu0 %v741
      %v820 = vpop.f32.mrf.mxu0
      %v821 = vadd.f32 %v681, %v820
      %v822 = vpop.f32.mrf.mxu0
      %v823 = vadd.f32 %v683, %v822
      %824 = vmatmul.bf16.gmra.mxu0 %v744
      %v825 = vpop.f32.mrf.mxu0
      %v826 = vadd.f32 %v686, %v825
      %v827 = vpop.f32.mrf.mxu0
      %v828 = vadd.f32 %v688, %v827
      %829 = vmatmul.bf16.gmra.mxu0 %v747
      %v830 = vpop.f32.mrf.mxu0
      %v831 = vadd.f32 %v691, %v830
      %v832 = vpop.f32.mrf.mxu0
      %v833 = vadd.f32 %v693, %v832
      %834 = vmatmul.bf16.gmra.mxu0 %v750
      %v835 = vpop.f32.mrf.mxu0
      %v836 = vadd.f32 %v696, %v835
      %v837 = vpop.f32.mrf.mxu0
      %v838 = vadd.f32 %v698, %v837
      %839 = vmatmul.bf16.gmra.mxu0 %v753
      %v840 = vpop.f32.mrf.mxu0
      %v841 = vadd.f32 %v701, %v840
      %v842 = vpop.f32.mrf.mxu0
      %v843 = vadd.f32 %v703, %v842
      %844 = vmatmul.bf16.gmra.mxu0 %v756
      %v845 = vpop.f32.mrf.mxu0
      %v846 = vadd.f32 %v706, %v845
      %v847 = vpop.f32.mrf.mxu0
      %v848 = vadd.f32 %v708, %v847
      %849 = vdwg.mxu0
      %v850 = vld [vmem:[%s328 + $0x2] sm:$0xff]
      %v851 = vld [vmem:[%s328 + $0xa] sm:$0xff]
      %v852 = vld [vmem:[%s328 + $0x1a] sm:$0xff]
      %v853 = vld [vmem:[%s328 + $0x22] sm:$0xff]
      %v854 = vld [vmem:[%s328 + $0x32] sm:$0xff]
      %v855 = vld [vmem:[%s328 + $0x3a] sm:$0xff]
      %v856 = vld [vmem:[%s328 + $0x4a] sm:$0xff]
      %v857 = vld [vmem:[%s328 + $0x52] sm:$0xff]
      %v858 = vld [vmem:[%s328 + $0x62] sm:$0xff]
      %v859 = vld [vmem:[%s328 + $0x6a] sm:$0xff]
      %v860 = vld [vmem:[%s328 + $0x7a] sm:$0xff]
      %v861 = vld [vmem:[%s328 + $0x82] sm:$0xff]
      %v862 = vld [vmem:[%s328 + $0x92] sm:$0xff]
      %v863 = vld [vmem:[%s328 + $0x9a] sm:$0xff]
      %v864 = vld [vmem:[%s328 + $0xaa] sm:$0xff]
      %v865 = vld [vmem:[%s328 + $0xb2] sm:$0xff]
      %v866 = vld [vmem:[%s328 + $0xc2] sm:$0xff]
      %v867 = vld [vmem:[%s328 + $0xca] sm:$0xff]
      %v868 = vld [vmem:[%s328 + $0xda] sm:$0xff]
      %v869 = vld [vmem:[%s328 + $0xe2] sm:$0xff]
      %v870 = vld [vmem:[%s328 + $0xf2] sm:$0xff]
      %v871 = vld [vmem:[%s328 + $0xfa] sm:$0xff]
      %v872 = vld [vmem:[%s328 + $0x10a] sm:$0xff]
      %v873 = vld [vmem:[%s328 + $0x112] sm:$0xff]
      %v874 = vld [vmem:[%s328 + $0x122] sm:$0xff]
      %v875 = vld [vmem:[%s328 + $0x12a] sm:$0xff]
      %v876 = vld [vmem:[%s328 + $0x13a] sm:$0xff]
      %v877 = vld [vmem:[%s328 + $0x142] sm:$0xff]
      %v878 = vld [vmem:[%s328 + $0x152] sm:$0xff]
      %v879 = vld [vmem:[%s328 + $0x15a] sm:$0xff]
      %v880 = vld [vmem:[%s328 + $0x16a] sm:$0xff]
      %v881 = vld [vmem:[%s328 + $0x172] sm:$0xff]
      %v882 = vpack.c.bf16 %v851, %v850
      %v883 = vpack.c.bf16 %v853, %v852
      %v884 = vpack.c.bf16 %v855, %v854
      %v885 = vpack.c.bf16 %v857, %v856
      %v886 = vpack.c.bf16 %v859, %v858
      %v887 = vpack.c.bf16 %v861, %v860
      %v888 = vpack.c.bf16 %v863, %v862
      %v889 = vpack.c.bf16 %v865, %v864
      %v890 = vpack.c.bf16 %v867, %v866
      %v891 = vpack.c.bf16 %v869, %v868
      %v892 = vpack.c.bf16 %v871, %v870
      %v893 = vpack.c.bf16 %v873, %v872
      %v894 = vpack.c.bf16 %v875, %v874
      %v895 = vpack.c.bf16 %v877, %v876
      %v896 = vpack.c.bf16 %v879, %v878
      %v897 = vpack.c.bf16 %v881, %v880
      %s898 = scalar_lea.vmem %s1, 4
      %v899 = vld [vmem:[%s898] sm:$0x3]
      %v901 = vsel %vm565, %v882, 0
      %v904 = vsel %vm565, %v883, 0
      %v907 = vsel %vm565, %v884, 0
      %v910 = vsel %vm565, %v885, 0
      %v913 = vsel %vm565, %v886, 0
      %v916 = vsel %vm565, %v887, 0
      %v919 = vsel %vm565, %v888, 0
      %v922 = vsel %vm565, %v889, 0
      %v925 = vsel %vm565, %v890, 0
      %v928 = vsel %vm565, %v891, 0
      %v931 = vsel %vm565, %v892, 0
      %v934 = vsel %vm565, %v893, 0
      %v937 = vsel %vm565, %v894, 0
      %v940 = vsel %vm565, %v895, 0
      %v943 = vsel %vm565, %v896, 0
      %v946 = vsel %vm565, %v897, 0
      %v949 = vand.u32 %v899, %v617
      %951 = vmatpush.bf16.msra.mxu0 0
      %952 = vmatpush.bf16.msra.mxu0 0
      %953 = vmatpush.bf16.msra.mxu0 0
      %954 = vmatpush.bf16.msra.mxu0 0
      %955 = vmatpush.bf16.msra.mxu0 0
      %956 = vmatpush.bf16.msra.mxu0 0
      %957 = vmatpush.bf16.msra.mxu0 0
      %958 = vmatpush.bf16.msra.mxu0 %v949
      %959 = vmatmul.bf16.gmra.mxu0 %v901
      %v960 = vpop.f32.mrf.mxu0
      %v961 = vadd.f32 0.0, %v960
      %v962 = vpop.f32.mrf.mxu0
      %v963 = vadd.f32 0.0, %v962
      %964 = vmatmul.bf16.gmra.mxu0 %v904
      %v965 = vpop.f32.mrf.mxu0
      %v966 = vadd.f32 0.0, %v965
      %v967 = vpop.f32.mrf.mxu0
      %v968 = vadd.f32 0.0, %v967
      %969 = vmatmul.bf16.gmra.mxu0 %v907
      %v970 = vpop.f32.mrf.mxu0
      %v971 = vadd.f32 0.0, %v970
      %v972 = vpop.f32.mrf.mxu0
      %v973 = vadd.f32 0.0, %v972
      %974 = vmatmul.bf16.gmra.mxu0 %v910
      %v975 = vpop.f32.mrf.mxu0
      %v976 = vadd.f32 0.0, %v975
      %v977 = vpop.f32.mrf.mxu0
      %v978 = vadd.f32 0.0, %v977
      %979 = vmatmul.bf16.gmra.mxu0 %v913
      %v980 = vpop.f32.mrf.mxu0
      %v981 = vadd.f32 0.0, %v980
      %v982 = vpop.f32.mrf.mxu0
      %v983 = vadd.f32 0.0, %v982
      %984 = vmatmul.bf16.gmra.mxu0 %v916
      %v985 = vpop.f32.mrf.mxu0
      %v986 = vadd.f32 0.0, %v985
      %v987 = vpop.f32.mrf.mxu0
      %v988 = vadd.f32 0.0, %v987
      %989 = vmatmul.bf16.gmra.mxu0 %v919
      %v990 = vpop.f32.mrf.mxu0
      %v991 = vadd.f32 0.0, %v990
      %v992 = vpop.f32.mrf.mxu0
      %v993 = vadd.f32 0.0, %v992
      %994 = vmatmul.bf16.gmra.mxu0 %v922
      %v995 = vpop.f32.mrf.mxu0
      %v996 = vadd.f32 0.0, %v995
      %v997 = vpop.f32.mrf.mxu0
      %v998 = vadd.f32 0.0, %v997
      %999 = vmatmul.bf16.gmra.mxu0 %v925
      %v1000 = vpop.f32.mrf.mxu0
      %v1001 = vadd.f32 0.0, %v1000
      %v1002 = vpop.f32.mrf.mxu0
      %v1003 = vadd.f32 0.0, %v1002
      %1004 = vmatmul.bf16.gmra.mxu0 %v928
      %v1005 = vpop.f32.mrf.mxu0
      %v1006 = vadd.f32 0.0, %v1005
      %v1007 = vpop.f32.mrf.mxu0
      %v1008 = vadd.f32 0.0, %v1007
      %1009 = vmatmul.bf16.gmra.mxu0 %v931
      %v1010 = vpop.f32.mrf.mxu0
      %v1011 = vadd.f32 0.0, %v1010
      %v1012 = vpop.f32.mrf.mxu0
      %v1013 = vadd.f32 0.0, %v1012
      %1014 = vmatmul.bf16.gmra.mxu0 %v934
      %v1015 = vpop.f32.mrf.mxu0
      %v1016 = vadd.f32 0.0, %v1015
      %v1017 = vpop.f32.mrf.mxu0
      %v1018 = vadd.f32 0.0, %v1017
      %1019 = vmatmul.bf16.gmra.mxu0 %v937
      %v1020 = vpop.f32.mrf.mxu0
      %v1021 = vadd.f32 0.0, %v1020
      %v1022 = vpop.f32.mrf.mxu0
      %v1023 = vadd.f32 0.0, %v1022
      %1024 = vmatmul.bf16.gmra.mxu0 %v940
      %v1025 = vpop.f32.mrf.mxu0
      %v1026 = vadd.f32 0.0, %v1025
      %v1027 = vpop.f32.mrf.mxu0
      %v1028 = vadd.f32 0.0, %v1027
      %1029 = vmatmul.bf16.gmra.mxu0 %v943
      %v1030 = vpop.f32.mrf.mxu0
      %v1031 = vadd.f32 0.0, %v1030
      %v1032 = vpop.f32.mrf.mxu0
      %v1033 = vadd.f32 0.0, %v1032
      %1034 = vmatmul.bf16.gmra.mxu0 %v946
      %v1035 = vpop.f32.mrf.mxu0
      %v1036 = vadd.f32 0.0, %v1035
      %v1037 = vpop.f32.mrf.mxu0
      %v1038 = vadd.f32 0.0, %v1037
      %1039 = vdwg.mxu0
      %v1040 = vadd.f32 %v771, %v961
      %v1041 = vadd.f32 %v773, %v963
      %v1042 = vadd.f32 %v776, %v966
      %v1043 = vadd.f32 %v778, %v968
      %v1044 = vadd.f32 %v781, %v971
      %v1045 = vadd.f32 %v783, %v973
      %v1046 = vadd.f32 %v786, %v976
      %v1047 = vadd.f32 %v788, %v978
      %v1048 = vadd.f32 %v791, %v981
      %v1049 = vadd.f32 %v793, %v983
      %v1050 = vadd.f32 %v796, %v986
      %v1051 = vadd.f32 %v798, %v988
      %v1052 = vadd.f32 %v801, %v991
      %v1053 = vadd.f32 %v803, %v993
      %v1054 = vadd.f32 %v806, %v996
      %v1055 = vadd.f32 %v808, %v998
      %v1056 = vadd.f32 %v811, %v1001
      %v1057 = vadd.f32 %v813, %v1003
      %v1058 = vadd.f32 %v816, %v1006
      %v1059 = vadd.f32 %v818, %v1008
      %v1060 = vadd.f32 %v821, %v1011
      %v1061 = vadd.f32 %v823, %v1013
      %v1062 = vadd.f32 %v826, %v1016
      %v1063 = vadd.f32 %v828, %v1018
      %v1064 = vadd.f32 %v831, %v1021
      %v1065 = vadd.f32 %v833, %v1023
      %v1066 = vadd.f32 %v836, %v1026
      %v1067 = vadd.f32 %v838, %v1028
      %v1068 = vadd.f32 %v841, %v1031
      %v1069 = vadd.f32 %v843, %v1033
      %v1070 = vadd.f32 %v846, %v1036
      %v1071 = vadd.f32 %v848, %v1038
      %s1072 = scalar_lea.vmem %s328, 24
      %v1073 = vld [vmem:[%s1072] sm:$0xff]
      %v1074 = vld [vmem:[%s1072 + $0x8] sm:$0xff]
      %v1075 = vld [vmem:[%s1072 + $0x18] sm:$0xff]
      %v1076 = vld [vmem:[%s1072 + $0x20] sm:$0xff]
      %v1077 = vld [vmem:[%s1072 + $0x30] sm:$0xff]
      %v1078 = vld [vmem:[%s1072 + $0x38] sm:$0xff]
      %v1079 = vld [vmem:[%s1072 + $0x48] sm:$0xff]
      %v1080 = vld [vmem:[%s1072 + $0x50] sm:$0xff]
      %v1081 = vld [vmem:[%s1072 + $0x60] sm:$0xff]
      %v1082 = vld [vmem:[%s1072 + $0x68] sm:$0xff]
      %v1083 = vld [vmem:[%s1072 + $0x78] sm:$0xff]
      %v1084 = vld [vmem:[%s1072 + $0x80] sm:$0xff]
      %v1085 = vld [vmem:[%s1072 + $0x90] sm:$0xff]
      %v1086 = vld [vmem:[%s1072 + $0x98] sm:$0xff]
      %v1087 = vld [vmem:[%s1072 + $0xa8] sm:$0xff]
      %v1088 = vld [vmem:[%s1072 + $0xb0] sm:$0xff]
      %v1089 = vld [vmem:[%s1072 + $0xc0] sm:$0xff]
      %v1090 = vld [vmem:[%s1072 + $0xc8] sm:$0xff]
      %v1091 = vld [vmem:[%s1072 + $0xd8] sm:$0xff]
      %v1092 = vld [vmem:[%s1072 + $0xe0] sm:$0xff]
      %v1093 = vld [vmem:[%s1072 + $0xf0] sm:$0xff]
      %v1094 = vld [vmem:[%s1072 + $0xf8] sm:$0xff]
      %v1095 = vld [vmem:[%s1072 + $0x108] sm:$0xff]
      %v1096 = vld [vmem:[%s1072 + $0x110] sm:$0xff]
      %v1097 = vld [vmem:[%s1072 + $0x120] sm:$0xff]
      %v1098 = vld [vmem:[%s1072 + $0x128] sm:$0xff]
      %v1099 = vld [vmem:[%s1072 + $0x138] sm:$0xff]
      %v1100 = vld [vmem:[%s1072 + $0x140] sm:$0xff]
      %v1101 = vld [vmem:[%s1072 + $0x150] sm:$0xff]
      %v1102 = vld [vmem:[%s1072 + $0x158] sm:$0xff]
      %v1103 = vld [vmem:[%s1072 + $0x168] sm:$0xff]
      %v1104 = vld [vmem:[%s1072 + $0x170] sm:$0xff]
      %v1105 = vpack.c.bf16 %v1074, %v1073
      %v1106 = vpack.c.bf16 %v1076, %v1075
      %v1107 = vpack.c.bf16 %v1078, %v1077
      %v1108 = vpack.c.bf16 %v1080, %v1079
      %v1109 = vpack.c.bf16 %v1082, %v1081
      %v1110 = vpack.c.bf16 %v1084, %v1083
      %v1111 = vpack.c.bf16 %v1086, %v1085
      %v1112 = vpack.c.bf16 %v1088, %v1087
      %v1113 = vpack.c.bf16 %v1090, %v1089
      %v1114 = vpack.c.bf16 %v1092, %v1091
      %v1115 = vpack.c.bf16 %v1094, %v1093
      %v1116 = vpack.c.bf16 %v1096, %v1095
      %v1117 = vpack.c.bf16 %v1098, %v1097
      %v1118 = vpack.c.bf16 %v1100, %v1099
      %v1119 = vpack.c.bf16 %v1102, %v1101
      %v1120 = vpack.c.bf16 %v1104, %v1103
      %s1121 = scalar_lea.vmem %s1, 6
      %v1122 = vld [vmem:[%s1121] sm:$0x3]
      %v1124 = vsel %vm565, %v1105, 0
      %v1127 = vsel %vm565, %v1106, 0
      %v1130 = vsel %vm565, %v1107, 0
      %v1133 = vsel %vm565, %v1108, 0
      %v1136 = vsel %vm565, %v1109, 0
      %v1139 = vsel %vm565, %v1110, 0
      %v1142 = vsel %vm565, %v1111, 0
      %v1145 = vsel %vm565, %v1112, 0
      %v1148 = vsel %vm565, %v1113, 0
      %v1151 = vsel %vm565, %v1114, 0
      %v1154 = vsel %vm565, %v1115, 0
      %v1157 = vsel %vm565, %v1116, 0
      %v1160 = vsel %vm565, %v1117, 0
      %v1163 = vsel %vm565, %v1118, 0
      %v1166 = vsel %vm565, %v1119, 0
      %v1169 = vsel %vm565, %v1120, 0
      %v1172 = vand.u32 %v1122, %v617
      %1174 = vmatpush.bf16.msra.mxu0 0
      %1175 = vmatpush.bf16.msra.mxu0 0
      %1176 = vmatpush.bf16.msra.mxu0 0
      %1177 = vmatpush.bf16.msra.mxu0 0
      %1178 = vmatpush.bf16.msra.mxu0 0
      %1179 = vmatpush.bf16.msra.mxu0 0
      %1180 = vmatpush.bf16.msra.mxu0 0
      %1181 = vmatpush.bf16.msra.mxu0 %v1172
      %1182 = vmatmul.bf16.gmra.mxu0 %v1124
      %v1183 = vpop.f32.mrf.mxu0
      %v1184 = vadd.f32 0.0, %v1183
      %v1185 = vpop.f32.mrf.mxu0
      %v1186 = vadd.f32 0.0, %v1185
      %1187 = vmatmul.bf16.gmra.mxu0 %v1127
      %v1188 = vpop.f32.mrf.mxu0
      %v1189 = vadd.f32 0.0, %v1188
      %v1190 = vpop.f32.mrf.mxu0
      %v1191 = vadd.f32 0.0, %v1190
      %1192 = vmatmul.bf16.gmra.mxu0 %v1130
      %v1193 = vpop.f32.mrf.mxu0
      %v1194 = vadd.f32 0.0, %v1193
      %v1195 = vpop.f32.mrf.mxu0
      %v1196 = vadd.f32 0.0, %v1195
      %1197 = vmatmul.bf16.gmra.mxu0 %v1133
      %v1198 = vpop.f32.mrf.mxu0
      %v1199 = vadd.f32 0.0, %v1198
      %v1200 = vpop.f32.mrf.mxu0
      %v1201 = vadd.f32 0.0, %v1200
      %1202 = vmatmul.bf16.gmra.mxu0 %v1136
      %v1203 = vpop.f32.mrf.mxu0
      %v1204 = vadd.f32 0.0, %v1203
      %v1205 = vpop.f32.mrf.mxu0
      %v1206 = vadd.f32 0.0, %v1205
      %1207 = vmatmul.bf16.gmra.mxu0 %v1139
      %v1208 = vpop.f32.mrf.mxu0
      %v1209 = vadd.f32 0.0, %v1208
      %v1210 = vpop.f32.mrf.mxu0
      %v1211 = vadd.f32 0.0, %v1210
      %1212 = vmatmul.bf16.gmra.mxu0 %v1142
      %v1213 = vpop.f32.mrf.mxu0
      %v1214 = vadd.f32 0.0, %v1213
      %v1215 = vpop.f32.mrf.mxu0
      %v1216 = vadd.f32 0.0, %v1215
      %1217 = vmatmul.bf16.gmra.mxu0 %v1145
      %v1218 = vpop.f32.mrf.mxu0
      %v1219 = vadd.f32 0.0, %v1218
      %v1220 = vpop.f32.mrf.mxu0
      %v1221 = vadd.f32 0.0, %v1220
      %1222 = vmatmul.bf16.gmra.mxu0 %v1148
      %v1223 = vpop.f32.mrf.mxu0
      %v1224 = vadd.f32 0.0, %v1223
      %v1225 = vpop.f32.mrf.mxu0
      %v1226 = vadd.f32 0.0, %v1225
      %1227 = vmatmul.bf16.gmra.mxu0 %v1151
      %v1228 = vpop.f32.mrf.mxu0
      %v1229 = vadd.f32 0.0, %v1228
      %v1230 = vpop.f32.mrf.mxu0
      %v1231 = vadd.f32 0.0, %v1230
      %1232 = vmatmul.bf16.gmra.mxu0 %v1154
      %v1233 = vpop.f32.mrf.mxu0
      %v1234 = vadd.f32 0.0, %v1233
      %v1235 = vpop.f32.mrf.mxu0
      %v1236 = vadd.f32 0.0, %v1235
      %1237 = vmatmul.bf16.gmra.mxu0 %v1157
      %v1238 = vpop.f32.mrf.mxu0
      %v1239 = vadd.f32 0.0, %v1238
      %v1240 = vpop.f32.mrf.mxu0
      %v1241 = vadd.f32 0.0, %v1240
      %1242 = vmatmul.bf16.gmra.mxu0 %v1160
      %v1243 = vpop.f32.mrf.mxu0
      %v1244 = vadd.f32 0.0, %v1243
      %v1245 = vpop.f32.mrf.mxu0
      %v1246 = vadd.f32 0.0, %v1245
      %1247 = vmatmul.bf16.gmra.mxu0 %v1163
      %v1248 = vpop.f32.mrf.mxu0
      %v1249 = vadd.f32 0.0, %v1248
      %v1250 = vpop.f32.mrf.mxu0
      %v1251 = vadd.f32 0.0, %v1250
      %1252 = vmatmul.bf16.gmra.mxu0 %v1166
      %v1253 = vpop.f32.mrf.mxu0
      %v1254 = vadd.f32 0.0, %v1253
      %v1255 = vpop.f32.mrf.mxu0
      %v1256 = vadd.f32 0.0, %v1255
      %1257 = vmatmul.bf16.gmra.mxu0 %v1169
      %v1258 = vpop.f32.mrf.mxu0
      %v1259 = vadd.f32 0.0, %v1258
      %v1260 = vpop.f32.mrf.mxu0
      %v1261 = vadd.f32 0.0, %v1260
      %1262 = vdwg.mxu0
      %v1263 = vadd.f32 %v1040, %v1184
      %v1264 = vadd.f32 %v1041, %v1186
      %v1265 = vadd.f32 %v1042, %v1189
      %v1266 = vadd.f32 %v1043, %v1191
      %v1267 = vadd.f32 %v1044, %v1194
      %v1268 = vadd.f32 %v1045, %v1196
      %v1269 = vadd.f32 %v1046, %v1199
      %v1270 = vadd.f32 %v1047, %v1201
      %v1271 = vadd.f32 %v1048, %v1204
      %v1272 = vadd.f32 %v1049, %v1206
      %v1273 = vadd.f32 %v1050, %v1209
      %v1274 = vadd.f32 %v1051, %v1211
      %v1275 = vadd.f32 %v1052, %v1214
      %v1276 = vadd.f32 %v1053, %v1216
      %v1277 = vadd.f32 %v1054, %v1219
      %v1278 = vadd.f32 %v1055, %v1221
      %v1279 = vadd.f32 %v1056, %v1224
      %v1280 = vadd.f32 %v1057, %v1226
      %v1281 = vadd.f32 %v1058, %v1229
      %v1282 = vadd.f32 %v1059, %v1231
      %v1283 = vadd.f32 %v1060, %v1234
      %v1284 = vadd.f32 %v1061, %v1236
      %v1285 = vadd.f32 %v1062, %v1239
      %v1286 = vadd.f32 %v1063, %v1241
      %v1287 = vadd.f32 %v1064, %v1244
      %v1288 = vadd.f32 %v1065, %v1246
      %v1289 = vadd.f32 %v1066, %v1249
      %v1290 = vadd.f32 %v1067, %v1251
      %v1291 = vadd.f32 %v1068, %v1254
      %v1292 = vadd.f32 %v1069, %v1256
      %v1293 = vadd.f32 %v1070, %v1259
      %v1294 = vadd.f32 %v1071, %v1261
      %v1295 = vld [vmem:[%s1072 + $0x1] sm:$0xff]
      %v1296 = vld [vmem:[%s1072 + $0x9] sm:$0xff]
      %v1297 = vld [vmem:[%s1072 + $0x19] sm:$0xff]
      %v1298 = vld [vmem:[%s1072 + $0x21] sm:$0xff]
      %v1299 = vld [vmem:[%s1072 + $0x31] sm:$0xff]
      %v1300 = vld [vmem:[%s1072 + $0x39] sm:$0xff]
      %v1301 = vld [vmem:[%s1072 + $0x49] sm:$0xff]
      %v1302 = vld [vmem:[%s1072 + $0x51] sm:$0xff]
      %v1303 = vld [vmem:[%s1072 + $0x61] sm:$0xff]
      %v1304 = vld [vmem:[%s1072 + $0x69] sm:$0xff]
      %v1305 = vld [vmem:[%s1072 + $0x79] sm:$0xff]
      %v1306 = vld [vmem:[%s1072 + $0x81] sm:$0xff]
      %v1307 = vld [vmem:[%s1072 + $0x91] sm:$0xff]
      %v1308 = vld [vmem:[%s1072 + $0x99] sm:$0xff]
      %v1309 = vld [vmem:[%s1072 + $0xa9] sm:$0xff]
      %v1310 = vld [vmem:[%s1072 + $0xb1] sm:$0xff]
      %v1311 = vld [vmem:[%s1072 + $0xc1] sm:$0xff]
      %v1312 = vld [vmem:[%s1072 + $0xc9] sm:$0xff]
      %v1313 = vld [vmem:[%s1072 + $0xd9] sm:$0xff]
      %v1314 = vld [vmem:[%s1072 + $0xe1] sm:$0xff]
      %v1315 = vld [vmem:[%s1072 + $0xf1] sm:$0xff]
      %v1316 = vld [vmem:[%s1072 + $0xf9] sm:$0xff]
      %v1317 = vld [vmem:[%s1072 + $0x109] sm:$0xff]
      %v1318 = vld [vmem:[%s1072 + $0x111] sm:$0xff]
      %v1319 = vld [vmem:[%s1072 + $0x121] sm:$0xff]
      %v1320 = vld [vmem:[%s1072 + $0x129] sm:$0xff]
      %v1321 = vld [vmem:[%s1072 + $0x139] sm:$0xff]
      %v1322 = vld [vmem:[%s1072 + $0x141] sm:$0xff]
      %v1323 = vld [vmem:[%s1072 + $0x151] sm:$0xff]
      %v1324 = vld [vmem:[%s1072 + $0x159] sm:$0xff]
      %v1325 = vld [vmem:[%s1072 + $0x169] sm:$0xff]
      %v1326 = vld [vmem:[%s1072 + $0x171] sm:$0xff]
      %v1327 = vpack.c.bf16 %v1296, %v1295
      %v1328 = vpack.c.bf16 %v1298, %v1297
      %v1329 = vpack.c.bf16 %v1300, %v1299
      %v1330 = vpack.c.bf16 %v1302, %v1301
      %v1331 = vpack.c.bf16 %v1304, %v1303
      %v1332 = vpack.c.bf16 %v1306, %v1305
      %v1333 = vpack.c.bf16 %v1308, %v1307
      %v1334 = vpack.c.bf16 %v1310, %v1309
      %v1335 = vpack.c.bf16 %v1312, %v1311
      %v1336 = vpack.c.bf16 %v1314, %v1313
      %v1337 = vpack.c.bf16 %v1316, %v1315
      %v1338 = vpack.c.bf16 %v1318, %v1317
      %v1339 = vpack.c.bf16 %v1320, %v1319
      %v1340 = vpack.c.bf16 %v1322, %v1321
      %v1341 = vpack.c.bf16 %v1324, %v1323
      %v1342 = vpack.c.bf16 %v1326, %v1325
      %s1343 = scalar_lea.vmem %s1, 8
      %v1344 = vld [vmem:[%s1343] sm:$0x3]
      %v1346 = vsel %vm565, %v1327, 0
      %v1349 = vsel %vm565, %v1328, 0
      %v1352 = vsel %vm565, %v1329, 0
      %v1355 = vsel %vm565, %v1330, 0
      %v1358 = vsel %vm565, %v1331, 0
      %v1361 = vsel %vm565, %v1332, 0
      %v1364 = vsel %vm565, %v1333, 0
      %v1367 = vsel %vm565, %v1334, 0
      %v1370 = vsel %vm565, %v1335, 0
      %v1373 = vsel %vm565, %v1336, 0
      %v1376 = vsel %vm565, %v1337, 0
      %v1379 = vsel %vm565, %v1338, 0
      %v1382 = vsel %vm565, %v1339, 0
      %v1385 = vsel %vm565, %v1340, 0
      %v1388 = vsel %vm565, %v1341, 0
      %v1391 = vsel %vm565, %v1342, 0
      %v1394 = vand.u32 %v1344, %v617
      %1396 = vmatpush.bf16.msra.mxu0 0
      %1397 = vmatpush.bf16.msra.mxu0 0
      %1398 = vmatpush.bf16.msra.mxu0 0
      %1399 = vmatpush.bf16.msra.mxu0 0
      %1400 = vmatpush.bf16.msra.mxu0 0
      %1401 = vmatpush.bf16.msra.mxu0 0
      %1402 = vmatpush.bf16.msra.mxu0 0
      %1403 = vmatpush.bf16.msra.mxu0 %v1394
      %1404 = vmatmul.bf16.gmra.mxu0 %v1346
      %v1405 = vpop.f32.mrf.mxu0
      %v1406 = vadd.f32 0.0, %v1405
      %v1407 = vpop.f32.mrf.mxu0
      %v1408 = vadd.f32 0.0, %v1407
      %1409 = vmatmul.bf16.gmra.mxu0 %v1349
      %v1410 = vpop.f32.mrf.mxu0
      %v1411 = vadd.f32 0.0, %v1410
      %v1412 = vpop.f32.mrf.mxu0
      %v1413 = vadd.f32 0.0, %v1412
      %1414 = vmatmul.bf16.gmra.mxu0 %v1352
      %v1415 = vpop.f32.mrf.mxu0
      %v1416 = vadd.f32 0.0, %v1415
      %v1417 = vpop.f32.mrf.mxu0
      %v1418 = vadd.f32 0.0, %v1417
      %1419 = vmatmul.bf16.gmra.mxu0 %v1355
      %v1420 = vpop.f32.mrf.mxu0
      %v1421 = vadd.f32 0.0, %v1420
      %v1422 = vpop.f32.mrf.mxu0
      %v1423 = vadd.f32 0.0, %v1422
      %1424 = vmatmul.bf16.gmra.mxu0 %v1358
      %v1425 = vpop.f32.mrf.mxu0
      %v1426 = vadd.f32 0.0, %v1425
      %v1427 = vpop.f32.mrf.mxu0
      %v1428 = vadd.f32 0.0, %v1427
      %1429 = vmatmul.bf16.gmra.mxu0 %v1361
      %v1430 = vpop.f32.mrf.mxu0
      %v1431 = vadd.f32 0.0, %v1430
      %v1432 = vpop.f32.mrf.mxu0
      %v1433 = vadd.f32 0.0, %v1432
      %1434 = vmatmul.bf16.gmra.mxu0 %v1364
      %v1435 = vpop.f32.mrf.mxu0
      %v1436 = vadd.f32 0.0, %v1435
      %v1437 = vpop.f32.mrf.mxu0
      %v1438 = vadd.f32 0.0, %v1437
      %1439 = vmatmul.bf16.gmra.mxu0 %v1367
      %v1440 = vpop.f32.mrf.mxu0
      %v1441 = vadd.f32 0.0, %v1440
      %v1442 = vpop.f32.mrf.mxu0
      %v1443 = vadd.f32 0.0, %v1442
      %1444 = vmatmul.bf16.gmra.mxu0 %v1370
      %v1445 = vpop.f32.mrf.mxu0
      %v1446 = vadd.f32 0.0, %v1445
      %v1447 = vpop.f32.mrf.mxu0
      %v1448 = vadd.f32 0.0, %v1447
      %1449 = vmatmul.bf16.gmra.mxu0 %v1373
      %v1450 = vpop.f32.mrf.mxu0
      %v1451 = vadd.f32 0.0, %v1450
      %v1452 = vpop.f32.mrf.mxu0
      %v1453 = vadd.f32 0.0, %v1452
      %1454 = vmatmul.bf16.gmra.mxu0 %v1376
      %v1455 = vpop.f32.mrf.mxu0
      %v1456 = vadd.f32 0.0, %v1455
      %v1457 = vpop.f32.mrf.mxu0
      %v1458 = vadd.f32 0.0, %v1457
      %1459 = vmatmul.bf16.gmra.mxu0 %v1379
      %v1460 = vpop.f32.mrf.mxu0
      %v1461 = vadd.f32 0.0, %v1460
      %v1462 = vpop.f32.mrf.mxu0
      %v1463 = vadd.f32 0.0, %v1462
      %1464 = vmatmul.bf16.gmra.mxu0 %v1382
      %v1465 = vpop.f32.mrf.mxu0
      %v1466 = vadd.f32 0.0, %v1465
      %v1467 = vpop.f32.mrf.mxu0
      %v1468 = vadd.f32 0.0, %v1467
      %1469 = vmatmul.bf16.gmra.mxu0 %v1385
      %v1470 = vpop.f32.mrf.mxu0
      %v1471 = vadd.f32 0.0, %v1470
      %v1472 = vpop.f32.mrf.mxu0
      %v1473 = vadd.f32 0.0, %v1472
      %1474 = vmatmul.bf16.gmra.mxu0 %v1388
      %v1475 = vpop.f32.mrf.mxu0
      %v1476 = vadd.f32 0.0, %v1475
      %v1477 = vpop.f32.mrf.mxu0
      %v1478 = vadd.f32 0.0, %v1477
      %1479 = vmatmul.bf16.gmra.mxu0 %v1391
      %v1480 = vpop.f32.mrf.mxu0
      %v1481 = vadd.f32 0.0, %v1480
      %v1482 = vpop.f32.mrf.mxu0
      %v1483 = vadd.f32 0.0, %v1482
      %1484 = vdwg.mxu0
      %v1485 = vadd.f32 %v1263, %v1406
      %v1486 = vadd.f32 %v1264, %v1408
      %v1487 = vadd.f32 %v1265, %v1411
      %v1488 = vadd.f32 %v1266, %v1413
      %v1489 = vadd.f32 %v1267, %v1416
      %v1490 = vadd.f32 %v1268, %v1418
      %v1491 = vadd.f32 %v1269, %v1421
      %v1492 = vadd.f32 %v1270, %v1423
      %v1493 = vadd.f32 %v1271, %v1426
      %v1494 = vadd.f32 %v1272, %v1428
      %v1495 = vadd.f32 %v1273, %v1431
      %v1496 = vadd.f32 %v1274, %v1433
      %v1497 = vadd.f32 %v1275, %v1436
      %v1498 = vadd.f32 %v1276, %v1438
      %v1499 = vadd.f32 %v1277, %v1441
      %v1500 = vadd.f32 %v1278, %v1443
      %v1501 = vadd.f32 %v1279, %v1446
      %v1502 = vadd.f32 %v1280, %v1448
      %v1503 = vadd.f32 %v1281, %v1451
      %v1504 = vadd.f32 %v1282, %v1453
      %v1505 = vadd.f32 %v1283, %v1456
      %v1506 = vadd.f32 %v1284, %v1458
      %v1507 = vadd.f32 %v1285, %v1461
      %v1508 = vadd.f32 %v1286, %v1463
      %v1509 = vadd.f32 %v1287, %v1466
      %v1510 = vadd.f32 %v1288, %v1468
      %v1511 = vadd.f32 %v1289, %v1471
      %v1512 = vadd.f32 %v1290, %v1473
      %v1513 = vadd.f32 %v1291, %v1476
      %v1514 = vadd.f32 %v1292, %v1478
      %v1515 = vadd.f32 %v1293, %v1481
      %v1516 = vadd.f32 %v1294, %v1483
      %v1517 = vld [vmem:[%s1072 + $0x2] sm:$0xff]
      %v1518 = vld [vmem:[%s1072 + $0xa] sm:$0xff]
      %v1519 = vld [vmem:[%s1072 + $0x1a] sm:$0xff]
      %v1520 = vld [vmem:[%s1072 + $0x22] sm:$0xff]
      %v1521 = vld [vmem:[%s1072 + $0x32] sm:$0xff]
      %v1522 = vld [vmem:[%s1072 + $0x3a] sm:$0xff]
      %v1523 = vld [vmem:[%s1072 + $0x4a] sm:$0xff]
      %v1524 = vld [vmem:[%s1072 + $0x52] sm:$0xff]
      %v1525 = vld [vmem:[%s1072 + $0x62] sm:$0xff]
      %v1526 = vld [vmem:[%s1072 + $0x6a] sm:$0xff]
      %v1527 = vld [vmem:[%s1072 + $0x7a] sm:$0xff]
      %v1528 = vld [vmem:[%s1072 + $0x82] sm:$0xff]
      %v1529 = vld [vmem:[%s1072 + $0x92] sm:$0xff]
      %v1530 = vld [vmem:[%s1072 + $0x9a] sm:$0xff]
      %v1531 = vld [vmem:[%s1072 + $0xaa] sm:$0xff]
      %v1532 = vld [vmem:[%s1072 + $0xb2] sm:$0xff]
      %v1533 = vld [vmem:[%s1072 + $0xc2] sm:$0xff]
      %v1534 = vld [vmem:[%s1072 + $0xca] sm:$0xff]
      %v1535 = vld [vmem:[%s1072 + $0xda] sm:$0xff]
      %v1536 = vld [vmem:[%s1072 + $0xe2] sm:$0xff]
      %v1537 = vld [vmem:[%s1072 + $0xf2] sm:$0xff]
      %v1538 = vld [vmem:[%s1072 + $0xfa] sm:$0xff]
      %v1539 = vld [vmem:[%s1072 + $0x10a] sm:$0xff]
      %v1540 = vld [vmem:[%s1072 + $0x112] sm:$0xff]
      %v1541 = vld [vmem:[%s1072 + $0x122] sm:$0xff]
      %v1542 = vld [vmem:[%s1072 + $0x12a] sm:$0xff]
      %v1543 = vld [vmem:[%s1072 + $0x13a] sm:$0xff]
      %v1544 = vld [vmem:[%s1072 + $0x142] sm:$0xff]
      %v1545 = vld [vmem:[%s1072 + $0x152] sm:$0xff]
      %v1546 = vld [vmem:[%s1072 + $0x15a] sm:$0xff]
      %v1547 = vld [vmem:[%s1072 + $0x16a] sm:$0xff]
      %v1548 = vld [vmem:[%s1072 + $0x172] sm:$0xff]
      %v1549 = vpack.c.bf16 %v1518, %v1517
      %v1550 = vpack.c.bf16 %v1520, %v1519
      %v1551 = vpack.c.bf16 %v1522, %v1521
      %v1552 = vpack.c.bf16 %v1524, %v1523
      %v1553 = vpack.c.bf16 %v1526, %v1525
      %v1554 = vpack.c.bf16 %v1528, %v1527
      %v1555 = vpack.c.bf16 %v1530, %v1529
      %v1556 = vpack.c.bf16 %v1532, %v1531
      %v1557 = vpack.c.bf16 %v1534, %v1533
      %v1558 = vpack.c.bf16 %v1536, %v1535
      %v1559 = vpack.c.bf16 %v1538, %v1537
      %v1560 = vpack.c.bf16 %v1540, %v1539
      %v1561 = vpack.c.bf16 %v1542, %v1541
      %v1562 = vpack.c.bf16 %v1544, %v1543
      %v1563 = vpack.c.bf16 %v1546, %v1545
      %v1564 = vpack.c.bf16 %v1548, %v1547
      %s1565 = scalar_lea.vmem %s1, 10
      %v1566 = vld [vmem:[%s1565] sm:$0x3]
      %v1568 = vsel %vm565, %v1549, 0
      %v1571 = vsel %vm565, %v1550, 0
      %v1574 = vsel %vm565, %v1551, 0
      %v1577 = vsel %vm565, %v1552, 0
      %v1580 = vsel %vm565, %v1553, 0
      %v1583 = vsel %vm565, %v1554, 0
      %v1586 = vsel %vm565, %v1555, 0
      %v1589 = vsel %vm565, %v1556, 0
      %v1592 = vsel %vm565, %v1557, 0
      %v1595 = vsel %vm565, %v1558, 0
      %v1598 = vsel %vm565, %v1559, 0
      %v1601 = vsel %vm565, %v1560, 0
      %v1604 = vsel %vm565, %v1561, 0
      %v1607 = vsel %vm565, %v1562, 0
      %v1610 = vsel %vm565, %v1563, 0
      %v1613 = vsel %vm565, %v1564, 0
      %v1616 = vand.u32 %v1566, %v617
      %1618 = vmatpush.bf16.msra.mxu0 0
      %1619 = vmatpush.bf16.msra.mxu0 0
      %1620 = vmatpush.bf16.msra.mxu0 0
      %1621 = vmatpush.bf16.msra.mxu0 0
      %1622 = vmatpush.bf16.msra.mxu0 0
      %1623 = vmatpush.bf16.msra.mxu0 0
      %1624 = vmatpush.bf16.msra.mxu0 0
      %1625 = vmatpush.bf16.msra.mxu0 %v1616
      %1626 = vmatmul.bf16.gmra.mxu0 %v1568
      %v1627 = vpop.f32.mrf.mxu0
      %v1628 = vadd.f32 0.0, %v1627
      %v1629 = vpop.f32.mrf.mxu0
      %v1630 = vadd.f32 0.0, %v1629
      %1631 = vmatmul.bf16.gmra.mxu0 %v1571
      %v1632 = vpop.f32.mrf.mxu0
      %v1633 = vadd.f32 0.0, %v1632
      %v1634 = vpop.f32.mrf.mxu0
      %v1635 = vadd.f32 0.0, %v1634
      %1636 = vmatmul.bf16.gmra.mxu0 %v1574
      %v1637 = vpop.f32.mrf.mxu0
      %v1638 = vadd.f32 0.0, %v1637
      %v1639 = vpop.f32.mrf.mxu0
      %v1640 = vadd.f32 0.0, %v1639
      %1641 = vmatmul.bf16.gmra.mxu0 %v1577
      %v1642 = vpop.f32.mrf.mxu0
      %v1643 = vadd.f32 0.0, %v1642
      %v1644 = vpop.f32.mrf.mxu0
      %v1645 = vadd.f32 0.0, %v1644
      %1646 = vmatmul.bf16.gmra.mxu0 %v1580
      %v1647 = vpop.f32.mrf.mxu0
      %v1648 = vadd.f32 0.0, %v1647
      %v1649 = vpop.f32.mrf.mxu0
      %v1650 = vadd.f32 0.0, %v1649
      %1651 = vmatmul.bf16.gmra.mxu0 %v1583
      %v1652 = vpop.f32.mrf.mxu0
      %v1653 = vadd.f32 0.0, %v1652
      %v1654 = vpop.f32.mrf.mxu0
      %v1655 = vadd.f32 0.0, %v1654
      %1656 = vmatmul.bf16.gmra.mxu0 %v1586
      %v1657 = vpop.f32.mrf.mxu0
      %v1658 = vadd.f32 0.0, %v1657
      %v1659 = vpop.f32.mrf.mxu0
      %v1660 = vadd.f32 0.0, %v1659
      %1661 = vmatmul.bf16.gmra.mxu0 %v1589
      %v1662 = vpop.f32.mrf.mxu0
      %v1663 = vadd.f32 0.0, %v1662
      %v1664 = vpop.f32.mrf.mxu0
      %v1665 = vadd.f32 0.0, %v1664
      %1666 = vmatmul.bf16.gmra.mxu0 %v1592
      %v1667 = vpop.f32.mrf.mxu0
      %v1668 = vadd.f32 0.0, %v1667
      %v1669 = vpop.f32.mrf.mxu0
      %v1670 = vadd.f32 0.0, %v1669
      %1671 = vmatmul.bf16.gmra.mxu0 %v1595
      %v1672 = vpop.f32.mrf.mxu0
      %v1673 = vadd.f32 0.0, %v1672
      %v1674 = vpop.f32.mrf.mxu0
      %v1675 = vadd.f32 0.0, %v1674
      %1676 = vmatmul.bf16.gmra.mxu0 %v1598
      %v1677 = vpop.f32.mrf.mxu0
      %v1678 = vadd.f32 0.0, %v1677
      %v1679 = vpop.f32.mrf.mxu0
      %v1680 = vadd.f32 0.0, %v1679
      %1681 = vmatmul.bf16.gmra.mxu0 %v1601
      %v1682 = vpop.f32.mrf.mxu0
      %v1683 = vadd.f32 0.0, %v1682
      %v1684 = vpop.f32.mrf.mxu0
      %v1685 = vadd.f32 0.0, %v1684
      %1686 = vmatmul.bf16.gmra.mxu0 %v1604
      %v1687 = vpop.f32.mrf.mxu0
      %v1688 = vadd.f32 0.0, %v1687
      %v1689 = vpop.f32.mrf.mxu0
      %v1690 = vadd.f32 0.0, %v1689
      %1691 = vmatmul.bf16.gmra.mxu0 %v1607
      %v1692 = vpop.f32.mrf.mxu0
      %v1693 = vadd.f32 0.0, %v1692
      %v1694 = vpop.f32.mrf.mxu0
      %v1695 = vadd.f32 0.0, %v1694
      %1696 = vmatmul.bf16.gmra.mxu0 %v1610
      %v1697 = vpop.f32.mrf.mxu0
      %v1698 = vadd.f32 0.0, %v1697
      %v1699 = vpop.f32.mrf.mxu0
      %v1700 = vadd.f32 0.0, %v1699
      %1701 = vmatmul.bf16.gmra.mxu0 %v1613
      %v1702 = vpop.f32.mrf.mxu0
      %v1703 = vadd.f32 0.0, %v1702
      %v1704 = vpop.f32.mrf.mxu0
      %v1705 = vadd.f32 0.0, %v1704
      %1706 = vdwg.mxu0
      %v1707 = vadd.f32 %v1485, %v1628
      %v1708 = vadd.f32 %v1486, %v1630
      %v1709 = vadd.f32 %v1487, %v1633
      %v1710 = vadd.f32 %v1488, %v1635
      %v1711 = vadd.f32 %v1489, %v1638
      %v1712 = vadd.f32 %v1490, %v1640
      %v1713 = vadd.f32 %v1491, %v1643
      %v1714 = vadd.f32 %v1492, %v1645
      %v1715 = vadd.f32 %v1493, %v1648
      %v1716 = vadd.f32 %v1494, %v1650
      %v1717 = vadd.f32 %v1495, %v1653
      %v1718 = vadd.f32 %v1496, %v1655
      %v1719 = vadd.f32 %v1497, %v1658
      %v1720 = vadd.f32 %v1498, %v1660
      %v1721 = vadd.f32 %v1499, %v1663
      %v1722 = vadd.f32 %v1500, %v1665
      %v1723 = vadd.f32 %v1501, %v1668
      %v1724 = vadd.f32 %v1502, %v1670
      %v1725 = vadd.f32 %v1503, %v1673
      %v1726 = vadd.f32 %v1504, %v1675
      %v1727 = vadd.f32 %v1505, %v1678
      %v1728 = vadd.f32 %v1506, %v1680
      %v1729 = vadd.f32 %v1507, %v1683
      %v1730 = vadd.f32 %v1508, %v1685
      %v1731 = vadd.f32 %v1509, %v1688
      %v1732 = vadd.f32 %v1510, %v1690
      %v1733 = vadd.f32 %v1511, %v1693
      %v1734 = vadd.f32 %v1512, %v1695
      %v1735 = vadd.f32 %v1513, %v1698
      %v1736 = vadd.f32 %v1514, %v1700
      %v1737 = vadd.f32 %v1515, %v1703
      %v1738 = vadd.f32 %v1516, %v1705
      %s1739 = scalar_lea.vmem %s328, 48
      %v1740 = vld [vmem:[%s1739] sm:$0xff]
      %v1741 = vld [vmem:[%s1739 + $0x8] sm:$0xff]
      %v1742 = vld [vmem:[%s1739 + $0x18] sm:$0xff]
      %v1743 = vld [vmem:[%s1739 + $0x20] sm:$0xff]
      %v1744 = vld [vmem:[%s1739 + $0x30] sm:$0xff]
      %v1745 = vld [vmem:[%s1739 + $0x38] sm:$0xff]
      %v1746 = vld [vmem:[%s1739 + $0x48] sm:$0xff]
      %v1747 = vld [vmem:[%s1739 + $0x50] sm:$0xff]
      %v1748 = vld [vmem:[%s1739 + $0x60] sm:$0xff]
      %v1749 = vld [vmem:[%s1739 + $0x68] sm:$0xff]
      %v1750 = vld [vmem:[%s1739 + $0x78] sm:$0xff]
      %v1751 = vld [vmem:[%s1739 + $0x80] sm:$0xff]
      %v1752 = vld [vmem:[%s1739 + $0x90] sm:$0xff]
      %v1753 = vld [vmem:[%s1739 + $0x98] sm:$0xff]
      %v1754 = vld [vmem:[%s1739 + $0xa8] sm:$0xff]
      %v1755 = vld [vmem:[%s1739 + $0xb0] sm:$0xff]
      %v1756 = vld [vmem:[%s1739 + $0xc0] sm:$0xff]
      %v1757 = vld [vmem:[%s1739 + $0xc8] sm:$0xff]
      %v1758 = vld [vmem:[%s1739 + $0xd8] sm:$0xff]
      %v1759 = vld [vmem:[%s1739 + $0xe0] sm:$0xff]
      %v1760 = vld [vmem:[%s1739 + $0xf0] sm:$0xff]
      %v1761 = vld [vmem:[%s1739 + $0xf8] sm:$0xff]
      %v1762 = vld [vmem:[%s1739 + $0x108] sm:$0xff]
      %v1763 = vld [vmem:[%s1739 + $0x110] sm:$0xff]
      %v1764 = vld [vmem:[%s1739 + $0x120] sm:$0xff]
      %v1765 = vld [vmem:[%s1739 + $0x128] sm:$0xff]
      %v1766 = vld [vmem:[%s1739 + $0x138] sm:$0xff]
      %v1767 = vld [vmem:[%s1739 + $0x140] sm:$0xff]
      %v1768 = vld [vmem:[%s1739 + $0x150] sm:$0xff]
      %v1769 = vld [vmem:[%s1739 + $0x158] sm:$0xff]
      %v1770 = vld [vmem:[%s1739 + $0x168] sm:$0xff]
      %v1771 = vld [vmem:[%s1739 + $0x170] sm:$0xff]
      %v1772 = vpack.c.bf16 %v1741, %v1740
      %v1773 = vpack.c.bf16 %v1743, %v1742
      %v1774 = vpack.c.bf16 %v1745, %v1744
      %v1775 = vpack.c.bf16 %v1747, %v1746
      %v1776 = vpack.c.bf16 %v1749, %v1748
      %v1777 = vpack.c.bf16 %v1751, %v1750
      %v1778 = vpack.c.bf16 %v1753, %v1752
      %v1779 = vpack.c.bf16 %v1755, %v1754
      %v1780 = vpack.c.bf16 %v1757, %v1756
      %v1781 = vpack.c.bf16 %v1759, %v1758
      %v1782 = vpack.c.bf16 %v1761, %v1760
      %v1783 = vpack.c.bf16 %v1763, %v1762
      %v1784 = vpack.c.bf16 %v1765, %v1764
      %v1785 = vpack.c.bf16 %v1767, %v1766
      %v1786 = vpack.c.bf16 %v1769, %v1768
      %v1787 = vpack.c.bf16 %v1771, %v1770
      %s1788 = scalar_lea.vmem %s1, 12
      %v1789 = vld [vmem:[%s1788] sm:$0x3]
      %v1791 = vsel %vm565, %v1772, 0
      %v1794 = vsel %vm565, %v1773, 0
      %v1797 = vsel %vm565, %v1774, 0
      %v1800 = vsel %vm565, %v1775, 0
      %v1803 = vsel %vm565, %v1776, 0
      %v1806 = vsel %vm565, %v1777, 0
      %v1809 = vsel %vm565, %v1778, 0
      %v1812 = vsel %vm565, %v1779, 0
      %v1815 = vsel %vm565, %v1780, 0
      %v1818 = vsel %vm565, %v1781, 0
      %v1821 = vsel %vm565, %v1782, 0
      %v1824 = vsel %vm565, %v1783, 0
      %v1827 = vsel %vm565, %v1784, 0
      %v1830 = vsel %vm565, %v1785, 0
      %v1833 = vsel %vm565, %v1786, 0
      %v1836 = vsel %vm565, %v1787, 0
      %v1839 = vand.u32 %v1789, %v617
      %1841 = vmatpush.bf16.msra.mxu0 0
      %1842 = vmatpush.bf16.msra.mxu0 0
      %1843 = vmatpush.bf16.msra.mxu0 0
      %1844 = vmatpush.bf16.msra.mxu0 0
      %1845 = vmatpush.bf16.msra.mxu0 0
      %1846 = vmatpush.bf16.msra.mxu0 0
      %1847 = vmatpush.bf16.msra.mxu0 0
      %1848 = vmatpush.bf16.msra.mxu0 %v1839
      %1849 = vmatmul.bf16.gmra.mxu0 %v1791
      %v1850 = vpop.f32.mrf.mxu0
      %v1851 = vadd.f32 0.0, %v1850
      %v1852 = vpop.f32.mrf.mxu0
      %v1853 = vadd.f32 0.0, %v1852
      %1854 = vmatmul.bf16.gmra.mxu0 %v1794
      %v1855 = vpop.f32.mrf.mxu0
      %v1856 = vadd.f32 0.0, %v1855
      %v1857 = vpop.f32.mrf.mxu0
      %v1858 = vadd.f32 0.0, %v1857
      %1859 = vmatmul.bf16.gmra.mxu0 %v1797
      %v1860 = vpop.f32.mrf.mxu0
      %v1861 = vadd.f32 0.0, %v1860
      %v1862 = vpop.f32.mrf.mxu0
      %v1863 = vadd.f32 0.0, %v1862
      %1864 = vmatmul.bf16.gmra.mxu0 %v1800
      %v1865 = vpop.f32.mrf.mxu0
      %v1866 = vadd.f32 0.0, %v1865
      %v1867 = vpop.f32.mrf.mxu0
      %v1868 = vadd.f32 0.0, %v1867
      %1869 = vmatmul.bf16.gmra.mxu0 %v1803
      %v1870 = vpop.f32.mrf.mxu0
      %v1871 = vadd.f32 0.0, %v1870
      %v1872 = vpop.f32.mrf.mxu0
      %v1873 = vadd.f32 0.0, %v1872
      %1874 = vmatmul.bf16.gmra.mxu0 %v1806
      %v1875 = vpop.f32.mrf.mxu0
      %v1876 = vadd.f32 0.0, %v1875
      %v1877 = vpop.f32.mrf.mxu0
      %v1878 = vadd.f32 0.0, %v1877
      %1879 = vmatmul.bf16.gmra.mxu0 %v1809
      %v1880 = vpop.f32.mrf.mxu0
      %v1881 = vadd.f32 0.0, %v1880
      %v1882 = vpop.f32.mrf.mxu0
      %v1883 = vadd.f32 0.0, %v1882
      %1884 = vmatmul.bf16.gmra.mxu0 %v1812
      %v1885 = vpop.f32.mrf.mxu0
      %v1886 = vadd.f32 0.0, %v1885
      %v1887 = vpop.f32.mrf.mxu0
      %v1888 = vadd.f32 0.0, %v1887
      %1889 = vmatmul.bf16.gmra.mxu0 %v1815
      %v1890 = vpop.f32.mrf.mxu0
      %v1891 = vadd.f32 0.0, %v1890
      %v1892 = vpop.f32.mrf.mxu0
      %v1893 = vadd.f32 0.0, %v1892
      %1894 = vmatmul.bf16.gmra.mxu0 %v1818
      %v1895 = vpop.f32.mrf.mxu0
      %v1896 = vadd.f32 0.0, %v1895
      %v1897 = vpop.f32.mrf.mxu0
      %v1898 = vadd.f32 0.0, %v1897
      %1899 = vmatmul.bf16.gmra.mxu0 %v1821
      %v1900 = vpop.f32.mrf.mxu0
      %v1901 = vadd.f32 0.0, %v1900
      %v1902 = vpop.f32.mrf.mxu0
      %v1903 = vadd.f32 0.0, %v1902
      %1904 = vmatmul.bf16.gmra.mxu0 %v1824
      %v1905 = vpop.f32.mrf.mxu0
      %v1906 = vadd.f32 0.0, %v1905
      %v1907 = vpop.f32.mrf.mxu0
      %v1908 = vadd.f32 0.0, %v1907
      %1909 = vmatmul.bf16.gmra.mxu0 %v1827
      %v1910 = vpop.f32.mrf.mxu0
      %v1911 = vadd.f32 0.0, %v1910
      %v1912 = vpop.f32.mrf.mxu0
      %v1913 = vadd.f32 0.0, %v1912
      %1914 = vmatmul.bf16.gmra.mxu0 %v1830
      %v1915 = vpop.f32.mrf.mxu0
      %v1916 = vadd.f32 0.0, %v1915
      %v1917 = vpop.f32.mrf.mxu0
      %v1918 = vadd.f32 0.0, %v1917
      %1919 = vmatmul.bf16.gmra.mxu0 %v1833
      %v1920 = vpop.f32.mrf.mxu0
      %v1921 = vadd.f32 0.0, %v1920
      %v1922 = vpop.f32.mrf.mxu0
      %v1923 = vadd.f32 0.0, %v1922
      %1924 = vmatmul.bf16.gmra.mxu0 %v1836
      %v1925 = vpop.f32.mrf.mxu0
      %v1926 = vadd.f32 0.0, %v1925
      %v1927 = vpop.f32.mrf.mxu0
      %v1928 = vadd.f32 0.0, %v1927
      %1929 = vdwg.mxu0
      %v1930 = vadd.f32 %v1707, %v1851
      %v1931 = vadd.f32 %v1708, %v1853
      %v1932 = vadd.f32 %v1709, %v1856
      %v1933 = vadd.f32 %v1710, %v1858
      %v1934 = vadd.f32 %v1711, %v1861
      %v1935 = vadd.f32 %v1712, %v1863
      %v1936 = vadd.f32 %v1713, %v1866
      %v1937 = vadd.f32 %v1714, %v1868
      %v1938 = vadd.f32 %v1715, %v1871
      %v1939 = vadd.f32 %v1716, %v1873
      %v1940 = vadd.f32 %v1717, %v1876
      %v1941 = vadd.f32 %v1718, %v1878
      %v1942 = vadd.f32 %v1719, %v1881
      %v1943 = vadd.f32 %v1720, %v1883
      %v1944 = vadd.f32 %v1721, %v1886
      %v1945 = vadd.f32 %v1722, %v1888
      %v1946 = vadd.f32 %v1723, %v1891
      %v1947 = vadd.f32 %v1724, %v1893
      %v1948 = vadd.f32 %v1725, %v1896
      %v1949 = vadd.f32 %v1726, %v1898
      %v1950 = vadd.f32 %v1727, %v1901
      %v1951 = vadd.f32 %v1728, %v1903
      %v1952 = vadd.f32 %v1729, %v1906
      %v1953 = vadd.f32 %v1730, %v1908
      %v1954 = vadd.f32 %v1731, %v1911
      %v1955 = vadd.f32 %v1732, %v1913
      %v1956 = vadd.f32 %v1733, %v1916
      %v1957 = vadd.f32 %v1734, %v1918
      %v1958 = vadd.f32 %v1735, %v1921
      %v1959 = vadd.f32 %v1736, %v1923
      %v1960 = vadd.f32 %v1737, %v1926
      %v1961 = vadd.f32 %v1738, %v1928
      %v1962 = vld [vmem:[%s1739 + $0x1] sm:$0xff]
      %v1963 = vld [vmem:[%s1739 + $0x9] sm:$0xff]
      %v1964 = vld [vmem:[%s1739 + $0x19] sm:$0xff]
      %v1965 = vld [vmem:[%s1739 + $0x21] sm:$0xff]
      %v1966 = vld [vmem:[%s1739 + $0x31] sm:$0xff]
      %v1967 = vld [vmem:[%s1739 + $0x39] sm:$0xff]
      %v1968 = vld [vmem:[%s1739 + $0x49] sm:$0xff]
      %v1969 = vld [vmem:[%s1739 + $0x51] sm:$0xff]
      %v1970 = vld [vmem:[%s1739 + $0x61] sm:$0xff]
      %v1971 = vld [vmem:[%s1739 + $0x69] sm:$0xff]
      %v1972 = vld [vmem:[%s1739 + $0x79] sm:$0xff]
      %v1973 = vld [vmem:[%s1739 + $0x81] sm:$0xff]
      %v1974 = vld [vmem:[%s1739 + $0x91] sm:$0xff]
      %v1975 = vld [vmem:[%s1739 + $0x99] sm:$0xff]
      %v1976 = vld [vmem:[%s1739 + $0xa9] sm:$0xff]
      %v1977 = vld [vmem:[%s1739 + $0xb1] sm:$0xff]
      %v1978 = vld [vmem:[%s1739 + $0xc1] sm:$0xff]
      %v1979 = vld [vmem:[%s1739 + $0xc9] sm:$0xff]
      %v1980 = vld [vmem:[%s1739 + $0xd9] sm:$0xff]
      %v1981 = vld [vmem:[%s1739 + $0xe1] sm:$0xff]
      %v1982 = vld [vmem:[%s1739 + $0xf1] sm:$0xff]
      %v1983 = vld [vmem:[%s1739 + $0xf9] sm:$0xff]
      %v1984 = vld [vmem:[%s1739 + $0x109] sm:$0xff]
      %v1985 = vld [vmem:[%s1739 + $0x111] sm:$0xff]
      %v1986 = vld [vmem:[%s1739 + $0x121] sm:$0xff]
      %v1987 = vld [vmem:[%s1739 + $0x129] sm:$0xff]
      %v1988 = vld [vmem:[%s1739 + $0x139] sm:$0xff]
      %v1989 = vld [vmem:[%s1739 + $0x141] sm:$0xff]
      %v1990 = vld [vmem:[%s1739 + $0x151] sm:$0xff]
      %v1991 = vld [vmem:[%s1739 + $0x159] sm:$0xff]
      %v1992 = vld [vmem:[%s1739 + $0x169] sm:$0xff]
      %v1993 = vld [vmem:[%s1739 + $0x171] sm:$0xff]
      %v1994 = vpack.c.bf16 %v1963, %v1962
      %v1995 = vpack.c.bf16 %v1965, %v1964
      %v1996 = vpack.c.bf16 %v1967, %v1966
      %v1997 = vpack.c.bf16 %v1969, %v1968
      %v1998 = vpack.c.bf16 %v1971, %v1970
      %v1999 = vpack.c.bf16 %v1973, %v1972
      %v2000 = vpack.c.bf16 %v1975, %v1974
      %v2001 = vpack.c.bf16 %v1977, %v1976
      %v2002 = vpack.c.bf16 %v1979, %v1978
      %v2003 = vpack.c.bf16 %v1981, %v1980
      %v2004 = vpack.c.bf16 %v1983, %v1982
      %v2005 = vpack.c.bf16 %v1985, %v1984
      %v2006 = vpack.c.bf16 %v1987, %v1986
      %v2007 = vpack.c.bf16 %v1989, %v1988
      %v2008 = vpack.c.bf16 %v1991, %v1990
      %v2009 = vpack.c.bf16 %v1993, %v1992
      %s2010 = scalar_lea.vmem %s1, 14
      %v2011 = vld [vmem:[%s2010] sm:$0x3]
      %v2013 = vsel %vm565, %v1994, 0
      %v2016 = vsel %vm565, %v1995, 0
      %v2019 = vsel %vm565, %v1996, 0
      %v2022 = vsel %vm565, %v1997, 0
      %v2025 = vsel %vm565, %v1998, 0
      %v2028 = vsel %vm565, %v1999, 0
      %v2031 = vsel %vm565, %v2000, 0
      %v2034 = vsel %vm565, %v2001, 0
      %v2037 = vsel %vm565, %v2002, 0
      %v2040 = vsel %vm565, %v2003, 0
      %v2043 = vsel %vm565, %v2004, 0
      %v2046 = vsel %vm565, %v2005, 0
      %v2049 = vsel %vm565, %v2006, 0
      %v2052 = vsel %vm565, %v2007, 0
      %v2055 = vsel %vm565, %v2008, 0
      %v2058 = vsel %vm565, %v2009, 0
      %v2061 = vand.u32 %v2011, %v617
      %2063 = vmatpush.bf16.msra.mxu0 0
      %2064 = vmatpush.bf16.msra.mxu0 0
      %2065 = vmatpush.bf16.msra.mxu0 0
      %2066 = vmatpush.bf16.msra.mxu0 0
      %2067 = vmatpush.bf16.msra.mxu0 0
      %2068 = vmatpush.bf16.msra.mxu0 0
      %2069 = vmatpush.bf16.msra.mxu0 0
      %2070 = vmatpush.bf16.msra.mxu0 %v2061
      %2071 = vmatmul.bf16.gmra.mxu0 %v2013
      %v2072 = vpop.f32.mrf.mxu0
      %v2073 = vadd.f32 0.0, %v2072
      %v2074 = vpop.f32.mrf.mxu0
      %v2075 = vadd.f32 0.0, %v2074
      %2076 = vmatmul.bf16.gmra.mxu0 %v2016
      %v2077 = vpop.f32.mrf.mxu0
      %v2078 = vadd.f32 0.0, %v2077
      %v2079 = vpop.f32.mrf.mxu0
      %v2080 = vadd.f32 0.0, %v2079
      %2081 = vmatmul.bf16.gmra.mxu0 %v2019
      %v2082 = vpop.f32.mrf.mxu0
      %v2083 = vadd.f32 0.0, %v2082
      %v2084 = vpop.f32.mrf.mxu0
      %v2085 = vadd.f32 0.0, %v2084
      %2086 = vmatmul.bf16.gmra.mxu0 %v2022
      %v2087 = vpop.f32.mrf.mxu0
      %v2088 = vadd.f32 0.0, %v2087
      %v2089 = vpop.f32.mrf.mxu0
      %v2090 = vadd.f32 0.0, %v2089
      %2091 = vmatmul.bf16.gmra.mxu0 %v2025
      %v2092 = vpop.f32.mrf.mxu0
      %v2093 = vadd.f32 0.0, %v2092
      %v2094 = vpop.f32.mrf.mxu0
      %v2095 = vadd.f32 0.0, %v2094
      %2096 = vmatmul.bf16.gmra.mxu0 %v2028
      %v2097 = vpop.f32.mrf.mxu0
      %v2098 = vadd.f32 0.0, %v2097
      %v2099 = vpop.f32.mrf.mxu0
      %v2100 = vadd.f32 0.0, %v2099
      %2101 = vmatmul.bf16.gmra.mxu0 %v2031
      %v2102 = vpop.f32.mrf.mxu0
      %v2103 = vadd.f32 0.0, %v2102
      %v2104 = vpop.f32.mrf.mxu0
      %v2105 = vadd.f32 0.0, %v2104
      %2106 = vmatmul.bf16.gmra.mxu0 %v2034
      %v2107 = vpop.f32.mrf.mxu0
      %v2108 = vadd.f32 0.0, %v2107
      %v2109 = vpop.f32.mrf.mxu0
      %v2110 = vadd.f32 0.0, %v2109
      %2111 = vmatmul.bf16.gmra.mxu0 %v2037
      %v2112 = vpop.f32.mrf.mxu0
      %v2113 = vadd.f32 0.0, %v2112
      %v2114 = vpop.f32.mrf.mxu0
      %v2115 = vadd.f32 0.0, %v2114
      %2116 = vmatmul.bf16.gmra.mxu0 %v2040
      %v2117 = vpop.f32.mrf.mxu0
      %v2118 = vadd.f32 0.0, %v2117
      %v2119 = vpop.f32.mrf.mxu0
      %v2120 = vadd.f32 0.0, %v2119
      %2121 = vmatmul.bf16.gmra.mxu0 %v2043
      %v2122 = vpop.f32.mrf.mxu0
      %v2123 = vadd.f32 0.0, %v2122
      %v2124 = vpop.f32.mrf.mxu0
      %v2125 = vadd.f32 0.0, %v2124
      %2126 = vmatmul.bf16.gmra.mxu0 %v2046
      %v2127 = vpop.f32.mrf.mxu0
      %v2128 = vadd.f32 0.0, %v2127
      %v2129 = vpop.f32.mrf.mxu0
      %v2130 = vadd.f32 0.0, %v2129
      %2131 = vmatmul.bf16.gmra.mxu0 %v2049
      %v2132 = vpop.f32.mrf.mxu0
      %v2133 = vadd.f32 0.0, %v2132
      %v2134 = vpop.f32.mrf.mxu0
      %v2135 = vadd.f32 0.0, %v2134
      %2136 = vmatmul.bf16.gmra.mxu0 %v2052
      %v2137 = vpop.f32.mrf.mxu0
      %v2138 = vadd.f32 0.0, %v2137
      %v2139 = vpop.f32.mrf.mxu0
      %v2140 = vadd.f32 0.0, %v2139
      %2141 = vmatmul.bf16.gmra.mxu0 %v2055
      %v2142 = vpop.f32.mrf.mxu0
      %v2143 = vadd.f32 0.0, %v2142
      %v2144 = vpop.f32.mrf.mxu0
      %v2145 = vadd.f32 0.0, %v2144
      %2146 = vmatmul.bf16.gmra.mxu0 %v2058
      %v2147 = vpop.f32.mrf.mxu0
      %v2148 = vadd.f32 0.0, %v2147
      %v2149 = vpop.f32.mrf.mxu0
      %v2150 = vadd.f32 0.0, %v2149
      %2151 = vdwg.mxu0
      %v2152 = vadd.f32 %v1930, %v2073
      %v2153 = vadd.f32 %v1931, %v2075
      %v2154 = vadd.f32 %v1932, %v2078
      %v2155 = vadd.f32 %v1933, %v2080
      %v2156 = vadd.f32 %v1934, %v2083
      %v2157 = vadd.f32 %v1935, %v2085
      %v2158 = vadd.f32 %v1936, %v2088
      %v2159 = vadd.f32 %v1937, %v2090
      %v2160 = vadd.f32 %v1938, %v2093
      %v2161 = vadd.f32 %v1939, %v2095
      %v2162 = vadd.f32 %v1940, %v2098
      %v2163 = vadd.f32 %v1941, %v2100
      %v2164 = vadd.f32 %v1942, %v2103
      %v2165 = vadd.f32 %v1943, %v2105
      %v2166 = vadd.f32 %v1944, %v2108
      %v2167 = vadd.f32 %v1945, %v2110
      %v2168 = vadd.f32 %v1946, %v2113
      %v2169 = vadd.f32 %v1947, %v2115
      %v2170 = vadd.f32 %v1948, %v2118
      %v2171 = vadd.f32 %v1949, %v2120
      %v2172 = vadd.f32 %v1950, %v2123
      %v2173 = vadd.f32 %v1951, %v2125
      %v2174 = vadd.f32 %v1952, %v2128
      %v2175 = vadd.f32 %v1953, %v2130
      %v2176 = vadd.f32 %v1954, %v2133
      %v2177 = vadd.f32 %v1955, %v2135
      %v2178 = vadd.f32 %v1956, %v2138
      %v2179 = vadd.f32 %v1957, %v2140
      %v2180 = vadd.f32 %v1958, %v2143
      %v2181 = vadd.f32 %v1959, %v2145
      %v2182 = vadd.f32 %v1960, %v2148
      %v2183 = vadd.f32 %v1961, %v2150
      %v2184 = vld [vmem:[%s1739 + $0x2] sm:$0xff]
      %v2185 = vld [vmem:[%s1739 + $0xa] sm:$0xff]
      %v2186 = vld [vmem:[%s1739 + $0x1a] sm:$0xff]
      %v2187 = vld [vmem:[%s1739 + $0x22] sm:$0xff]
      %v2188 = vld [vmem:[%s1739 + $0x32] sm:$0xff]
      %v2189 = vld [vmem:[%s1739 + $0x3a] sm:$0xff]
      %v2190 = vld [vmem:[%s1739 + $0x4a] sm:$0xff]
      %v2191 = vld [vmem:[%s1739 + $0x52] sm:$0xff]
      %v2192 = vld [vmem:[%s1739 + $0x62] sm:$0xff]
      %v2193 = vld [vmem:[%s1739 + $0x6a] sm:$0xff]
      %v2194 = vld [vmem:[%s1739 + $0x7a] sm:$0xff]
      %v2195 = vld [vmem:[%s1739 + $0x82] sm:$0xff]
      %v2196 = vld [vmem:[%s1739 + $0x92] sm:$0xff]
      %v2197 = vld [vmem:[%s1739 + $0x9a] sm:$0xff]
      %v2198 = vld [vmem:[%s1739 + $0xaa] sm:$0xff]
      %v2199 = vld [vmem:[%s1739 + $0xb2] sm:$0xff]
      %v2200 = vld [vmem:[%s1739 + $0xc2] sm:$0xff]
      %v2201 = vld [vmem:[%s1739 + $0xca] sm:$0xff]
      %v2202 = vld [vmem:[%s1739 + $0xda] sm:$0xff]
      %v2203 = vld [vmem:[%s1739 + $0xe2] sm:$0xff]
      %v2204 = vld [vmem:[%s1739 + $0xf2] sm:$0xff]
      %v2205 = vld [vmem:[%s1739 + $0xfa] sm:$0xff]
      %v2206 = vld [vmem:[%s1739 + $0x10a] sm:$0xff]
      %v2207 = vld [vmem:[%s1739 + $0x112] sm:$0xff]
      %v2208 = vld [vmem:[%s1739 + $0x122] sm:$0xff]
      %v2209 = vld [vmem:[%s1739 + $0x12a] sm:$0xff]
      %v2210 = vld [vmem:[%s1739 + $0x13a] sm:$0xff]
      %v2211 = vld [vmem:[%s1739 + $0x142] sm:$0xff]
      %v2212 = vld [vmem:[%s1739 + $0x152] sm:$0xff]
      %v2213 = vld [vmem:[%s1739 + $0x15a] sm:$0xff]
      %v2214 = vld [vmem:[%s1739 + $0x16a] sm:$0xff]
      %v2215 = vld [vmem:[%s1739 + $0x172] sm:$0xff]
      %v2216 = vpack.c.bf16 %v2185, %v2184
      %v2217 = vpack.c.bf16 %v2187, %v2186
      %v2218 = vpack.c.bf16 %v2189, %v2188
      %v2219 = vpack.c.bf16 %v2191, %v2190
      %v2220 = vpack.c.bf16 %v2193, %v2192
      %v2221 = vpack.c.bf16 %v2195, %v2194
      %v2222 = vpack.c.bf16 %v2197, %v2196
      %v2223 = vpack.c.bf16 %v2199, %v2198
      %v2224 = vpack.c.bf16 %v2201, %v2200
      %v2225 = vpack.c.bf16 %v2203, %v2202
      %v2226 = vpack.c.bf16 %v2205, %v2204
      %v2227 = vpack.c.bf16 %v2207, %v2206
      %v2228 = vpack.c.bf16 %v2209, %v2208
      %v2229 = vpack.c.bf16 %v2211, %v2210
      %v2230 = vpack.c.bf16 %v2213, %v2212
      %v2231 = vpack.c.bf16 %v2215, %v2214
      %s2232 = scalar_lea.vmem %s1, 16
      %v2233 = vld [vmem:[%s2232] sm:$0x3]
      %v2235 = vsel %vm565, %v2216, 0
      %v2238 = vsel %vm565, %v2217, 0
      %v2241 = vsel %vm565, %v2218, 0
      %v2244 = vsel %vm565, %v2219, 0
      %v2247 = vsel %vm565, %v2220, 0
      %v2250 = vsel %vm565, %v2221, 0
      %v2253 = vsel %vm565, %v2222, 0
      %v2256 = vsel %vm565, %v2223, 0
      %v2259 = vsel %vm565, %v2224, 0
      %v2262 = vsel %vm565, %v2225, 0
      %v2265 = vsel %vm565, %v2226, 0
      %v2268 = vsel %vm565, %v2227, 0
      %v2271 = vsel %vm565, %v2228, 0
      %v2274 = vsel %vm565, %v2229, 0
      %v2277 = vsel %vm565, %v2230, 0
      %v2280 = vsel %vm565, %v2231, 0
      %v2283 = vand.u32 %v2233, %v617
      %2285 = vmatpush.bf16.msra.mxu0 0
      %2286 = vmatpush.bf16.msra.mxu0 0
      %2287 = vmatpush.bf16.msra.mxu0 0
      %2288 = vmatpush.bf16.msra.mxu0 0
      %2289 = vmatpush.bf16.msra.mxu0 0
      %2290 = vmatpush.bf16.msra.mxu0 0
      %2291 = vmatpush.bf16.msra.mxu0 0
      %2292 = vmatpush.bf16.msra.mxu0 %v2283
      %2293 = vmatmul.bf16.gmra.mxu0 %v2235
      %v2294 = vpop.f32.mrf.mxu0
      %v2295 = vadd.f32 0.0, %v2294
      %v2296 = vpop.f32.mrf.mxu0
      %v2297 = vadd.f32 0.0, %v2296
      %2298 = vmatmul.bf16.gmra.mxu0 %v2238
      %v2299 = vpop.f32.mrf.mxu0
      %v2300 = vadd.f32 0.0, %v2299
      %v2301 = vpop.f32.mrf.mxu0
      %v2302 = vadd.f32 0.0, %v2301
      %2303 = vmatmul.bf16.gmra.mxu0 %v2241
      %v2304 = vpop.f32.mrf.mxu0
      %v2305 = vadd.f32 0.0, %v2304
      %v2306 = vpop.f32.mrf.mxu0
      %v2307 = vadd.f32 0.0, %v2306
      %2308 = vmatmul.bf16.gmra.mxu0 %v2244
      %v2309 = vpop.f32.mrf.mxu0
      %v2310 = vadd.f32 0.0, %v2309
      %v2311 = vpop.f32.mrf.mxu0
      %v2312 = vadd.f32 0.0, %v2311
      %2313 = vmatmul.bf16.gmra.mxu0 %v2247
      %v2314 = vpop.f32.mrf.mxu0
      %v2315 = vadd.f32 0.0, %v2314
      %v2316 = vpop.f32.mrf.mxu0
      %v2317 = vadd.f32 0.0, %v2316
      %2318 = vmatmul.bf16.gmra.mxu0 %v2250
      %v2319 = vpop.f32.mrf.mxu0
      %v2320 = vadd.f32 0.0, %v2319
      %v2321 = vpop.f32.mrf.mxu0
      %v2322 = vadd.f32 0.0, %v2321
      %2323 = vmatmul.bf16.gmra.mxu0 %v2253
      %v2324 = vpop.f32.mrf.mxu0
      %v2325 = vadd.f32 0.0, %v2324
      %v2326 = vpop.f32.mrf.mxu0
      %v2327 = vadd.f32 0.0, %v2326
      %2328 = vmatmul.bf16.gmra.mxu0 %v2256
      %v2329 = vpop.f32.mrf.mxu0
      %v2330 = vadd.f32 0.0, %v2329
      %v2331 = vpop.f32.mrf.mxu0
      %v2332 = vadd.f32 0.0, %v2331
      %2333 = vmatmul.bf16.gmra.mxu0 %v2259
      %v2334 = vpop.f32.mrf.mxu0
      %v2335 = vadd.f32 0.0, %v2334
      %v2336 = vpop.f32.mrf.mxu0
      %v2337 = vadd.f32 0.0, %v2336
      %2338 = vmatmul.bf16.gmra.mxu0 %v2262
      %v2339 = vpop.f32.mrf.mxu0
      %v2340 = vadd.f32 0.0, %v2339
      %v2341 = vpop.f32.mrf.mxu0
      %v2342 = vadd.f32 0.0, %v2341
      %2343 = vmatmul.bf16.gmra.mxu0 %v2265
      %v2344 = vpop.f32.mrf.mxu0
      %v2345 = vadd.f32 0.0, %v2344
      %v2346 = vpop.f32.mrf.mxu0
      %v2347 = vadd.f32 0.0, %v2346
      %2348 = vmatmul.bf16.gmra.mxu0 %v2268
      %v2349 = vpop.f32.mrf.mxu0
      %v2350 = vadd.f32 0.0, %v2349
      %v2351 = vpop.f32.mrf.mxu0
      %v2352 = vadd.f32 0.0, %v2351
      %2353 = vmatmul.bf16.gmra.mxu0 %v2271
      %v2354 = vpop.f32.mrf.mxu0
      %v2355 = vadd.f32 0.0, %v2354
      %v2356 = vpop.f32.mrf.mxu0
      %v2357 = vadd.f32 0.0, %v2356
      %2358 = vmatmul.bf16.gmra.mxu0 %v2274
      %v2359 = vpop.f32.mrf.mxu0
      %v2360 = vadd.f32 0.0, %v2359
      %v2361 = vpop.f32.mrf.mxu0
      %v2362 = vadd.f32 0.0, %v2361
      %2363 = vmatmul.bf16.gmra.mxu0 %v2277
      %v2364 = vpop.f32.mrf.mxu0
      %v2365 = vadd.f32 0.0, %v2364
      %v2366 = vpop.f32.mrf.mxu0
      %v2367 = vadd.f32 0.0, %v2366
      %2368 = vmatmul.bf16.gmra.mxu0 %v2280
      %v2369 = vpop.f32.mrf.mxu0
      %v2370 = vadd.f32 0.0, %v2369
      %v2371 = vpop.f32.mrf.mxu0
      %v2372 = vadd.f32 0.0, %v2371
      %2373 = vdwg.mxu0
      %v2374 = vadd.f32 %v2152, %v2295
      %v2375 = vadd.f32 %v2153, %v2297
      %v2376 = vadd.f32 %v2154, %v2300
      %v2377 = vadd.f32 %v2155, %v2302
      %v2378 = vadd.f32 %v2156, %v2305
      %v2379 = vadd.f32 %v2157, %v2307
      %v2380 = vadd.f32 %v2158, %v2310
      %v2381 = vadd.f32 %v2159, %v2312
      %v2382 = vadd.f32 %v2160, %v2315
      %v2383 = vadd.f32 %v2161, %v2317
      %v2384 = vadd.f32 %v2162, %v2320
      %v2385 = vadd.f32 %v2163, %v2322
      %v2386 = vadd.f32 %v2164, %v2325
      %v2387 = vadd.f32 %v2165, %v2327
      %v2388 = vadd.f32 %v2166, %v2330
      %v2389 = vadd.f32 %v2167, %v2332
      %v2390 = vadd.f32 %v2168, %v2335
      %v2391 = vadd.f32 %v2169, %v2337
      %v2392 = vadd.f32 %v2170, %v2340
      %v2393 = vadd.f32 %v2171, %v2342
      %v2394 = vadd.f32 %v2172, %v2345
      %v2395 = vadd.f32 %v2173, %v2347
      %v2396 = vadd.f32 %v2174, %v2350
      %v2397 = vadd.f32 %v2175, %v2352
      %v2398 = vadd.f32 %v2176, %v2355
      %v2399 = vadd.f32 %v2177, %v2357
      %v2400 = vadd.f32 %v2178, %v2360
      %v2401 = vadd.f32 %v2179, %v2362
      %v2402 = vadd.f32 %v2180, %v2365
      %v2403 = vadd.f32 %v2181, %v2367
      %v2404 = vadd.f32 %v2182, %v2370
      %v2405 = vadd.f32 %v2183, %v2372
      %v2406 = vld [vmem:[%s2] sm:$0x1]
      %v2408 = vperm.slane %v2406, 0
      %v2410 = vadd.f32 %v2374, %v2408
      %v2411 = vadd.f32 %v2375, %v2408
      %v2412 = vadd.f32 %v2376, %v2408
      %v2413 = vadd.f32 %v2377, %v2408
      %v2414 = vadd.f32 %v2378, %v2408
      %v2415 = vadd.f32 %v2379, %v2408
      %v2416 = vadd.f32 %v2380, %v2408
      %v2417 = vadd.f32 %v2381, %v2408
      %v2418 = vadd.f32 %v2382, %v2408
      %v2419 = vadd.f32 %v2383, %v2408
      %v2420 = vadd.f32 %v2384, %v2408
      %v2421 = vadd.f32 %v2385, %v2408
      %v2422 = vadd.f32 %v2386, %v2408
      %v2423 = vadd.f32 %v2387, %v2408
      %v2424 = vadd.f32 %v2388, %v2408
      %v2425 = vadd.f32 %v2389, %v2408
      %v2426 = vadd.f32 %v2390, %v2408
      %v2427 = vadd.f32 %v2391, %v2408
      %v2428 = vadd.f32 %v2392, %v2408
      %v2429 = vadd.f32 %v2393, %v2408
      %v2430 = vadd.f32 %v2394, %v2408
      %v2431 = vadd.f32 %v2395, %v2408
      %v2432 = vadd.f32 %v2396, %v2408
      %v2433 = vadd.f32 %v2397, %v2408
      %v2434 = vadd.f32 %v2398, %v2408
      %v2435 = vadd.f32 %v2399, %v2408
      %v2436 = vadd.f32 %v2400, %v2408
      %v2437 = vadd.f32 %v2401, %v2408
      %v2438 = vadd.f32 %v2402, %v2408
      %v2439 = vadd.f32 %v2403, %v2408
      %v2440 = vadd.f32 %v2404, %v2408
      %v2441 = vadd.f32 %v2405, %v2408
      %v2442 = vmax.f32 %v2410, 0.0
      %v2443 = vmax.f32 %v2411, 0.0
      %v2444 = vmax.f32 %v2412, 0.0
      %v2445 = vmax.f32 %v2413, 0.0
      %v2446 = vmax.f32 %v2414, 0.0
      %v2447 = vmax.f32 %v2415, 0.0
      %v2448 = vmax.f32 %v2416, 0.0
      %v2449 = vmax.f32 %v2417, 0.0
      %v2450 = vmax.f32 %v2418, 0.0
      %v2451 = vmax.f32 %v2419, 0.0
      %v2452 = vmax.f32 %v2420, 0.0
      %v2453 = vmax.f32 %v2421, 0.0
      %v2454 = vmax.f32 %v2422, 0.0
      %v2455 = vmax.f32 %v2423, 0.0
      %v2456 = vmax.f32 %v2424, 0.0
      %v2457 = vmax.f32 %v2425, 0.0
      %v2458 = vmax.f32 %v2426, 0.0
      %v2459 = vmax.f32 %v2427, 0.0
      %v2460 = vmax.f32 %v2428, 0.0
      %v2461 = vmax.f32 %v2429, 0.0
      %v2462 = vmax.f32 %v2430, 0.0
      %v2463 = vmax.f32 %v2431, 0.0
      %v2464 = vmax.f32 %v2432, 0.0
      %v2465 = vmax.f32 %v2433, 0.0
      %v2466 = vmax.f32 %v2434, 0.0
      %v2467 = vmax.f32 %v2435, 0.0
      %v2468 = vmax.f32 %v2436, 0.0
      %v2469 = vmax.f32 %v2437, 0.0
      %v2470 = vmax.f32 %v2438, 0.0
      %v2471 = vmax.f32 %v2439, 0.0
      %v2472 = vmax.f32 %v2440, 0.0
      %v2473 = vmax.f32 %v2441, 0.0
      %s2474 = scalar_lea.vmem [#allocation2], 24
      %2475 = vst.msk [vmem:[%s2474 + $0x1] sm:$0xff] %vm334, %v2442
      %2476 = vst.msk [vmem:[%s2474 + $0x9] sm:$0xff] %vm334, %v2443
      %2477 = vst.msk [vmem:[%s2474 + $0x19] sm:$0xff] %vm334, %v2444
      %2478 = vst.msk [vmem:[%s2474 + $0x21] sm:$0xff] %vm334, %v2445
      %2479 = vst.msk [vmem:[%s2474 + $0x31] sm:$0xff] %vm334, %v2446
      %2480 = vst.msk [vmem:[%s2474 + $0x39] sm:$0xff] %vm334, %v2447
      %2481 = vst.msk [vmem:[%s2474 + $0x49] sm:$0xff] %vm334, %v2448
      %2482 = vst.msk [vmem:[%s2474 + $0x51] sm:$0xff] %vm334, %v2449
      %2483 = vst.msk [vmem:[%s2474 + $0x61] sm:$0xff] %vm334, %v2450
      %2484 = vst.msk [vmem:[%s2474 + $0x69] sm:$0xff] %vm334, %v2451
      %2485 = vst.msk [vmem:[%s2474 + $0x79] sm:$0xff] %vm334, %v2452
      %2486 = vst.msk [vmem:[%s2474 + $0x81] sm:$0xff] %vm334, %v2453
      %2487 = vst.msk [vmem:[%s2474 + $0x91] sm:$0xff] %vm334, %v2454
      %2488 = vst.msk [vmem:[%s2474 + $0x99] sm:$0xff] %vm334, %v2455
      %2489 = vst.msk [vmem:[%s2474 + $0xa9] sm:$0xff] %vm334, %v2456
      %2490 = vst.msk [vmem:[%s2474 + $0xb1] sm:$0xff] %vm334, %v2457
      %2491 = vst.msk [vmem:[%s2474 + $0xc1] sm:$0xff] %vm334, %v2458
      %2492 = vst.msk [vmem:[%s2474 + $0xc9] sm:$0xff] %vm334, %v2459
      %2493 = vst.msk [vmem:[%s2474 + $0xd9] sm:$0xff] %vm334, %v2460
      %2494 = vst.msk [vmem:[%s2474 + $0xe1] sm:$0xff] %vm334, %v2461
      %2495 = vst.msk [vmem:[%s2474 + $0xf1] sm:$0xff] %vm334, %v2462
      %2496 = vst.msk [vmem:[%s2474 + $0xf9] sm:$0xff] %vm334, %v2463
      %2497 = vst.msk [vmem:[%s2474 + $0x109] sm:$0xff] %vm334, %v2464
      %2498 = vst.msk [vmem:[%s2474 + $0x111] sm:$0xff] %vm334, %v2465
      %2499 = vst.msk [vmem:[%s2474 + $0x121] sm:$0xff] %vm334, %v2466
      %2500 = vst.msk [vmem:[%s2474 + $0x129] sm:$0xff] %vm334, %v2467
      %2501 = vst.msk [vmem:[%s2474 + $0x139] sm:$0xff] %vm334, %v2468
      %2502 = vst.msk [vmem:[%s2474 + $0x141] sm:$0xff] %vm334, %v2469
      %2503 = vst.msk [vmem:[%s2474 + $0x151] sm:$0xff] %vm334, %v2470
      %2504 = vst.msk [vmem:[%s2474 + $0x159] sm:$0xff] %vm334, %v2471
      %2505 = vst.msk [vmem:[%s2474 + $0x169] sm:$0xff] %vm334, %v2472
      %2506 = vst.msk [vmem:[%s2474 + $0x171] sm:$0xff] %vm334, %v2473
      %v2507 = vld [vmem:[#allocation2] sm:$0xff]
      %v2508 = vld [vmem:[#allocation2 + $0x8] sm:$0xff]
      %v2509 = vld [vmem:[#allocation2 + $0x18] sm:$0xff]
      %v2510 = vld [vmem:[#allocation2 + $0x20] sm:$0xff]
      %v2511 = vld [vmem:[#allocation2 + $0x30] sm:$0xff]
      %v2512 = vld [vmem:[#allocation2 + $0x38] sm:$0xff]
      %v2513 = vld [vmem:[#allocation2 + $0x48] sm:$0xff]
      %v2514 = vld [vmem:[#allocation2 + $0x50] sm:$0xff]
      %v2515 = vld [vmem:[#allocation2 + $0x60] sm:$0xff]
      %v2516 = vld [vmem:[#allocation2 + $0x68] sm:$0xff]
      %v2517 = vld [vmem:[#allocation2 + $0x78] sm:$0xff]
      %v2518 = vld [vmem:[#allocation2 + $0x80] sm:$0xff]
      %v2519 = vld [vmem:[#allocation2 + $0x90] sm:$0xff]
      %v2520 = vld [vmem:[#allocation2 + $0x98] sm:$0xff]
      %v2521 = vld [vmem:[#allocation2 + $0xa8] sm:$0xff]
      %v2522 = vld [vmem:[#allocation2 + $0xb0] sm:$0xff]
      %v2523 = vld [vmem:[#allocation2 + $0xc0] sm:$0xff]
      %v2524 = vld [vmem:[#allocation2 + $0xc8] sm:$0xff]
      %v2525 = vld [vmem:[#allocation2 + $0xd8] sm:$0xff]
      %v2526 = vld [vmem:[#allocation2 + $0xe0] sm:$0xff]
      %v2527 = vld [vmem:[#allocation2 + $0xf0] sm:$0xff]
      %v2528 = vld [vmem:[#allocation2 + $0xf8] sm:$0xff]
      %v2529 = vld [vmem:[#allocation2 + $0x108] sm:$0xff]
      %v2530 = vld [vmem:[#allocation2 + $0x110] sm:$0xff]
      %v2531 = vld [vmem:[#allocation2 + $0x120] sm:$0xff]
      %v2532 = vld [vmem:[#allocation2 + $0x128] sm:$0xff]
      %v2533 = vld [vmem:[#allocation2 + $0x138] sm:$0xff]
      %v2534 = vld [vmem:[#allocation2 + $0x140] sm:$0xff]
      %v2535 = vld [vmem:[#allocation2 + $0x150] sm:$0xff]
      %v2536 = vld [vmem:[#allocation2 + $0x158] sm:$0xff]
      %v2537 = vld [vmem:[#allocation2 + $0x168] sm:$0xff]
      %v2538 = vld [vmem:[#allocation2 + $0x170] sm:$0xff]
      %v2539 = vpack.c.bf16 %v2508, %v2507
      %v2540 = vpack.c.bf16 %v2510, %v2509
      %v2541 = vpack.c.bf16 %v2512, %v2511
      %v2542 = vpack.c.bf16 %v2514, %v2513
      %v2543 = vpack.c.bf16 %v2516, %v2515
      %v2544 = vpack.c.bf16 %v2518, %v2517
      %v2545 = vpack.c.bf16 %v2520, %v2519
      %v2546 = vpack.c.bf16 %v2522, %v2521
      %v2547 = vpack.c.bf16 %v2524, %v2523
      %v2548 = vpack.c.bf16 %v2526, %v2525
      %v2549 = vpack.c.bf16 %v2528, %v2527
      %v2550 = vpack.c.bf16 %v2530, %v2529
      %v2551 = vpack.c.bf16 %v2532, %v2531
      %v2552 = vpack.c.bf16 %v2534, %v2533
      %v2553 = vpack.c.bf16 %v2536, %v2535
      %v2554 = vpack.c.bf16 %v2538, %v2537
      %v2555 = vld [vmem:[%s3] sm:$0xf]
      %v2556 = vld [vmem:[%s3 + $0x4] sm:$0xf]
      %v2557 = vld [vmem:[%s3 + $0x8] sm:$0xf]
      %v2558 = vld [vmem:[%s3 + $0xc] sm:$0xf]
      %v2559 = vld [vmem:[%s3 + $0x10] sm:$0xf]
      %v2560 = vld [vmem:[%s3 + $0x14] sm:$0xf]
      %v2561 = vld [vmem:[%s3 + $0x18] sm:$0xf]
      %v2562 = vld [vmem:[%s3 + $0x1c] sm:$0xf]
      %v2563 = vld [vmem:[#allocation2 + $0x1] sm:$0xff]
      %v2564 = vld [vmem:[#allocation2 + $0x9] sm:$0xff]
      %v2565 = vld [vmem:[#allocation2 + $0x19] sm:$0xff]
      %v2566 = vld [vmem:[#allocation2 + $0x21] sm:$0xff]
      %v2567 = vld [vmem:[#allocation2 + $0x31] sm:$0xff]
      %v2568 = vld [vmem:[#allocation2 + $0x39] sm:$0xff]
      %v2569 = vld [vmem:[#allocation2 + $0x49] sm:$0xff]
      %v2570 = vld [vmem:[#allocation2 + $0x51] sm:$0xff]
      %v2571 = vld [vmem:[#allocation2 + $0x61] sm:$0xff]
      %v2572 = vld [vmem:[#allocation2 + $0x69] sm:$0xff]
      %v2573 = vld [vmem:[#allocation2 + $0x79] sm:$0xff]
      %v2574 = vld [vmem:[#allocation2 + $0x81] sm:$0xff]
      %v2575 = vld [vmem:[#allocation2 + $0x91] sm:$0xff]
      %v2576 = vld [vmem:[#allocation2 + $0x99] sm:$0xff]
      %v2577 = vld [vmem:[#allocation2 + $0xa9] sm:$0xff]
      %v2578 = vld [vmem:[#allocation2 + $0xb1] sm:$0xff]
      %v2579 = vld [vmem:[#allocation2 + $0xc1] sm:$0xff]
      %v2580 = vld [vmem:[#allocation2 + $0xc9] sm:$0xff]
      %v2581 = vld [vmem:[#allocation2 + $0xd9] sm:$0xff]
      %v2582 = vld [vmem:[#allocation2 + $0xe1] sm:$0xff]
      %v2583 = vld [vmem:[#allocation2 + $0xf1] sm:$0xff]
      %v2584 = vld [vmem:[#allocation2 + $0xf9] sm:$0xff]
      %v2585 = vld [vmem:[#allocation2 + $0x109] sm:$0xff]
      %v2586 = vld [vmem:[#allocation2 + $0x111] sm:$0xff]
      %v2587 = vld [vmem:[#allocation2 + $0x121] sm:$0xff]
      %v2588 = vld [vmem:[#allocation2 + $0x129] sm:$0xff]
      %v2589 = vld [vmem:[#allocation2 + $0x139] sm:$0xff]
      %v2590 = vld [vmem:[#allocation2 + $0x141] sm:$0xff]
      %v2591 = vld [vmem:[#allocation2 + $0x151] sm:$0xff]
      %v2592 = vld [vmem:[#allocation2 + $0x159] sm:$0xff]
      %v2593 = vld [vmem:[#allocation2 + $0x169] sm:$0xff]
      %v2594 = vld [vmem:[#allocation2 + $0x171] sm:$0xff]
      %v2595 = vpack.c.bf16 %v2564, %v2563
      %v2596 = vpack.c.bf16 %v2566, %v2565
      %v2597 = vpack.c.bf16 %v2568, %v2567
      %v2598 = vpack.c.bf16 %v2570, %v2569
      %v2599 = vpack.c.bf16 %v2572, %v2571
      %v2600 = vpack.c.bf16 %v2574, %v2573
      %v2601 = vpack.c.bf16 %v2576, %v2575
      %v2602 = vpack.c.bf16 %v2578, %v2577
      %v2603 = vpack.c.bf16 %v2580, %v2579
      %v2604 = vpack.c.bf16 %v2582, %v2581
      %v2605 = vpack.c.bf16 %v2584, %v2583
      %v2606 = vpack.c.bf16 %v2586, %v2585
      %v2607 = vpack.c.bf16 %v2588, %v2587
      %v2608 = vpack.c.bf16 %v2590, %v2589
      %v2609 = vpack.c.bf16 %v2592, %v2591
      %v2610 = vpack.c.bf16 %v2594, %v2593
      %s2611 = scalar_lea.vmem %s3, 32
      %v2612 = vld [vmem:[%s2611] sm:$0xf]
      %v2613 = vld [vmem:[%s2611 + $0x4] sm:$0xf]
      %v2614 = vld [vmem:[%s2611 + $0x8] sm:$0xf]
      %v2615 = vld [vmem:[%s2611 + $0xc] sm:$0xf]
      %v2616 = vld [vmem:[%s2611 + $0x10] sm:$0xf]
      %v2617 = vld [vmem:[%s2611 + $0x14] sm:$0xf]
      %v2618 = vld [vmem:[%s2611 + $0x18] sm:$0xf]
      %v2619 = vld [vmem:[%s2611 + $0x1c] sm:$0xf]
      %v2628 = vunpack.c.l.b16 %v2612
      %v2629 = vunpack.c.l.b16 %v2613
      %v2630 = vunpack.c.l.b16 %v2614
      %v2631 = vunpack.c.l.b16 %v2615
      %v2632 = vunpack.c.l.b16 %v2616
      %v2633 = vunpack.c.l.b16 %v2617
      %v2634 = vunpack.c.l.b16 %v2618
      %v2635 = vunpack.c.l.b16 %v2619
      %v2636 = vpack.c.b16 %v2629, %v2628
      %v2637 = vpack.c.b16 %v2631, %v2630
      %v2638 = vpack.c.b16 %v2633, %v2632
      %v2639 = vpack.c.b16 %v2635, %v2634
      %v2645 = vsel %vm334, %v2595, 0
      %v2648 = vsel %vm334, %v2596, 0
      %v2651 = vsel %vm334, %v2597, 0
      %v2654 = vsel %vm334, %v2598, 0
      %v2657 = vsel %vm334, %v2599, 0
      %v2660 = vsel %vm334, %v2600, 0
      %v2663 = vsel %vm334, %v2601, 0
      %v2666 = vsel %vm334, %v2602, 0
      %v2669 = vsel %vm334, %v2603, 0
      %v2672 = vsel %vm334, %v2604, 0
      %v2675 = vsel %vm334, %v2605, 0
      %v2678 = vsel %vm334, %v2606, 0
      %v2681 = vsel %vm334, %v2607, 0
      %v2684 = vsel %vm334, %v2608, 0
      %v2687 = vsel %vm334, %v2609, 0
      %v2690 = vsel %vm334, %v2610, 0
      %2692 = vmatpush.bf16.msra.mxu0 0
      %2693 = vmatpush.bf16.msra.mxu0 0
      %2694 = vmatpush.bf16.msra.mxu0 0
      %2695 = vmatpush.bf16.msra.mxu0 0
      %2696 = vmatpush.bf16.msra.mxu0 %v2639
      %2697 = vmatpush.bf16.msra.mxu0 %v2638
      %2698 = vmatpush.bf16.msra.mxu0 %v2637
      %2699 = vmatpush.bf16.msra.mxu0 %v2636
      %2700 = vmatmul.bf16.gmra.mxu0 %v2645
      %v2701 = vpop.f32.mrf.mxu0
      %v2702 = vadd.f32 0.0, %v2701
      %v2703 = vpop.f32.mrf.mxu0
      %v2704 = vadd.f32 0.0, %v2703
      %2705 = vmatmul.bf16.gmra.mxu0 %v2648
      %v2706 = vpop.f32.mrf.mxu0
      %v2707 = vadd.f32 0.0, %v2706
      %v2708 = vpop.f32.mrf.mxu0
      %v2709 = vadd.f32 0.0, %v2708
      %2710 = vmatmul.bf16.gmra.mxu0 %v2651
      %v2711 = vpop.f32.mrf.mxu0
      %v2712 = vadd.f32 0.0, %v2711
      %v2713 = vpop.f32.mrf.mxu0
      %v2714 = vadd.f32 0.0, %v2713
      %2715 = vmatmul.bf16.gmra.mxu0 %v2654
      %v2716 = vpop.f32.mrf.mxu0
      %v2717 = vadd.f32 0.0, %v2716
      %v2718 = vpop.f32.mrf.mxu0
      %v2719 = vadd.f32 0.0, %v2718
      %2720 = vmatmul.bf16.gmra.mxu0 %v2657
      %v2721 = vpop.f32.mrf.mxu0
      %v2722 = vadd.f32 0.0, %v2721
      %v2723 = vpop.f32.mrf.mxu0
      %v2724 = vadd.f32 0.0, %v2723
      %2725 = vmatmul.bf16.gmra.mxu0 %v2660
      %v2726 = vpop.f32.mrf.mxu0
      %v2727 = vadd.f32 0.0, %v2726
      %v2728 = vpop.f32.mrf.mxu0
      %v2729 = vadd.f32 0.0, %v2728
      %2730 = vmatmul.bf16.gmra.mxu0 %v2663
      %v2731 = vpop.f32.mrf.mxu0
      %v2732 = vadd.f32 0.0, %v2731
      %v2733 = vpop.f32.mrf.mxu0
      %v2734 = vadd.f32 0.0, %v2733
      %2735 = vmatmul.bf16.gmra.mxu0 %v2666
      %v2736 = vpop.f32.mrf.mxu0
      %v2737 = vadd.f32 0.0, %v2736
      %v2738 = vpop.f32.mrf.mxu0
      %v2739 = vadd.f32 0.0, %v2738
      %2740 = vmatmul.bf16.gmra.mxu0 %v2669
      %v2741 = vpop.f32.mrf.mxu0
      %v2742 = vadd.f32 0.0, %v2741
      %v2743 = vpop.f32.mrf.mxu0
      %v2744 = vadd.f32 0.0, %v2743
      %2745 = vmatmul.bf16.gmra.mxu0 %v2672
      %v2746 = vpop.f32.mrf.mxu0
      %v2747 = vadd.f32 0.0, %v2746
      %v2748 = vpop.f32.mrf.mxu0
      %v2749 = vadd.f32 0.0, %v2748
      %2750 = vmatmul.bf16.gmra.mxu0 %v2675
      %v2751 = vpop.f32.mrf.mxu0
      %v2752 = vadd.f32 0.0, %v2751
      %v2753 = vpop.f32.mrf.mxu0
      %v2754 = vadd.f32 0.0, %v2753
      %2755 = vmatmul.bf16.gmra.mxu0 %v2678
      %v2756 = vpop.f32.mrf.mxu0
      %v2757 = vadd.f32 0.0, %v2756
      %v2758 = vpop.f32.mrf.mxu0
      %v2759 = vadd.f32 0.0, %v2758
      %2760 = vmatmul.bf16.gmra.mxu0 %v2681
      %v2761 = vpop.f32.mrf.mxu0
      %v2762 = vadd.f32 0.0, %v2761
      %v2763 = vpop.f32.mrf.mxu0
      %v2764 = vadd.f32 0.0, %v2763
      %2765 = vmatmul.bf16.gmra.mxu0 %v2684
      %v2766 = vpop.f32.mrf.mxu0
      %v2767 = vadd.f32 0.0, %v2766
      %v2768 = vpop.f32.mrf.mxu0
      %v2769 = vadd.f32 0.0, %v2768
      %2770 = vmatmul.bf16.gmra.mxu0 %v2687
      %v2771 = vpop.f32.mrf.mxu0
      %v2772 = vadd.f32 0.0, %v2771
      %v2773 = vpop.f32.mrf.mxu0
      %v2774 = vadd.f32 0.0, %v2773
      %2775 = vmatmul.bf16.gmra.mxu0 %v2690
      %v2776 = vpop.f32.mrf.mxu0
      %v2777 = vadd.f32 0.0, %v2776
      %v2778 = vpop.f32.mrf.mxu0
      %v2779 = vadd.f32 0.0, %v2778
      %2780 = vdwg.mxu0
      %v2789 = vunpack.c.l.b16 %v2555
      %v2790 = vunpack.c.l.b16 %v2556
      %v2791 = vunpack.c.l.b16 %v2557
      %v2792 = vunpack.c.l.b16 %v2558
      %v2793 = vunpack.c.l.b16 %v2559
      %v2794 = vunpack.c.l.b16 %v2560
      %v2795 = vunpack.c.l.b16 %v2561
      %v2796 = vunpack.c.l.b16 %v2562
      %v2797 = vpack.c.b16 %v2790, %v2789
      %v2798 = vpack.c.b16 %v2792, %v2791
      %v2799 = vpack.c.b16 %v2794, %v2793
      %v2800 = vpack.c.b16 %v2796, %v2795
      %v2806 = vsel %vm334, %v2539, 0
      %v2809 = vsel %vm334, %v2540, 0
      %v2812 = vsel %vm334, %v2541, 0
      %v2815 = vsel %vm334, %v2542, 0
      %v2818 = vsel %vm334, %v2543, 0
      %v2821 = vsel %vm334, %v2544, 0
      %v2824 = vsel %vm334, %v2545, 0
      %v2827 = vsel %vm334, %v2546, 0
      %v2830 = vsel %vm334, %v2547, 0
      %v2833 = vsel %vm334, %v2548, 0
      %v2836 = vsel %vm334, %v2549, 0
      %v2839 = vsel %vm334, %v2550, 0
      %v2842 = vsel %vm334, %v2551, 0
      %v2845 = vsel %vm334, %v2552, 0
      %v2848 = vsel %vm334, %v2553, 0
      %v2851 = vsel %vm334, %v2554, 0
      %2853 = vmatpush.bf16.msra.mxu0 0
      %2854 = vmatpush.bf16.msra.mxu0 0
      %2855 = vmatpush.bf16.msra.mxu0 0
      %2856 = vmatpush.bf16.msra.mxu0 0
      %2857 = vmatpush.bf16.msra.mxu0 %v2800
      %2858 = vmatpush.bf16.msra.mxu0 %v2799
      %2859 = vmatpush.bf16.msra.mxu0 %v2798
      %2860 = vmatpush.bf16.msra.mxu0 %v2797
      %2861 = vmatmul.bf16.gmra.mxu0 %v2806
      %v2862 = vpop.f32.mrf.mxu0
      %v2863 = vadd.f32 %v2702, %v2862
      %v2864 = vpop.f32.mrf.mxu0
      %v2865 = vadd.f32 %v2704, %v2864
      %2866 = vmatmul.bf16.gmra.mxu0 %v2809
      %v2867 = vpop.f32.mrf.mxu0
      %v2868 = vadd.f32 %v2707, %v2867
      %v2869 = vpop.f32.mrf.mxu0
      %v2870 = vadd.f32 %v2709, %v2869
      %2871 = vmatmul.bf16.gmra.mxu0 %v2812
      %v2872 = vpop.f32.mrf.mxu0
      %v2873 = vadd.f32 %v2712, %v2872
      %v2874 = vpop.f32.mrf.mxu0
      %v2875 = vadd.f32 %v2714, %v2874
      %2876 = vmatmul.bf16.gmra.mxu0 %v2815
      %v2877 = vpop.f32.mrf.mxu0
      %v2878 = vadd.f32 %v2717, %v2877
      %v2879 = vpop.f32.mrf.mxu0
      %v2880 = vadd.f32 %v2719, %v2879
      %2881 = vmatmul.bf16.gmra.mxu0 %v2818
      %v2882 = vpop.f32.mrf.mxu0
      %v2883 = vadd.f32 %v2722, %v2882
      %v2884 = vpop.f32.mrf.mxu0
      %v2885 = vadd.f32 %v2724, %v2884
      %2886 = vmatmul.bf16.gmra.mxu0 %v2821
      %v2887 = vpop.f32.mrf.mxu0
      %v2888 = vadd.f32 %v2727, %v2887
      %v2889 = vpop.f32.mrf.mxu0
      %v2890 = vadd.f32 %v2729, %v2889
      %2891 = vmatmul.bf16.gmra.mxu0 %v2824
      %v2892 = vpop.f32.mrf.mxu0
      %v2893 = vadd.f32 %v2732, %v2892
      %v2894 = vpop.f32.mrf.mxu0
      %v2895 = vadd.f32 %v2734, %v2894
      %2896 = vmatmul.bf16.gmra.mxu0 %v2827
      %v2897 = vpop.f32.mrf.mxu0
      %v2898 = vadd.f32 %v2737, %v2897
      %v2899 = vpop.f32.mrf.mxu0
      %v2900 = vadd.f32 %v2739, %v2899
      %2901 = vmatmul.bf16.gmra.mxu0 %v2830
      %v2902 = vpop.f32.mrf.mxu0
      %v2903 = vadd.f32 %v2742, %v2902
      %v2904 = vpop.f32.mrf.mxu0
      %v2905 = vadd.f32 %v2744, %v2904
      %2906 = vmatmul.bf16.gmra.mxu0 %v2833
      %v2907 = vpop.f32.mrf.mxu0
      %v2908 = vadd.f32 %v2747, %v2907
      %v2909 = vpop.f32.mrf.mxu0
      %v2910 = vadd.f32 %v2749, %v2909
      %2911 = vmatmul.bf16.gmra.mxu0 %v2836
      %v2912 = vpop.f32.mrf.mxu0
      %v2913 = vadd.f32 %v2752, %v2912
      %v2914 = vpop.f32.mrf.mxu0
      %v2915 = vadd.f32 %v2754, %v2914
      %2916 = vmatmul.bf16.gmra.mxu0 %v2839
      %v2917 = vpop.f32.mrf.mxu0
      %v2918 = vadd.f32 %v2757, %v2917
      %v2919 = vpop.f32.mrf.mxu0
      %v2920 = vadd.f32 %v2759, %v2919
      %2921 = vmatmul.bf16.gmra.mxu0 %v2842
      %v2922 = vpop.f32.mrf.mxu0
      %v2923 = vadd.f32 %v2762, %v2922
      %v2924 = vpop.f32.mrf.mxu0
      %v2925 = vadd.f32 %v2764, %v2924
      %2926 = vmatmul.bf16.gmra.mxu0 %v2845
      %v2927 = vpop.f32.mrf.mxu0
      %v2928 = vadd.f32 %v2767, %v2927
      %v2929 = vpop.f32.mrf.mxu0
      %v2930 = vadd.f32 %v2769, %v2929
      %2931 = vmatmul.bf16.gmra.mxu0 %v2848
      %v2932 = vpop.f32.mrf.mxu0
      %v2933 = vadd.f32 %v2772, %v2932
      %v2934 = vpop.f32.mrf.mxu0
      %v2935 = vadd.f32 %v2774, %v2934
      %2936 = vmatmul.bf16.gmra.mxu0 %v2851
      %v2937 = vpop.f32.mrf.mxu0
      %v2938 = vadd.f32 %v2777, %v2937
      %v2939 = vpop.f32.mrf.mxu0
      %v2940 = vadd.f32 %v2779, %v2939
      %2941 = vdwg.mxu0
      %v2942 = vld [vmem:[#allocation2 + $0x2] sm:$0xff]
      %v2943 = vld [vmem:[#allocation2 + $0xa] sm:$0xff]
      %v2944 = vld [vmem:[#allocation2 + $0x1a] sm:$0xff]
      %v2945 = vld [vmem:[#allocation2 + $0x22] sm:$0xff]
      %v2946 = vld [vmem:[#allocation2 + $0x32] sm:$0xff]
      %v2947 = vld [vmem:[#allocation2 + $0x3a] sm:$0xff]
      %v2948 = vld [vmem:[#allocation2 + $0x4a] sm:$0xff]
      %v2949 = vld [vmem:[#allocation2 + $0x52] sm:$0xff]
      %v2950 = vld [vmem:[#allocation2 + $0x62] sm:$0xff]
      %v2951 = vld [vmem:[#allocation2 + $0x6a] sm:$0xff]
      %v2952 = vld [vmem:[#allocation2 + $0x7a] sm:$0xff]
      %v2953 = vld [vmem:[#allocation2 + $0x82] sm:$0xff]
      %v2954 = vld [vmem:[#allocation2 + $0x92] sm:$0xff]
      %v2955 = vld [vmem:[#allocation2 + $0x9a] sm:$0xff]
      %v2956 = vld [vmem:[#allocation2 + $0xaa] sm:$0xff]
      %v2957 = vld [vmem:[#allocation2 + $0xb2] sm:$0xff]
      %v2958 = vld [vmem:[#allocation2 + $0xc2] sm:$0xff]
      %v2959 = vld [vmem:[#allocation2 + $0xca] sm:$0xff]
      %v2960 = vld [vmem:[#allocation2 + $0xda] sm:$0xff]
      %v2961 = vld [vmem:[#allocation2 + $0xe2] sm:$0xff]
      %v2962 = vld [vmem:[#allocation2 + $0xf2] sm:$0xff]
      %v2963 = vld [vmem:[#allocation2 + $0xfa] sm:$0xff]
      %v2964 = vld [vmem:[#allocation2 + $0x10a] sm:$0xff]
      %v2965 = vld [vmem:[#allocation2 + $0x112] sm:$0xff]
      %v2966 = vld [vmem:[#allocation2 + $0x122] sm:$0xff]
      %v2967 = vld [vmem:[#allocation2 + $0x12a] sm:$0xff]
      %v2968 = vld [vmem:[#allocation2 + $0x13a] sm:$0xff]
      %v2969 = vld [vmem:[#allocation2 + $0x142] sm:$0xff]
      %v2970 = vld [vmem:[#allocation2 + $0x152] sm:$0xff]
      %v2971 = vld [vmem:[#allocation2 + $0x15a] sm:$0xff]
      %v2972 = vld [vmem:[#allocation2 + $0x16a] sm:$0xff]
      %v2973 = vld [vmem:[#allocation2 + $0x172] sm:$0xff]
      %v2974 = vpack.c.bf16 %v2943, %v2942
      %v2975 = vpack.c.bf16 %v2945, %v2944
      %v2976 = vpack.c.bf16 %v2947, %v2946
      %v2977 = vpack.c.bf16 %v2949, %v2948
      %v2978 = vpack.c.bf16 %v2951, %v2950
      %v2979 = vpack.c.bf16 %v2953, %v2952
      %v2980 = vpack.c.bf16 %v2955, %v2954
      %v2981 = vpack.c.bf16 %v2957, %v2956
      %v2982 = vpack.c.bf16 %v2959, %v2958
      %v2983 = vpack.c.bf16 %v2961, %v2960
      %v2984 = vpack.c.bf16 %v2963, %v2962
      %v2985 = vpack.c.bf16 %v2965, %v2964
      %v2986 = vpack.c.bf16 %v2967, %v2966
      %v2987 = vpack.c.bf16 %v2969, %v2968
      %v2988 = vpack.c.bf16 %v2971, %v2970
      %v2989 = vpack.c.bf16 %v2973, %v2972
      %s2990 = scalar_lea.vmem %s3, 64
      %v2991 = vld [vmem:[%s2990] sm:$0xf]
      %v2992 = vld [vmem:[%s2990 + $0x4] sm:$0xf]
      %v2993 = vld [vmem:[%s2990 + $0x8] sm:$0xf]
      %v2994 = vld [vmem:[%s2990 + $0xc] sm:$0xf]
      %v2995 = vld [vmem:[%s2990 + $0x10] sm:$0xf]
      %v2996 = vld [vmem:[%s2990 + $0x14] sm:$0xf]
      %v2997 = vld [vmem:[%s2990 + $0x18] sm:$0xf]
      %v2998 = vld [vmem:[%s2990 + $0x1c] sm:$0xf]
      %v3007 = vunpack.c.l.b16 %v2991
      %v3008 = vunpack.c.l.b16 %v2992
      %v3009 = vunpack.c.l.b16 %v2993
      %v3010 = vunpack.c.l.b16 %v2994
      %v3011 = vunpack.c.l.b16 %v2995
      %v3012 = vunpack.c.l.b16 %v2996
      %v3013 = vunpack.c.l.b16 %v2997
      %v3014 = vunpack.c.l.b16 %v2998
      %v3015 = vpack.c.b16 %v3008, %v3007
      %v3016 = vpack.c.b16 %v3010, %v3009
      %v3017 = vpack.c.b16 %v3012, %v3011
      %v3018 = vpack.c.b16 %v3014, %v3013
      %v3024 = vsel %vm334, %v2974, 0
      %v3027 = vsel %vm334, %v2975, 0
      %v3030 = vsel %vm334, %v2976, 0
      %v3033 = vsel %vm334, %v2977, 0
      %v3036 = vsel %vm334, %v2978, 0
      %v3039 = vsel %vm334, %v2979, 0
      %v3042 = vsel %vm334, %v2980, 0
      %v3045 = vsel %vm334, %v2981, 0
      %v3048 = vsel %vm334, %v2982, 0
      %v3051 = vsel %vm334, %v2983, 0
      %v3054 = vsel %vm334, %v2984, 0
      %v3057 = vsel %vm334, %v2985, 0
      %v3060 = vsel %vm334, %v2986, 0
      %v3063 = vsel %vm334, %v2987, 0
      %v3066 = vsel %vm334, %v2988, 0
      %v3069 = vsel %vm334, %v2989, 0
      %3071 = vmatpush.bf16.msra.mxu0 0
      %3072 = vmatpush.bf16.msra.mxu0 0
      %3073 = vmatpush.bf16.msra.mxu0 0
      %3074 = vmatpush.bf16.msra.mxu0 0
      %3075 = vmatpush.bf16.msra.mxu0 %v3018
      %3076 = vmatpush.bf16.msra.mxu0 %v3017
      %3077 = vmatpush.bf16.msra.mxu0 %v3016
      %3078 = vmatpush.bf16.msra.mxu0 %v3015
      %3079 = vmatmul.bf16.gmra.mxu0 %v3024
      %v3080 = vpop.f32.mrf.mxu0
      %v3081 = vadd.f32 0.0, %v3080
      %v3082 = vpop.f32.mrf.mxu0
      %v3083 = vadd.f32 0.0, %v3082
      %3084 = vmatmul.bf16.gmra.mxu0 %v3027
      %v3085 = vpop.f32.mrf.mxu0
      %v3086 = vadd.f32 0.0, %v3085
      %v3087 = vpop.f32.mrf.mxu0
      %v3088 = vadd.f32 0.0, %v3087
      %3089 = vmatmul.bf16.gmra.mxu0 %v3030
      %v3090 = vpop.f32.mrf.mxu0
      %v3091 = vadd.f32 0.0, %v3090
      %v3092 = vpop.f32.mrf.mxu0
      %v3093 = vadd.f32 0.0, %v3092
      %3094 = vmatmul.bf16.gmra.mxu0 %v3033
      %v3095 = vpop.f32.mrf.mxu0
      %v3096 = vadd.f32 0.0, %v3095
      %v3097 = vpop.f32.mrf.mxu0
      %v3098 = vadd.f32 0.0, %v3097
      %3099 = vmatmul.bf16.gmra.mxu0 %v3036
      %v3100 = vpop.f32.mrf.mxu0
      %v3101 = vadd.f32 0.0, %v3100
      %v3102 = vpop.f32.mrf.mxu0
      %v3103 = vadd.f32 0.0, %v3102
      %3104 = vmatmul.bf16.gmra.mxu0 %v3039
      %v3105 = vpop.f32.mrf.mxu0
      %v3106 = vadd.f32 0.0, %v3105
      %v3107 = vpop.f32.mrf.mxu0
      %v3108 = vadd.f32 0.0, %v3107
      %3109 = vmatmul.bf16.gmra.mxu0 %v3042
      %v3110 = vpop.f32.mrf.mxu0
      %v3111 = vadd.f32 0.0, %v3110
      %v3112 = vpop.f32.mrf.mxu0
      %v3113 = vadd.f32 0.0, %v3112
      %3114 = vmatmul.bf16.gmra.mxu0 %v3045
      %v3115 = vpop.f32.mrf.mxu0
      %v3116 = vadd.f32 0.0, %v3115
      %v3117 = vpop.f32.mrf.mxu0
      %v3118 = vadd.f32 0.0, %v3117
      %3119 = vmatmul.bf16.gmra.mxu0 %v3048
      %v3120 = vpop.f32.mrf.mxu0
      %v3121 = vadd.f32 0.0, %v3120
      %v3122 = vpop.f32.mrf.mxu0
      %v3123 = vadd.f32 0.0, %v3122
      %3124 = vmatmul.bf16.gmra.mxu0 %v3051
      %v3125 = vpop.f32.mrf.mxu0
      %v3126 = vadd.f32 0.0, %v3125
      %v3127 = vpop.f32.mrf.mxu0
      %v3128 = vadd.f32 0.0, %v3127
      %3129 = vmatmul.bf16.gmra.mxu0 %v3054
      %v3130 = vpop.f32.mrf.mxu0
      %v3131 = vadd.f32 0.0, %v3130
      %v3132 = vpop.f32.mrf.mxu0
      %v3133 = vadd.f32 0.0, %v3132
      %3134 = vmatmul.bf16.gmra.mxu0 %v3057
      %v3135 = vpop.f32.mrf.mxu0
      %v3136 = vadd.f32 0.0, %v3135
      %v3137 = vpop.f32.mrf.mxu0
      %v3138 = vadd.f32 0.0, %v3137
      %3139 = vmatmul.bf16.gmra.mxu0 %v3060
      %v3140 = vpop.f32.mrf.mxu0
      %v3141 = vadd.f32 0.0, %v3140
      %v3142 = vpop.f32.mrf.mxu0
      %v3143 = vadd.f32 0.0, %v3142
      %3144 = vmatmul.bf16.gmra.mxu0 %v3063
      %v3145 = vpop.f32.mrf.mxu0
      %v3146 = vadd.f32 0.0, %v3145
      %v3147 = vpop.f32.mrf.mxu0
      %v3148 = vadd.f32 0.0, %v3147
      %3149 = vmatmul.bf16.gmra.mxu0 %v3066
      %v3150 = vpop.f32.mrf.mxu0
      %v3151 = vadd.f32 0.0, %v3150
      %v3152 = vpop.f32.mrf.mxu0
      %v3153 = vadd.f32 0.0, %v3152
      %3154 = vmatmul.bf16.gmra.mxu0 %v3069
      %v3155 = vpop.f32.mrf.mxu0
      %v3156 = vadd.f32 0.0, %v3155
      %v3157 = vpop.f32.mrf.mxu0
      %v3158 = vadd.f32 0.0, %v3157
      %3159 = vdwg.mxu0
      %v3160 = vadd.f32 %v2863, %v3081
      %v3161 = vadd.f32 %v2865, %v3083
      %v3162 = vadd.f32 %v2868, %v3086
      %v3163 = vadd.f32 %v2870, %v3088
      %v3164 = vadd.f32 %v2873, %v3091
      %v3165 = vadd.f32 %v2875, %v3093
      %v3166 = vadd.f32 %v2878, %v3096
      %v3167 = vadd.f32 %v2880, %v3098
      %v3168 = vadd.f32 %v2883, %v3101
      %v3169 = vadd.f32 %v2885, %v3103
      %v3170 = vadd.f32 %v2888, %v3106
      %v3171 = vadd.f32 %v2890, %v3108
      %v3172 = vadd.f32 %v2893, %v3111
      %v3173 = vadd.f32 %v2895, %v3113
      %v3174 = vadd.f32 %v2898, %v3116
      %v3175 = vadd.f32 %v2900, %v3118
      %v3176 = vadd.f32 %v2903, %v3121
      %v3177 = vadd.f32 %v2905, %v3123
      %v3178 = vadd.f32 %v2908, %v3126
      %v3179 = vadd.f32 %v2910, %v3128
      %v3180 = vadd.f32 %v2913, %v3131
      %v3181 = vadd.f32 %v2915, %v3133
      %v3182 = vadd.f32 %v2918, %v3136
      %v3183 = vadd.f32 %v2920, %v3138
      %v3184 = vadd.f32 %v2923, %v3141
      %v3185 = vadd.f32 %v2925, %v3143
      %v3186 = vadd.f32 %v2928, %v3146
      %v3187 = vadd.f32 %v2930, %v3148
      %v3188 = vadd.f32 %v2933, %v3151
      %v3189 = vadd.f32 %v2935, %v3153
      %v3190 = vadd.f32 %v2938, %v3156
      %v3191 = vadd.f32 %v2940, %v3158
      %v3192 = vld [vmem:[%s2474] sm:$0xff]
      %v3193 = vld [vmem:[%s2474 + $0x8] sm:$0xff]
      %v3194 = vld [vmem:[%s2474 + $0x18] sm:$0xff]
      %v3195 = vld [vmem:[%s2474 + $0x20] sm:$0xff]
      %v3196 = vld [vmem:[%s2474 + $0x30] sm:$0xff]
      %v3197 = vld [vmem:[%s2474 + $0x38] sm:$0xff]
      %v3198 = vld [vmem:[%s2474 + $0x48] sm:$0xff]
      %v3199 = vld [vmem:[%s2474 + $0x50] sm:$0xff]
      %v3200 = vld [vmem:[%s2474 + $0x60] sm:$0xff]
      %v3201 = vld [vmem:[%s2474 + $0x68] sm:$0xff]
      %v3202 = vld [vmem:[%s2474 + $0x78] sm:$0xff]
      %v3203 = vld [vmem:[%s2474 + $0x80] sm:$0xff]
      %v3204 = vld [vmem:[%s2474 + $0x90] sm:$0xff]
      %v3205 = vld [vmem:[%s2474 + $0x98] sm:$0xff]
      %v3206 = vld [vmem:[%s2474 + $0xa8] sm:$0xff]
      %v3207 = vld [vmem:[%s2474 + $0xb0] sm:$0xff]
      %v3208 = vld [vmem:[%s2474 + $0xc0] sm:$0xff]
      %v3209 = vld [vmem:[%s2474 + $0xc8] sm:$0xff]
      %v3210 = vld [vmem:[%s2474 + $0xd8] sm:$0xff]
      %v3211 = vld [vmem:[%s2474 + $0xe0] sm:$0xff]
      %v3212 = vld [vmem:[%s2474 + $0xf0] sm:$0xff]
      %v3213 = vld [vmem:[%s2474 + $0xf8] sm:$0xff]
      %v3214 = vld [vmem:[%s2474 + $0x108] sm:$0xff]
      %v3215 = vld [vmem:[%s2474 + $0x110] sm:$0xff]
      %v3216 = vld [vmem:[%s2474 + $0x120] sm:$0xff]
      %v3217 = vld [vmem:[%s2474 + $0x128] sm:$0xff]
      %v3218 = vld [vmem:[%s2474 + $0x138] sm:$0xff]
      %v3219 = vld [vmem:[%s2474 + $0x140] sm:$0xff]
      %v3220 = vld [vmem:[%s2474 + $0x150] sm:$0xff]
      %v3221 = vld [vmem:[%s2474 + $0x158] sm:$0xff]
      %v3222 = vld [vmem:[%s2474 + $0x168] sm:$0xff]
      %v3223 = vld [vmem:[%s2474 + $0x170] sm:$0xff]
      %v3224 = vpack.c.bf16 %v3193, %v3192
      %v3225 = vpack.c.bf16 %v3195, %v3194
      %v3226 = vpack.c.bf16 %v3197, %v3196
      %v3227 = vpack.c.bf16 %v3199, %v3198
      %v3228 = vpack.c.bf16 %v3201, %v3200
      %v3229 = vpack.c.bf16 %v3203, %v3202
      %v3230 = vpack.c.bf16 %v3205, %v3204
      %v3231 = vpack.c.bf16 %v3207, %v3206
      %v3232 = vpack.c.bf16 %v3209, %v3208
      %v3233 = vpack.c.bf16 %v3211, %v3210
      %v3234 = vpack.c.bf16 %v3213, %v3212
      %v3235 = vpack.c.bf16 %v3215, %v3214
      %v3236 = vpack.c.bf16 %v3217, %v3216
      %v3237 = vpack.c.bf16 %v3219, %v3218
      %v3238 = vpack.c.bf16 %v3221, %v3220
      %v3239 = vpack.c.bf16 %v3223, %v3222
      %s3240 = scalar_lea.vmem %s3, 96
      %v3241 = vld [vmem:[%s3240] sm:$0xf]
      %v3242 = vld [vmem:[%s3240 + $0x4] sm:$0xf]
      %v3243 = vld [vmem:[%s3240 + $0x8] sm:$0xf]
      %v3244 = vld [vmem:[%s3240 + $0xc] sm:$0xf]
      %v3245 = vld [vmem:[%s3240 + $0x10] sm:$0xf]
      %v3246 = vld [vmem:[%s3240 + $0x14] sm:$0xf]
      %v3247 = vld [vmem:[%s3240 + $0x18] sm:$0xf]
      %v3248 = vld [vmem:[%s3240 + $0x1c] sm:$0xf]
      %v3257 = vunpack.c.l.b16 %v3241
      %v3258 = vunpack.c.l.b16 %v3242
      %v3259 = vunpack.c.l.b16 %v3243
      %v3260 = vunpack.c.l.b16 %v3244
      %v3261 = vunpack.c.l.b16 %v3245
      %v3262 = vunpack.c.l.b16 %v3246
      %v3263 = vunpack.c.l.b16 %v3247
      %v3264 = vunpack.c.l.b16 %v3248
      %v3265 = vpack.c.b16 %v3258, %v3257
      %v3266 = vpack.c.b16 %v3260, %v3259
      %v3267 = vpack.c.b16 %v3262, %v3261
      %v3268 = vpack.c.b16 %v3264, %v3263
      %v3274 = vsel %vm334, %v3224, 0
      %v3277 = vsel %vm334, %v3225, 0
      %v3280 = vsel %vm334, %v3226, 0
      %v3283 = vsel %vm334, %v3227, 0
      %v3286 = vsel %vm334, %v3228, 0
      %v3289 = vsel %vm334, %v3229, 0
      %v3292 = vsel %vm334, %v3230, 0
      %v3295 = vsel %vm334, %v3231, 0
      %v3298 = vsel %vm334, %v3232, 0
      %v3301 = vsel %vm334, %v3233, 0
      %v3304 = vsel %vm334, %v3234, 0
      %v3307 = vsel %vm334, %v3235, 0
      %v3310 = vsel %vm334, %v3236, 0
      %v3313 = vsel %vm334, %v3237, 0
      %v3316 = vsel %vm334, %v3238, 0
      %v3319 = vsel %vm334, %v3239, 0
      %3321 = vmatpush.bf16.msra.mxu0 0
      %3322 = vmatpush.bf16.msra.mxu0 0
      %3323 = vmatpush.bf16.msra.mxu0 0
      %3324 = vmatpush.bf16.msra.mxu0 0
      %3325 = vmatpush.bf16.msra.mxu0 %v3268
      %3326 = vmatpush.bf16.msra.mxu0 %v3267
      %3327 = vmatpush.bf16.msra.mxu0 %v3266
      %3328 = vmatpush.bf16.msra.mxu0 %v3265
      %3329 = vmatmul.bf16.gmra.mxu0 %v3274
      %v3330 = vpop.f32.mrf.mxu0
      %v3331 = vadd.f32 0.0, %v3330
      %v3332 = vpop.f32.mrf.mxu0
      %v3333 = vadd.f32 0.0, %v3332
      %3334 = vmatmul.bf16.gmra.mxu0 %v3277
      %v3335 = vpop.f32.mrf.mxu0
      %v3336 = vadd.f32 0.0, %v3335
      %v3337 = vpop.f32.mrf.mxu0
      %v3338 = vadd.f32 0.0, %v3337
      %3339 = vmatmul.bf16.gmra.mxu0 %v3280
      %v3340 = vpop.f32.mrf.mxu0
      %v3341 = vadd.f32 0.0, %v3340
      %v3342 = vpop.f32.mrf.mxu0
      %v3343 = vadd.f32 0.0, %v3342
      %3344 = vmatmul.bf16.gmra.mxu0 %v3283
      %v3345 = vpop.f32.mrf.mxu0
      %v3346 = vadd.f32 0.0, %v3345
      %v3347 = vpop.f32.mrf.mxu0
      %v3348 = vadd.f32 0.0, %v3347
      %3349 = vmatmul.bf16.gmra.mxu0 %v3286
      %v3350 = vpop.f32.mrf.mxu0
      %v3351 = vadd.f32 0.0, %v3350
      %v3352 = vpop.f32.mrf.mxu0
      %v3353 = vadd.f32 0.0, %v3352
      %3354 = vmatmul.bf16.gmra.mxu0 %v3289
      %v3355 = vpop.f32.mrf.mxu0
      %v3356 = vadd.f32 0.0, %v3355
      %v3357 = vpop.f32.mrf.mxu0
      %v3358 = vadd.f32 0.0, %v3357
      %3359 = vmatmul.bf16.gmra.mxu0 %v3292
      %v3360 = vpop.f32.mrf.mxu0
      %v3361 = vadd.f32 0.0, %v3360
      %v3362 = vpop.f32.mrf.mxu0
      %v3363 = vadd.f32 0.0, %v3362
      %3364 = vmatmul.bf16.gmra.mxu0 %v3295
      %v3365 = vpop.f32.mrf.mxu0
      %v3366 = vadd.f32 0.0, %v3365
      %v3367 = vpop.f32.mrf.mxu0
      %v3368 = vadd.f32 0.0, %v3367
      %3369 = vmatmul.bf16.gmra.mxu0 %v3298
      %v3370 = vpop.f32.mrf.mxu0
      %v3371 = vadd.f32 0.0, %v3370
      %v3372 = vpop.f32.mrf.mxu0
      %v3373 = vadd.f32 0.0, %v3372
      %3374 = vmatmul.bf16.gmra.mxu0 %v3301
      %v3375 = vpop.f32.mrf.mxu0
      %v3376 = vadd.f32 0.0, %v3375
      %v3377 = vpop.f32.mrf.mxu0
      %v3378 = vadd.f32 0.0, %v3377
      %3379 = vmatmul.bf16.gmra.mxu0 %v3304
      %v3380 = vpop.f32.mrf.mxu0
      %v3381 = vadd.f32 0.0, %v3380
      %v3382 = vpop.f32.mrf.mxu0
      %v3383 = vadd.f32 0.0, %v3382
      %3384 = vmatmul.bf16.gmra.mxu0 %v3307
      %v3385 = vpop.f32.mrf.mxu0
      %v3386 = vadd.f32 0.0, %v3385
      %v3387 = vpop.f32.mrf.mxu0
      %v3388 = vadd.f32 0.0, %v3387
      %3389 = vmatmul.bf16.gmra.mxu0 %v3310
      %v3390 = vpop.f32.mrf.mxu0
      %v3391 = vadd.f32 0.0, %v3390
      %v3392 = vpop.f32.mrf.mxu0
      %v3393 = vadd.f32 0.0, %v3392
      %3394 = vmatmul.bf16.gmra.mxu0 %v3313
      %v3395 = vpop.f32.mrf.mxu0
      %v3396 = vadd.f32 0.0, %v3395
      %v3397 = vpop.f32.mrf.mxu0
      %v3398 = vadd.f32 0.0, %v3397
      %3399 = vmatmul.bf16.gmra.mxu0 %v3316
      %v3400 = vpop.f32.mrf.mxu0
      %v3401 = vadd.f32 0.0, %v3400
      %v3402 = vpop.f32.mrf.mxu0
      %v3403 = vadd.f32 0.0, %v3402
      %3404 = vmatmul.bf16.gmra.mxu0 %v3319
      %v3405 = vpop.f32.mrf.mxu0
      %v3406 = vadd.f32 0.0, %v3405
      %v3407 = vpop.f32.mrf.mxu0
      %v3408 = vadd.f32 0.0, %v3407
      %3409 = vdwg.mxu0
      %v3410 = vadd.f32 %v3160, %v3331
      %v3411 = vadd.f32 %v3161, %v3333
      %v3412 = vadd.f32 %v3162, %v3336
      %v3413 = vadd.f32 %v3163, %v3338
      %v3414 = vadd.f32 %v3164, %v3341
      %v3415 = vadd.f32 %v3165, %v3343
      %v3416 = vadd.f32 %v3166, %v3346
      %v3417 = vadd.f32 %v3167, %v3348
      %v3418 = vadd.f32 %v3168, %v3351
      %v3419 = vadd.f32 %v3169, %v3353
      %v3420 = vadd.f32 %v3170, %v3356
      %v3421 = vadd.f32 %v3171, %v3358
      %v3422 = vadd.f32 %v3172, %v3361
      %v3423 = vadd.f32 %v3173, %v3363
      %v3424 = vadd.f32 %v3174, %v3366
      %v3425 = vadd.f32 %v3175, %v3368
      %v3426 = vadd.f32 %v3176, %v3371
      %v3427 = vadd.f32 %v3177, %v3373
      %v3428 = vadd.f32 %v3178, %v3376
      %v3429 = vadd.f32 %v3179, %v3378
      %v3430 = vadd.f32 %v3180, %v3381
      %v3431 = vadd.f32 %v3181, %v3383
      %v3432 = vadd.f32 %v3182, %v3386
      %v3433 = vadd.f32 %v3183, %v3388
      %v3434 = vadd.f32 %v3184, %v3391
      %v3435 = vadd.f32 %v3185, %v3393
      %v3436 = vadd.f32 %v3186, %v3396
      %v3437 = vadd.f32 %v3187, %v3398
      %v3438 = vadd.f32 %v3188, %v3401
      %v3439 = vadd.f32 %v3189, %v3403
      %v3440 = vadd.f32 %v3190, %v3406
      %v3441 = vadd.f32 %v3191, %v3408
      %v3442 = vld [vmem:[%s2474 + $0x1] sm:$0xff]
      %v3443 = vld [vmem:[%s2474 + $0x9] sm:$0xff]
      %v3444 = vld [vmem:[%s2474 + $0x19] sm:$0xff]
      %v3445 = vld [vmem:[%s2474 + $0x21] sm:$0xff]
      %v3446 = vld [vmem:[%s2474 + $0x31] sm:$0xff]
      %v3447 = vld [vmem:[%s2474 + $0x39] sm:$0xff]
      %v3448 = vld [vmem:[%s2474 + $0x49] sm:$0xff]
      %v3449 = vld [vmem:[%s2474 + $0x51] sm:$0xff]
      %v3450 = vld [vmem:[%s2474 + $0x61] sm:$0xff]
      %v3451 = vld [vmem:[%s2474 + $0x69] sm:$0xff]
      %v3452 = vld [vmem:[%s2474 + $0x79] sm:$0xff]
      %v3453 = vld [vmem:[%s2474 + $0x81] sm:$0xff]
      %v3454 = vld [vmem:[%s2474 + $0x91] sm:$0xff]
      %v3455 = vld [vmem:[%s2474 + $0x99] sm:$0xff]
      %v3456 = vld [vmem:[%s2474 + $0xa9] sm:$0xff]
      %v3457 = vld [vmem:[%s2474 + $0xb1] sm:$0xff]
      %v3458 = vld [vmem:[%s2474 + $0xc1] sm:$0xff]
      %v3459 = vld [vmem:[%s2474 + $0xc9] sm:$0xff]
      %v3460 = vld [vmem:[%s2474 + $0xd9] sm:$0xff]
      %v3461 = vld [vmem:[%s2474 + $0xe1] sm:$0xff]
      %v3462 = vld [vmem:[%s2474 + $0xf1] sm:$0xff]
      %v3463 = vld [vmem:[%s2474 + $0xf9] sm:$0xff]
      %v3464 = vld [vmem:[%s2474 + $0x109] sm:$0xff]
      %v3465 = vld [vmem:[%s2474 + $0x111] sm:$0xff]
      %v3466 = vld [vmem:[%s2474 + $0x121] sm:$0xff]
      %v3467 = vld [vmem:[%s2474 + $0x129] sm:$0xff]
      %v3468 = vld [vmem:[%s2474 + $0x139] sm:$0xff]
      %v3469 = vld [vmem:[%s2474 + $0x141] sm:$0xff]
      %v3470 = vld [vmem:[%s2474 + $0x151] sm:$0xff]
      %v3471 = vld [vmem:[%s2474 + $0x159] sm:$0xff]
      %v3472 = vld [vmem:[%s2474 + $0x169] sm:$0xff]
      %v3473 = vld [vmem:[%s2474 + $0x171] sm:$0xff]
      %v3474 = vpack.c.bf16 %v3443, %v3442
      %v3475 = vpack.c.bf16 %v3445, %v3444
      %v3476 = vpack.c.bf16 %v3447, %v3446
      %v3477 = vpack.c.bf16 %v3449, %v3448
      %v3478 = vpack.c.bf16 %v3451, %v3450
      %v3479 = vpack.c.bf16 %v3453, %v3452
      %v3480 = vpack.c.bf16 %v3455, %v3454
      %v3481 = vpack.c.bf16 %v3457, %v3456
      %v3482 = vpack.c.bf16 %v3459, %v3458
      %v3483 = vpack.c.bf16 %v3461, %v3460
      %v3484 = vpack.c.bf16 %v3463, %v3462
      %v3485 = vpack.c.bf16 %v3465, %v3464
      %v3486 = vpack.c.bf16 %v3467, %v3466
      %v3487 = vpack.c.bf16 %v3469, %v3468
      %v3488 = vpack.c.bf16 %v3471, %v3470
      %v3489 = vpack.c.bf16 %v3473, %v3472
      %s3490 = scalar_lea.vmem %s3, 128
      %v3491 = vld [vmem:[%s3490] sm:$0xf]
      %v3492 = vld [vmem:[%s3490 + $0x4] sm:$0xf]
      %v3493 = vld [vmem:[%s3490 + $0x8] sm:$0xf]
      %v3494 = vld [vmem:[%s3490 + $0xc] sm:$0xf]
      %v3495 = vld [vmem:[%s3490 + $0x10] sm:$0xf]
      %v3496 = vld [vmem:[%s3490 + $0x14] sm:$0xf]
      %v3497 = vld [vmem:[%s3490 + $0x18] sm:$0xf]
      %v3498 = vld [vmem:[%s3490 + $0x1c] sm:$0xf]
      %v3507 = vunpack.c.l.b16 %v3491
      %v3508 = vunpack.c.l.b16 %v3492
      %v3509 = vunpack.c.l.b16 %v3493
      %v3510 = vunpack.c.l.b16 %v3494
      %v3511 = vunpack.c.l.b16 %v3495
      %v3512 = vunpack.c.l.b16 %v3496
      %v3513 = vunpack.c.l.b16 %v3497
      %v3514 = vunpack.c.l.b16 %v3498
      %v3515 = vpack.c.b16 %v3508, %v3507
      %v3516 = vpack.c.b16 %v3510, %v3509
      %v3517 = vpack.c.b16 %v3512, %v3511
      %v3518 = vpack.c.b16 %v3514, %v3513
      %v3524 = vsel %vm334, %v3474, 0
      %v3527 = vsel %vm334, %v3475, 0
      %v3530 = vsel %vm334, %v3476, 0
      %v3533 = vsel %vm334, %v3477, 0
      %v3536 = vsel %vm334, %v3478, 0
      %v3539 = vsel %vm334, %v3479, 0
      %v3542 = vsel %vm334, %v3480, 0
      %v3545 = vsel %vm334, %v3481, 0
      %v3548 = vsel %vm334, %v3482, 0
      %v3551 = vsel %vm334, %v3483, 0
      %v3554 = vsel %vm334, %v3484, 0
      %v3557 = vsel %vm334, %v3485, 0
      %v3560 = vsel %vm334, %v3486, 0
      %v3563 = vsel %vm334, %v3487, 0
      %v3566 = vsel %vm334, %v3488, 0
      %v3569 = vsel %vm334, %v3489, 0
      %3571 = vmatpush.bf16.msra.mxu0 0
      %3572 = vmatpush.bf16.msra.mxu0 0
      %3573 = vmatpush.bf16.msra.mxu0 0
      %3574 = vmatpush.bf16.msra.mxu0 0
      %3575 = vmatpush.bf16.msra.mxu0 %v3518
      %3576 = vmatpush.bf16.msra.mxu0 %v3517
      %3577 = vmatpush.bf16.msra.mxu0 %v3516
      %3578 = vmatpush.bf16.msra.mxu0 %v3515
      %3579 = vmatmul.bf16.gmra.mxu0 %v3524
      %v3580 = vpop.f32.mrf.mxu0
      %v3581 = vadd.f32 0.0, %v3580
      %v3582 = vpop.f32.mrf.mxu0
      %v3583 = vadd.f32 0.0, %v3582
      %3584 = vmatmul.bf16.gmra.mxu0 %v3527
      %v3585 = vpop.f32.mrf.mxu0
      %v3586 = vadd.f32 0.0, %v3585
      %v3587 = vpop.f32.mrf.mxu0
      %v3588 = vadd.f32 0.0, %v3587
      %3589 = vmatmul.bf16.gmra.mxu0 %v3530
      %v3590 = vpop.f32.mrf.mxu0
      %v3591 = vadd.f32 0.0, %v3590
      %v3592 = vpop.f32.mrf.mxu0
      %v3593 = vadd.f32 0.0, %v3592
      %3594 = vmatmul.bf16.gmra.mxu0 %v3533
      %v3595 = vpop.f32.mrf.mxu0
      %v3596 = vadd.f32 0.0, %v3595
      %v3597 = vpop.f32.mrf.mxu0
      %v3598 = vadd.f32 0.0, %v3597
      %3599 = vmatmul.bf16.gmra.mxu0 %v3536
      %v3600 = vpop.f32.mrf.mxu0
      %v3601 = vadd.f32 0.0, %v3600
      %v3602 = vpop.f32.mrf.mxu0
      %v3603 = vadd.f32 0.0, %v3602
      %3604 = vmatmul.bf16.gmra.mxu0 %v3539
      %v3605 = vpop.f32.mrf.mxu0
      %v3606 = vadd.f32 0.0, %v3605
      %v3607 = vpop.f32.mrf.mxu0
      %v3608 = vadd.f32 0.0, %v3607
      %3609 = vmatmul.bf16.gmra.mxu0 %v3542
      %v3610 = vpop.f32.mrf.mxu0
      %v3611 = vadd.f32 0.0, %v3610
      %v3612 = vpop.f32.mrf.mxu0
      %v3613 = vadd.f32 0.0, %v3612
      %3614 = vmatmul.bf16.gmra.mxu0 %v3545
      %v3615 = vpop.f32.mrf.mxu0
      %v3616 = vadd.f32 0.0, %v3615
      %v3617 = vpop.f32.mrf.mxu0
      %v3618 = vadd.f32 0.0, %v3617
      %3619 = vmatmul.bf16.gmra.mxu0 %v3548
      %v3620 = vpop.f32.mrf.mxu0
      %v3621 = vadd.f32 0.0, %v3620
      %v3622 = vpop.f32.mrf.mxu0
      %v3623 = vadd.f32 0.0, %v3622
      %3624 = vmatmul.bf16.gmra.mxu0 %v3551
      %v3625 = vpop.f32.mrf.mxu0
      %v3626 = vadd.f32 0.0, %v3625
      %v3627 = vpop.f32.mrf.mxu0
      %v3628 = vadd.f32 0.0, %v3627
      %3629 = vmatmul.bf16.gmra.mxu0 %v3554
      %v3630 = vpop.f32.mrf.mxu0
      %v3631 = vadd.f32 0.0, %v3630
      %v3632 = vpop.f32.mrf.mxu0
      %v3633 = vadd.f32 0.0, %v3632
      %3634 = vmatmul.bf16.gmra.mxu0 %v3557
      %v3635 = vpop.f32.mrf.mxu0
      %v3636 = vadd.f32 0.0, %v3635
      %v3637 = vpop.f32.mrf.mxu0
      %v3638 = vadd.f32 0.0, %v3637
      %3639 = vmatmul.bf16.gmra.mxu0 %v3560
      %v3640 = vpop.f32.mrf.mxu0
      %v3641 = vadd.f32 0.0, %v3640
      %v3642 = vpop.f32.mrf.mxu0
      %v3643 = vadd.f32 0.0, %v3642
      %3644 = vmatmul.bf16.gmra.mxu0 %v3563
      %v3645 = vpop.f32.mrf.mxu0
      %v3646 = vadd.f32 0.0, %v3645
      %v3647 = vpop.f32.mrf.mxu0
      %v3648 = vadd.f32 0.0, %v3647
      %3649 = vmatmul.bf16.gmra.mxu0 %v3566
      %v3650 = vpop.f32.mrf.mxu0
      %v3651 = vadd.f32 0.0, %v3650
      %v3652 = vpop.f32.mrf.mxu0
      %v3653 = vadd.f32 0.0, %v3652
      %3654 = vmatmul.bf16.gmra.mxu0 %v3569
      %v3655 = vpop.f32.mrf.mxu0
      %v3656 = vadd.f32 0.0, %v3655
      %v3657 = vpop.f32.mrf.mxu0
      %v3658 = vadd.f32 0.0, %v3657
      %3659 = vdwg.mxu0
      %v3660 = vadd.f32 %v3410, %v3581
      %v3661 = vadd.f32 %v3411, %v3583
      %v3662 = vadd.f32 %v3412, %v3586
      %v3663 = vadd.f32 %v3413, %v3588
      %v3664 = vadd.f32 %v3414, %v3591
      %v3665 = vadd.f32 %v3415, %v3593
      %v3666 = vadd.f32 %v3416, %v3596
      %v3667 = vadd.f32 %v3417, %v3598
      %v3668 = vadd.f32 %v3418, %v3601
      %v3669 = vadd.f32 %v3419, %v3603
      %v3670 = vadd.f32 %v3420, %v3606
      %v3671 = vadd.f32 %v3421, %v3608
      %v3672 = vadd.f32 %v3422, %v3611
      %v3673 = vadd.f32 %v3423, %v3613
      %v3674 = vadd.f32 %v3424, %v3616
      %v3675 = vadd.f32 %v3425, %v3618
      %v3676 = vadd.f32 %v3426, %v3621
      %v3677 = vadd.f32 %v3427, %v3623
      %v3678 = vadd.f32 %v3428, %v3626
      %v3679 = vadd.f32 %v3429, %v3628
      %v3680 = vadd.f32 %v3430, %v3631
      %v3681 = vadd.f32 %v3431, %v3633
      %v3682 = vadd.f32 %v3432, %v3636
      %v3683 = vadd.f32 %v3433, %v3638
      %v3684 = vadd.f32 %v3434, %v3641
      %v3685 = vadd.f32 %v3435, %v3643
      %v3686 = vadd.f32 %v3436, %v3646
      %v3687 = vadd.f32 %v3437, %v3648
      %v3688 = vadd.f32 %v3438, %v3651
      %v3689 = vadd.f32 %v3439, %v3653
      %v3690 = vadd.f32 %v3440, %v3656
      %v3691 = vadd.f32 %v3441, %v3658
      %v3692 = vld [vmem:[%s2474 + $0x2] sm:$0xff]
      %v3693 = vld [vmem:[%s2474 + $0xa] sm:$0xff]
      %v3694 = vld [vmem:[%s2474 + $0x1a] sm:$0xff]
      %v3695 = vld [vmem:[%s2474 + $0x22] sm:$0xff]
      %v3696 = vld [vmem:[%s2474 + $0x32] sm:$0xff]
      %v3697 = vld [vmem:[%s2474 + $0x3a] sm:$0xff]
      %v3698 = vld [vmem:[%s2474 + $0x4a] sm:$0xff]
      %v3699 = vld [vmem:[%s2474 + $0x52] sm:$0xff]
      %v3700 = vld [vmem:[%s2474 + $0x62] sm:$0xff]
      %v3701 = vld [vmem:[%s2474 + $0x6a] sm:$0xff]
      %v3702 = vld [vmem:[%s2474 + $0x7a] sm:$0xff]
      %v3703 = vld [vmem:[%s2474 + $0x82] sm:$0xff]
      %v3704 = vld [vmem:[%s2474 + $0x92] sm:$0xff]
      %v3705 = vld [vmem:[%s2474 + $0x9a] sm:$0xff]
      %v3706 = vld [vmem:[%s2474 + $0xaa] sm:$0xff]
      %v3707 = vld [vmem:[%s2474 + $0xb2] sm:$0xff]
      %v3708 = vld [vmem:[%s2474 + $0xc2] sm:$0xff]
      %v3709 = vld [vmem:[%s2474 + $0xca] sm:$0xff]
      %v3710 = vld [vmem:[%s2474 + $0xda] sm:$0xff]
      %v3711 = vld [vmem:[%s2474 + $0xe2] sm:$0xff]
      %v3712 = vld [vmem:[%s2474 + $0xf2] sm:$0xff]
      %v3713 = vld [vmem:[%s2474 + $0xfa] sm:$0xff]
      %v3714 = vld [vmem:[%s2474 + $0x10a] sm:$0xff]
      %v3715 = vld [vmem:[%s2474 + $0x112] sm:$0xff]
      %v3716 = vld [vmem:[%s2474 + $0x122] sm:$0xff]
      %v3717 = vld [vmem:[%s2474 + $0x12a] sm:$0xff]
      %v3718 = vld [vmem:[%s2474 + $0x13a] sm:$0xff]
      %v3719 = vld [vmem:[%s2474 + $0x142] sm:$0xff]
      %v3720 = vld [vmem:[%s2474 + $0x152] sm:$0xff]
      %v3721 = vld [vmem:[%s2474 + $0x15a] sm:$0xff]
      %v3722 = vld [vmem:[%s2474 + $0x16a] sm:$0xff]
      %v3723 = vld [vmem:[%s2474 + $0x172] sm:$0xff]
      %v3724 = vpack.c.bf16 %v3693, %v3692
      %v3725 = vpack.c.bf16 %v3695, %v3694
      %v3726 = vpack.c.bf16 %v3697, %v3696
      %v3727 = vpack.c.bf16 %v3699, %v3698
      %v3728 = vpack.c.bf16 %v3701, %v3700
      %v3729 = vpack.c.bf16 %v3703, %v3702
      %v3730 = vpack.c.bf16 %v3705, %v3704
      %v3731 = vpack.c.bf16 %v3707, %v3706
      %v3732 = vpack.c.bf16 %v3709, %v3708
      %v3733 = vpack.c.bf16 %v3711, %v3710
      %v3734 = vpack.c.bf16 %v3713, %v3712
      %v3735 = vpack.c.bf16 %v3715, %v3714
      %v3736 = vpack.c.bf16 %v3717, %v3716
      %v3737 = vpack.c.bf16 %v3719, %v3718
      %v3738 = vpack.c.bf16 %v3721, %v3720
      %v3739 = vpack.c.bf16 %v3723, %v3722
      %s3740 = scalar_lea.vmem %s3, 160
      %v3741 = vld [vmem:[%s3740] sm:$0xf]
      %v3742 = vld [vmem:[%s3740 + $0x4] sm:$0xf]
      %v3743 = vld [vmem:[%s3740 + $0x8] sm:$0xf]
      %v3744 = vld [vmem:[%s3740 + $0xc] sm:$0xf]
      %v3745 = vld [vmem:[%s3740 + $0x10] sm:$0xf]
      %v3746 = vld [vmem:[%s3740 + $0x14] sm:$0xf]
      %v3747 = vld [vmem:[%s3740 + $0x18] sm:$0xf]
      %v3748 = vld [vmem:[%s3740 + $0x1c] sm:$0xf]
      %v3757 = vunpack.c.l.b16 %v3741
      %v3758 = vunpack.c.l.b16 %v3742
      %v3759 = vunpack.c.l.b16 %v3743
      %v3760 = vunpack.c.l.b16 %v3744
      %v3761 = vunpack.c.l.b16 %v3745
      %v3762 = vunpack.c.l.b16 %v3746
      %v3763 = vunpack.c.l.b16 %v3747
      %v3764 = vunpack.c.l.b16 %v3748
      %v3765 = vpack.c.b16 %v3758, %v3757
      %v3766 = vpack.c.b16 %v3760, %v3759
      %v3767 = vpack.c.b16 %v3762, %v3761
      %v3768 = vpack.c.b16 %v3764, %v3763
      %v3774 = vsel %vm334, %v3724, 0
      %v3777 = vsel %vm334, %v3725, 0
      %v3780 = vsel %vm334, %v3726, 0
      %v3783 = vsel %vm334, %v3727, 0
      %v3786 = vsel %vm334, %v3728, 0
      %v3789 = vsel %vm334, %v3729, 0
      %v3792 = vsel %vm334, %v3730, 0
      %v3795 = vsel %vm334, %v3731, 0
      %v3798 = vsel %vm334, %v3732, 0
      %v3801 = vsel %vm334, %v3733, 0
      %v3804 = vsel %vm334, %v3734, 0
      %v3807 = vsel %vm334, %v3735, 0
      %v3810 = vsel %vm334, %v3736, 0
      %v3813 = vsel %vm334, %v3737, 0
      %v3816 = vsel %vm334, %v3738, 0
      %v3819 = vsel %vm334, %v3739, 0
      %3821 = vmatpush.bf16.msra.mxu0 0
      %3822 = vmatpush.bf16.msra.mxu0 0
      %3823 = vmatpush.bf16.msra.mxu0 0
      %3824 = vmatpush.bf16.msra.mxu0 0
      %3825 = vmatpush.bf16.msra.mxu0 %v3768
      %3826 = vmatpush.bf16.msra.mxu0 %v3767
      %3827 = vmatpush.bf16.msra.mxu0 %v3766
      %3828 = vmatpush.bf16.msra.mxu0 %v3765
      %3829 = vmatmul.bf16.gmra.mxu0 %v3774
      %v3830 = vpop.f32.mrf.mxu0
      %v3831 = vadd.f32 0.0, %v3830
      %v3832 = vpop.f32.mrf.mxu0
      %v3833 = vadd.f32 0.0, %v3832
      %3834 = vmatmul.bf16.gmra.mxu0 %v3777
      %v3835 = vpop.f32.mrf.mxu0
      %v3836 = vadd.f32 0.0, %v3835
      %v3837 = vpop.f32.mrf.mxu0
      %v3838 = vadd.f32 0.0, %v3837
      %3839 = vmatmul.bf16.gmra.mxu0 %v3780
      %v3840 = vpop.f32.mrf.mxu0
      %v3841 = vadd.f32 0.0, %v3840
      %v3842 = vpop.f32.mrf.mxu0
      %v3843 = vadd.f32 0.0, %v3842
      %3844 = vmatmul.bf16.gmra.mxu0 %v3783
      %v3845 = vpop.f32.mrf.mxu0
      %v3846 = vadd.f32 0.0, %v3845
      %v3847 = vpop.f32.mrf.mxu0
      %v3848 = vadd.f32 0.0, %v3847
      %3849 = vmatmul.bf16.gmra.mxu0 %v3786
      %v3850 = vpop.f32.mrf.mxu0
      %v3851 = vadd.f32 0.0, %v3850
      %v3852 = vpop.f32.mrf.mxu0
      %v3853 = vadd.f32 0.0, %v3852
      %3854 = vmatmul.bf16.gmra.mxu0 %v3789
      %v3855 = vpop.f32.mrf.mxu0
      %v3856 = vadd.f32 0.0, %v3855
      %v3857 = vpop.f32.mrf.mxu0
      %v3858 = vadd.f32 0.0, %v3857
      %3859 = vmatmul.bf16.gmra.mxu0 %v3792
      %v3860 = vpop.f32.mrf.mxu0
      %v3861 = vadd.f32 0.0, %v3860
      %v3862 = vpop.f32.mrf.mxu0
      %v3863 = vadd.f32 0.0, %v3862
      %3864 = vmatmul.bf16.gmra.mxu0 %v3795
      %v3865 = vpop.f32.mrf.mxu0
      %v3866 = vadd.f32 0.0, %v3865
      %v3867 = vpop.f32.mrf.mxu0
      %v3868 = vadd.f32 0.0, %v3867
      %3869 = vmatmul.bf16.gmra.mxu0 %v3798
      %v3870 = vpop.f32.mrf.mxu0
      %v3871 = vadd.f32 0.0, %v3870
      %v3872 = vpop.f32.mrf.mxu0
      %v3873 = vadd.f32 0.0, %v3872
      %3874 = vmatmul.bf16.gmra.mxu0 %v3801
      %v3875 = vpop.f32.mrf.mxu0
      %v3876 = vadd.f32 0.0, %v3875
      %v3877 = vpop.f32.mrf.mxu0
      %v3878 = vadd.f32 0.0, %v3877
      %3879 = vmatmul.bf16.gmra.mxu0 %v3804
      %v3880 = vpop.f32.mrf.mxu0
      %v3881 = vadd.f32 0.0, %v3880
      %v3882 = vpop.f32.mrf.mxu0
      %v3883 = vadd.f32 0.0, %v3882
      %3884 = vmatmul.bf16.gmra.mxu0 %v3807
      %v3885 = vpop.f32.mrf.mxu0
      %v3886 = vadd.f32 0.0, %v3885
      %v3887 = vpop.f32.mrf.mxu0
      %v3888 = vadd.f32 0.0, %v3887
      %3889 = vmatmul.bf16.gmra.mxu0 %v3810
      %v3890 = vpop.f32.mrf.mxu0
      %v3891 = vadd.f32 0.0, %v3890
      %v3892 = vpop.f32.mrf.mxu0
      %v3893 = vadd.f32 0.0, %v3892
      %3894 = vmatmul.bf16.gmra.mxu0 %v3813
      %v3895 = vpop.f32.mrf.mxu0
      %v3896 = vadd.f32 0.0, %v3895
      %v3897 = vpop.f32.mrf.mxu0
      %v3898 = vadd.f32 0.0, %v3897
      %3899 = vmatmul.bf16.gmra.mxu0 %v3816
      %v3900 = vpop.f32.mrf.mxu0
      %v3901 = vadd.f32 0.0, %v3900
      %v3902 = vpop.f32.mrf.mxu0
      %v3903 = vadd.f32 0.0, %v3902
      %3904 = vmatmul.bf16.gmra.mxu0 %v3819
      %v3905 = vpop.f32.mrf.mxu0
      %v3906 = vadd.f32 0.0, %v3905
      %v3907 = vpop.f32.mrf.mxu0
      %v3908 = vadd.f32 0.0, %v3907
      %3909 = vdwg.mxu0
      %v3910 = vadd.f32 %v3660, %v3831
      %v3911 = vadd.f32 %v3661, %v3833
      %v3912 = vadd.f32 %v3662, %v3836
      %v3913 = vadd.f32 %v3663, %v3838
      %v3914 = vadd.f32 %v3664, %v3841
      %v3915 = vadd.f32 %v3665, %v3843
      %v3916 = vadd.f32 %v3666, %v3846
      %v3917 = vadd.f32 %v3667, %v3848
      %v3918 = vadd.f32 %v3668, %v3851
      %v3919 = vadd.f32 %v3669, %v3853
      %v3920 = vadd.f32 %v3670, %v3856
      %v3921 = vadd.f32 %v3671, %v3858
      %v3922 = vadd.f32 %v3672, %v3861
      %v3923 = vadd.f32 %v3673, %v3863
      %v3924 = vadd.f32 %v3674, %v3866
      %v3925 = vadd.f32 %v3675, %v3868
      %v3926 = vadd.f32 %v3676, %v3871
      %v3927 = vadd.f32 %v3677, %v3873
      %v3928 = vadd.f32 %v3678, %v3876
      %v3929 = vadd.f32 %v3679, %v3878
      %v3930 = vadd.f32 %v3680, %v3881
      %v3931 = vadd.f32 %v3681, %v3883
      %v3932 = vadd.f32 %v3682, %v3886
      %v3933 = vadd.f32 %v3683, %v3888
      %v3934 = vadd.f32 %v3684, %v3891
      %v3935 = vadd.f32 %v3685, %v3893
      %v3936 = vadd.f32 %v3686, %v3896
      %v3937 = vadd.f32 %v3687, %v3898
      %v3938 = vadd.f32 %v3688, %v3901
      %v3939 = vadd.f32 %v3689, %v3903
      %v3940 = vadd.f32 %v3690, %v3906
      %v3941 = vadd.f32 %v3691, %v3908
      %s3942 = scalar_lea.vmem [#allocation2], 48
      %v3943 = vld [vmem:[%s3942] sm:$0xff]
      %v3944 = vld [vmem:[%s3942 + $0x8] sm:$0xff]
      %v3945 = vld [vmem:[%s3942 + $0x18] sm:$0xff]
      %v3946 = vld [vmem:[%s3942 + $0x20] sm:$0xff]
      %v3947 = vld [vmem:[%s3942 + $0x30] sm:$0xff]
      %v3948 = vld [vmem:[%s3942 + $0x38] sm:$0xff]
      %v3949 = vld [vmem:[%s3942 + $0x48] sm:$0xff]
      %v3950 = vld [vmem:[%s3942 + $0x50] sm:$0xff]
      %v3951 = vld [vmem:[%s3942 + $0x60] sm:$0xff]
      %v3952 = vld [vmem:[%s3942 + $0x68] sm:$0xff]
      %v3953 = vld [vmem:[%s3942 + $0x78] sm:$0xff]
      %v3954 = vld [vmem:[%s3942 + $0x80] sm:$0xff]
      %v3955 = vld [vmem:[%s3942 + $0x90] sm:$0xff]
      %v3956 = vld [vmem:[%s3942 + $0x98] sm:$0xff]
      %v3957 = vld [vmem:[%s3942 + $0xa8] sm:$0xff]
      %v3958 = vld [vmem:[%s3942 + $0xb0] sm:$0xff]
      %v3959 = vld [vmem:[%s3942 + $0xc0] sm:$0xff]
      %v3960 = vld [vmem:[%s3942 + $0xc8] sm:$0xff]
      %v3961 = vld [vmem:[%s3942 + $0xd8] sm:$0xff]
      %v3962 = vld [vmem:[%s3942 + $0xe0] sm:$0xff]
      %v3963 = vld [vmem:[%s3942 + $0xf0] sm:$0xff]
      %v3964 = vld [vmem:[%s3942 + $0xf8] sm:$0xff]
      %v3965 = vld [vmem:[%s3942 + $0x108] sm:$0xff]
      %v3966 = vld [vmem:[%s3942 + $0x110] sm:$0xff]
      %v3967 = vld [vmem:[%s3942 + $0x120] sm:$0xff]
      %v3968 = vld [vmem:[%s3942 + $0x128] sm:$0xff]
      %v3969 = vld [vmem:[%s3942 + $0x138] sm:$0xff]
      %v3970 = vld [vmem:[%s3942 + $0x140] sm:$0xff]
      %v3971 = vld [vmem:[%s3942 + $0x150] sm:$0xff]
      %v3972 = vld [vmem:[%s3942 + $0x158] sm:$0xff]
      %v3973 = vld [vmem:[%s3942 + $0x168] sm:$0xff]
      %v3974 = vld [vmem:[%s3942 + $0x170] sm:$0xff]
      %v3975 = vpack.c.bf16 %v3944, %v3943
      %v3976 = vpack.c.bf16 %v3946, %v3945
      %v3977 = vpack.c.bf16 %v3948, %v3947
      %v3978 = vpack.c.bf16 %v3950, %v3949
      %v3979 = vpack.c.bf16 %v3952, %v3951
      %v3980 = vpack.c.bf16 %v3954, %v3953
      %v3981 = vpack.c.bf16 %v3956, %v3955
      %v3982 = vpack.c.bf16 %v3958, %v3957
      %v3983 = vpack.c.bf16 %v3960, %v3959
      %v3984 = vpack.c.bf16 %v3962, %v3961
      %v3985 = vpack.c.bf16 %v3964, %v3963
      %v3986 = vpack.c.bf16 %v3966, %v3965
      %v3987 = vpack.c.bf16 %v3968, %v3967
      %v3988 = vpack.c.bf16 %v3970, %v3969
      %v3989 = vpack.c.bf16 %v3972, %v3971
      %v3990 = vpack.c.bf16 %v3974, %v3973
      %s3991 = scalar_lea.vmem %s3, 192
      %v3992 = vld [vmem:[%s3991] sm:$0xf]
      %v3993 = vld [vmem:[%s3991 + $0x4] sm:$0xf]
      %v3994 = vld [vmem:[%s3991 + $0x8] sm:$0xf]
      %v3995 = vld [vmem:[%s3991 + $0xc] sm:$0xf]
      %v3996 = vld [vmem:[%s3991 + $0x10] sm:$0xf]
      %v3997 = vld [vmem:[%s3991 + $0x14] sm:$0xf]
      %v3998 = vld [vmem:[%s3991 + $0x18] sm:$0xf]
      %v3999 = vld [vmem:[%s3991 + $0x1c] sm:$0xf]
      %v4008 = vunpack.c.l.b16 %v3992
      %v4009 = vunpack.c.l.b16 %v3993
      %v4010 = vunpack.c.l.b16 %v3994
      %v4011 = vunpack.c.l.b16 %v3995
      %v4012 = vunpack.c.l.b16 %v3996
      %v4013 = vunpack.c.l.b16 %v3997
      %v4014 = vunpack.c.l.b16 %v3998
      %v4015 = vunpack.c.l.b16 %v3999
      %v4016 = vpack.c.b16 %v4009, %v4008
      %v4017 = vpack.c.b16 %v4011, %v4010
      %v4018 = vpack.c.b16 %v4013, %v4012
      %v4019 = vpack.c.b16 %v4015, %v4014
      %v4025 = vsel %vm334, %v3975, 0
      %v4028 = vsel %vm334, %v3976, 0
      %v4031 = vsel %vm334, %v3977, 0
      %v4034 = vsel %vm334, %v3978, 0
      %v4037 = vsel %vm334, %v3979, 0
      %v4040 = vsel %vm334, %v3980, 0
      %v4043 = vsel %vm334, %v3981, 0
      %v4046 = vsel %vm334, %v3982, 0
      %v4049 = vsel %vm334, %v3983, 0
      %v4052 = vsel %vm334, %v3984, 0
      %v4055 = vsel %vm334, %v3985, 0
      %v4058 = vsel %vm334, %v3986, 0
      %v4061 = vsel %vm334, %v3987, 0
      %v4064 = vsel %vm334, %v3988, 0
      %v4067 = vsel %vm334, %v3989, 0
      %v4070 = vsel %vm334, %v3990, 0
      %4072 = vmatpush.bf16.msra.mxu0 0
      %4073 = vmatpush.bf16.msra.mxu0 0
      %4074 = vmatpush.bf16.msra.mxu0 0
      %4075 = vmatpush.bf16.msra.mxu0 0
      %4076 = vmatpush.bf16.msra.mxu0 %v4019
      %4077 = vmatpush.bf16.msra.mxu0 %v4018
      %4078 = vmatpush.bf16.msra.mxu0 %v4017
      %4079 = vmatpush.bf16.msra.mxu0 %v4016
      %4080 = vmatmul.bf16.gmra.mxu0 %v4025
      %v4081 = vpop.f32.mrf.mxu0
      %v4082 = vadd.f32 0.0, %v4081
      %v4083 = vpop.f32.mrf.mxu0
      %v4084 = vadd.f32 0.0, %v4083
      %4085 = vmatmul.bf16.gmra.mxu0 %v4028
      %v4086 = vpop.f32.mrf.mxu0
      %v4087 = vadd.f32 0.0, %v4086
      %v4088 = vpop.f32.mrf.mxu0
      %v4089 = vadd.f32 0.0, %v4088
      %4090 = vmatmul.bf16.gmra.mxu0 %v4031
      %v4091 = vpop.f32.mrf.mxu0
      %v4092 = vadd.f32 0.0, %v4091
      %v4093 = vpop.f32.mrf.mxu0
      %v4094 = vadd.f32 0.0, %v4093
      %4095 = vmatmul.bf16.gmra.mxu0 %v4034
      %v4096 = vpop.f32.mrf.mxu0
      %v4097 = vadd.f32 0.0, %v4096
      %v4098 = vpop.f32.mrf.mxu0
      %v4099 = vadd.f32 0.0, %v4098
      %4100 = vmatmul.bf16.gmra.mxu0 %v4037
      %v4101 = vpop.f32.mrf.mxu0
      %v4102 = vadd.f32 0.0, %v4101
      %v4103 = vpop.f32.mrf.mxu0
      %v4104 = vadd.f32 0.0, %v4103
      %4105 = vmatmul.bf16.gmra.mxu0 %v4040
      %v4106 = vpop.f32.mrf.mxu0
      %v4107 = vadd.f32 0.0, %v4106
      %v4108 = vpop.f32.mrf.mxu0
      %v4109 = vadd.f32 0.0, %v4108
      %4110 = vmatmul.bf16.gmra.mxu0 %v4043
      %v4111 = vpop.f32.mrf.mxu0
      %v4112 = vadd.f32 0.0, %v4111
      %v4113 = vpop.f32.mrf.mxu0
      %v4114 = vadd.f32 0.0, %v4113
      %4115 = vmatmul.bf16.gmra.mxu0 %v4046
      %v4116 = vpop.f32.mrf.mxu0
      %v4117 = vadd.f32 0.0, %v4116
      %v4118 = vpop.f32.mrf.mxu0
      %v4119 = vadd.f32 0.0, %v4118
      %4120 = vmatmul.bf16.gmra.mxu0 %v4049
      %v4121 = vpop.f32.mrf.mxu0
      %v4122 = vadd.f32 0.0, %v4121
      %v4123 = vpop.f32.mrf.mxu0
      %v4124 = vadd.f32 0.0, %v4123
      %4125 = vmatmul.bf16.gmra.mxu0 %v4052
      %v4126 = vpop.f32.mrf.mxu0
      %v4127 = vadd.f32 0.0, %v4126
      %v4128 = vpop.f32.mrf.mxu0
      %v4129 = vadd.f32 0.0, %v4128
      %4130 = vmatmul.bf16.gmra.mxu0 %v4055
      %v4131 = vpop.f32.mrf.mxu0
      %v4132 = vadd.f32 0.0, %v4131
      %v4133 = vpop.f32.mrf.mxu0
      %v4134 = vadd.f32 0.0, %v4133
      %4135 = vmatmul.bf16.gmra.mxu0 %v4058
      %v4136 = vpop.f32.mrf.mxu0
      %v4137 = vadd.f32 0.0, %v4136
      %v4138 = vpop.f32.mrf.mxu0
      %v4139 = vadd.f32 0.0, %v4138
      %4140 = vmatmul.bf16.gmra.mxu0 %v4061
      %v4141 = vpop.f32.mrf.mxu0
      %v4142 = vadd.f32 0.0, %v4141
      %v4143 = vpop.f32.mrf.mxu0
      %v4144 = vadd.f32 0.0, %v4143
      %4145 = vmatmul.bf16.gmra.mxu0 %v4064
      %v4146 = vpop.f32.mrf.mxu0
      %v4147 = vadd.f32 0.0, %v4146
      %v4148 = vpop.f32.mrf.mxu0
      %v4149 = vadd.f32 0.0, %v4148
      %4150 = vmatmul.bf16.gmra.mxu0 %v4067
      %v4151 = vpop.f32.mrf.mxu0
      %v4152 = vadd.f32 0.0, %v4151
      %v4153 = vpop.f32.mrf.mxu0
      %v4154 = vadd.f32 0.0, %v4153
      %4155 = vmatmul.bf16.gmra.mxu0 %v4070
      %v4156 = vpop.f32.mrf.mxu0
      %v4157 = vadd.f32 0.0, %v4156
      %v4158 = vpop.f32.mrf.mxu0
      %v4159 = vadd.f32 0.0, %v4158
      %4160 = vdwg.mxu0
      %v4161 = vadd.f32 %v3910, %v4082
      %v4162 = vadd.f32 %v3911, %v4084
      %v4163 = vadd.f32 %v3912, %v4087
      %v4164 = vadd.f32 %v3913, %v4089
      %v4165 = vadd.f32 %v3914, %v4092
      %v4166 = vadd.f32 %v3915, %v4094
      %v4167 = vadd.f32 %v3916, %v4097
      %v4168 = vadd.f32 %v3917, %v4099
      %v4169 = vadd.f32 %v3918, %v4102
      %v4170 = vadd.f32 %v3919, %v4104
      %v4171 = vadd.f32 %v3920, %v4107
      %v4172 = vadd.f32 %v3921, %v4109
      %v4173 = vadd.f32 %v3922, %v4112
      %v4174 = vadd.f32 %v3923, %v4114
      %v4175 = vadd.f32 %v3924, %v4117
      %v4176 = vadd.f32 %v3925, %v4119
      %v4177 = vadd.f32 %v3926, %v4122
      %v4178 = vadd.f32 %v3927, %v4124
      %v4179 = vadd.f32 %v3928, %v4127
      %v4180 = vadd.f32 %v3929, %v4129
      %v4181 = vadd.f32 %v3930, %v4132
      %v4182 = vadd.f32 %v3931, %v4134
      %v4183 = vadd.f32 %v3932, %v4137
      %v4184 = vadd.f32 %v3933, %v4139
      %v4185 = vadd.f32 %v3934, %v4142
      %v4186 = vadd.f32 %v3935, %v4144
      %v4187 = vadd.f32 %v3936, %v4147
      %v4188 = vadd.f32 %v3937, %v4149
      %v4189 = vadd.f32 %v3938, %v4152
      %v4190 = vadd.f32 %v3939, %v4154
      %v4191 = vadd.f32 %v3940, %v4157
      %v4192 = vadd.f32 %v3941, %v4159
      %v4193 = vld [vmem:[%s3942 + $0x1] sm:$0xff]
      %v4194 = vld [vmem:[%s3942 + $0x9] sm:$0xff]
      %v4195 = vld [vmem:[%s3942 + $0x19] sm:$0xff]
      %v4196 = vld [vmem:[%s3942 + $0x21] sm:$0xff]
      %v4197 = vld [vmem:[%s3942 + $0x31] sm:$0xff]
      %v4198 = vld [vmem:[%s3942 + $0x39] sm:$0xff]
      %v4199 = vld [vmem:[%s3942 + $0x49] sm:$0xff]
      %v4200 = vld [vmem:[%s3942 + $0x51] sm:$0xff]
      %v4201 = vld [vmem:[%s3942 + $0x61] sm:$0xff]
      %v4202 = vld [vmem:[%s3942 + $0x69] sm:$0xff]
      %v4203 = vld [vmem:[%s3942 + $0x79] sm:$0xff]
      %v4204 = vld [vmem:[%s3942 + $0x81] sm:$0xff]
      %v4205 = vld [vmem:[%s3942 + $0x91] sm:$0xff]
      %v4206 = vld [vmem:[%s3942 + $0x99] sm:$0xff]
      %v4207 = vld [vmem:[%s3942 + $0xa9] sm:$0xff]
      %v4208 = vld [vmem:[%s3942 + $0xb1] sm:$0xff]
      %v4209 = vld [vmem:[%s3942 + $0xc1] sm:$0xff]
      %v4210 = vld [vmem:[%s3942 + $0xc9] sm:$0xff]
      %v4211 = vld [vmem:[%s3942 + $0xd9] sm:$0xff]
      %v4212 = vld [vmem:[%s3942 + $0xe1] sm:$0xff]
      %v4213 = vld [vmem:[%s3942 + $0xf1] sm:$0xff]
      %v4214 = vld [vmem:[%s3942 + $0xf9] sm:$0xff]
      %v4215 = vld [vmem:[%s3942 + $0x109] sm:$0xff]
      %v4216 = vld [vmem:[%s3942 + $0x111] sm:$0xff]
      %v4217 = vld [vmem:[%s3942 + $0x121] sm:$0xff]
      %v4218 = vld [vmem:[%s3942 + $0x129] sm:$0xff]
      %v4219 = vld [vmem:[%s3942 + $0x139] sm:$0xff]
      %v4220 = vld [vmem:[%s3942 + $0x141] sm:$0xff]
      %v4221 = vld [vmem:[%s3942 + $0x151] sm:$0xff]
      %v4222 = vld [vmem:[%s3942 + $0x159] sm:$0xff]
      %v4223 = vld [vmem:[%s3942 + $0x169] sm:$0xff]
      %v4224 = vld [vmem:[%s3942 + $0x171] sm:$0xff]
      %v4225 = vpack.c.bf16 %v4194, %v4193
      %v4226 = vpack.c.bf16 %v4196, %v4195
      %v4227 = vpack.c.bf16 %v4198, %v4197
      %v4228 = vpack.c.bf16 %v4200, %v4199
      %v4229 = vpack.c.bf16 %v4202, %v4201
      %v4230 = vpack.c.bf16 %v4204, %v4203
      %v4231 = vpack.c.bf16 %v4206, %v4205
      %v4232 = vpack.c.bf16 %v4208, %v4207
      %v4233 = vpack.c.bf16 %v4210, %v4209
      %v4234 = vpack.c.bf16 %v4212, %v4211
      %v4235 = vpack.c.bf16 %v4214, %v4213
      %v4236 = vpack.c.bf16 %v4216, %v4215
      %v4237 = vpack.c.bf16 %v4218, %v4217
      %v4238 = vpack.c.bf16 %v4220, %v4219
      %v4239 = vpack.c.bf16 %v4222, %v4221
      %v4240 = vpack.c.bf16 %v4224, %v4223
      %s4241 = scalar_lea.vmem %s3, 224
      %v4242 = vld [vmem:[%s4241] sm:$0xf]
      %v4243 = vld [vmem:[%s4241 + $0x4] sm:$0xf]
      %v4244 = vld [vmem:[%s4241 + $0x8] sm:$0xf]
      %v4245 = vld [vmem:[%s4241 + $0xc] sm:$0xf]
      %v4246 = vld [vmem:[%s4241 + $0x10] sm:$0xf]
      %v4247 = vld [vmem:[%s4241 + $0x14] sm:$0xf]
      %v4248 = vld [vmem:[%s4241 + $0x18] sm:$0xf]
      %v4249 = vld [vmem:[%s4241 + $0x1c] sm:$0xf]
      %v4258 = vunpack.c.l.b16 %v4242
      %v4259 = vunpack.c.l.b16 %v4243
      %v4260 = vunpack.c.l.b16 %v4244
      %v4261 = vunpack.c.l.b16 %v4245
      %v4262 = vunpack.c.l.b16 %v4246
      %v4263 = vunpack.c.l.b16 %v4247
      %v4264 = vunpack.c.l.b16 %v4248
      %v4265 = vunpack.c.l.b16 %v4249
      %v4266 = vpack.c.b16 %v4259, %v4258
      %v4267 = vpack.c.b16 %v4261, %v4260
      %v4268 = vpack.c.b16 %v4263, %v4262
      %v4269 = vpack.c.b16 %v4265, %v4264
      %v4275 = vsel %vm334, %v4225, 0
      %v4278 = vsel %vm334, %v4226, 0
      %v4281 = vsel %vm334, %v4227, 0
      %v4284 = vsel %vm334, %v4228, 0
      %v4287 = vsel %vm334, %v4229, 0
      %v4290 = vsel %vm334, %v4230, 0
      %v4293 = vsel %vm334, %v4231, 0
      %v4296 = vsel %vm334, %v4232, 0
      %v4299 = vsel %vm334, %v4233, 0
      %v4302 = vsel %vm334, %v4234, 0
      %v4305 = vsel %vm334, %v4235, 0
      %v4308 = vsel %vm334, %v4236, 0
      %v4311 = vsel %vm334, %v4237, 0
      %v4314 = vsel %vm334, %v4238, 0
      %v4317 = vsel %vm334, %v4239, 0
      %v4320 = vsel %vm334, %v4240, 0
      %4322 = vmatpush.bf16.msra.mxu0 0
      %4323 = vmatpush.bf16.msra.mxu0 0
      %4324 = vmatpush.bf16.msra.mxu0 0
      %4325 = vmatpush.bf16.msra.mxu0 0
      %4326 = vmatpush.bf16.msra.mxu0 %v4269
      %4327 = vmatpush.bf16.msra.mxu0 %v4268
      %4328 = vmatpush.bf16.msra.mxu0 %v4267
      %4329 = vmatpush.bf16.msra.mxu0 %v4266
      %4330 = vmatmul.bf16.gmra.mxu0 %v4275
      %v4331 = vpop.f32.mrf.mxu0
      %v4332 = vadd.f32 0.0, %v4331
      %v4333 = vpop.f32.mrf.mxu0
      %v4334 = vadd.f32 0.0, %v4333
      %4335 = vmatmul.bf16.gmra.mxu0 %v4278
      %v4336 = vpop.f32.mrf.mxu0
      %v4337 = vadd.f32 0.0, %v4336
      %v4338 = vpop.f32.mrf.mxu0
      %v4339 = vadd.f32 0.0, %v4338
      %4340 = vmatmul.bf16.gmra.mxu0 %v4281
      %v4341 = vpop.f32.mrf.mxu0
      %v4342 = vadd.f32 0.0, %v4341
      %v4343 = vpop.f32.mrf.mxu0
      %v4344 = vadd.f32 0.0, %v4343
      %4345 = vmatmul.bf16.gmra.mxu0 %v4284
      %v4346 = vpop.f32.mrf.mxu0
      %v4347 = vadd.f32 0.0, %v4346
      %v4348 = vpop.f32.mrf.mxu0
      %v4349 = vadd.f32 0.0, %v4348
      %4350 = vmatmul.bf16.gmra.mxu0 %v4287
      %v4351 = vpop.f32.mrf.mxu0
      %v4352 = vadd.f32 0.0, %v4351
      %v4353 = vpop.f32.mrf.mxu0
      %v4354 = vadd.f32 0.0, %v4353
      %4355 = vmatmul.bf16.gmra.mxu0 %v4290
      %v4356 = vpop.f32.mrf.mxu0
      %v4357 = vadd.f32 0.0, %v4356
      %v4358 = vpop.f32.mrf.mxu0
      %v4359 = vadd.f32 0.0, %v4358
      %4360 = vmatmul.bf16.gmra.mxu0 %v4293
      %v4361 = vpop.f32.mrf.mxu0
      %v4362 = vadd.f32 0.0, %v4361
      %v4363 = vpop.f32.mrf.mxu0
      %v4364 = vadd.f32 0.0, %v4363
      %4365 = vmatmul.bf16.gmra.mxu0 %v4296
      %v4366 = vpop.f32.mrf.mxu0
      %v4367 = vadd.f32 0.0, %v4366
      %v4368 = vpop.f32.mrf.mxu0
      %v4369 = vadd.f32 0.0, %v4368
      %4370 = vmatmul.bf16.gmra.mxu0 %v4299
      %v4371 = vpop.f32.mrf.mxu0
      %v4372 = vadd.f32 0.0, %v4371
      %v4373 = vpop.f32.mrf.mxu0
      %v4374 = vadd.f32 0.0, %v4373
      %4375 = vmatmul.bf16.gmra.mxu0 %v4302
      %v4376 = vpop.f32.mrf.mxu0
      %v4377 = vadd.f32 0.0, %v4376
      %v4378 = vpop.f32.mrf.mxu0
      %v4379 = vadd.f32 0.0, %v4378
      %4380 = vmatmul.bf16.gmra.mxu0 %v4305
      %v4381 = vpop.f32.mrf.mxu0
      %v4382 = vadd.f32 0.0, %v4381
      %v4383 = vpop.f32.mrf.mxu0
      %v4384 = vadd.f32 0.0, %v4383
      %4385 = vmatmul.bf16.gmra.mxu0 %v4308
      %v4386 = vpop.f32.mrf.mxu0
      %v4387 = vadd.f32 0.0, %v4386
      %v4388 = vpop.f32.mrf.mxu0
      %v4389 = vadd.f32 0.0, %v4388
      %4390 = vmatmul.bf16.gmra.mxu0 %v4311
      %v4391 = vpop.f32.mrf.mxu0
      %v4392 = vadd.f32 0.0, %v4391
      %v4393 = vpop.f32.mrf.mxu0
      %v4394 = vadd.f32 0.0, %v4393
      %4395 = vmatmul.bf16.gmra.mxu0 %v4314
      %v4396 = vpop.f32.mrf.mxu0
      %v4397 = vadd.f32 0.0, %v4396
      %v4398 = vpop.f32.mrf.mxu0
      %v4399 = vadd.f32 0.0, %v4398
      %4400 = vmatmul.bf16.gmra.mxu0 %v4317
      %v4401 = vpop.f32.mrf.mxu0
      %v4402 = vadd.f32 0.0, %v4401
      %v4403 = vpop.f32.mrf.mxu0
      %v4404 = vadd.f32 0.0, %v4403
      %4405 = vmatmul.bf16.gmra.mxu0 %v4320
      %v4406 = vpop.f32.mrf.mxu0
      %v4407 = vadd.f32 0.0, %v4406
      %v4408 = vpop.f32.mrf.mxu0
      %v4409 = vadd.f32 0.0, %v4408
      %4410 = vdwg.mxu0
      %v4411 = vadd.f32 %v4161, %v4332
      %v4412 = vadd.f32 %v4162, %v4334
      %v4413 = vadd.f32 %v4163, %v4337
      %v4414 = vadd.f32 %v4164, %v4339
      %v4415 = vadd.f32 %v4165, %v4342
      %v4416 = vadd.f32 %v4166, %v4344
      %v4417 = vadd.f32 %v4167, %v4347
      %v4418 = vadd.f32 %v4168, %v4349
      %v4419 = vadd.f32 %v4169, %v4352
      %v4420 = vadd.f32 %v4170, %v4354
      %v4421 = vadd.f32 %v4171, %v4357
      %v4422 = vadd.f32 %v4172, %v4359
      %v4423 = vadd.f32 %v4173, %v4362
      %v4424 = vadd.f32 %v4174, %v4364
      %v4425 = vadd.f32 %v4175, %v4367
      %v4426 = vadd.f32 %v4176, %v4369
      %v4427 = vadd.f32 %v4177, %v4372
      %v4428 = vadd.f32 %v4178, %v4374
      %v4429 = vadd.f32 %v4179, %v4377
      %v4430 = vadd.f32 %v4180, %v4379
      %v4431 = vadd.f32 %v4181, %v4382
      %v4432 = vadd.f32 %v4182, %v4384
      %v4433 = vadd.f32 %v4183, %v4387
      %v4434 = vadd.f32 %v4184, %v4389
      %v4435 = vadd.f32 %v4185, %v4392
      %v4436 = vadd.f32 %v4186, %v4394
      %v4437 = vadd.f32 %v4187, %v4397
      %v4438 = vadd.f32 %v4188, %v4399
      %v4439 = vadd.f32 %v4189, %v4402
      %v4440 = vadd.f32 %v4190, %v4404
      %v4441 = vadd.f32 %v4191, %v4407
      %v4442 = vadd.f32 %v4192, %v4409
      %v4443 = vld [vmem:[%s3942 + $0x2] sm:$0xff]
      %v4444 = vld [vmem:[%s3942 + $0xa] sm:$0xff]
      %v4445 = vld [vmem:[%s3942 + $0x1a] sm:$0xff]
      %v4446 = vld [vmem:[%s3942 + $0x22] sm:$0xff]
      %v4447 = vld [vmem:[%s3942 + $0x32] sm:$0xff]
      %v4448 = vld [vmem:[%s3942 + $0x3a] sm:$0xff]
      %v4449 = vld [vmem:[%s3942 + $0x4a] sm:$0xff]
      %v4450 = vld [vmem:[%s3942 + $0x52] sm:$0xff]
      %v4451 = vld [vmem:[%s3942 + $0x62] sm:$0xff]
      %v4452 = vld [vmem:[%s3942 + $0x6a] sm:$0xff]
      %v4453 = vld [vmem:[%s3942 + $0x7a] sm:$0xff]
      %v4454 = vld [vmem:[%s3942 + $0x82] sm:$0xff]
      %v4455 = vld [vmem:[%s3942 + $0x92] sm:$0xff]
      %v4456 = vld [vmem:[%s3942 + $0x9a] sm:$0xff]
      %v4457 = vld [vmem:[%s3942 + $0xaa] sm:$0xff]
      %v4458 = vld [vmem:[%s3942 + $0xb2] sm:$0xff]
      %v4459 = vld [vmem:[%s3942 + $0xc2] sm:$0xff]
      %v4460 = vld [vmem:[%s3942 + $0xca] sm:$0xff]
      %v4461 = vld [vmem:[%s3942 + $0xda] sm:$0xff]
      %v4462 = vld [vmem:[%s3942 + $0xe2] sm:$0xff]
      %v4463 = vld [vmem:[%s3942 + $0xf2] sm:$0xff]
      %v4464 = vld [vmem:[%s3942 + $0xfa] sm:$0xff]
      %v4465 = vld [vmem:[%s3942 + $0x10a] sm:$0xff]
      %v4466 = vld [vmem:[%s3942 + $0x112] sm:$0xff]
      %v4467 = vld [vmem:[%s3942 + $0x122] sm:$0xff]
      %v4468 = vld [vmem:[%s3942 + $0x12a] sm:$0xff]
      %v4469 = vld [vmem:[%s3942 + $0x13a] sm:$0xff]
      %v4470 = vld [vmem:[%s3942 + $0x142] sm:$0xff]
      %v4471 = vld [vmem:[%s3942 + $0x152] sm:$0xff]
      %v4472 = vld [vmem:[%s3942 + $0x15a] sm:$0xff]
      %v4473 = vld [vmem:[%s3942 + $0x16a] sm:$0xff]
      %v4474 = vld [vmem:[%s3942 + $0x172] sm:$0xff]
      %v4475 = vpack.c.bf16 %v4444, %v4443
      %v4476 = vpack.c.bf16 %v4446, %v4445
      %v4477 = vpack.c.bf16 %v4448, %v4447
      %v4478 = vpack.c.bf16 %v4450, %v4449
      %v4479 = vpack.c.bf16 %v4452, %v4451
      %v4480 = vpack.c.bf16 %v4454, %v4453
      %v4481 = vpack.c.bf16 %v4456, %v4455
      %v4482 = vpack.c.bf16 %v4458, %v4457
      %v4483 = vpack.c.bf16 %v4460, %v4459
      %v4484 = vpack.c.bf16 %v4462, %v4461
      %v4485 = vpack.c.bf16 %v4464, %v4463
      %v4486 = vpack.c.bf16 %v4466, %v4465
      %v4487 = vpack.c.bf16 %v4468, %v4467
      %v4488 = vpack.c.bf16 %v4470, %v4469
      %v4489 = vpack.c.bf16 %v4472, %v4471
      %v4490 = vpack.c.bf16 %v4474, %v4473
      %s4491 = scalar_lea.vmem %s3, 256
      %v4492 = vld [vmem:[%s4491] sm:$0xf]
      %v4493 = vld [vmem:[%s4491 + $0x4] sm:$0xf]
      %v4494 = vld [vmem:[%s4491 + $0x8] sm:$0xf]
      %v4495 = vld [vmem:[%s4491 + $0xc] sm:$0xf]
      %v4496 = vld [vmem:[%s4491 + $0x10] sm:$0xf]
      %v4497 = vld [vmem:[%s4491 + $0x14] sm:$0xf]
      %v4498 = vld [vmem:[%s4491 + $0x18] sm:$0xf]
      %v4499 = vld [vmem:[%s4491 + $0x1c] sm:$0xf]
      %v4508 = vunpack.c.l.b16 %v4492
      %v4509 = vunpack.c.l.b16 %v4493
      %v4510 = vunpack.c.l.b16 %v4494
      %v4511 = vunpack.c.l.b16 %v4495
      %v4512 = vunpack.c.l.b16 %v4496
      %v4513 = vunpack.c.l.b16 %v4497
      %v4514 = vunpack.c.l.b16 %v4498
      %v4515 = vunpack.c.l.b16 %v4499
      %v4516 = vpack.c.b16 %v4509, %v4508
      %v4517 = vpack.c.b16 %v4511, %v4510
      %v4518 = vpack.c.b16 %v4513, %v4512
      %v4519 = vpack.c.b16 %v4515, %v4514
      %v4525 = vsel %vm334, %v4475, 0
      %v4528 = vsel %vm334, %v4476, 0
      %v4531 = vsel %vm334, %v4477, 0
      %v4534 = vsel %vm334, %v4478, 0
      %v4537 = vsel %vm334, %v4479, 0
      %v4540 = vsel %vm334, %v4480, 0
      %v4543 = vsel %vm334, %v4481, 0
      %v4546 = vsel %vm334, %v4482, 0
      %v4549 = vsel %vm334, %v4483, 0
      %v4552 = vsel %vm334, %v4484, 0
      %v4555 = vsel %vm334, %v4485, 0
      %v4558 = vsel %vm334, %v4486, 0
      %v4561 = vsel %vm334, %v4487, 0
      %v4564 = vsel %vm334, %v4488, 0
      %v4567 = vsel %vm334, %v4489, 0
      %v4570 = vsel %vm334, %v4490, 0
      %4572 = vmatpush.bf16.msra.mxu0 0
      %4573 = vmatpush.bf16.msra.mxu0 0
      %4574 = vmatpush.bf16.msra.mxu0 0
      %4575 = vmatpush.bf16.msra.mxu0 0
      %4576 = vmatpush.bf16.msra.mxu0 %v4519
      %4577 = vmatpush.bf16.msra.mxu0 %v4518
      %4578 = vmatpush.bf16.msra.mxu0 %v4517
      %4579 = vmatpush.bf16.msra.mxu0 %v4516
      %4580 = vmatmul.bf16.gmra.mxu0 %v4525
      %v4581 = vpop.f32.mrf.mxu0
      %v4582 = vadd.f32 0.0, %v4581
      %v4583 = vpop.f32.mrf.mxu0
      %v4584 = vadd.f32 0.0, %v4583
      %4585 = vmatmul.bf16.gmra.mxu0 %v4528
      %v4586 = vpop.f32.mrf.mxu0
      %v4587 = vadd.f32 0.0, %v4586
      %v4588 = vpop.f32.mrf.mxu0
      %v4589 = vadd.f32 0.0, %v4588
      %4590 = vmatmul.bf16.gmra.mxu0 %v4531
      %v4591 = vpop.f32.mrf.mxu0
      %v4592 = vadd.f32 0.0, %v4591
      %v4593 = vpop.f32.mrf.mxu0
      %v4594 = vadd.f32 0.0, %v4593
      %4595 = vmatmul.bf16.gmra.mxu0 %v4534
      %v4596 = vpop.f32.mrf.mxu0
      %v4597 = vadd.f32 0.0, %v4596
      %v4598 = vpop.f32.mrf.mxu0
      %v4599 = vadd.f32 0.0, %v4598
      %4600 = vmatmul.bf16.gmra.mxu0 %v4537
      %v4601 = vpop.f32.mrf.mxu0
      %v4602 = vadd.f32 0.0, %v4601
      %v4603 = vpop.f32.mrf.mxu0
      %v4604 = vadd.f32 0.0, %v4603
      %4605 = vmatmul.bf16.gmra.mxu0 %v4540
      %v4606 = vpop.f32.mrf.mxu0
      %v4607 = vadd.f32 0.0, %v4606
      %v4608 = vpop.f32.mrf.mxu0
      %v4609 = vadd.f32 0.0, %v4608
      %4610 = vmatmul.bf16.gmra.mxu0 %v4543
      %v4611 = vpop.f32.mrf.mxu0
      %v4612 = vadd.f32 0.0, %v4611
      %v4613 = vpop.f32.mrf.mxu0
      %v4614 = vadd.f32 0.0, %v4613
      %4615 = vmatmul.bf16.gmra.mxu0 %v4546
      %v4616 = vpop.f32.mrf.mxu0
      %v4617 = vadd.f32 0.0, %v4616
      %v4618 = vpop.f32.mrf.mxu0
      %v4619 = vadd.f32 0.0, %v4618
      %4620 = vmatmul.bf16.gmra.mxu0 %v4549
      %v4621 = vpop.f32.mrf.mxu0
      %v4622 = vadd.f32 0.0, %v4621
      %v4623 = vpop.f32.mrf.mxu0
      %v4624 = vadd.f32 0.0, %v4623
      %4625 = vmatmul.bf16.gmra.mxu0 %v4552
      %v4626 = vpop.f32.mrf.mxu0
      %v4627 = vadd.f32 0.0, %v4626
      %v4628 = vpop.f32.mrf.mxu0
      %v4629 = vadd.f32 0.0, %v4628
      %4630 = vmatmul.bf16.gmra.mxu0 %v4555
      %v4631 = vpop.f32.mrf.mxu0
      %v4632 = vadd.f32 0.0, %v4631
      %v4633 = vpop.f32.mrf.mxu0
      %v4634 = vadd.f32 0.0, %v4633
      %4635 = vmatmul.bf16.gmra.mxu0 %v4558
      %v4636 = vpop.f32.mrf.mxu0
      %v4637 = vadd.f32 0.0, %v4636
      %v4638 = vpop.f32.mrf.mxu0
      %v4639 = vadd.f32 0.0, %v4638
      %4640 = vmatmul.bf16.gmra.mxu0 %v4561
      %v4641 = vpop.f32.mrf.mxu0
      %v4642 = vadd.f32 0.0, %v4641
      %v4643 = vpop.f32.mrf.mxu0
      %v4644 = vadd.f32 0.0, %v4643
      %4645 = vmatmul.bf16.gmra.mxu0 %v4564
      %v4646 = vpop.f32.mrf.mxu0
      %v4647 = vadd.f32 0.0, %v4646
      %v4648 = vpop.f32.mrf.mxu0
      %v4649 = vadd.f32 0.0, %v4648
      %4650 = vmatmul.bf16.gmra.mxu0 %v4567
      %v4651 = vpop.f32.mrf.mxu0
      %v4652 = vadd.f32 0.0, %v4651
      %v4653 = vpop.f32.mrf.mxu0
      %v4654 = vadd.f32 0.0, %v4653
      %4655 = vmatmul.bf16.gmra.mxu0 %v4570
      %v4656 = vpop.f32.mrf.mxu0
      %v4657 = vadd.f32 0.0, %v4656
      %v4658 = vpop.f32.mrf.mxu0
      %v4659 = vadd.f32 0.0, %v4658
      %4660 = vdwg.mxu0
      %v4661 = vadd.f32 %v4411, %v4582
      %v4662 = vadd.f32 %v4412, %v4584
      %v4663 = vadd.f32 %v4413, %v4587
      %v4664 = vadd.f32 %v4414, %v4589
      %v4665 = vadd.f32 %v4415, %v4592
      %v4666 = vadd.f32 %v4416, %v4594
      %v4667 = vadd.f32 %v4417, %v4597
      %v4668 = vadd.f32 %v4418, %v4599
      %v4669 = vadd.f32 %v4419, %v4602
      %v4670 = vadd.f32 %v4420, %v4604
      %v4671 = vadd.f32 %v4421, %v4607
      %v4672 = vadd.f32 %v4422, %v4609
      %v4673 = vadd.f32 %v4423, %v4612
      %v4674 = vadd.f32 %v4424, %v4614
      %v4675 = vadd.f32 %v4425, %v4617
      %v4676 = vadd.f32 %v4426, %v4619
      %v4677 = vadd.f32 %v4427, %v4622
      %v4678 = vadd.f32 %v4428, %v4624
      %v4679 = vadd.f32 %v4429, %v4627
      %v4680 = vadd.f32 %v4430, %v4629
      %v4681 = vadd.f32 %v4431, %v4632
      %v4682 = vadd.f32 %v4432, %v4634
      %v4683 = vadd.f32 %v4433, %v4637
      %v4684 = vadd.f32 %v4434, %v4639
      %v4685 = vadd.f32 %v4435, %v4642
      %v4686 = vadd.f32 %v4436, %v4644
      %v4687 = vadd.f32 %v4437, %v4647
      %v4688 = vadd.f32 %v4438, %v4649
      %v4689 = vadd.f32 %v4439, %v4652
      %v4690 = vadd.f32 %v4440, %v4654
      %v4691 = vadd.f32 %v4441, %v4657
      %v4692 = vadd.f32 %v4442, %v4659
      %v4693 = vld [vmem:[%s4] sm:$0x1]
      %v4695 = vperm.slane %v4693, 0
      %v4697 = vadd.f32 %v4661, %v4695
      %v4698 = vadd.f32 %v4662, %v4695
      %v4699 = vadd.f32 %v4663, %v4695
      %v4700 = vadd.f32 %v4664, %v4695
      %v4701 = vadd.f32 %v4665, %v4695
      %v4702 = vadd.f32 %v4666, %v4695
      %v4703 = vadd.f32 %v4667, %v4695
      %v4704 = vadd.f32 %v4668, %v4695
      %v4705 = vadd.f32 %v4669, %v4695
      %v4706 = vadd.f32 %v4670, %v4695
      %v4707 = vadd.f32 %v4671, %v4695
      %v4708 = vadd.f32 %v4672, %v4695
      %v4709 = vadd.f32 %v4673, %v4695
      %v4710 = vadd.f32 %v4674, %v4695
      %v4711 = vadd.f32 %v4675, %v4695
      %v4712 = vadd.f32 %v4676, %v4695
      %v4713 = vadd.f32 %v4677, %v4695
      %v4714 = vadd.f32 %v4678, %v4695
      %v4715 = vadd.f32 %v4679, %v4695
      %v4716 = vadd.f32 %v4680, %v4695
      %v4717 = vadd.f32 %v4681, %v4695
      %v4718 = vadd.f32 %v4682, %v4695
      %v4719 = vadd.f32 %v4683, %v4695
      %v4720 = vadd.f32 %v4684, %v4695
      %v4721 = vadd.f32 %v4685, %v4695
      %v4722 = vadd.f32 %v4686, %v4695
      %v4723 = vadd.f32 %v4687, %v4695
      %v4724 = vadd.f32 %v4688, %v4695
      %v4725 = vadd.f32 %v4689, %v4695
      %v4726 = vadd.f32 %v4690, %v4695
      %v4727 = vadd.f32 %v4691, %v4695
      %v4728 = vadd.f32 %v4692, %v4695
      %v4729 = vmax.f32 %v4697, 0.0
      %v4730 = vmax.f32 %v4698, 0.0
      %v4731 = vmax.f32 %v4699, 0.0
      %v4732 = vmax.f32 %v4700, 0.0
      %v4733 = vmax.f32 %v4701, 0.0
      %v4734 = vmax.f32 %v4702, 0.0
      %v4735 = vmax.f32 %v4703, 0.0
      %v4736 = vmax.f32 %v4704, 0.0
      %v4737 = vmax.f32 %v4705, 0.0
      %v4738 = vmax.f32 %v4706, 0.0
      %v4739 = vmax.f32 %v4707, 0.0
      %v4740 = vmax.f32 %v4708, 0.0
      %v4741 = vmax.f32 %v4709, 0.0
      %v4742 = vmax.f32 %v4710, 0.0
      %v4743 = vmax.f32 %v4711, 0.0
      %v4744 = vmax.f32 %v4712, 0.0
      %v4745 = vmax.f32 %v4713, 0.0
      %v4746 = vmax.f32 %v4714, 0.0
      %v4747 = vmax.f32 %v4715, 0.0
      %v4748 = vmax.f32 %v4716, 0.0
      %v4749 = vmax.f32 %v4717, 0.0
      %v4750 = vmax.f32 %v4718, 0.0
      %v4751 = vmax.f32 %v4719, 0.0
      %v4752 = vmax.f32 %v4720, 0.0
      %v4753 = vmax.f32 %v4721, 0.0
      %v4754 = vmax.f32 %v4722, 0.0
      %v4755 = vmax.f32 %v4723, 0.0
      %v4756 = vmax.f32 %v4724, 0.0
      %v4757 = vmax.f32 %v4725, 0.0
      %v4758 = vmax.f32 %v4726, 0.0
      %v4759 = vmax.f32 %v4727, 0.0
      %v4760 = vmax.f32 %v4728, 0.0
      %v4761 = vmax.f32 %v4729, %v4731
      %v4762 = vmax.f32 %v4730, %v4732
      %v4763 = vmax.f32 %v4733, %v4735
      %v4764 = vmax.f32 %v4734, %v4736
      %v4765 = vmax.f32 %v4737, %v4739
      %v4766 = vmax.f32 %v4738, %v4740
      %v4767 = vmax.f32 %v4741, %v4743
      %v4768 = vmax.f32 %v4742, %v4744
      %v4769 = vmax.f32 %v4745, %v4747
      %v4770 = vmax.f32 %v4746, %v4748
      %v4771 = vmax.f32 %v4749, %v4751
      %v4772 = vmax.f32 %v4750, %v4752
      %v4773 = vmax.f32 %v4753, %v4755
      %v4774 = vmax.f32 %v4754, %v4756
      %v4775 = vmax.f32 %v4757, %v4759
      %v4776 = vmax.f32 %v4758, %v4760
      %v4785 = vrot.slane %v4761, 1
      %v4786 = vrot.slane %v4763, 1
      %v4787 = vrot.slane %v4765, 1
      %v4788 = vrot.slane %v4767, 1
      %v4789 = vrot.slane %v4769, 1
      %v4790 = vrot.slane %v4771, 1
      %v4791 = vrot.slane %v4773, 1
      %v4792 = vrot.slane %v4775, 1
      %v4801 = vmax.f32 %v4761, %v4785
      %v4802 = vmax.f32 %v4763, %v4786
      %v4803 = vmax.f32 %v4765, %v4787
      %v4804 = vmax.f32 %v4767, %v4788
      %v4805 = vmax.f32 %v4769, %v4789
      %v4806 = vmax.f32 %v4771, %v4790
      %v4807 = vmax.f32 %v4773, %v4791
      %v4808 = vmax.f32 %v4775, %v4792
      %v4817 = vrot.slane %v4762, 1
      %v4818 = vrot.slane %v4764, 1
      %v4819 = vrot.slane %v4766, 1
      %v4820 = vrot.slane %v4768, 1
      %v4821 = vrot.slane %v4770, 1
      %v4822 = vrot.slane %v4772, 1
      %v4823 = vrot.slane %v4774, 1
      %v4824 = vrot.slane %v4776, 1
      %v4833 = vmax.f32 %v4762, %v4817
      %v4834 = vmax.f32 %v4764, %v4818
      %v4835 = vmax.f32 %v4766, %v4819
      %v4836 = vmax.f32 %v4768, %v4820
      %v4837 = vmax.f32 %v4770, %v4821
      %v4838 = vmax.f32 %v4772, %v4822
      %v4839 = vmax.f32 %v4774, %v4823
      %v4840 = vmax.f32 %v4776, %v4824
      %v4841 = vmul.f32 %v4801, 0.53333336
      %v4842 = vmul.f32 %v4802, 0.53333336
      %v4843 = vmul.f32 %v4803, 0.53333336
      %v4844 = vmul.f32 %v4804, 0.53333336
      %v4845 = vmul.f32 %v4805, 0.53333336
      %v4846 = vmul.f32 %v4806, 0.53333336
      %v4847 = vmul.f32 %v4807, 0.53333336
      %v4848 = vmul.f32 %v4808, 0.53333336
      %v4849 = vmul.f32 %v4801, 0.46666667
      %v4850 = vmul.f32 %v4802, 0.46666667
      %v4851 = vmul.f32 %v4803, 0.46666667
      %v4852 = vmul.f32 %v4804, 0.46666667
      %v4853 = vmul.f32 %v4805, 0.46666667
      %v4854 = vmul.f32 %v4806, 0.46666667
      %v4855 = vmul.f32 %v4807, 0.46666667
      %v4856 = vmul.f32 %v4808, 0.46666667
      %v4865 = vrot.slane %v4849, 2
      %v4866 = vrot.slane %v4850, 2
      %v4867 = vrot.slane %v4851, 2
      %v4868 = vrot.slane %v4852, 2
      %v4869 = vrot.slane %v4853, 2
      %v4870 = vrot.slane %v4854, 2
      %v4871 = vrot.slane %v4855, 2
      %v4872 = vrot.slane %v4856, 2
      %v4881 = vadd.f32 %v4841, %v4865
      %v4882 = vadd.f32 %v4842, %v4866
      %v4883 = vadd.f32 %v4843, %v4867
      %v4884 = vadd.f32 %v4844, %v4868
      %v4885 = vadd.f32 %v4845, %v4869
      %v4886 = vadd.f32 %v4846, %v4870
      %v4887 = vadd.f32 %v4847, %v4871
      %v4888 = vadd.f32 %v4848, %v4872
      %v4889 = vmul.f32 %v4801, 0.06666667
      %v4890 = vmul.f32 %v4802, 0.06666667
      %v4891 = vmul.f32 %v4803, 0.06666667
      %v4892 = vmul.f32 %v4804, 0.06666667
      %v4893 = vmul.f32 %v4805, 0.06666667
      %v4894 = vmul.f32 %v4806, 0.06666667
      %v4895 = vmul.f32 %v4807, 0.06666667
      %v4896 = vmul.f32 %v4808, 0.06666667
      %v4897 = vmul.f32 %v4801, 0.93333334
      %v4898 = vmul.f32 %v4802, 0.93333334
      %v4899 = vmul.f32 %v4803, 0.93333334
      %v4900 = vmul.f32 %v4804, 0.93333334
      %v4901 = vmul.f32 %v4805, 0.93333334
      %v4902 = vmul.f32 %v4806, 0.93333334
      %v4903 = vmul.f32 %v4807, 0.93333334
      %v4904 = vmul.f32 %v4808, 0.93333334
      %v4913 = vrot.slane %v4897, 2
      %v4914 = vrot.slane %v4898, 2
      %v4915 = vrot.slane %v4899, 2
      %v4916 = vrot.slane %v4900, 2
      %v4917 = vrot.slane %v4901, 2
      %v4918 = vrot.slane %v4902, 2
      %v4919 = vrot.slane %v4903, 2
      %v4920 = vrot.slane %v4904, 2
      %v4929 = vadd.f32 %v4889, %v4913
      %v4930 = vadd.f32 %v4890, %v4914
      %v4931 = vadd.f32 %v4891, %v4915
      %v4932 = vadd.f32 %v4892, %v4916
      %v4933 = vadd.f32 %v4893, %v4917
      %v4934 = vadd.f32 %v4894, %v4918
      %v4935 = vadd.f32 %v4895, %v4919
      %v4936 = vadd.f32 %v4896, %v4920
      %v4937 = vmul.f32 %v4801, 0.6
      %v4938 = vmul.f32 %v4802, 0.6
      %v4939 = vmul.f32 %v4803, 0.6
      %v4940 = vmul.f32 %v4804, 0.6
      %v4941 = vmul.f32 %v4805, 0.6
      %v4942 = vmul.f32 %v4806, 0.6
      %v4943 = vmul.f32 %v4807, 0.6
      %v4944 = vmul.f32 %v4808, 0.6
      %v4945 = vmul.f32 %v4801, 0.4
      %v4946 = vmul.f32 %v4802, 0.4
      %v4947 = vmul.f32 %v4803, 0.4
      %v4948 = vmul.f32 %v4804, 0.4
      %v4949 = vmul.f32 %v4805, 0.4
      %v4950 = vmul.f32 %v4806, 0.4
      %v4951 = vmul.f32 %v4807, 0.4
      %v4952 = vmul.f32 %v4808, 0.4
      %v4961 = vrot.slane %v4945, 2
      %v4962 = vrot.slane %v4946, 2
      %v4963 = vrot.slane %v4947, 2
      %v4964 = vrot.slane %v4948, 2
      %v4965 = vrot.slane %v4949, 2
      %v4966 = vrot.slane %v4950, 2
      %v4967 = vrot.slane %v4951, 2
      %v4968 = vrot.slane %v4952, 2
      %v4977 = vadd.f32 %v4937, %v4961
      %v4978 = vadd.f32 %v4938, %v4962
      %v4979 = vadd.f32 %v4939, %v4963
      %v4980 = vadd.f32 %v4940, %v4964
      %v4981 = vadd.f32 %v4941, %v4965
      %v4982 = vadd.f32 %v4942, %v4966
      %v4983 = vadd.f32 %v4943, %v4967
      %v4984 = vadd.f32 %v4944, %v4968
      %v4985 = vmul.f32 %v4801, 0.13333334
      %v4986 = vmul.f32 %v4802, 0.13333334
      %v4987 = vmul.f32 %v4803, 0.13333334
      %v4988 = vmul.f32 %v4804, 0.13333334
      %v4989 = vmul.f32 %v4805, 0.13333334
      %v4990 = vmul.f32 %v4806, 0.13333334
      %v4991 = vmul.f32 %v4807, 0.13333334
      %v4992 = vmul.f32 %v4808, 0.13333334
      %v4993 = vmul.f32 %v4801, 0.8666667
      %v4994 = vmul.f32 %v4802, 0.8666667
      %v4995 = vmul.f32 %v4803, 0.8666667
      %v4996 = vmul.f32 %v4804, 0.8666667
      %v4997 = vmul.f32 %v4805, 0.8666667
      %v4998 = vmul.f32 %v4806, 0.8666667
      %v4999 = vmul.f32 %v4807, 0.8666667
      %v5000 = vmul.f32 %v4808, 0.8666667
      %v5009 = vrot.slane %v4993, 2
      %v5010 = vrot.slane %v4994, 2
      %v5011 = vrot.slane %v4995, 2
      %v5012 = vrot.slane %v4996, 2
      %v5013 = vrot.slane %v4997, 2
      %v5014 = vrot.slane %v4998, 2
      %v5015 = vrot.slane %v4999, 2
      %v5016 = vrot.slane %v5000, 2
      %v5025 = vadd.f32 %v4985, %v5009
      %v5026 = vadd.f32 %v4986, %v5010
      %v5027 = vadd.f32 %v4987, %v5011
      %v5028 = vadd.f32 %v4988, %v5012
      %v5029 = vadd.f32 %v4989, %v5013
      %v5030 = vadd.f32 %v4990, %v5014
      %v5031 = vadd.f32 %v4991, %v5015
      %v5032 = vadd.f32 %v4992, %v5016
      %v5033 = vmul.f32 %v4801, 0.6666667
      %v5034 = vmul.f32 %v4802, 0.6666667
      %v5035 = vmul.f32 %v4803, 0.6666667
      %v5036 = vmul.f32 %v4804, 0.6666667
      %v5037 = vmul.f32 %v4805, 0.6666667
      %v5038 = vmul.f32 %v4806, 0.6666667
      %v5039 = vmul.f32 %v4807, 0.6666667
      %v5040 = vmul.f32 %v4808, 0.6666667
      %v5041 = vmul.f32 %v4801, 0.33333334
      %v5042 = vmul.f32 %v4802, 0.33333334
      %v5043 = vmul.f32 %v4803, 0.33333334
      %v5044 = vmul.f32 %v4804, 0.33333334
      %v5045 = vmul.f32 %v4805, 0.33333334
      %v5046 = vmul.f32 %v4806, 0.33333334
      %v5047 = vmul.f32 %v4807, 0.33333334
      %v5048 = vmul.f32 %v4808, 0.33333334
      %v5057 = vrot.slane %v5041, 2
      %v5058 = vrot.slane %v5042, 2
      %v5059 = vrot.slane %v5043, 2
      %v5060 = vrot.slane %v5044, 2
      %v5061 = vrot.slane %v5045, 2
      %v5062 = vrot.slane %v5046, 2
      %v5063 = vrot.slane %v5047, 2
      %v5064 = vrot.slane %v5048, 2
      %v5073 = vadd.f32 %v5033, %v5057
      %v5074 = vadd.f32 %v5034, %v5058
      %v5075 = vadd.f32 %v5035, %v5059
      %v5076 = vadd.f32 %v5036, %v5060
      %v5077 = vadd.f32 %v5037, %v5061
      %v5078 = vadd.f32 %v5038, %v5062
      %v5079 = vadd.f32 %v5039, %v5063
      %v5080 = vadd.f32 %v5040, %v5064
      %v5081 = vmul.f32 %v4801, 0.2
      %v5082 = vmul.f32 %v4802, 0.2
      %v5083 = vmul.f32 %v4803, 0.2
      %v5084 = vmul.f32 %v4804, 0.2
      %v5085 = vmul.f32 %v4805, 0.2
      %v5086 = vmul.f32 %v4806, 0.2
      %v5087 = vmul.f32 %v4807, 0.2
      %v5088 = vmul.f32 %v4808, 0.2
      %v5089 = vmul.f32 %v4801, 0.8
      %v5090 = vmul.f32 %v4802, 0.8
      %v5091 = vmul.f32 %v4803, 0.8
      %v5092 = vmul.f32 %v4804, 0.8
      %v5093 = vmul.f32 %v4805, 0.8
      %v5094 = vmul.f32 %v4806, 0.8
      %v5095 = vmul.f32 %v4807, 0.8
      %v5096 = vmul.f32 %v4808, 0.8
      %v5105 = vrot.slane %v5089, 2
      %v5106 = vrot.slane %v5090, 2
      %v5107 = vrot.slane %v5091, 2
      %v5108 = vrot.slane %v5092, 2
      %v5109 = vrot.slane %v5093, 2
      %v5110 = vrot.slane %v5094, 2
      %v5111 = vrot.slane %v5095, 2
      %v5112 = vrot.slane %v5096, 2
      %v5121 = vadd.f32 %v5081, %v5105
      %v5122 = vadd.f32 %v5082, %v5106
      %v5123 = vadd.f32 %v5083, %v5107
      %v5124 = vadd.f32 %v5084, %v5108
      %v5125 = vadd.f32 %v5085, %v5109
      %v5126 = vadd.f32 %v5086, %v5110
      %v5127 = vadd.f32 %v5087, %v5111
      %v5128 = vadd.f32 %v5088, %v5112
      %v5129 = vmul.f32 %v4801, 0.73333335
      %v5130 = vmul.f32 %v4802, 0.73333335
      %v5131 = vmul.f32 %v4803, 0.73333335
      %v5132 = vmul.f32 %v4804, 0.73333335
      %v5133 = vmul.f32 %v4805, 0.73333335
      %v5134 = vmul.f32 %v4806, 0.73333335
      %v5135 = vmul.f32 %v4807, 0.73333335
      %v5136 = vmul.f32 %v4808, 0.73333335
      %v5137 = vmul.f32 %v4833, 0.26666668
      %v5138 = vmul.f32 %v4834, 0.26666668
      %v5139 = vmul.f32 %v4835, 0.26666668
      %v5140 = vmul.f32 %v4836, 0.26666668
      %v5141 = vmul.f32 %v4837, 0.26666668
      %v5142 = vmul.f32 %v4838, 0.26666668
      %v5143 = vmul.f32 %v4839, 0.26666668
      %v5144 = vmul.f32 %v4840, 0.26666668
      %v5153 = vrot.slane %v5137, 2
      %v5154 = vrot.slane %v5138, 2
      %v5155 = vrot.slane %v5139, 2
      %v5156 = vrot.slane %v5140, 2
      %v5157 = vrot.slane %v5141, 2
      %v5158 = vrot.slane %v5142, 2
      %v5159 = vrot.slane %v5143, 2
      %v5160 = vrot.slane %v5144, 2
      %v5169 = vadd.f32 %v5129, %v5153
      %v5170 = vadd.f32 %v5130, %v5154
      %v5171 = vadd.f32 %v5131, %v5155
      %v5172 = vadd.f32 %v5132, %v5156
      %v5173 = vadd.f32 %v5133, %v5157
      %v5174 = vadd.f32 %v5134, %v5158
      %v5175 = vadd.f32 %v5135, %v5159
      %v5176 = vadd.f32 %v5136, %v5160
      %v5177 = vmul.f32 %v4801, 0.26666668
      %v5178 = vmul.f32 %v4802, 0.26666668
      %v5179 = vmul.f32 %v4803, 0.26666668
      %v5180 = vmul.f32 %v4804, 0.26666668
      %v5181 = vmul.f32 %v4805, 0.26666668
      %v5182 = vmul.f32 %v4806, 0.26666668
      %v5183 = vmul.f32 %v4807, 0.26666668
      %v5184 = vmul.f32 %v4808, 0.26666668
      %v5185 = vmul.f32 %v4833, 0.73333335
      %v5186 = vmul.f32 %v4834, 0.73333335
      %v5187 = vmul.f32 %v4835, 0.73333335
      %v5188 = vmul.f32 %v4836, 0.73333335
      %v5189 = vmul.f32 %v4837, 0.73333335
      %v5190 = vmul.f32 %v4838, 0.73333335
      %v5191 = vmul.f32 %v4839, 0.73333335
      %v5192 = vmul.f32 %v4840, 0.73333335
      %v5201 = vrot.slane %v5185, 2
      %v5202 = vrot.slane %v5186, 2
      %v5203 = vrot.slane %v5187, 2
      %v5204 = vrot.slane %v5188, 2
      %v5205 = vrot.slane %v5189, 2
      %v5206 = vrot.slane %v5190, 2
      %v5207 = vrot.slane %v5191, 2
      %v5208 = vrot.slane %v5192, 2
      %v5217 = vadd.f32 %v5177, %v5201
      %v5218 = vadd.f32 %v5178, %v5202
      %v5219 = vadd.f32 %v5179, %v5203
      %v5220 = vadd.f32 %v5180, %v5204
      %v5221 = vadd.f32 %v5181, %v5205
      %v5222 = vadd.f32 %v5182, %v5206
      %v5223 = vadd.f32 %v5183, %v5207
      %v5224 = vadd.f32 %v5184, %v5208
      %v5225 = vmul.f32 %v4833, 0.8
      %v5226 = vmul.f32 %v4834, 0.8
      %v5227 = vmul.f32 %v4835, 0.8
      %v5228 = vmul.f32 %v4836, 0.8
      %v5229 = vmul.f32 %v4837, 0.8
      %v5230 = vmul.f32 %v4838, 0.8
      %v5231 = vmul.f32 %v4839, 0.8
      %v5232 = vmul.f32 %v4840, 0.8
      %v5233 = vmul.f32 %v4833, 0.2
      %v5234 = vmul.f32 %v4834, 0.2
      %v5235 = vmul.f32 %v4835, 0.2
      %v5236 = vmul.f32 %v4836, 0.2
      %v5237 = vmul.f32 %v4837, 0.2
      %v5238 = vmul.f32 %v4838, 0.2
      %v5239 = vmul.f32 %v4839, 0.2
      %v5240 = vmul.f32 %v4840, 0.2
      %v5249 = vrot.slane %v5233, 2
      %v5250 = vrot.slane %v5234, 2
      %v5251 = vrot.slane %v5235, 2
      %v5252 = vrot.slane %v5236, 2
      %v5253 = vrot.slane %v5237, 2
      %v5254 = vrot.slane %v5238, 2
      %v5255 = vrot.slane %v5239, 2
      %v5256 = vrot.slane %v5240, 2
      %v5265 = vadd.f32 %v5225, %v5249
      %v5266 = vadd.f32 %v5226, %v5250
      %v5267 = vadd.f32 %v5227, %v5251
      %v5268 = vadd.f32 %v5228, %v5252
      %v5269 = vadd.f32 %v5229, %v5253
      %v5270 = vadd.f32 %v5230, %v5254
      %v5271 = vadd.f32 %v5231, %v5255
      %v5272 = vadd.f32 %v5232, %v5256
      %v5273 = vmul.f32 %v4833, 0.33333334
      %v5274 = vmul.f32 %v4834, 0.33333334
      %v5275 = vmul.f32 %v4835, 0.33333334
      %v5276 = vmul.f32 %v4836, 0.33333334
      %v5277 = vmul.f32 %v4837, 0.33333334
      %v5278 = vmul.f32 %v4838, 0.33333334
      %v5279 = vmul.f32 %v4839, 0.33333334
      %v5280 = vmul.f32 %v4840, 0.33333334
      %v5281 = vmul.f32 %v4833, 0.6666667
      %v5282 = vmul.f32 %v4834, 0.6666667
      %v5283 = vmul.f32 %v4835, 0.6666667
      %v5284 = vmul.f32 %v4836, 0.6666667
      %v5285 = vmul.f32 %v4837, 0.6666667
      %v5286 = vmul.f32 %v4838, 0.6666667
      %v5287 = vmul.f32 %v4839, 0.6666667
      %v5288 = vmul.f32 %v4840, 0.6666667
      %v5297 = vrot.slane %v5281, 2
      %v5298 = vrot.slane %v5282, 2
      %v5299 = vrot.slane %v5283, 2
      %v5300 = vrot.slane %v5284, 2
      %v5301 = vrot.slane %v5285, 2
      %v5302 = vrot.slane %v5286, 2
      %v5303 = vrot.slane %v5287, 2
      %v5304 = vrot.slane %v5288, 2
      %v5313 = vadd.f32 %v5273, %v5297
      %v5314 = vadd.f32 %v5274, %v5298
      %v5315 = vadd.f32 %v5275, %v5299
      %v5316 = vadd.f32 %v5276, %v5300
      %v5317 = vadd.f32 %v5277, %v5301
      %v5318 = vadd.f32 %v5278, %v5302
      %v5319 = vadd.f32 %v5279, %v5303
      %v5320 = vadd.f32 %v5280, %v5304
      %v5321 = vmul.f32 %v4833, 0.8666667
      %v5322 = vmul.f32 %v4834, 0.8666667
      %v5323 = vmul.f32 %v4835, 0.8666667
      %v5324 = vmul.f32 %v4836, 0.8666667
      %v5325 = vmul.f32 %v4837, 0.8666667
      %v5326 = vmul.f32 %v4838, 0.8666667
      %v5327 = vmul.f32 %v4839, 0.8666667
      %v5328 = vmul.f32 %v4840, 0.8666667
      %v5329 = vmul.f32 %v4833, 0.13333334
      %v5330 = vmul.f32 %v4834, 0.13333334
      %v5331 = vmul.f32 %v4835, 0.13333334
      %v5332 = vmul.f32 %v4836, 0.13333334
      %v5333 = vmul.f32 %v4837, 0.13333334
      %v5334 = vmul.f32 %v4838, 0.13333334
      %v5335 = vmul.f32 %v4839, 0.13333334
      %v5336 = vmul.f32 %v4840, 0.13333334
      %v5345 = vrot.slane %v5329, 2
      %v5346 = vrot.slane %v5330, 2
      %v5347 = vrot.slane %v5331, 2
      %v5348 = vrot.slane %v5332, 2
      %v5349 = vrot.slane %v5333, 2
      %v5350 = vrot.slane %v5334, 2
      %v5351 = vrot.slane %v5335, 2
      %v5352 = vrot.slane %v5336, 2
      %v5361 = vadd.f32 %v5321, %v5345
      %v5362 = vadd.f32 %v5322, %v5346
      %v5363 = vadd.f32 %v5323, %v5347
      %v5364 = vadd.f32 %v5324, %v5348
      %v5365 = vadd.f32 %v5325, %v5349
      %v5366 = vadd.f32 %v5326, %v5350
      %v5367 = vadd.f32 %v5327, %v5351
      %v5368 = vadd.f32 %v5328, %v5352
      %v5369 = vmul.f32 %v4833, 0.4
      %v5370 = vmul.f32 %v4834, 0.4
      %v5371 = vmul.f32 %v4835, 0.4
      %v5372 = vmul.f32 %v4836, 0.4
      %v5373 = vmul.f32 %v4837, 0.4
      %v5374 = vmul.f32 %v4838, 0.4
      %v5375 = vmul.f32 %v4839, 0.4
      %v5376 = vmul.f32 %v4840, 0.4
      %v5377 = vmul.f32 %v4833, 0.6
      %v5378 = vmul.f32 %v4834, 0.6
      %v5379 = vmul.f32 %v4835, 0.6
      %v5380 = vmul.f32 %v4836, 0.6
      %v5381 = vmul.f32 %v4837, 0.6
      %v5382 = vmul.f32 %v4838, 0.6
      %v5383 = vmul.f32 %v4839, 0.6
      %v5384 = vmul.f32 %v4840, 0.6
      %v5393 = vrot.slane %v5377, 2
      %v5394 = vrot.slane %v5378, 2
      %v5395 = vrot.slane %v5379, 2
      %v5396 = vrot.slane %v5380, 2
      %v5397 = vrot.slane %v5381, 2
      %v5398 = vrot.slane %v5382, 2
      %v5399 = vrot.slane %v5383, 2
      %v5400 = vrot.slane %v5384, 2
      %v5409 = vadd.f32 %v5369, %v5393
      %v5410 = vadd.f32 %v5370, %v5394
      %v5411 = vadd.f32 %v5371, %v5395
      %v5412 = vadd.f32 %v5372, %v5396
      %v5413 = vadd.f32 %v5373, %v5397
      %v5414 = vadd.f32 %v5374, %v5398
      %v5415 = vadd.f32 %v5375, %v5399
      %v5416 = vadd.f32 %v5376, %v5400
      %v5417 = vmul.f32 %v4833, 0.93333334
      %v5418 = vmul.f32 %v4834, 0.93333334
      %v5419 = vmul.f32 %v4835, 0.93333334
      %v5420 = vmul.f32 %v4836, 0.93333334
      %v5421 = vmul.f32 %v4837, 0.93333334
      %v5422 = vmul.f32 %v4838, 0.93333334
      %v5423 = vmul.f32 %v4839, 0.93333334
      %v5424 = vmul.f32 %v4840, 0.93333334
      %v5425 = vmul.f32 %v4833, 0.06666667
      %v5426 = vmul.f32 %v4834, 0.06666667
      %v5427 = vmul.f32 %v4835, 0.06666667
      %v5428 = vmul.f32 %v4836, 0.06666667
      %v5429 = vmul.f32 %v4837, 0.06666667
      %v5430 = vmul.f32 %v4838, 0.06666667
      %v5431 = vmul.f32 %v4839, 0.06666667
      %v5432 = vmul.f32 %v4840, 0.06666667
      %v5441 = vrot.slane %v5425, 2
      %v5442 = vrot.slane %v5426, 2
      %v5443 = vrot.slane %v5427, 2
      %v5444 = vrot.slane %v5428, 2
      %v5445 = vrot.slane %v5429, 2
      %v5446 = vrot.slane %v5430, 2
      %v5447 = vrot.slane %v5431, 2
      %v5448 = vrot.slane %v5432, 2
      %v5457 = vadd.f32 %v5417, %v5441
      %v5458 = vadd.f32 %v5418, %v5442
      %v5459 = vadd.f32 %v5419, %v5443
      %v5460 = vadd.f32 %v5420, %v5444
      %v5461 = vadd.f32 %v5421, %v5445
      %v5462 = vadd.f32 %v5422, %v5446
      %v5463 = vadd.f32 %v5423, %v5447
      %v5464 = vadd.f32 %v5424, %v5448
      %v5465 = vmul.f32 %v4833, 0.46666667
      %v5466 = vmul.f32 %v4834, 0.46666667
      %v5467 = vmul.f32 %v4835, 0.46666667
      %v5468 = vmul.f32 %v4836, 0.46666667
      %v5469 = vmul.f32 %v4837, 0.46666667
      %v5470 = vmul.f32 %v4838, 0.46666667
      %v5471 = vmul.f32 %v4839, 0.46666667
      %v5472 = vmul.f32 %v4840, 0.46666667
      %v5473 = vmul.f32 %v4833, 0.53333336
      %v5474 = vmul.f32 %v4834, 0.53333336
      %v5475 = vmul.f32 %v4835, 0.53333336
      %v5476 = vmul.f32 %v4836, 0.53333336
      %v5477 = vmul.f32 %v4837, 0.53333336
      %v5478 = vmul.f32 %v4838, 0.53333336
      %v5479 = vmul.f32 %v4839, 0.53333336
      %v5480 = vmul.f32 %v4840, 0.53333336
      %v5489 = vrot.slane %v5473, 2
      %v5490 = vrot.slane %v5474, 2
      %v5491 = vrot.slane %v5475, 2
      %v5492 = vrot.slane %v5476, 2
      %v5493 = vrot.slane %v5477, 2
      %v5494 = vrot.slane %v5478, 2
      %v5495 = vrot.slane %v5479, 2
      %v5496 = vrot.slane %v5480, 2
      %v5505 = vadd.f32 %v5465, %v5489
      %v5506 = vadd.f32 %v5466, %v5490
      %v5507 = vadd.f32 %v5467, %v5491
      %v5508 = vadd.f32 %v5468, %v5492
      %v5509 = vadd.f32 %v5469, %v5493
      %v5510 = vadd.f32 %v5470, %v5494
      %v5511 = vadd.f32 %v5471, %v5495
      %v5512 = vadd.f32 %v5472, %v5496
      %v5521 = vrot.slane %v4881, 7
      %v5522 = vrot.slane %v4882, 7
      %v5523 = vrot.slane %v4883, 7
      %v5524 = vrot.slane %v4884, 7
      %v5525 = vrot.slane %v4885, 7
      %v5526 = vrot.slane %v4886, 7
      %v5527 = vrot.slane %v4887, 7
      %v5528 = vrot.slane %v4888, 7
      %v5545 = vrot.slane %v4929, 6
      %v5546 = vrot.slane %v4930, 6
      %v5547 = vrot.slane %v4931, 6
      %v5548 = vrot.slane %v4932, 6
      %v5549 = vrot.slane %v4933, 6
      %v5550 = vrot.slane %v4934, 6
      %v5551 = vrot.slane %v4935, 6
      %v5552 = vrot.slane %v4936, 6
      %v5569 = vrot.slane %v4977, 7
      %v5570 = vrot.slane %v4978, 7
      %v5571 = vrot.slane %v4979, 7
      %v5572 = vrot.slane %v4980, 7
      %v5573 = vrot.slane %v4981, 7
      %v5574 = vrot.slane %v4982, 7
      %v5575 = vrot.slane %v4983, 7
      %v5576 = vrot.slane %v4984, 7
      %v5593 = vrot.slane %v5025, 6
      %v5594 = vrot.slane %v5026, 6
      %v5595 = vrot.slane %v5027, 6
      %v5596 = vrot.slane %v5028, 6
      %v5597 = vrot.slane %v5029, 6
      %v5598 = vrot.slane %v5030, 6
      %v5599 = vrot.slane %v5031, 6
      %v5600 = vrot.slane %v5032, 6
      %v5617 = vrot.slane %v5073, 7
      %v5618 = vrot.slane %v5074, 7
      %v5619 = vrot.slane %v5075, 7
      %v5620 = vrot.slane %v5076, 7
      %v5621 = vrot.slane %v5077, 7
      %v5622 = vrot.slane %v5078, 7
      %v5623 = vrot.slane %v5079, 7
      %v5624 = vrot.slane %v5080, 7
      %v5641 = vrot.slane %v5121, 6
      %v5642 = vrot.slane %v5122, 6
      %v5643 = vrot.slane %v5123, 6
      %v5644 = vrot.slane %v5124, 6
      %v5645 = vrot.slane %v5125, 6
      %v5646 = vrot.slane %v5126, 6
      %v5647 = vrot.slane %v5127, 6
      %v5648 = vrot.slane %v5128, 6
      %v5665 = vrot.slane %v5169, 7
      %v5666 = vrot.slane %v5170, 7
      %v5667 = vrot.slane %v5171, 7
      %v5668 = vrot.slane %v5172, 7
      %v5669 = vrot.slane %v5173, 7
      %v5670 = vrot.slane %v5174, 7
      %v5671 = vrot.slane %v5175, 7
      %v5672 = vrot.slane %v5176, 7
      %v5689 = vrot.slane %v5217, 6
      %v5690 = vrot.slane %v5218, 6
      %v5691 = vrot.slane %v5219, 6
      %v5692 = vrot.slane %v5220, 6
      %v5693 = vrot.slane %v5221, 6
      %v5694 = vrot.slane %v5222, 6
      %v5695 = vrot.slane %v5223, 6
      %v5696 = vrot.slane %v5224, 6
      %v5713 = vrot.slane %v5265, 7
      %v5714 = vrot.slane %v5266, 7
      %v5715 = vrot.slane %v5267, 7
      %v5716 = vrot.slane %v5268, 7
      %v5717 = vrot.slane %v5269, 7
      %v5718 = vrot.slane %v5270, 7
      %v5719 = vrot.slane %v5271, 7
      %v5720 = vrot.slane %v5272, 7
      %v5737 = vrot.slane %v5313, 6
      %v5738 = vrot.slane %v5314, 6
      %v5739 = vrot.slane %v5315, 6
      %v5740 = vrot.slane %v5316, 6
      %v5741 = vrot.slane %v5317, 6
      %v5742 = vrot.slane %v5318, 6
      %v5743 = vrot.slane %v5319, 6
      %v5744 = vrot.slane %v5320, 6
      %v5761 = vrot.slane %v5361, 7
      %v5762 = vrot.slane %v5362, 7
      %v5763 = vrot.slane %v5363, 7
      %v5764 = vrot.slane %v5364, 7
      %v5765 = vrot.slane %v5365, 7
      %v5766 = vrot.slane %v5366, 7
      %v5767 = vrot.slane %v5367, 7
      %v5768 = vrot.slane %v5368, 7
      %v5785 = vrot.slane %v5409, 6
      %v5786 = vrot.slane %v5410, 6
      %v5787 = vrot.slane %v5411, 6
      %v5788 = vrot.slane %v5412, 6
      %v5789 = vrot.slane %v5413, 6
      %v5790 = vrot.slane %v5414, 6
      %v5791 = vrot.slane %v5415, 6
      %v5792 = vrot.slane %v5416, 6
      %v5809 = vrot.slane %v5457, 7
      %v5810 = vrot.slane %v5458, 7
      %v5811 = vrot.slane %v5459, 7
      %v5812 = vrot.slane %v5460, 7
      %v5813 = vrot.slane %v5461, 7
      %v5814 = vrot.slane %v5462, 7
      %v5815 = vrot.slane %v5463, 7
      %v5816 = vrot.slane %v5464, 7
      %v5833 = vrot.slane %v5505, 6
      %v5834 = vrot.slane %v5506, 6
      %v5835 = vrot.slane %v5507, 6
      %v5836 = vrot.slane %v5508, 6
      %v5837 = vrot.slane %v5509, 6
      %v5838 = vrot.slane %v5510, 6
      %v5839 = vrot.slane %v5511, 6
      %v5840 = vrot.slane %v5512, 6
      %v5857 = vrot.slane %v4833, 7
      %v5858 = vrot.slane %v4834, 7
      %v5859 = vrot.slane %v4835, 7
      %v5860 = vrot.slane %v4836, 7
      %v5861 = vrot.slane %v4837, 7
      %v5862 = vrot.slane %v4838, 7
      %v5863 = vrot.slane %v4839, 7
      %v5864 = vrot.slane %v4840, 7
      %v5873 = vsel %vm614, %v4801, %v5521
      %v5874 = vsel %vm614, %v4802, %v5522
      %v5875 = vsel %vm614, %v4803, %v5523
      %v5876 = vsel %vm614, %v4804, %v5524
      %v5877 = vsel %vm614, %v4805, %v5525
      %v5878 = vsel %vm614, %v4806, %v5526
      %v5879 = vsel %vm614, %v4807, %v5527
      %v5880 = vsel %vm614, %v4808, %v5528
      %v5881 = vsel %vm615, %v5873, %v5545
      %v5882 = vsel %vm615, %v5874, %v5546
      %v5883 = vsel %vm615, %v5875, %v5547
      %v5884 = vsel %vm615, %v5876, %v5548
      %v5885 = vsel %vm615, %v5877, %v5549
      %v5886 = vsel %vm615, %v5878, %v5550
      %v5887 = vsel %vm615, %v5879, %v5551
      %v5888 = vsel %vm615, %v5880, %v5552
      %vm5889 = vcmask 1042432
      %v5890 = vsel %vm5889, %v5881, %v5569
      %v5891 = vsel %vm5889, %v5882, %v5570
      %v5892 = vsel %vm5889, %v5883, %v5571
      %v5893 = vsel %vm5889, %v5884, %v5572
      %v5894 = vsel %vm5889, %v5885, %v5573
      %v5895 = vsel %vm5889, %v5886, %v5574
      %v5896 = vsel %vm5889, %v5887, %v5575
      %v5897 = vsel %vm5889, %v5888, %v5576
      %vm5898 = vcmask 1043456
      %v5899 = vsel %vm5898, %v5890, %v5593
      %v5900 = vsel %vm5898, %v5891, %v5594
      %v5901 = vsel %vm5898, %v5892, %v5595
      %v5902 = vsel %vm5898, %v5893, %v5596
      %v5903 = vsel %vm5898, %v5894, %v5597
      %v5904 = vsel %vm5898, %v5895, %v5598
      %v5905 = vsel %vm5898, %v5896, %v5599
      %v5906 = vsel %vm5898, %v5897, %v5600
      %vm5907 = vcmask 1044480
      %v5908 = vsel %vm5907, %v5899, %v5617
      %v5909 = vsel %vm5907, %v5900, %v5618
      %v5910 = vsel %vm5907, %v5901, %v5619
      %v5911 = vsel %vm5907, %v5902, %v5620
      %v5912 = vsel %vm5907, %v5903, %v5621
      %v5913 = vsel %vm5907, %v5904, %v5622
      %v5914 = vsel %vm5907, %v5905, %v5623
      %v5915 = vsel %vm5907, %v5906, %v5624
      %vm5916 = vcmask 1045504
      %v5917 = vsel %vm5916, %v5908, %v5641
      %v5918 = vsel %vm5916, %v5909, %v5642
      %v5919 = vsel %vm5916, %v5910, %v5643
      %v5920 = vsel %vm5916, %v5911, %v5644
      %v5921 = vsel %vm5916, %v5912, %v5645
      %v5922 = vsel %vm5916, %v5913, %v5646
      %v5923 = vsel %vm5916, %v5914, %v5647
      %v5924 = vsel %vm5916, %v5915, %v5648
      %vm5925 = vcmask 1046528
      %v5926 = vsel %vm5925, %v5917, %v5665
      %v5927 = vsel %vm5925, %v5918, %v5666
      %v5928 = vsel %vm5925, %v5919, %v5667
      %v5929 = vsel %vm5925, %v5920, %v5668
      %v5930 = vsel %vm5925, %v5921, %v5669
      %v5931 = vsel %vm5925, %v5922, %v5670
      %v5932 = vsel %vm5925, %v5923, %v5671
      %v5933 = vsel %vm5925, %v5924, %v5672
      %v5934 = vsel %vm614, %v5689, %v5713
      %v5935 = vsel %vm614, %v5690, %v5714
      %v5936 = vsel %vm614, %v5691, %v5715
      %v5937 = vsel %vm614, %v5692, %v5716
      %v5938 = vsel %vm614, %v5693, %v5717
      %v5939 = vsel %vm614, %v5694, %v5718
      %v5940 = vsel %vm614, %v5695, %v5719
      %v5941 = vsel %vm614, %v5696, %v5720
      %v5942 = vsel %vm615, %v5934, %v5737
      %v5943 = vsel %vm615, %v5935, %v5738
      %v5944 = vsel %vm615, %v5936, %v5739
      %v5945 = vsel %vm615, %v5937, %v5740
      %v5946 = vsel %vm615, %v5938, %v5741
      %v5947 = vsel %vm615, %v5939, %v5742
      %v5948 = vsel %vm615, %v5940, %v5743
      %v5949 = vsel %vm615, %v5941, %v5744
      %v5950 = vsel %vm5889, %v5942, %v5761
      %v5951 = vsel %vm5889, %v5943, %v5762
      %v5952 = vsel %vm5889, %v5944, %v5763
      %v5953 = vsel %vm5889, %v5945, %v5764
      %v5954 = vsel %vm5889, %v5946, %v5765
      %v5955 = vsel %vm5889, %v5947, %v5766
      %v5956 = vsel %vm5889, %v5948, %v5767
      %v5957 = vsel %vm5889, %v5949, %v5768
      %v5958 = vsel %vm5898, %v5950, %v5785
      %v5959 = vsel %vm5898, %v5951, %v5786
      %v5960 = vsel %vm5898, %v5952, %v5787
      %v5961 = vsel %vm5898, %v5953, %v5788
      %v5962 = vsel %vm5898, %v5954, %v5789
      %v5963 = vsel %vm5898, %v5955, %v5790
      %v5964 = vsel %vm5898, %v5956, %v5791
      %v5965 = vsel %vm5898, %v5957, %v5792
      %v5966 = vsel %vm5907, %v5958, %v5809
      %v5967 = vsel %vm5907, %v5959, %v5810
      %v5968 = vsel %vm5907, %v5960, %v5811
      %v5969 = vsel %vm5907, %v5961, %v5812
      %v5970 = vsel %vm5907, %v5962, %v5813
      %v5971 = vsel %vm5907, %v5963, %v5814
      %v5972 = vsel %vm5907, %v5964, %v5815
      %v5973 = vsel %vm5907, %v5965, %v5816
      %v5974 = vsel %vm5916, %v5966, %v5833
      %v5975 = vsel %vm5916, %v5967, %v5834
      %v5976 = vsel %vm5916, %v5968, %v5835
      %v5977 = vsel %vm5916, %v5969, %v5836
      %v5978 = vsel %vm5916, %v5970, %v5837
      %v5979 = vsel %vm5916, %v5971, %v5838
      %v5980 = vsel %vm5916, %v5972, %v5839
      %v5981 = vsel %vm5916, %v5973, %v5840
      %v5982 = vsel %vm5925, %v5974, %v5857
      %v5983 = vsel %vm5925, %v5975, %v5858
      %v5984 = vsel %vm5925, %v5976, %v5859
      %v5985 = vsel %vm5925, %v5977, %v5860
      %v5986 = vsel %vm5925, %v5978, %v5861
      %v5987 = vsel %vm5925, %v5979, %v5862
      %v5988 = vsel %vm5925, %v5980, %v5863
      %v5989 = vsel %vm5925, %v5981, %v5864
      %v5990 = vmul.f32 %v5926, 0.53333336
      %v5991 = vmul.f32 %v5982, 0.53333336
      %v5992 = vmul.f32 %v5927, 0.46666667
      %v5993 = vmul.f32 %v5983, 0.46666667
      %v5994 = vadd.f32 %v5990, %v5992
      %v5995 = vadd.f32 %v5991, %v5993
      %v5996 = vmul.f32 %v5926, 0.06666667
      %v5997 = vmul.f32 %v5982, 0.06666667
      %v5998 = vmul.f32 %v5927, 0.93333334
      %v5999 = vmul.f32 %v5983, 0.93333334
      %v6000 = vadd.f32 %v5996, %v5998
      %v6001 = vadd.f32 %v5997, %v5999
      %v6002 = vmul.f32 %v5927, 0.6
      %v6003 = vmul.f32 %v5983, 0.6
      %v6004 = vmul.f32 %v5928, 0.4
      %v6005 = vmul.f32 %v5984, 0.4
      %v6006 = vadd.f32 %v6002, %v6004
      %v6007 = vadd.f32 %v6003, %v6005
      %v6008 = vmul.f32 %v5927, 0.13333334
      %v6009 = vmul.f32 %v5983, 0.13333334
      %v6010 = vmul.f32 %v5928, 0.8666667
      %v6011 = vmul.f32 %v5984, 0.8666667
      %v6012 = vadd.f32 %v6008, %v6010
      %v6013 = vadd.f32 %v6009, %v6011
      %v6014 = vmul.f32 %v5928, 0.6666667
      %v6015 = vmul.f32 %v5984, 0.6666667
      %v6016 = vmul.f32 %v5929, 0.33333334
      %v6017 = vmul.f32 %v5985, 0.33333334
      %v6018 = vadd.f32 %v6014, %v6016
      %v6019 = vadd.f32 %v6015, %v6017
      %v6020 = vmul.f32 %v5928, 0.2
      %v6021 = vmul.f32 %v5984, 0.2
      %v6022 = vmul.f32 %v5929, 0.8
      %v6023 = vmul.f32 %v5985, 0.8
      %v6024 = vadd.f32 %v6020, %v6022
      %v6025 = vadd.f32 %v6021, %v6023
      %v6026 = vmul.f32 %v5929, 0.73333335
      %v6027 = vmul.f32 %v5985, 0.73333335
      %v6028 = vmul.f32 %v5930, 0.26666668
      %v6029 = vmul.f32 %v5986, 0.26666668
      %v6030 = vadd.f32 %v6026, %v6028
      %v6031 = vadd.f32 %v6027, %v6029
      %v6032 = vmul.f32 %v5929, 0.26666668
      %v6033 = vmul.f32 %v5985, 0.26666668
      %v6034 = vmul.f32 %v5930, 0.73333335
      %v6035 = vmul.f32 %v5986, 0.73333335
      %v6036 = vadd.f32 %v6032, %v6034
      %v6037 = vadd.f32 %v6033, %v6035
      %v6038 = vmul.f32 %v5930, 0.8
      %v6039 = vmul.f32 %v5986, 0.8
      %v6040 = vmul.f32 %v5931, 0.2
      %v6041 = vmul.f32 %v5987, 0.2
      %v6042 = vadd.f32 %v6038, %v6040
      %v6043 = vadd.f32 %v6039, %v6041
      %v6044 = vmul.f32 %v5930, 0.33333334
      %v6045 = vmul.f32 %v5986, 0.33333334
      %v6046 = vmul.f32 %v5931, 0.6666667
      %v6047 = vmul.f32 %v5987, 0.6666667
      %v6048 = vadd.f32 %v6044, %v6046
      %v6049 = vadd.f32 %v6045, %v6047
      %v6050 = vmul.f32 %v5931, 0.8666667
      %v6051 = vmul.f32 %v5987, 0.8666667
      %v6052 = vmul.f32 %v5932, 0.13333334
      %v6053 = vmul.f32 %v5988, 0.13333334
      %v6054 = vadd.f32 %v6050, %v6052
      %v6055 = vadd.f32 %v6051, %v6053
      %v6056 = vmul.f32 %v5931, 0.4
      %v6057 = vmul.f32 %v5987, 0.4
      %v6058 = vmul.f32 %v5932, 0.6
      %v6059 = vmul.f32 %v5988, 0.6
      %v6060 = vadd.f32 %v6056, %v6058
      %v6061 = vadd.f32 %v6057, %v6059
      %v6062 = vmul.f32 %v5932, 0.93333334
      %v6063 = vmul.f32 %v5988, 0.93333334
      %v6064 = vmul.f32 %v5933, 0.06666667
      %v6065 = vmul.f32 %v5989, 0.06666667
      %v6066 = vadd.f32 %v6062, %v6064
      %v6067 = vadd.f32 %v6063, %v6065
      %v6068 = vmul.f32 %v5932, 0.46666667
      %v6069 = vmul.f32 %v5988, 0.46666667
      %v6070 = vmul.f32 %v5933, 0.53333336
      %v6071 = vmul.f32 %v5989, 0.53333336
      %v6072 = vadd.f32 %v6068, %v6070
      %v6073 = vadd.f32 %v6069, %v6071
      %s6074 = scalar_lea.vmem [#allocation3], 24
      %6075 = vst [vmem:[%s6074 + $0x1] sm:$0xff] %v5926
      %6076 = vst [vmem:[%s6074 + $0x9] sm:$0xff] %v5982
      %6077 = vst [vmem:[%s6074 + $0x19] sm:$0xff] %v5994
      %6078 = vst [vmem:[%s6074 + $0x21] sm:$0xff] %v5995
      %6079 = vst [vmem:[%s6074 + $0x31] sm:$0xff] %v6000
      %6080 = vst [vmem:[%s6074 + $0x39] sm:$0xff] %v6001
      %6081 = vst [vmem:[%s6074 + $0x49] sm:$0xff] %v6006
      %6082 = vst [vmem:[%s6074 + $0x51] sm:$0xff] %v6007
      %6083 = vst [vmem:[%s6074 + $0x61] sm:$0xff] %v6012
      %6084 = vst [vmem:[%s6074 + $0x69] sm:$0xff] %v6013
      %6085 = vst [vmem:[%s6074 + $0x79] sm:$0xff] %v6018
      %6086 = vst [vmem:[%s6074 + $0x81] sm:$0xff] %v6019
      %6087 = vst [vmem:[%s6074 + $0x91] sm:$0xff] %v6024
      %6088 = vst [vmem:[%s6074 + $0x99] sm:$0xff] %v6025
      %6089 = vst [vmem:[%s6074 + $0xa9] sm:$0xff] %v6030
      %6090 = vst [vmem:[%s6074 + $0xb1] sm:$0xff] %v6031
      %6091 = vst [vmem:[%s6074 + $0xc1] sm:$0xff] %v6036
      %6092 = vst [vmem:[%s6074 + $0xc9] sm:$0xff] %v6037
      %6093 = vst [vmem:[%s6074 + $0xd9] sm:$0xff] %v6042
      %6094 = vst [vmem:[%s6074 + $0xe1] sm:$0xff] %v6043
      %6095 = vst [vmem:[%s6074 + $0xf1] sm:$0xff] %v6048
      %6096 = vst [vmem:[%s6074 + $0xf9] sm:$0xff] %v6049
      %6097 = vst [vmem:[%s6074 + $0x109] sm:$0xff] %v6054
      %6098 = vst [vmem:[%s6074 + $0x111] sm:$0xff] %v6055
      %6099 = vst [vmem:[%s6074 + $0x121] sm:$0xff] %v6060
      %6100 = vst [vmem:[%s6074 + $0x129] sm:$0xff] %v6061
      %6101 = vst [vmem:[%s6074 + $0x139] sm:$0xff] %v6066
      %6102 = vst [vmem:[%s6074 + $0x141] sm:$0xff] %v6067
      %6103 = vst [vmem:[%s6074 + $0x151] sm:$0xff] %v6072
      %6104 = vst [vmem:[%s6074 + $0x159] sm:$0xff] %v6073
      %6105 = vst [vmem:[%s6074 + $0x169] sm:$0xff] %v5933
      %6106 = vst [vmem:[%s6074 + $0x171] sm:$0xff] %v5989
      %v6107 = vld [vmem:[#allocation3] sm:$0xff]
      %v6108 = vld [vmem:[#allocation3 + $0x8] sm:$0xff]
      %v6109 = vld [vmem:[#allocation3 + $0x18] sm:$0xff]
      %v6110 = vld [vmem:[#allocation3 + $0x20] sm:$0xff]
      %v6111 = vld [vmem:[#allocation3 + $0x30] sm:$0xff]
      %v6112 = vld [vmem:[#allocation3 + $0x38] sm:$0xff]
      %v6113 = vld [vmem:[#allocation3 + $0x48] sm:$0xff]
      %v6114 = vld [vmem:[#allocation3 + $0x50] sm:$0xff]
      %v6115 = vld [vmem:[#allocation3 + $0x60] sm:$0xff]
      %v6116 = vld [vmem:[#allocation3 + $0x68] sm:$0xff]
      %v6117 = vld [vmem:[#allocation3 + $0x78] sm:$0xff]
      %v6118 = vld [vmem:[#allocation3 + $0x80] sm:$0xff]
      %v6119 = vld [vmem:[#allocation3 + $0x90] sm:$0xff]
      %v6120 = vld [vmem:[#allocation3 + $0x98] sm:$0xff]
      %v6121 = vld [vmem:[#allocation3 + $0xa8] sm:$0xff]
      %v6122 = vld [vmem:[#allocation3 + $0xb0] sm:$0xff]
      %v6123 = vld [vmem:[#allocation3 + $0xc0] sm:$0xff]
      %v6124 = vld [vmem:[#allocation3 + $0xc8] sm:$0xff]
      %v6125 = vld [vmem:[#allocation3 + $0xd8] sm:$0xff]
      %v6126 = vld [vmem:[#allocation3 + $0xe0] sm:$0xff]
      %v6127 = vld [vmem:[#allocation3 + $0xf0] sm:$0xff]
      %v6128 = vld [vmem:[#allocation3 + $0xf8] sm:$0xff]
      %v6129 = vld [vmem:[#allocation3 + $0x108] sm:$0xff]
      %v6130 = vld [vmem:[#allocation3 + $0x110] sm:$0xff]
      %v6131 = vld [vmem:[#allocation3 + $0x120] sm:$0xff]
      %v6132 = vld [vmem:[#allocation3 + $0x128] sm:$0xff]
      %v6133 = vld [vmem:[#allocation3 + $0x138] sm:$0xff]
      %v6134 = vld [vmem:[#allocation3 + $0x140] sm:$0xff]
      %v6135 = vld [vmem:[#allocation3 + $0x150] sm:$0xff]
      %v6136 = vld [vmem:[#allocation3 + $0x158] sm:$0xff]
      %v6137 = vld [vmem:[#allocation3 + $0x168] sm:$0xff]
      %v6138 = vld [vmem:[#allocation3 + $0x170] sm:$0xff]
      %v6139 = vpack.c.bf16 %v6108, %v6107
      %v6140 = vpack.c.bf16 %v6110, %v6109
      %v6141 = vpack.c.bf16 %v6112, %v6111
      %v6142 = vpack.c.bf16 %v6114, %v6113
      %v6143 = vpack.c.bf16 %v6116, %v6115
      %v6144 = vpack.c.bf16 %v6118, %v6117
      %v6145 = vpack.c.bf16 %v6120, %v6119
      %v6146 = vpack.c.bf16 %v6122, %v6121
      %v6147 = vpack.c.bf16 %v6124, %v6123
      %v6148 = vpack.c.bf16 %v6126, %v6125
      %v6149 = vpack.c.bf16 %v6128, %v6127
      %v6150 = vpack.c.bf16 %v6130, %v6129
      %v6151 = vpack.c.bf16 %v6132, %v6131
      %v6152 = vpack.c.bf16 %v6134, %v6133
      %v6153 = vpack.c.bf16 %v6136, %v6135
      %v6154 = vpack.c.bf16 %v6138, %v6137
      %v6155 = vld [vmem:[%s5] sm:$0xf]
      %v6156 = vld [vmem:[%s5 + $0x4] sm:$0xf]
      %v6157 = vld [vmem:[%s5 + $0x8] sm:$0xf]
      %v6158 = vld [vmem:[%s5 + $0xc] sm:$0xf]
      %v6159 = vld [vmem:[%s5 + $0x10] sm:$0xf]
      %v6160 = vld [vmem:[%s5 + $0x14] sm:$0xf]
      %v6161 = vld [vmem:[%s5 + $0x18] sm:$0xf]
      %v6162 = vld [vmem:[%s5 + $0x1c] sm:$0xf]
      %v6163 = vld [vmem:[%s5 + $0x20] sm:$0xf]
      %v6164 = vld [vmem:[%s5 + $0x24] sm:$0xf]
      %v6165 = vld [vmem:[%s5 + $0x28] sm:$0xf]
      %v6166 = vld [vmem:[%s5 + $0x2c] sm:$0xf]
      %v6167 = vld [vmem:[%s5 + $0x30] sm:$0xf]
      %v6168 = vld [vmem:[%s5 + $0x34] sm:$0xf]
      %v6169 = vld [vmem:[%s5 + $0x38] sm:$0xf]
      %v6170 = vld [vmem:[%s5 + $0x3c] sm:$0xf]
      %v6171 = vld [vmem:[#allocation3 + $0x1] sm:$0xff]
      %v6172 = vld [vmem:[#allocation3 + $0x9] sm:$0xff]
      %v6173 = vld [vmem:[#allocation3 + $0x19] sm:$0xff]
      %v6174 = vld [vmem:[#allocation3 + $0x21] sm:$0xff]
      %v6175 = vld [vmem:[#allocation3 + $0x31] sm:$0xff]
      %v6176 = vld [vmem:[#allocation3 + $0x39] sm:$0xff]
      %v6177 = vld [vmem:[#allocation3 + $0x49] sm:$0xff]
      %v6178 = vld [vmem:[#allocation3 + $0x51] sm:$0xff]
      %v6179 = vld [vmem:[#allocation3 + $0x61] sm:$0xff]
      %v6180 = vld [vmem:[#allocation3 + $0x69] sm:$0xff]
      %v6181 = vld [vmem:[#allocation3 + $0x79] sm:$0xff]
      %v6182 = vld [vmem:[#allocation3 + $0x81] sm:$0xff]
      %v6183 = vld [vmem:[#allocation3 + $0x91] sm:$0xff]
      %v6184 = vld [vmem:[#allocation3 + $0x99] sm:$0xff]
      %v6185 = vld [vmem:[#allocation3 + $0xa9] sm:$0xff]
      %v6186 = vld [vmem:[#allocation3 + $0xb1] sm:$0xff]
      %v6187 = vld [vmem:[#allocation3 + $0xc1] sm:$0xff]
      %v6188 = vld [vmem:[#allocation3 + $0xc9] sm:$0xff]
      %v6189 = vld [vmem:[#allocation3 + $0xd9] sm:$0xff]
      %v6190 = vld [vmem:[#allocation3 + $0xe1] sm:$0xff]
      %v6191 = vld [vmem:[#allocation3 + $0xf1] sm:$0xff]
      %v6192 = vld [vmem:[#allocation3 + $0xf9] sm:$0xff]
      %v6193 = vld [vmem:[#allocation3 + $0x109] sm:$0xff]
      %v6194 = vld [vmem:[#allocation3 + $0x111] sm:$0xff]
      %v6195 = vld [vmem:[#allocation3 + $0x121] sm:$0xff]
      %v6196 = vld [vmem:[#allocation3 + $0x129] sm:$0xff]
      %v6197 = vld [vmem:[#allocation3 + $0x139] sm:$0xff]
      %v6198 = vld [vmem:[#allocation3 + $0x141] sm:$0xff]
      %v6199 = vld [vmem:[#allocation3 + $0x151] sm:$0xff]
      %v6200 = vld [vmem:[#allocation3 + $0x159] sm:$0xff]
      %v6201 = vld [vmem:[#allocation3 + $0x169] sm:$0xff]
      %v6202 = vld [vmem:[#allocation3 + $0x171] sm:$0xff]
      %v6203 = vpack.c.bf16 %v6172, %v6171
      %v6204 = vpack.c.bf16 %v6174, %v6173
      %v6205 = vpack.c.bf16 %v6176, %v6175
      %v6206 = vpack.c.bf16 %v6178, %v6177
      %v6207 = vpack.c.bf16 %v6180, %v6179
      %v6208 = vpack.c.bf16 %v6182, %v6181
      %v6209 = vpack.c.bf16 %v6184, %v6183
      %v6210 = vpack.c.bf16 %v6186, %v6185
      %v6211 = vpack.c.bf16 %v6188, %v6187
      %v6212 = vpack.c.bf16 %v6190, %v6189
      %v6213 = vpack.c.bf16 %v6192, %v6191
      %v6214 = vpack.c.bf16 %v6194, %v6193
      %v6215 = vpack.c.bf16 %v6196, %v6195
      %v6216 = vpack.c.bf16 %v6198, %v6197
      %v6217 = vpack.c.bf16 %v6200, %v6199
      %v6218 = vpack.c.bf16 %v6202, %v6201
      %s6219 = scalar_lea.vmem %s5, 64
      %v6220 = vld [vmem:[%s6219] sm:$0xf]
      %v6221 = vld [vmem:[%s6219 + $0x4] sm:$0xf]
      %v6222 = vld [vmem:[%s6219 + $0x8] sm:$0xf]
      %v6223 = vld [vmem:[%s6219 + $0xc] sm:$0xf]
      %v6224 = vld [vmem:[%s6219 + $0x10] sm:$0xf]
      %v6225 = vld [vmem:[%s6219 + $0x14] sm:$0xf]
      %v6226 = vld [vmem:[%s6219 + $0x18] sm:$0xf]
      %v6227 = vld [vmem:[%s6219 + $0x1c] sm:$0xf]
      %v6228 = vld [vmem:[%s6219 + $0x20] sm:$0xf]
      %v6229 = vld [vmem:[%s6219 + $0x24] sm:$0xf]
      %v6230 = vld [vmem:[%s6219 + $0x28] sm:$0xf]
      %v6231 = vld [vmem:[%s6219 + $0x2c] sm:$0xf]
      %v6232 = vld [vmem:[%s6219 + $0x30] sm:$0xf]
      %v6233 = vld [vmem:[%s6219 + $0x34] sm:$0xf]
      %v6234 = vld [vmem:[%s6219 + $0x38] sm:$0xf]
      %v6235 = vld [vmem:[%s6219 + $0x3c] sm:$0xf]
      %v6252 = vunpack.c.l.b16 %v6220
      %v6253 = vunpack.c.l.b16 %v6221
      %v6254 = vunpack.c.l.b16 %v6222
      %v6255 = vunpack.c.l.b16 %v6223
      %v6256 = vunpack.c.l.b16 %v6224
      %v6257 = vunpack.c.l.b16 %v6225
      %v6258 = vunpack.c.l.b16 %v6226
      %v6259 = vunpack.c.l.b16 %v6227
      %v6260 = vunpack.c.l.b16 %v6228
      %v6261 = vunpack.c.l.b16 %v6229
      %v6262 = vunpack.c.l.b16 %v6230
      %v6263 = vunpack.c.l.b16 %v6231
      %v6264 = vunpack.c.l.b16 %v6232
      %v6265 = vunpack.c.l.b16 %v6233
      %v6266 = vunpack.c.l.b16 %v6234
      %v6267 = vunpack.c.l.b16 %v6235
      %v6268 = vpack.c.b16 %v6253, %v6252
      %v6269 = vpack.c.b16 %v6255, %v6254
      %v6270 = vpack.c.b16 %v6257, %v6256
      %v6271 = vpack.c.b16 %v6259, %v6258
      %v6272 = vpack.c.b16 %v6261, %v6260
      %v6273 = vpack.c.b16 %v6263, %v6262
      %v6274 = vpack.c.b16 %v6265, %v6264
      %v6275 = vpack.c.b16 %v6267, %v6266
      %6284 = vmatpush.bf16.msra.mxu0 %v6275
      %6285 = vmatpush.bf16.msra.mxu0 %v6274
      %6286 = vmatpush.bf16.msra.mxu0 %v6273
      %6287 = vmatpush.bf16.msra.mxu0 %v6272
      %6288 = vmatpush.bf16.msra.mxu0 %v6271
      %6289 = vmatpush.bf16.msra.mxu0 %v6270
      %6290 = vmatpush.bf16.msra.mxu0 %v6269
      %6291 = vmatpush.bf16.msra.mxu0 %v6268
      %6292 = vmatmul.bf16.gmra.mxu0 %v6203
      %v6293 = vpop.f32.mrf.mxu0
      %v6294 = vadd.f32 0.0, %v6293
      %v6295 = vpop.f32.mrf.mxu0
      %v6296 = vadd.f32 0.0, %v6295
      %6297 = vmatmul.bf16.gmra.mxu0 %v6204
      %v6298 = vpop.f32.mrf.mxu0
      %v6299 = vadd.f32 0.0, %v6298
      %v6300 = vpop.f32.mrf.mxu0
      %v6301 = vadd.f32 0.0, %v6300
      %6302 = vmatmul.bf16.gmra.mxu0 %v6205
      %v6303 = vpop.f32.mrf.mxu0
      %v6304 = vadd.f32 0.0, %v6303
      %v6305 = vpop.f32.mrf.mxu0
      %v6306 = vadd.f32 0.0, %v6305
      %6307 = vmatmul.bf16.gmra.mxu0 %v6206
      %v6308 = vpop.f32.mrf.mxu0
      %v6309 = vadd.f32 0.0, %v6308
      %v6310 = vpop.f32.mrf.mxu0
      %v6311 = vadd.f32 0.0, %v6310
      %6312 = vmatmul.bf16.gmra.mxu0 %v6207
      %v6313 = vpop.f32.mrf.mxu0
      %v6314 = vadd.f32 0.0, %v6313
      %v6315 = vpop.f32.mrf.mxu0
      %v6316 = vadd.f32 0.0, %v6315
      %6317 = vmatmul.bf16.gmra.mxu0 %v6208
      %v6318 = vpop.f32.mrf.mxu0
      %v6319 = vadd.f32 0.0, %v6318
      %v6320 = vpop.f32.mrf.mxu0
      %v6321 = vadd.f32 0.0, %v6320
      %6322 = vmatmul.bf16.gmra.mxu0 %v6209
      %v6323 = vpop.f32.mrf.mxu0
      %v6324 = vadd.f32 0.0, %v6323
      %v6325 = vpop.f32.mrf.mxu0
      %v6326 = vadd.f32 0.0, %v6325
      %6327 = vmatmul.bf16.gmra.mxu0 %v6210
      %v6328 = vpop.f32.mrf.mxu0
      %v6329 = vadd.f32 0.0, %v6328
      %v6330 = vpop.f32.mrf.mxu0
      %v6331 = vadd.f32 0.0, %v6330
      %6332 = vmatmul.bf16.gmra.mxu0 %v6211
      %v6333 = vpop.f32.mrf.mxu0
      %v6334 = vadd.f32 0.0, %v6333
      %v6335 = vpop.f32.mrf.mxu0
      %v6336 = vadd.f32 0.0, %v6335
      %6337 = vmatmul.bf16.gmra.mxu0 %v6212
      %v6338 = vpop.f32.mrf.mxu0
      %v6339 = vadd.f32 0.0, %v6338
      %v6340 = vpop.f32.mrf.mxu0
      %v6341 = vadd.f32 0.0, %v6340
      %6342 = vmatmul.bf16.gmra.mxu0 %v6213
      %v6343 = vpop.f32.mrf.mxu0
      %v6344 = vadd.f32 0.0, %v6343
      %v6345 = vpop.f32.mrf.mxu0
      %v6346 = vadd.f32 0.0, %v6345
      %6347 = vmatmul.bf16.gmra.mxu0 %v6214
      %v6348 = vpop.f32.mrf.mxu0
      %v6349 = vadd.f32 0.0, %v6348
      %v6350 = vpop.f32.mrf.mxu0
      %v6351 = vadd.f32 0.0, %v6350
      %6352 = vmatmul.bf16.gmra.mxu0 %v6215
      %v6353 = vpop.f32.mrf.mxu0
      %v6354 = vadd.f32 0.0, %v6353
      %v6355 = vpop.f32.mrf.mxu0
      %v6356 = vadd.f32 0.0, %v6355
      %6357 = vmatmul.bf16.gmra.mxu0 %v6216
      %v6358 = vpop.f32.mrf.mxu0
      %v6359 = vadd.f32 0.0, %v6358
      %v6360 = vpop.f32.mrf.mxu0
      %v6361 = vadd.f32 0.0, %v6360
      %6362 = vmatmul.bf16.gmra.mxu0 %v6217
      %v6363 = vpop.f32.mrf.mxu0
      %v6364 = vadd.f32 0.0, %v6363
      %v6365 = vpop.f32.mrf.mxu0
      %v6366 = vadd.f32 0.0, %v6365
      %6367 = vmatmul.bf16.gmra.mxu0 %v6218
      %v6368 = vpop.f32.mrf.mxu0
      %v6369 = vadd.f32 0.0, %v6368
      %v6370 = vpop.f32.mrf.mxu0
      %v6371 = vadd.f32 0.0, %v6370
      %6372 = vdwg.mxu0
      %v6389 = vunpack.c.l.b16 %v6155
      %v6390 = vunpack.c.l.b16 %v6156
      %v6391 = vunpack.c.l.b16 %v6157
      %v6392 = vunpack.c.l.b16 %v6158
      %v6393 = vunpack.c.l.b16 %v6159
      %v6394 = vunpack.c.l.b16 %v6160
      %v6395 = vunpack.c.l.b16 %v6161
      %v6396 = vunpack.c.l.b16 %v6162
      %v6397 = vunpack.c.l.b16 %v6163
      %v6398 = vunpack.c.l.b16 %v6164
      %v6399 = vunpack.c.l.b16 %v6165
      %v6400 = vunpack.c.l.b16 %v6166
      %v6401 = vunpack.c.l.b16 %v6167
      %v6402 = vunpack.c.l.b16 %v6168
      %v6403 = vunpack.c.l.b16 %v6169
      %v6404 = vunpack.c.l.b16 %v6170
      %v6405 = vpack.c.b16 %v6390, %v6389
      %v6406 = vpack.c.b16 %v6392, %v6391
      %v6407 = vpack.c.b16 %v6394, %v6393
      %v6408 = vpack.c.b16 %v6396, %v6395
      %v6409 = vpack.c.b16 %v6398, %v6397
      %v6410 = vpack.c.b16 %v6400, %v6399
      %v6411 = vpack.c.b16 %v6402, %v6401
      %v6412 = vpack.c.b16 %v6404, %v6403
      %6421 = vmatpush.bf16.msra.mxu0 %v6412
      %6422 = vmatpush.bf16.msra.mxu0 %v6411
      %6423 = vmatpush.bf16.msra.mxu0 %v6410
      %6424 = vmatpush.bf16.msra.mxu0 %v6409
      %6425 = vmatpush.bf16.msra.mxu0 %v6408
      %6426 = vmatpush.bf16.msra.mxu0 %v6407
      %6427 = vmatpush.bf16.msra.mxu0 %v6406
      %6428 = vmatpush.bf16.msra.mxu0 %v6405
      %6429 = vmatmul.bf16.gmra.mxu0 %v6139
      %v6430 = vpop.f32.mrf.mxu0
      %v6431 = vadd.f32 %v6294, %v6430
      %v6432 = vpop.f32.mrf.mxu0
      %v6433 = vadd.f32 %v6296, %v6432
      %6434 = vmatmul.bf16.gmra.mxu0 %v6140
      %v6435 = vpop.f32.mrf.mxu0
      %v6436 = vadd.f32 %v6299, %v6435
      %v6437 = vpop.f32.mrf.mxu0
      %v6438 = vadd.f32 %v6301, %v6437
      %6439 = vmatmul.bf16.gmra.mxu0 %v6141
      %v6440 = vpop.f32.mrf.mxu0
      %v6441 = vadd.f32 %v6304, %v6440
      %v6442 = vpop.f32.mrf.mxu0
      %v6443 = vadd.f32 %v6306, %v6442
      %6444 = vmatmul.bf16.gmra.mxu0 %v6142
      %v6445 = vpop.f32.mrf.mxu0
      %v6446 = vadd.f32 %v6309, %v6445
      %v6447 = vpop.f32.mrf.mxu0
      %v6448 = vadd.f32 %v6311, %v6447
      %6449 = vmatmul.bf16.gmra.mxu0 %v6143
      %v6450 = vpop.f32.mrf.mxu0
      %v6451 = vadd.f32 %v6314, %v6450
      %v6452 = vpop.f32.mrf.mxu0
      %v6453 = vadd.f32 %v6316, %v6452
      %6454 = vmatmul.bf16.gmra.mxu0 %v6144
      %v6455 = vpop.f32.mrf.mxu0
      %v6456 = vadd.f32 %v6319, %v6455
      %v6457 = vpop.f32.mrf.mxu0
      %v6458 = vadd.f32 %v6321, %v6457
      %6459 = vmatmul.bf16.gmra.mxu0 %v6145
      %v6460 = vpop.f32.mrf.mxu0
      %v6461 = vadd.f32 %v6324, %v6460
      %v6462 = vpop.f32.mrf.mxu0
      %v6463 = vadd.f32 %v6326, %v6462
      %6464 = vmatmul.bf16.gmra.mxu0 %v6146
      %v6465 = vpop.f32.mrf.mxu0
      %v6466 = vadd.f32 %v6329, %v6465
      %v6467 = vpop.f32.mrf.mxu0
      %v6468 = vadd.f32 %v6331, %v6467
      %6469 = vmatmul.bf16.gmra.mxu0 %v6147
      %v6470 = vpop.f32.mrf.mxu0
      %v6471 = vadd.f32 %v6334, %v6470
      %v6472 = vpop.f32.mrf.mxu0
      %v6473 = vadd.f32 %v6336, %v6472
      %6474 = vmatmul.bf16.gmra.mxu0 %v6148
      %v6475 = vpop.f32.mrf.mxu0
      %v6476 = vadd.f32 %v6339, %v6475
      %v6477 = vpop.f32.mrf.mxu0
      %v6478 = vadd.f32 %v6341, %v6477
      %6479 = vmatmul.bf16.gmra.mxu0 %v6149
      %v6480 = vpop.f32.mrf.mxu0
      %v6481 = vadd.f32 %v6344, %v6480
      %v6482 = vpop.f32.mrf.mxu0
      %v6483 = vadd.f32 %v6346, %v6482
      %6484 = vmatmul.bf16.gmra.mxu0 %v6150
      %v6485 = vpop.f32.mrf.mxu0
      %v6486 = vadd.f32 %v6349, %v6485
      %v6487 = vpop.f32.mrf.mxu0
      %v6488 = vadd.f32 %v6351, %v6487
      %6489 = vmatmul.bf16.gmra.mxu0 %v6151
      %v6490 = vpop.f32.mrf.mxu0
      %v6491 = vadd.f32 %v6354, %v6490
      %v6492 = vpop.f32.mrf.mxu0
      %v6493 = vadd.f32 %v6356, %v6492
      %6494 = vmatmul.bf16.gmra.mxu0 %v6152
      %v6495 = vpop.f32.mrf.mxu0
      %v6496 = vadd.f32 %v6359, %v6495
      %v6497 = vpop.f32.mrf.mxu0
      %v6498 = vadd.f32 %v6361, %v6497
      %6499 = vmatmul.bf16.gmra.mxu0 %v6153
      %v6500 = vpop.f32.mrf.mxu0
      %v6501 = vadd.f32 %v6364, %v6500
      %v6502 = vpop.f32.mrf.mxu0
      %v6503 = vadd.f32 %v6366, %v6502
      %6504 = vmatmul.bf16.gmra.mxu0 %v6154
      %v6505 = vpop.f32.mrf.mxu0
      %v6506 = vadd.f32 %v6369, %v6505
      %v6507 = vpop.f32.mrf.mxu0
      %v6508 = vadd.f32 %v6371, %v6507
      %6509 = vdwg.mxu0
      %v6510 = vld [vmem:[#allocation3 + $0x2] sm:$0xff]
      %v6511 = vld [vmem:[#allocation3 + $0xa] sm:$0xff]
      %v6512 = vld [vmem:[#allocation3 + $0x1a] sm:$0xff]
      %v6513 = vld [vmem:[#allocation3 + $0x22] sm:$0xff]
      %v6514 = vld [vmem:[#allocation3 + $0x32] sm:$0xff]
      %v6515 = vld [vmem:[#allocation3 + $0x3a] sm:$0xff]
      %v6516 = vld [vmem:[#allocation3 + $0x4a] sm:$0xff]
      %v6517 = vld [vmem:[#allocation3 + $0x52] sm:$0xff]
      %v6518 = vld [vmem:[#allocation3 + $0x62] sm:$0xff]
      %v6519 = vld [vmem:[#allocation3 + $0x6a] sm:$0xff]
      %v6520 = vld [vmem:[#allocation3 + $0x7a] sm:$0xff]
      %v6521 = vld [vmem:[#allocation3 + $0x82] sm:$0xff]
      %v6522 = vld [vmem:[#allocation3 + $0x92] sm:$0xff]
      %v6523 = vld [vmem:[#allocation3 + $0x9a] sm:$0xff]
      %v6524 = vld [vmem:[#allocation3 + $0xaa] sm:$0xff]
      %v6525 = vld [vmem:[#allocation3 + $0xb2] sm:$0xff]
      %v6526 = vld [vmem:[#allocation3 + $0xc2] sm:$0xff]
      %v6527 = vld [vmem:[#allocation3 + $0xca] sm:$0xff]
      %v6528 = vld [vmem:[#allocation3 + $0xda] sm:$0xff]
      %v6529 = vld [vmem:[#allocation3 + $0xe2] sm:$0xff]
      %v6530 = vld [vmem:[#allocation3 + $0xf2] sm:$0xff]
      %v6531 = vld [vmem:[#allocation3 + $0xfa] sm:$0xff]
      %v6532 = vld [vmem:[#allocation3 + $0x10a] sm:$0xff]
      %v6533 = vld [vmem:[#allocation3 + $0x112] sm:$0xff]
      %v6534 = vld [vmem:[#allocation3 + $0x122] sm:$0xff]
      %v6535 = vld [vmem:[#allocation3 + $0x12a] sm:$0xff]
      %v6536 = vld [vmem:[#allocation3 + $0x13a] sm:$0xff]
      %v6537 = vld [vmem:[#allocation3 + $0x142] sm:$0xff]
      %v6538 = vld [vmem:[#allocation3 + $0x152] sm:$0xff]
      %v6539 = vld [vmem:[#allocation3 + $0x15a] sm:$0xff]
      %v6540 = vld [vmem:[#allocation3 + $0x16a] sm:$0xff]
      %v6541 = vld [vmem:[#allocation3 + $0x172] sm:$0xff]
      %v6542 = vpack.c.bf16 %v6511, %v6510
      %v6543 = vpack.c.bf16 %v6513, %v6512
      %v6544 = vpack.c.bf16 %v6515, %v6514
      %v6545 = vpack.c.bf16 %v6517, %v6516
      %v6546 = vpack.c.bf16 %v6519, %v6518
      %v6547 = vpack.c.bf16 %v6521, %v6520
      %v6548 = vpack.c.bf16 %v6523, %v6522
      %v6549 = vpack.c.bf16 %v6525, %v6524
      %v6550 = vpack.c.bf16 %v6527, %v6526
      %v6551 = vpack.c.bf16 %v6529, %v6528
      %v6552 = vpack.c.bf16 %v6531, %v6530
      %v6553 = vpack.c.bf16 %v6533, %v6532
      %v6554 = vpack.c.bf16 %v6535, %v6534
      %v6555 = vpack.c.bf16 %v6537, %v6536
      %v6556 = vpack.c.bf16 %v6539, %v6538
      %v6557 = vpack.c.bf16 %v6541, %v6540
      %s6558 = scalar_lea.vmem %s5, 128
      %v6559 = vld [vmem:[%s6558] sm:$0xf]
      %v6560 = vld [vmem:[%s6558 + $0x4] sm:$0xf]
      %v6561 = vld [vmem:[%s6558 + $0x8] sm:$0xf]
      %v6562 = vld [vmem:[%s6558 + $0xc] sm:$0xf]
      %v6563 = vld [vmem:[%s6558 + $0x10] sm:$0xf]
      %v6564 = vld [vmem:[%s6558 + $0x14] sm:$0xf]
      %v6565 = vld [vmem:[%s6558 + $0x18] sm:$0xf]
      %v6566 = vld [vmem:[%s6558 + $0x1c] sm:$0xf]
      %v6567 = vld [vmem:[%s6558 + $0x20] sm:$0xf]
      %v6568 = vld [vmem:[%s6558 + $0x24] sm:$0xf]
      %v6569 = vld [vmem:[%s6558 + $0x28] sm:$0xf]
      %v6570 = vld [vmem:[%s6558 + $0x2c] sm:$0xf]
      %v6571 = vld [vmem:[%s6558 + $0x30] sm:$0xf]
      %v6572 = vld [vmem:[%s6558 + $0x34] sm:$0xf]
      %v6573 = vld [vmem:[%s6558 + $0x38] sm:$0xf]
      %v6574 = vld [vmem:[%s6558 + $0x3c] sm:$0xf]
      %v6591 = vunpack.c.l.b16 %v6559
      %v6592 = vunpack.c.l.b16 %v6560
      %v6593 = vunpack.c.l.b16 %v6561
      %v6594 = vunpack.c.l.b16 %v6562
      %v6595 = vunpack.c.l.b16 %v6563
      %v6596 = vunpack.c.l.b16 %v6564
      %v6597 = vunpack.c.l.b16 %v6565
      %v6598 = vunpack.c.l.b16 %v6566
      %v6599 = vunpack.c.l.b16 %v6567
      %v6600 = vunpack.c.l.b16 %v6568
      %v6601 = vunpack.c.l.b16 %v6569
      %v6602 = vunpack.c.l.b16 %v6570
      %v6603 = vunpack.c.l.b16 %v6571
      %v6604 = vunpack.c.l.b16 %v6572
      %v6605 = vunpack.c.l.b16 %v6573
      %v6606 = vunpack.c.l.b16 %v6574
      %v6607 = vpack.c.b16 %v6592, %v6591
      %v6608 = vpack.c.b16 %v6594, %v6593
      %v6609 = vpack.c.b16 %v6596, %v6595
      %v6610 = vpack.c.b16 %v6598, %v6597
      %v6611 = vpack.c.b16 %v6600, %v6599
      %v6612 = vpack.c.b16 %v6602, %v6601
      %v6613 = vpack.c.b16 %v6604, %v6603
      %v6614 = vpack.c.b16 %v6606, %v6605
      %6623 = vmatpush.bf16.msra.mxu0 %v6614
      %6624 = vmatpush.bf16.msra.mxu0 %v6613
      %6625 = vmatpush.bf16.msra.mxu0 %v6612
      %6626 = vmatpush.bf16.msra.mxu0 %v6611
      %6627 = vmatpush.bf16.msra.mxu0 %v6610
      %6628 = vmatpush.bf16.msra.mxu0 %v6609
      %6629 = vmatpush.bf16.msra.mxu0 %v6608
      %6630 = vmatpush.bf16.msra.mxu0 %v6607
      %6631 = vmatmul.bf16.gmra.mxu0 %v6542
      %v6632 = vpop.f32.mrf.mxu0
      %v6633 = vadd.f32 0.0, %v6632
      %v6634 = vpop.f32.mrf.mxu0
      %v6635 = vadd.f32 0.0, %v6634
      %6636 = vmatmul.bf16.gmra.mxu0 %v6543
      %v6637 = vpop.f32.mrf.mxu0
      %v6638 = vadd.f32 0.0, %v6637
      %v6639 = vpop.f32.mrf.mxu0
      %v6640 = vadd.f32 0.0, %v6639
      %6641 = vmatmul.bf16.gmra.mxu0 %v6544
      %v6642 = vpop.f32.mrf.mxu0
      %v6643 = vadd.f32 0.0, %v6642
      %v6644 = vpop.f32.mrf.mxu0
      %v6645 = vadd.f32 0.0, %v6644
      %6646 = vmatmul.bf16.gmra.mxu0 %v6545
      %v6647 = vpop.f32.mrf.mxu0
      %v6648 = vadd.f32 0.0, %v6647
      %v6649 = vpop.f32.mrf.mxu0
      %v6650 = vadd.f32 0.0, %v6649
      %6651 = vmatmul.bf16.gmra.mxu0 %v6546
      %v6652 = vpop.f32.mrf.mxu0
      %v6653 = vadd.f32 0.0, %v6652
      %v6654 = vpop.f32.mrf.mxu0
      %v6655 = vadd.f32 0.0, %v6654
      %6656 = vmatmul.bf16.gmra.mxu0 %v6547
      %v6657 = vpop.f32.mrf.mxu0
      %v6658 = vadd.f32 0.0, %v6657
      %v6659 = vpop.f32.mrf.mxu0
      %v6660 = vadd.f32 0.0, %v6659
      %6661 = vmatmul.bf16.gmra.mxu0 %v6548
      %v6662 = vpop.f32.mrf.mxu0
      %v6663 = vadd.f32 0.0, %v6662
      %v6664 = vpop.f32.mrf.mxu0
      %v6665 = vadd.f32 0.0, %v6664
      %6666 = vmatmul.bf16.gmra.mxu0 %v6549
      %v6667 = vpop.f32.mrf.mxu0
      %v6668 = vadd.f32 0.0, %v6667
      %v6669 = vpop.f32.mrf.mxu0
      %v6670 = vadd.f32 0.0, %v6669
      %6671 = vmatmul.bf16.gmra.mxu0 %v6550
      %v6672 = vpop.f32.mrf.mxu0
      %v6673 = vadd.f32 0.0, %v6672
      %v6674 = vpop.f32.mrf.mxu0
      %v6675 = vadd.f32 0.0, %v6674
      %6676 = vmatmul.bf16.gmra.mxu0 %v6551
      %v6677 = vpop.f32.mrf.mxu0
      %v6678 = vadd.f32 0.0, %v6677
      %v6679 = vpop.f32.mrf.mxu0
      %v6680 = vadd.f32 0.0, %v6679
      %6681 = vmatmul.bf16.gmra.mxu0 %v6552
      %v6682 = vpop.f32.mrf.mxu0
      %v6683 = vadd.f32 0.0, %v6682
      %v6684 = vpop.f32.mrf.mxu0
      %v6685 = vadd.f32 0.0, %v6684
      %6686 = vmatmul.bf16.gmra.mxu0 %v6553
      %v6687 = vpop.f32.mrf.mxu0
      %v6688 = vadd.f32 0.0, %v6687
      %v6689 = vpop.f32.mrf.mxu0
      %v6690 = vadd.f32 0.0, %v6689
      %6691 = vmatmul.bf16.gmra.mxu0 %v6554
      %v6692 = vpop.f32.mrf.mxu0
      %v6693 = vadd.f32 0.0, %v6692
      %v6694 = vpop.f32.mrf.mxu0
      %v6695 = vadd.f32 0.0, %v6694
      %6696 = vmatmul.bf16.gmra.mxu0 %v6555
      %v6697 = vpop.f32.mrf.mxu0
      %v6698 = vadd.f32 0.0, %v6697
      %v6699 = vpop.f32.mrf.mxu0
      %v6700 = vadd.f32 0.0, %v6699
      %6701 = vmatmul.bf16.gmra.mxu0 %v6556
      %v6702 = vpop.f32.mrf.mxu0
      %v6703 = vadd.f32 0.0, %v6702
      %v6704 = vpop.f32.mrf.mxu0
      %v6705 = vadd.f32 0.0, %v6704
      %6706 = vmatmul.bf16.gmra.mxu0 %v6557
      %v6707 = vpop.f32.mrf.mxu0
      %v6708 = vadd.f32 0.0, %v6707
      %v6709 = vpop.f32.mrf.mxu0
      %v6710 = vadd.f32 0.0, %v6709
      %6711 = vdwg.mxu0
      %v6712 = vadd.f32 %v6431, %v6633
      %v6713 = vadd.f32 %v6433, %v6635
      %v6714 = vadd.f32 %v6436, %v6638
      %v6715 = vadd.f32 %v6438, %v6640
      %v6716 = vadd.f32 %v6441, %v6643
      %v6717 = vadd.f32 %v6443, %v6645
      %v6718 = vadd.f32 %v6446, %v6648
      %v6719 = vadd.f32 %v6448, %v6650
      %v6720 = vadd.f32 %v6451, %v6653
      %v6721 = vadd.f32 %v6453, %v6655
      %v6722 = vadd.f32 %v6456, %v6658
      %v6723 = vadd.f32 %v6458, %v6660
      %v6724 = vadd.f32 %v6461, %v6663
      %v6725 = vadd.f32 %v6463, %v6665
      %v6726 = vadd.f32 %v6466, %v6668
      %v6727 = vadd.f32 %v6468, %v6670
      %v6728 = vadd.f32 %v6471, %v6673
      %v6729 = vadd.f32 %v6473, %v6675
      %v6730 = vadd.f32 %v6476, %v6678
      %v6731 = vadd.f32 %v6478, %v6680
      %v6732 = vadd.f32 %v6481, %v6683
      %v6733 = vadd.f32 %v6483, %v6685
      %v6734 = vadd.f32 %v6486, %v6688
      %v6735 = vadd.f32 %v6488, %v6690
      %v6736 = vadd.f32 %v6491, %v6693
      %v6737 = vadd.f32 %v6493, %v6695
      %v6738 = vadd.f32 %v6496, %v6698
      %v6739 = vadd.f32 %v6498, %v6700
      %v6740 = vadd.f32 %v6501, %v6703
      %v6741 = vadd.f32 %v6503, %v6705
      %v6742 = vadd.f32 %v6506, %v6708
      %v6743 = vadd.f32 %v6508, %v6710
      %v6744 = vld [vmem:[%s6074] sm:$0xff]
      %v6745 = vld [vmem:[%s6074 + $0x8] sm:$0xff]
      %v6746 = vld [vmem:[%s6074 + $0x18] sm:$0xff]
      %v6747 = vld [vmem:[%s6074 + $0x20] sm:$0xff]
      %v6748 = vld [vmem:[%s6074 + $0x30] sm:$0xff]
      %v6749 = vld [vmem:[%s6074 + $0x38] sm:$0xff]
      %v6750 = vld [vmem:[%s6074 + $0x48] sm:$0xff]
      %v6751 = vld [vmem:[%s6074 + $0x50] sm:$0xff]
      %v6752 = vld [vmem:[%s6074 + $0x60] sm:$0xff]
      %v6753 = vld [vmem:[%s6074 + $0x68] sm:$0xff]
      %v6754 = vld [vmem:[%s6074 + $0x78] sm:$0xff]
      %v6755 = vld [vmem:[%s6074 + $0x80] sm:$0xff]
      %v6756 = vld [vmem:[%s6074 + $0x90] sm:$0xff]
      %v6757 = vld [vmem:[%s6074 + $0x98] sm:$0xff]
      %v6758 = vld [vmem:[%s6074 + $0xa8] sm:$0xff]
      %v6759 = vld [vmem:[%s6074 + $0xb0] sm:$0xff]
      %v6760 = vld [vmem:[%s6074 + $0xc0] sm:$0xff]
      %v6761 = vld [vmem:[%s6074 + $0xc8] sm:$0xff]
      %v6762 = vld [vmem:[%s6074 + $0xd8] sm:$0xff]
      %v6763 = vld [vmem:[%s6074 + $0xe0] sm:$0xff]
      %v6764 = vld [vmem:[%s6074 + $0xf0] sm:$0xff]
      %v6765 = vld [vmem:[%s6074 + $0xf8] sm:$0xff]
      %v6766 = vld [vmem:[%s6074 + $0x108] sm:$0xff]
      %v6767 = vld [vmem:[%s6074 + $0x110] sm:$0xff]
      %v6768 = vld [vmem:[%s6074 + $0x120] sm:$0xff]
      %v6769 = vld [vmem:[%s6074 + $0x128] sm:$0xff]
      %v6770 = vld [vmem:[%s6074 + $0x138] sm:$0xff]
      %v6771 = vld [vmem:[%s6074 + $0x140] sm:$0xff]
      %v6772 = vld [vmem:[%s6074 + $0x150] sm:$0xff]
      %v6773 = vld [vmem:[%s6074 + $0x158] sm:$0xff]
      %v6774 = vld [vmem:[%s6074 + $0x168] sm:$0xff]
      %v6775 = vld [vmem:[%s6074 + $0x170] sm:$0xff]
      %v6776 = vpack.c.bf16 %v6745, %v6744
      %v6777 = vpack.c.bf16 %v6747, %v6746
      %v6778 = vpack.c.bf16 %v6749, %v6748
      %v6779 = vpack.c.bf16 %v6751, %v6750
      %v6780 = vpack.c.bf16 %v6753, %v6752
      %v6781 = vpack.c.bf16 %v6755, %v6754
      %v6782 = vpack.c.bf16 %v6757, %v6756
      %v6783 = vpack.c.bf16 %v6759, %v6758
      %v6784 = vpack.c.bf16 %v6761, %v6760
      %v6785 = vpack.c.bf16 %v6763, %v6762
      %v6786 = vpack.c.bf16 %v6765, %v6764
      %v6787 = vpack.c.bf16 %v6767, %v6766
      %v6788 = vpack.c.bf16 %v6769, %v6768
      %v6789 = vpack.c.bf16 %v6771, %v6770
      %v6790 = vpack.c.bf16 %v6773, %v6772
      %v6791 = vpack.c.bf16 %v6775, %v6774
      %s6792 = scalar_lea.vmem %s5, 192
      %v6793 = vld [vmem:[%s6792] sm:$0xf]
      %v6794 = vld [vmem:[%s6792 + $0x4] sm:$0xf]
      %v6795 = vld [vmem:[%s6792 + $0x8] sm:$0xf]
      %v6796 = vld [vmem:[%s6792 + $0xc] sm:$0xf]
      %v6797 = vld [vmem:[%s6792 + $0x10] sm:$0xf]
      %v6798 = vld [vmem:[%s6792 + $0x14] sm:$0xf]
      %v6799 = vld [vmem:[%s6792 + $0x18] sm:$0xf]
      %v6800 = vld [vmem:[%s6792 + $0x1c] sm:$0xf]
      %v6801 = vld [vmem:[%s6792 + $0x20] sm:$0xf]
      %v6802 = vld [vmem:[%s6792 + $0x24] sm:$0xf]
      %v6803 = vld [vmem:[%s6792 + $0x28] sm:$0xf]
      %v6804 = vld [vmem:[%s6792 + $0x2c] sm:$0xf]
      %v6805 = vld [vmem:[%s6792 + $0x30] sm:$0xf]
      %v6806 = vld [vmem:[%s6792 + $0x34] sm:$0xf]
      %v6807 = vld [vmem:[%s6792 + $0x38] sm:$0xf]
      %v6808 = vld [vmem:[%s6792 + $0x3c] sm:$0xf]
      %v6825 = vunpack.c.l.b16 %v6793
      %v6826 = vunpack.c.l.b16 %v6794
      %v6827 = vunpack.c.l.b16 %v6795
      %v6828 = vunpack.c.l.b16 %v6796
      %v6829 = vunpack.c.l.b16 %v6797
      %v6830 = vunpack.c.l.b16 %v6798
      %v6831 = vunpack.c.l.b16 %v6799
      %v6832 = vunpack.c.l.b16 %v6800
      %v6833 = vunpack.c.l.b16 %v6801
      %v6834 = vunpack.c.l.b16 %v6802
      %v6835 = vunpack.c.l.b16 %v6803
      %v6836 = vunpack.c.l.b16 %v6804
      %v6837 = vunpack.c.l.b16 %v6805
      %v6838 = vunpack.c.l.b16 %v6806
      %v6839 = vunpack.c.l.b16 %v6807
      %v6840 = vunpack.c.l.b16 %v6808
      %v6841 = vpack.c.b16 %v6826, %v6825
      %v6842 = vpack.c.b16 %v6828, %v6827
      %v6843 = vpack.c.b16 %v6830, %v6829
      %v6844 = vpack.c.b16 %v6832, %v6831
      %v6845 = vpack.c.b16 %v6834, %v6833
      %v6846 = vpack.c.b16 %v6836, %v6835
      %v6847 = vpack.c.b16 %v6838, %v6837
      %v6848 = vpack.c.b16 %v6840, %v6839
      %6857 = vmatpush.bf16.msra.mxu0 %v6848
      %6858 = vmatpush.bf16.msra.mxu0 %v6847
      %6859 = vmatpush.bf16.msra.mxu0 %v6846
      %6860 = vmatpush.bf16.msra.mxu0 %v6845
      %6861 = vmatpush.bf16.msra.mxu0 %v6844
      %6862 = vmatpush.bf16.msra.mxu0 %v6843
      %6863 = vmatpush.bf16.msra.mxu0 %v6842
      %6864 = vmatpush.bf16.msra.mxu0 %v6841
      %6865 = vmatmul.bf16.gmra.mxu0 %v6776
      %v6866 = vpop.f32.mrf.mxu0
      %v6867 = vadd.f32 0.0, %v6866
      %v6868 = vpop.f32.mrf.mxu0
      %v6869 = vadd.f32 0.0, %v6868
      %6870 = vmatmul.bf16.gmra.mxu0 %v6777
      %v6871 = vpop.f32.mrf.mxu0
      %v6872 = vadd.f32 0.0, %v6871
      %v6873 = vpop.f32.mrf.mxu0
      %v6874 = vadd.f32 0.0, %v6873
      %6875 = vmatmul.bf16.gmra.mxu0 %v6778
      %v6876 = vpop.f32.mrf.mxu0
      %v6877 = vadd.f32 0.0, %v6876
      %v6878 = vpop.f32.mrf.mxu0
      %v6879 = vadd.f32 0.0, %v6878
      %6880 = vmatmul.bf16.gmra.mxu0 %v6779
      %v6881 = vpop.f32.mrf.mxu0
      %v6882 = vadd.f32 0.0, %v6881
      %v6883 = vpop.f32.mrf.mxu0
      %v6884 = vadd.f32 0.0, %v6883
      %6885 = vmatmul.bf16.gmra.mxu0 %v6780
      %v6886 = vpop.f32.mrf.mxu0
      %v6887 = vadd.f32 0.0, %v6886
      %v6888 = vpop.f32.mrf.mxu0
      %v6889 = vadd.f32 0.0, %v6888
      %6890 = vmatmul.bf16.gmra.mxu0 %v6781
      %v6891 = vpop.f32.mrf.mxu0
      %v6892 = vadd.f32 0.0, %v6891
      %v6893 = vpop.f32.mrf.mxu0
      %v6894 = vadd.f32 0.0, %v6893
      %6895 = vmatmul.bf16.gmra.mxu0 %v6782
      %v6896 = vpop.f32.mrf.mxu0
      %v6897 = vadd.f32 0.0, %v6896
      %v6898 = vpop.f32.mrf.mxu0
      %v6899 = vadd.f32 0.0, %v6898
      %6900 = vmatmul.bf16.gmra.mxu0 %v6783
      %v6901 = vpop.f32.mrf.mxu0
      %v6902 = vadd.f32 0.0, %v6901
      %v6903 = vpop.f32.mrf.mxu0
      %v6904 = vadd.f32 0.0, %v6903
      %6905 = vmatmul.bf16.gmra.mxu0 %v6784
      %v6906 = vpop.f32.mrf.mxu0
      %v6907 = vadd.f32 0.0, %v6906
      %v6908 = vpop.f32.mrf.mxu0
      %v6909 = vadd.f32 0.0, %v6908
      %6910 = vmatmul.bf16.gmra.mxu0 %v6785
      %v6911 = vpop.f32.mrf.mxu0
      %v6912 = vadd.f32 0.0, %v6911
      %v6913 = vpop.f32.mrf.mxu0
      %v6914 = vadd.f32 0.0, %v6913
      %6915 = vmatmul.bf16.gmra.mxu0 %v6786
      %v6916 = vpop.f32.mrf.mxu0
      %v6917 = vadd.f32 0.0, %v6916
      %v6918 = vpop.f32.mrf.mxu0
      %v6919 = vadd.f32 0.0, %v6918
      %6920 = vmatmul.bf16.gmra.mxu0 %v6787
      %v6921 = vpop.f32.mrf.mxu0
      %v6922 = vadd.f32 0.0, %v6921
      %v6923 = vpop.f32.mrf.mxu0
      %v6924 = vadd.f32 0.0, %v6923
      %6925 = vmatmul.bf16.gmra.mxu0 %v6788
      %v6926 = vpop.f32.mrf.mxu0
      %v6927 = vadd.f32 0.0, %v6926
      %v6928 = vpop.f32.mrf.mxu0
      %v6929 = vadd.f32 0.0, %v6928
      %6930 = vmatmul.bf16.gmra.mxu0 %v6789
      %v6931 = vpop.f32.mrf.mxu0
      %v6932 = vadd.f32 0.0, %v6931
      %v6933 = vpop.f32.mrf.mxu0
      %v6934 = vadd.f32 0.0, %v6933
      %6935 = vmatmul.bf16.gmra.mxu0 %v6790
      %v6936 = vpop.f32.mrf.mxu0
      %v6937 = vadd.f32 0.0, %v6936
      %v6938 = vpop.f32.mrf.mxu0
      %v6939 = vadd.f32 0.0, %v6938
      %6940 = vmatmul.bf16.gmra.mxu0 %v6791
      %v6941 = vpop.f32.mrf.mxu0
      %v6942 = vadd.f32 0.0, %v6941
      %v6943 = vpop.f32.mrf.mxu0
      %v6944 = vadd.f32 0.0, %v6943
      %6945 = vdwg.mxu0
      %v6946 = vadd.f32 %v6712, %v6867
      %v6947 = vadd.f32 %v6713, %v6869
      %v6948 = vadd.f32 %v6714, %v6872
      %v6949 = vadd.f32 %v6715, %v6874
      %v6950 = vadd.f32 %v6716, %v6877
      %v6951 = vadd.f32 %v6717, %v6879
      %v6952 = vadd.f32 %v6718, %v6882
      %v6953 = vadd.f32 %v6719, %v6884
      %v6954 = vadd.f32 %v6720, %v6887
      %v6955 = vadd.f32 %v6721, %v6889
      %v6956 = vadd.f32 %v6722, %v6892
      %v6957 = vadd.f32 %v6723, %v6894
      %v6958 = vadd.f32 %v6724, %v6897
      %v6959 = vadd.f32 %v6725, %v6899
      %v6960 = vadd.f32 %v6726, %v6902
      %v6961 = vadd.f32 %v6727, %v6904
      %v6962 = vadd.f32 %v6728, %v6907
      %v6963 = vadd.f32 %v6729, %v6909
      %v6964 = vadd.f32 %v6730, %v6912
      %v6965 = vadd.f32 %v6731, %v6914
      %v6966 = vadd.f32 %v6732, %v6917
      %v6967 = vadd.f32 %v6733, %v6919
      %v6968 = vadd.f32 %v6734, %v6922
      %v6969 = vadd.f32 %v6735, %v6924
      %v6970 = vadd.f32 %v6736, %v6927
      %v6971 = vadd.f32 %v6737, %v6929
      %v6972 = vadd.f32 %v6738, %v6932
      %v6973 = vadd.f32 %v6739, %v6934
      %v6974 = vadd.f32 %v6740, %v6937
      %v6975 = vadd.f32 %v6741, %v6939
      %v6976 = vadd.f32 %v6742, %v6942
      %v6977 = vadd.f32 %v6743, %v6944
      %v6978 = vld [vmem:[%s6074 + $0x1] sm:$0xff]
      %v6979 = vld [vmem:[%s6074 + $0x9] sm:$0xff]
      %v6980 = vld [vmem:[%s6074 + $0x19] sm:$0xff]
      %v6981 = vld [vmem:[%s6074 + $0x21] sm:$0xff]
      %v6982 = vld [vmem:[%s6074 + $0x31] sm:$0xff]
      %v6983 = vld [vmem:[%s6074 + $0x39] sm:$0xff]
      %v6984 = vld [vmem:[%s6074 + $0x49] sm:$0xff]
      %v6985 = vld [vmem:[%s6074 + $0x51] sm:$0xff]
      %v6986 = vld [vmem:[%s6074 + $0x61] sm:$0xff]
      %v6987 = vld [vmem:[%s6074 + $0x69] sm:$0xff]
      %v6988 = vld [vmem:[%s6074 + $0x79] sm:$0xff]
      %v6989 = vld [vmem:[%s6074 + $0x81] sm:$0xff]
      %v6990 = vld [vmem:[%s6074 + $0x91] sm:$0xff]
      %v6991 = vld [vmem:[%s6074 + $0x99] sm:$0xff]
      %v6992 = vld [vmem:[%s6074 + $0xa9] sm:$0xff]
      %v6993 = vld [vmem:[%s6074 + $0xb1] sm:$0xff]
      %v6994 = vld [vmem:[%s6074 + $0xc1] sm:$0xff]
      %v6995 = vld [vmem:[%s6074 + $0xc9] sm:$0xff]
      %v6996 = vld [vmem:[%s6074 + $0xd9] sm:$0xff]
      %v6997 = vld [vmem:[%s6074 + $0xe1] sm:$0xff]
      %v6998 = vld [vmem:[%s6074 + $0xf1] sm:$0xff]
      %v6999 = vld [vmem:[%s6074 + $0xf9] sm:$0xff]
      %v7000 = vld [vmem:[%s6074 + $0x109] sm:$0xff]
      %v7001 = vld [vmem:[%s6074 + $0x111] sm:$0xff]
      %v7002 = vld [vmem:[%s6074 + $0x121] sm:$0xff]
      %v7003 = vld [vmem:[%s6074 + $0x129] sm:$0xff]
      %v7004 = vld [vmem:[%s6074 + $0x139] sm:$0xff]
      %v7005 = vld [vmem:[%s6074 + $0x141] sm:$0xff]
      %v7006 = vld [vmem:[%s6074 + $0x151] sm:$0xff]
      %v7007 = vld [vmem:[%s6074 + $0x159] sm:$0xff]
      %v7008 = vld [vmem:[%s6074 + $0x169] sm:$0xff]
      %v7009 = vld [vmem:[%s6074 + $0x171] sm:$0xff]
      %v7010 = vpack.c.bf16 %v6979, %v6978
      %v7011 = vpack.c.bf16 %v6981, %v6980
      %v7012 = vpack.c.bf16 %v6983, %v6982
      %v7013 = vpack.c.bf16 %v6985, %v6984
      %v7014 = vpack.c.bf16 %v6987, %v6986
      %v7015 = vpack.c.bf16 %v6989, %v6988
      %v7016 = vpack.c.bf16 %v6991, %v6990
      %v7017 = vpack.c.bf16 %v6993, %v6992
      %v7018 = vpack.c.bf16 %v6995, %v6994
      %v7019 = vpack.c.bf16 %v6997, %v6996
      %v7020 = vpack.c.bf16 %v6999, %v6998
      %v7021 = vpack.c.bf16 %v7001, %v7000
      %v7022 = vpack.c.bf16 %v7003, %v7002
      %v7023 = vpack.c.bf16 %v7005, %v7004
      %v7024 = vpack.c.bf16 %v7007, %v7006
      %v7025 = vpack.c.bf16 %v7009, %v7008
      %s7026 = scalar_lea.vmem %s5, 256
      %v7027 = vld [vmem:[%s7026] sm:$0xf]
      %v7028 = vld [vmem:[%s7026 + $0x4] sm:$0xf]
      %v7029 = vld [vmem:[%s7026 + $0x8] sm:$0xf]
      %v7030 = vld [vmem:[%s7026 + $0xc] sm:$0xf]
      %v7031 = vld [vmem:[%s7026 + $0x10] sm:$0xf]
      %v7032 = vld [vmem:[%s7026 + $0x14] sm:$0xf]
      %v7033 = vld [vmem:[%s7026 + $0x18] sm:$0xf]
      %v7034 = vld [vmem:[%s7026 + $0x1c] sm:$0xf]
      %v7035 = vld [vmem:[%s7026 + $0x20] sm:$0xf]
      %v7036 = vld [vmem:[%s7026 + $0x24] sm:$0xf]
      %v7037 = vld [vmem:[%s7026 + $0x28] sm:$0xf]
      %v7038 = vld [vmem:[%s7026 + $0x2c] sm:$0xf]
      %v7039 = vld [vmem:[%s7026 + $0x30] sm:$0xf]
      %v7040 = vld [vmem:[%s7026 + $0x34] sm:$0xf]
      %v7041 = vld [vmem:[%s7026 + $0x38] sm:$0xf]
      %v7042 = vld [vmem:[%s7026 + $0x3c] sm:$0xf]
      %v7059 = vunpack.c.l.b16 %v7027
      %v7060 = vunpack.c.l.b16 %v7028
      %v7061 = vunpack.c.l.b16 %v7029
      %v7062 = vunpack.c.l.b16 %v7030
      %v7063 = vunpack.c.l.b16 %v7031
      %v7064 = vunpack.c.l.b16 %v7032
      %v7065 = vunpack.c.l.b16 %v7033
      %v7066 = vunpack.c.l.b16 %v7034
      %v7067 = vunpack.c.l.b16 %v7035
      %v7068 = vunpack.c.l.b16 %v7036
      %v7069 = vunpack.c.l.b16 %v7037
      %v7070 = vunpack.c.l.b16 %v7038
      %v7071 = vunpack.c.l.b16 %v7039
      %v7072 = vunpack.c.l.b16 %v7040
      %v7073 = vunpack.c.l.b16 %v7041
      %v7074 = vunpack.c.l.b16 %v7042
      %v7075 = vpack.c.b16 %v7060, %v7059
      %v7076 = vpack.c.b16 %v7062, %v7061
      %v7077 = vpack.c.b16 %v7064, %v7063
      %v7078 = vpack.c.b16 %v7066, %v7065
      %v7079 = vpack.c.b16 %v7068, %v7067
      %v7080 = vpack.c.b16 %v7070, %v7069
      %v7081 = vpack.c.b16 %v7072, %v7071
      %v7082 = vpack.c.b16 %v7074, %v7073
      %7091 = vmatpush.bf16.msra.mxu0 %v7082
      %7092 = vmatpush.bf16.msra.mxu0 %v7081
      %7093 = vmatpush.bf16.msra.mxu0 %v7080
      %7094 = vmatpush.bf16.msra.mxu0 %v7079
      %7095 = vmatpush.bf16.msra.mxu0 %v7078
      %7096 = vmatpush.bf16.msra.mxu0 %v7077
      %7097 = vmatpush.bf16.msra.mxu0 %v7076
      %7098 = vmatpush.bf16.msra.mxu0 %v7075
      %7099 = vmatmul.bf16.gmra.mxu0 %v7010
      %v7100 = vpop.f32.mrf.mxu0
      %v7101 = vadd.f32 0.0, %v7100
      %v7102 = vpop.f32.mrf.mxu0
      %v7103 = vadd.f32 0.0, %v7102
      %7104 = vmatmul.bf16.gmra.mxu0 %v7011
      %v7105 = vpop.f32.mrf.mxu0
      %v7106 = vadd.f32 0.0, %v7105
      %v7107 = vpop.f32.mrf.mxu0
      %v7108 = vadd.f32 0.0, %v7107
      %7109 = vmatmul.bf16.gmra.mxu0 %v7012
      %v7110 = vpop.f32.mrf.mxu0
      %v7111 = vadd.f32 0.0, %v7110
      %v7112 = vpop.f32.mrf.mxu0
      %v7113 = vadd.f32 0.0, %v7112
      %7114 = vmatmul.bf16.gmra.mxu0 %v7013
      %v7115 = vpop.f32.mrf.mxu0
      %v7116 = vadd.f32 0.0, %v7115
      %v7117 = vpop.f32.mrf.mxu0
      %v7118 = vadd.f32 0.0, %v7117
      %7119 = vmatmul.bf16.gmra.mxu0 %v7014
      %v7120 = vpop.f32.mrf.mxu0
      %v7121 = vadd.f32 0.0, %v7120
      %v7122 = vpop.f32.mrf.mxu0
      %v7123 = vadd.f32 0.0, %v7122
      %7124 = vmatmul.bf16.gmra.mxu0 %v7015
      %v7125 = vpop.f32.mrf.mxu0
      %v7126 = vadd.f32 0.0, %v7125
      %v7127 = vpop.f32.mrf.mxu0
      %v7128 = vadd.f32 0.0, %v7127
      %7129 = vmatmul.bf16.gmra.mxu0 %v7016
      %v7130 = vpop.f32.mrf.mxu0
      %v7131 = vadd.f32 0.0, %v7130
      %v7132 = vpop.f32.mrf.mxu0
      %v7133 = vadd.f32 0.0, %v7132
      %7134 = vmatmul.bf16.gmra.mxu0 %v7017
      %v7135 = vpop.f32.mrf.mxu0
      %v7136 = vadd.f32 0.0, %v7135
      %v7137 = vpop.f32.mrf.mxu0
      %v7138 = vadd.f32 0.0, %v7137
      %7139 = vmatmul.bf16.gmra.mxu0 %v7018
      %v7140 = vpop.f32.mrf.mxu0
      %v7141 = vadd.f32 0.0, %v7140
      %v7142 = vpop.f32.mrf.mxu0
      %v7143 = vadd.f32 0.0, %v7142
      %7144 = vmatmul.bf16.gmra.mxu0 %v7019
      %v7145 = vpop.f32.mrf.mxu0
      %v7146 = vadd.f32 0.0, %v7145
      %v7147 = vpop.f32.mrf.mxu0
      %v7148 = vadd.f32 0.0, %v7147
      %7149 = vmatmul.bf16.gmra.mxu0 %v7020
      %v7150 = vpop.f32.mrf.mxu0
      %v7151 = vadd.f32 0.0, %v7150
      %v7152 = vpop.f32.mrf.mxu0
      %v7153 = vadd.f32 0.0, %v7152
      %7154 = vmatmul.bf16.gmra.mxu0 %v7021
      %v7155 = vpop.f32.mrf.mxu0
      %v7156 = vadd.f32 0.0, %v7155
      %v7157 = vpop.f32.mrf.mxu0
      %v7158 = vadd.f32 0.0, %v7157
      %7159 = vmatmul.bf16.gmra.mxu0 %v7022
      %v7160 = vpop.f32.mrf.mxu0
      %v7161 = vadd.f32 0.0, %v7160
      %v7162 = vpop.f32.mrf.mxu0
      %v7163 = vadd.f32 0.0, %v7162
      %7164 = vmatmul.bf16.gmra.mxu0 %v7023
      %v7165 = vpop.f32.mrf.mxu0
      %v7166 = vadd.f32 0.0, %v7165
      %v7167 = vpop.f32.mrf.mxu0
      %v7168 = vadd.f32 0.0, %v7167
      %7169 = vmatmul.bf16.gmra.mxu0 %v7024
      %v7170 = vpop.f32.mrf.mxu0
      %v7171 = vadd.f32 0.0, %v7170
      %v7172 = vpop.f32.mrf.mxu0
      %v7173 = vadd.f32 0.0, %v7172
      %7174 = vmatmul.bf16.gmra.mxu0 %v7025
      %v7175 = vpop.f32.mrf.mxu0
      %v7176 = vadd.f32 0.0, %v7175
      %v7177 = vpop.f32.mrf.mxu0
      %v7178 = vadd.f32 0.0, %v7177
      %7179 = vdwg.mxu0
      %v7180 = vadd.f32 %v6946, %v7101
      %v7181 = vadd.f32 %v6947, %v7103
      %v7182 = vadd.f32 %v6948, %v7106
      %v7183 = vadd.f32 %v6949, %v7108
      %v7184 = vadd.f32 %v6950, %v7111
      %v7185 = vadd.f32 %v6951, %v7113
      %v7186 = vadd.f32 %v6952, %v7116
      %v7187 = vadd.f32 %v6953, %v7118
      %v7188 = vadd.f32 %v6954, %v7121
      %v7189 = vadd.f32 %v6955, %v7123
      %v7190 = vadd.f32 %v6956, %v7126
      %v7191 = vadd.f32 %v6957, %v7128
      %v7192 = vadd.f32 %v6958, %v7131
      %v7193 = vadd.f32 %v6959, %v7133
      %v7194 = vadd.f32 %v6960, %v7136
      %v7195 = vadd.f32 %v6961, %v7138
      %v7196 = vadd.f32 %v6962, %v7141
      %v7197 = vadd.f32 %v6963, %v7143
      %v7198 = vadd.f32 %v6964, %v7146
      %v7199 = vadd.f32 %v6965, %v7148
      %v7200 = vadd.f32 %v6966, %v7151
      %v7201 = vadd.f32 %v6967, %v7153
      %v7202 = vadd.f32 %v6968, %v7156
      %v7203 = vadd.f32 %v6969, %v7158
      %v7204 = vadd.f32 %v6970, %v7161
      %v7205 = vadd.f32 %v6971, %v7163
      %v7206 = vadd.f32 %v6972, %v7166
      %v7207 = vadd.f32 %v6973, %v7168
      %v7208 = vadd.f32 %v6974, %v7171
      %v7209 = vadd.f32 %v6975, %v7173
      %v7210 = vadd.f32 %v6976, %v7176
      %v7211 = vadd.f32 %v6977, %v7178
      %v7212 = vld [vmem:[%s6074 + $0x2] sm:$0xff]
      %v7213 = vld [vmem:[%s6074 + $0xa] sm:$0xff]
      %v7214 = vld [vmem:[%s6074 + $0x1a] sm:$0xff]
      %v7215 = vld [vmem:[%s6074 + $0x22] sm:$0xff]
      %v7216 = vld [vmem:[%s6074 + $0x32] sm:$0xff]
      %v7217 = vld [vmem:[%s6074 + $0x3a] sm:$0xff]
      %v7218 = vld [vmem:[%s6074 + $0x4a] sm:$0xff]
      %v7219 = vld [vmem:[%s6074 + $0x52] sm:$0xff]
      %v7220 = vld [vmem:[%s6074 + $0x62] sm:$0xff]
      %v7221 = vld [vmem:[%s6074 + $0x6a] sm:$0xff]
      %v7222 = vld [vmem:[%s6074 + $0x7a] sm:$0xff]
      %v7223 = vld [vmem:[%s6074 + $0x82] sm:$0xff]
      %v7224 = vld [vmem:[%s6074 + $0x92] sm:$0xff]
      %v7225 = vld [vmem:[%s6074 + $0x9a] sm:$0xff]
      %v7226 = vld [vmem:[%s6074 + $0xaa] sm:$0xff]
      %v7227 = vld [vmem:[%s6074 + $0xb2] sm:$0xff]
      %v7228 = vld [vmem:[%s6074 + $0xc2] sm:$0xff]
      %v7229 = vld [vmem:[%s6074 + $0xca] sm:$0xff]
      %v7230 = vld [vmem:[%s6074 + $0xda] sm:$0xff]
      %v7231 = vld [vmem:[%s6074 + $0xe2] sm:$0xff]
      %v7232 = vld [vmem:[%s6074 + $0xf2] sm:$0xff]
      %v7233 = vld [vmem:[%s6074 + $0xfa] sm:$0xff]
      %v7234 = vld [vmem:[%s6074 + $0x10a] sm:$0xff]
      %v7235 = vld [vmem:[%s6074 + $0x112] sm:$0xff]
      %v7236 = vld [vmem:[%s6074 + $0x122] sm:$0xff]
      %v7237 = vld [vmem:[%s6074 + $0x12a] sm:$0xff]
      %v7238 = vld [vmem:[%s6074 + $0x13a] sm:$0xff]
      %v7239 = vld [vmem:[%s6074 + $0x142] sm:$0xff]
      %v7240 = vld [vmem:[%s6074 + $0x152] sm:$0xff]
      %v7241 = vld [vmem:[%s6074 + $0x15a] sm:$0xff]
      %v7242 = vld [vmem:[%s6074 + $0x16a] sm:$0xff]
      %v7243 = vld [vmem:[%s6074 + $0x172] sm:$0xff]
      %v7244 = vpack.c.bf16 %v7213, %v7212
      %v7245 = vpack.c.bf16 %v7215, %v7214
      %v7246 = vpack.c.bf16 %v7217, %v7216
      %v7247 = vpack.c.bf16 %v7219, %v7218
      %v7248 = vpack.c.bf16 %v7221, %v7220
      %v7249 = vpack.c.bf16 %v7223, %v7222
      %v7250 = vpack.c.bf16 %v7225, %v7224
      %v7251 = vpack.c.bf16 %v7227, %v7226
      %v7252 = vpack.c.bf16 %v7229, %v7228
      %v7253 = vpack.c.bf16 %v7231, %v7230
      %v7254 = vpack.c.bf16 %v7233, %v7232
      %v7255 = vpack.c.bf16 %v7235, %v7234
      %v7256 = vpack.c.bf16 %v7237, %v7236
      %v7257 = vpack.c.bf16 %v7239, %v7238
      %v7258 = vpack.c.bf16 %v7241, %v7240
      %v7259 = vpack.c.bf16 %v7243, %v7242
      %s7260 = scalar_lea.vmem %s5, 320
      %v7261 = vld [vmem:[%s7260] sm:$0xf]
      %v7262 = vld [vmem:[%s7260 + $0x4] sm:$0xf]
      %v7263 = vld [vmem:[%s7260 + $0x8] sm:$0xf]
      %v7264 = vld [vmem:[%s7260 + $0xc] sm:$0xf]
      %v7265 = vld [vmem:[%s7260 + $0x10] sm:$0xf]
      %v7266 = vld [vmem:[%s7260 + $0x14] sm:$0xf]
      %v7267 = vld [vmem:[%s7260 + $0x18] sm:$0xf]
      %v7268 = vld [vmem:[%s7260 + $0x1c] sm:$0xf]
      %v7269 = vld [vmem:[%s7260 + $0x20] sm:$0xf]
      %v7270 = vld [vmem:[%s7260 + $0x24] sm:$0xf]
      %v7271 = vld [vmem:[%s7260 + $0x28] sm:$0xf]
      %v7272 = vld [vmem:[%s7260 + $0x2c] sm:$0xf]
      %v7273 = vld [vmem:[%s7260 + $0x30] sm:$0xf]
      %v7274 = vld [vmem:[%s7260 + $0x34] sm:$0xf]
      %v7275 = vld [vmem:[%s7260 + $0x38] sm:$0xf]
      %v7276 = vld [vmem:[%s7260 + $0x3c] sm:$0xf]
      %v7293 = vunpack.c.l.b16 %v7261
      %v7294 = vunpack.c.l.b16 %v7262
      %v7295 = vunpack.c.l.b16 %v7263
      %v7296 = vunpack.c.l.b16 %v7264
      %v7297 = vunpack.c.l.b16 %v7265
      %v7298 = vunpack.c.l.b16 %v7266
      %v7299 = vunpack.c.l.b16 %v7267
      %v7300 = vunpack.c.l.b16 %v7268
      %v7301 = vunpack.c.l.b16 %v7269
      %v7302 = vunpack.c.l.b16 %v7270
      %v7303 = vunpack.c.l.b16 %v7271
      %v7304 = vunpack.c.l.b16 %v7272
      %v7305 = vunpack.c.l.b16 %v7273
      %v7306 = vunpack.c.l.b16 %v7274
      %v7307 = vunpack.c.l.b16 %v7275
      %v7308 = vunpack.c.l.b16 %v7276
      %v7309 = vpack.c.b16 %v7294, %v7293
      %v7310 = vpack.c.b16 %v7296, %v7295
      %v7311 = vpack.c.b16 %v7298, %v7297
      %v7312 = vpack.c.b16 %v7300, %v7299
      %v7313 = vpack.c.b16 %v7302, %v7301
      %v7314 = vpack.c.b16 %v7304, %v7303
      %v7315 = vpack.c.b16 %v7306, %v7305
      %v7316 = vpack.c.b16 %v7308, %v7307
      %7325 = vmatpush.bf16.msra.mxu0 %v7316
      %7326 = vmatpush.bf16.msra.mxu0 %v7315
      %7327 = vmatpush.bf16.msra.mxu0 %v7314
      %7328 = vmatpush.bf16.msra.mxu0 %v7313
      %7329 = vmatpush.bf16.msra.mxu0 %v7312
      %7330 = vmatpush.bf16.msra.mxu0 %v7311
      %7331 = vmatpush.bf16.msra.mxu0 %v7310
      %7332 = vmatpush.bf16.msra.mxu0 %v7309
      %7333 = vmatmul.bf16.gmra.mxu0 %v7244
      %v7334 = vpop.f32.mrf.mxu0
      %v7335 = vadd.f32 0.0, %v7334
      %v7336 = vpop.f32.mrf.mxu0
      %v7337 = vadd.f32 0.0, %v7336
      %7338 = vmatmul.bf16.gmra.mxu0 %v7245
      %v7339 = vpop.f32.mrf.mxu0
      %v7340 = vadd.f32 0.0, %v7339
      %v7341 = vpop.f32.mrf.mxu0
      %v7342 = vadd.f32 0.0, %v7341
      %7343 = vmatmul.bf16.gmra.mxu0 %v7246
      %v7344 = vpop.f32.mrf.mxu0
      %v7345 = vadd.f32 0.0, %v7344
      %v7346 = vpop.f32.mrf.mxu0
      %v7347 = vadd.f32 0.0, %v7346
      %7348 = vmatmul.bf16.gmra.mxu0 %v7247
      %v7349 = vpop.f32.mrf.mxu0
      %v7350 = vadd.f32 0.0, %v7349
      %v7351 = vpop.f32.mrf.mxu0
      %v7352 = vadd.f32 0.0, %v7351
      %7353 = vmatmul.bf16.gmra.mxu0 %v7248
      %v7354 = vpop.f32.mrf.mxu0
      %v7355 = vadd.f32 0.0, %v7354
      %v7356 = vpop.f32.mrf.mxu0
      %v7357 = vadd.f32 0.0, %v7356
      %7358 = vmatmul.bf16.gmra.mxu0 %v7249
      %v7359 = vpop.f32.mrf.mxu0
      %v7360 = vadd.f32 0.0, %v7359
      %v7361 = vpop.f32.mrf.mxu0
      %v7362 = vadd.f32 0.0, %v7361
      %7363 = vmatmul.bf16.gmra.mxu0 %v7250
      %v7364 = vpop.f32.mrf.mxu0
      %v7365 = vadd.f32 0.0, %v7364
      %v7366 = vpop.f32.mrf.mxu0
      %v7367 = vadd.f32 0.0, %v7366
      %7368 = vmatmul.bf16.gmra.mxu0 %v7251
      %v7369 = vpop.f32.mrf.mxu0
      %v7370 = vadd.f32 0.0, %v7369
      %v7371 = vpop.f32.mrf.mxu0
      %v7372 = vadd.f32 0.0, %v7371
      %7373 = vmatmul.bf16.gmra.mxu0 %v7252
      %v7374 = vpop.f32.mrf.mxu0
      %v7375 = vadd.f32 0.0, %v7374
      %v7376 = vpop.f32.mrf.mxu0
      %v7377 = vadd.f32 0.0, %v7376
      %7378 = vmatmul.bf16.gmra.mxu0 %v7253
      %v7379 = vpop.f32.mrf.mxu0
      %v7380 = vadd.f32 0.0, %v7379
      %v7381 = vpop.f32.mrf.mxu0
      %v7382 = vadd.f32 0.0, %v7381
      %7383 = vmatmul.bf16.gmra.mxu0 %v7254
      %v7384 = vpop.f32.mrf.mxu0
      %v7385 = vadd.f32 0.0, %v7384
      %v7386 = vpop.f32.mrf.mxu0
      %v7387 = vadd.f32 0.0, %v7386
      %7388 = vmatmul.bf16.gmra.mxu0 %v7255
      %v7389 = vpop.f32.mrf.mxu0
      %v7390 = vadd.f32 0.0, %v7389
      %v7391 = vpop.f32.mrf.mxu0
      %v7392 = vadd.f32 0.0, %v7391
      %7393 = vmatmul.bf16.gmra.mxu0 %v7256
      %v7394 = vpop.f32.mrf.mxu0
      %v7395 = vadd.f32 0.0, %v7394
      %v7396 = vpop.f32.mrf.mxu0
      %v7397 = vadd.f32 0.0, %v7396
      %7398 = vmatmul.bf16.gmra.mxu0 %v7257
      %v7399 = vpop.f32.mrf.mxu0
      %v7400 = vadd.f32 0.0, %v7399
      %v7401 = vpop.f32.mrf.mxu0
      %v7402 = vadd.f32 0.0, %v7401
      %7403 = vmatmul.bf16.gmra.mxu0 %v7258
      %v7404 = vpop.f32.mrf.mxu0
      %v7405 = vadd.f32 0.0, %v7404
      %v7406 = vpop.f32.mrf.mxu0
      %v7407 = vadd.f32 0.0, %v7406
      %7408 = vmatmul.bf16.gmra.mxu0 %v7259
      %v7409 = vpop.f32.mrf.mxu0
      %v7410 = vadd.f32 0.0, %v7409
      %v7411 = vpop.f32.mrf.mxu0
      %v7412 = vadd.f32 0.0, %v7411
      %7413 = vdwg.mxu0
      %v7414 = vadd.f32 %v7180, %v7335
      %v7415 = vadd.f32 %v7181, %v7337
      %v7416 = vadd.f32 %v7182, %v7340
      %v7417 = vadd.f32 %v7183, %v7342
      %v7418 = vadd.f32 %v7184, %v7345
      %v7419 = vadd.f32 %v7185, %v7347
      %v7420 = vadd.f32 %v7186, %v7350
      %v7421 = vadd.f32 %v7187, %v7352
      %v7422 = vadd.f32 %v7188, %v7355
      %v7423 = vadd.f32 %v7189, %v7357
      %v7424 = vadd.f32 %v7190, %v7360
      %v7425 = vadd.f32 %v7191, %v7362
      %v7426 = vadd.f32 %v7192, %v7365
      %v7427 = vadd.f32 %v7193, %v7367
      %v7428 = vadd.f32 %v7194, %v7370
      %v7429 = vadd.f32 %v7195, %v7372
      %v7430 = vadd.f32 %v7196, %v7375
      %v7431 = vadd.f32 %v7197, %v7377
      %v7432 = vadd.f32 %v7198, %v7380
      %v7433 = vadd.f32 %v7199, %v7382
      %v7434 = vadd.f32 %v7200, %v7385
      %v7435 = vadd.f32 %v7201, %v7387
      %v7436 = vadd.f32 %v7202, %v7390
      %v7437 = vadd.f32 %v7203, %v7392
      %v7438 = vadd.f32 %v7204, %v7395
      %v7439 = vadd.f32 %v7205, %v7397
      %v7440 = vadd.f32 %v7206, %v7400
      %v7441 = vadd.f32 %v7207, %v7402
      %v7442 = vadd.f32 %v7208, %v7405
      %v7443 = vadd.f32 %v7209, %v7407
      %v7444 = vadd.f32 %v7210, %v7410
      %v7445 = vadd.f32 %v7211, %v7412
      %s7446 = scalar_lea.vmem [#allocation3], 48
      %v7447 = vld [vmem:[%s7446] sm:$0xff]
      %v7448 = vld [vmem:[%s7446 + $0x8] sm:$0xff]
      %v7449 = vld [vmem:[%s7446 + $0x18] sm:$0xff]
      %v7450 = vld [vmem:[%s7446 + $0x20] sm:$0xff]
      %v7451 = vld [vmem:[%s7446 + $0x30] sm:$0xff]
      %v7452 = vld [vmem:[%s7446 + $0x38] sm:$0xff]
      %v7453 = vld [vmem:[%s7446 + $0x48] sm:$0xff]
      %v7454 = vld [vmem:[%s7446 + $0x50] sm:$0xff]
      %v7455 = vld [vmem:[%s7446 + $0x60] sm:$0xff]
      %v7456 = vld [vmem:[%s7446 + $0x68] sm:$0xff]
      %v7457 = vld [vmem:[%s7446 + $0x78] sm:$0xff]
      %v7458 = vld [vmem:[%s7446 + $0x80] sm:$0xff]
      %v7459 = vld [vmem:[%s7446 + $0x90] sm:$0xff]
      %v7460 = vld [vmem:[%s7446 + $0x98] sm:$0xff]
      %v7461 = vld [vmem:[%s7446 + $0xa8] sm:$0xff]
      %v7462 = vld [vmem:[%s7446 + $0xb0] sm:$0xff]
      %v7463 = vld [vmem:[%s7446 + $0xc0] sm:$0xff]
      %v7464 = vld [vmem:[%s7446 + $0xc8] sm:$0xff]
      %v7465 = vld [vmem:[%s7446 + $0xd8] sm:$0xff]
      %v7466 = vld [vmem:[%s7446 + $0xe0] sm:$0xff]
      %v7467 = vld [vmem:[%s7446 + $0xf0] sm:$0xff]
      %v7468 = vld [vmem:[%s7446 + $0xf8] sm:$0xff]
      %v7469 = vld [vmem:[%s7446 + $0x108] sm:$0xff]
      %v7470 = vld [vmem:[%s7446 + $0x110] sm:$0xff]
      %v7471 = vld [vmem:[%s7446 + $0x120] sm:$0xff]
      %v7472 = vld [vmem:[%s7446 + $0x128] sm:$0xff]
      %v7473 = vld [vmem:[%s7446 + $0x138] sm:$0xff]
      %v7474 = vld [vmem:[%s7446 + $0x140] sm:$0xff]
      %v7475 = vld [vmem:[%s7446 + $0x150] sm:$0xff]
      %v7476 = vld [vmem:[%s7446 + $0x158] sm:$0xff]
      %v7477 = vld [vmem:[%s7446 + $0x168] sm:$0xff]
      %v7478 = vld [vmem:[%s7446 + $0x170] sm:$0xff]
      %v7479 = vpack.c.bf16 %v7448, %v7447
      %v7480 = vpack.c.bf16 %v7450, %v7449
      %v7481 = vpack.c.bf16 %v7452, %v7451
      %v7482 = vpack.c.bf16 %v7454, %v7453
      %v7483 = vpack.c.bf16 %v7456, %v7455
      %v7484 = vpack.c.bf16 %v7458, %v7457
      %v7485 = vpack.c.bf16 %v7460, %v7459
      %v7486 = vpack.c.bf16 %v7462, %v7461
      %v7487 = vpack.c.bf16 %v7464, %v7463
      %v7488 = vpack.c.bf16 %v7466, %v7465
      %v7489 = vpack.c.bf16 %v7468, %v7467
      %v7490 = vpack.c.bf16 %v7470, %v7469
      %v7491 = vpack.c.bf16 %v7472, %v7471
      %v7492 = vpack.c.bf16 %v7474, %v7473
      %v7493 = vpack.c.bf16 %v7476, %v7475
      %v7494 = vpack.c.bf16 %v7478, %v7477
      %s7495 = scalar_lea.vmem %s5, 384
      %v7496 = vld [vmem:[%s7495] sm:$0xf]
      %v7497 = vld [vmem:[%s7495 + $0x4] sm:$0xf]
      %v7498 = vld [vmem:[%s7495 + $0x8] sm:$0xf]
      %v7499 = vld [vmem:[%s7495 + $0xc] sm:$0xf]
      %v7500 = vld [vmem:[%s7495 + $0x10] sm:$0xf]
      %v7501 = vld [vmem:[%s7495 + $0x14] sm:$0xf]
      %v7502 = vld [vmem:[%s7495 + $0x18] sm:$0xf]
      %v7503 = vld [vmem:[%s7495 + $0x1c] sm:$0xf]
      %v7504 = vld [vmem:[%s7495 + $0x20] sm:$0xf]
      %v7505 = vld [vmem:[%s7495 + $0x24] sm:$0xf]
      %v7506 = vld [vmem:[%s7495 + $0x28] sm:$0xf]
      %v7507 = vld [vmem:[%s7495 + $0x2c] sm:$0xf]
      %v7508 = vld [vmem:[%s7495 + $0x30] sm:$0xf]
      %v7509 = vld [vmem:[%s7495 + $0x34] sm:$0xf]
      %v7510 = vld [vmem:[%s7495 + $0x38] sm:$0xf]
      %v7511 = vld [vmem:[%s7495 + $0x3c] sm:$0xf]
      %v7528 = vunpack.c.l.b16 %v7496
      %v7529 = vunpack.c.l.b16 %v7497
      %v7530 = vunpack.c.l.b16 %v7498
      %v7531 = vunpack.c.l.b16 %v7499
      %v7532 = vunpack.c.l.b16 %v7500
      %v7533 = vunpack.c.l.b16 %v7501
      %v7534 = vunpack.c.l.b16 %v7502
      %v7535 = vunpack.c.l.b16 %v7503
      %v7536 = vunpack.c.l.b16 %v7504
      %v7537 = vunpack.c.l.b16 %v7505
      %v7538 = vunpack.c.l.b16 %v7506
      %v7539 = vunpack.c.l.b16 %v7507
      %v7540 = vunpack.c.l.b16 %v7508
      %v7541 = vunpack.c.l.b16 %v7509
      %v7542 = vunpack.c.l.b16 %v7510
      %v7543 = vunpack.c.l.b16 %v7511
      %v7544 = vpack.c.b16 %v7529, %v7528
      %v7545 = vpack.c.b16 %v7531, %v7530
      %v7546 = vpack.c.b16 %v7533, %v7532
      %v7547 = vpack.c.b16 %v7535, %v7534
      %v7548 = vpack.c.b16 %v7537, %v7536
      %v7549 = vpack.c.b16 %v7539, %v7538
      %v7550 = vpack.c.b16 %v7541, %v7540
      %v7551 = vpack.c.b16 %v7543, %v7542
      %7560 = vmatpush.bf16.msra.mxu0 %v7551
      %7561 = vmatpush.bf16.msra.mxu0 %v7550
      %7562 = vmatpush.bf16.msra.mxu0 %v7549
      %7563 = vmatpush.bf16.msra.mxu0 %v7548
      %7564 = vmatpush.bf16.msra.mxu0 %v7547
      %7565 = vmatpush.bf16.msra.mxu0 %v7546
      %7566 = vmatpush.bf16.msra.mxu0 %v7545
      %7567 = vmatpush.bf16.msra.mxu0 %v7544
      %7568 = vmatmul.bf16.gmra.mxu0 %v7479
      %v7569 = vpop.f32.mrf.mxu0
      %v7570 = vadd.f32 0.0, %v7569
      %v7571 = vpop.f32.mrf.mxu0
      %v7572 = vadd.f32 0.0, %v7571
      %7573 = vmatmul.bf16.gmra.mxu0 %v7480
      %v7574 = vpop.f32.mrf.mxu0
      %v7575 = vadd.f32 0.0, %v7574
      %v7576 = vpop.f32.mrf.mxu0
      %v7577 = vadd.f32 0.0, %v7576
      %7578 = vmatmul.bf16.gmra.mxu0 %v7481
      %v7579 = vpop.f32.mrf.mxu0
      %v7580 = vadd.f32 0.0, %v7579
      %v7581 = vpop.f32.mrf.mxu0
      %v7582 = vadd.f32 0.0, %v7581
      %7583 = vmatmul.bf16.gmra.mxu0 %v7482
      %v7584 = vpop.f32.mrf.mxu0
      %v7585 = vadd.f32 0.0, %v7584
      %v7586 = vpop.f32.mrf.mxu0
      %v7587 = vadd.f32 0.0, %v7586
      %7588 = vmatmul.bf16.gmra.mxu0 %v7483
      %v7589 = vpop.f32.mrf.mxu0
      %v7590 = vadd.f32 0.0, %v7589
      %v7591 = vpop.f32.mrf.mxu0
      %v7592 = vadd.f32 0.0, %v7591
      %7593 = vmatmul.bf16.gmra.mxu0 %v7484
      %v7594 = vpop.f32.mrf.mxu0
      %v7595 = vadd.f32 0.0, %v7594
      %v7596 = vpop.f32.mrf.mxu0
      %v7597 = vadd.f32 0.0, %v7596
      %7598 = vmatmul.bf16.gmra.mxu0 %v7485
      %v7599 = vpop.f32.mrf.mxu0
      %v7600 = vadd.f32 0.0, %v7599
      %v7601 = vpop.f32.mrf.mxu0
      %v7602 = vadd.f32 0.0, %v7601
      %7603 = vmatmul.bf16.gmra.mxu0 %v7486
      %v7604 = vpop.f32.mrf.mxu0
      %v7605 = vadd.f32 0.0, %v7604
      %v7606 = vpop.f32.mrf.mxu0
      %v7607 = vadd.f32 0.0, %v7606
      %7608 = vmatmul.bf16.gmra.mxu0 %v7487
      %v7609 = vpop.f32.mrf.mxu0
      %v7610 = vadd.f32 0.0, %v7609
      %v7611 = vpop.f32.mrf.mxu0
      %v7612 = vadd.f32 0.0, %v7611
      %7613 = vmatmul.bf16.gmra.mxu0 %v7488
      %v7614 = vpop.f32.mrf.mxu0
      %v7615 = vadd.f32 0.0, %v7614
      %v7616 = vpop.f32.mrf.mxu0
      %v7617 = vadd.f32 0.0, %v7616
      %7618 = vmatmul.bf16.gmra.mxu0 %v7489
      %v7619 = vpop.f32.mrf.mxu0
      %v7620 = vadd.f32 0.0, %v7619
      %v7621 = vpop.f32.mrf.mxu0
      %v7622 = vadd.f32 0.0, %v7621
      %7623 = vmatmul.bf16.gmra.mxu0 %v7490
      %v7624 = vpop.f32.mrf.mxu0
      %v7625 = vadd.f32 0.0, %v7624
      %v7626 = vpop.f32.mrf.mxu0
      %v7627 = vadd.f32 0.0, %v7626
      %7628 = vmatmul.bf16.gmra.mxu0 %v7491
      %v7629 = vpop.f32.mrf.mxu0
      %v7630 = vadd.f32 0.0, %v7629
      %v7631 = vpop.f32.mrf.mxu0
      %v7632 = vadd.f32 0.0, %v7631
      %7633 = vmatmul.bf16.gmra.mxu0 %v7492
      %v7634 = vpop.f32.mrf.mxu0
      %v7635 = vadd.f32 0.0, %v7634
      %v7636 = vpop.f32.mrf.mxu0
      %v7637 = vadd.f32 0.0, %v7636
      %7638 = vmatmul.bf16.gmra.mxu0 %v7493
      %v7639 = vpop.f32.mrf.mxu0
      %v7640 = vadd.f32 0.0, %v7639
      %v7641 = vpop.f32.mrf.mxu0
      %v7642 = vadd.f32 0.0, %v7641
      %7643 = vmatmul.bf16.gmra.mxu0 %v7494
      %v7644 = vpop.f32.mrf.mxu0
      %v7645 = vadd.f32 0.0, %v7644
      %v7646 = vpop.f32.mrf.mxu0
      %v7647 = vadd.f32 0.0, %v7646
      %7648 = vdwg.mxu0
      %v7649 = vadd.f32 %v7414, %v7570
      %v7650 = vadd.f32 %v7415, %v7572
      %v7651 = vadd.f32 %v7416, %v7575
      %v7652 = vadd.f32 %v7417, %v7577
      %v7653 = vadd.f32 %v7418, %v7580
      %v7654 = vadd.f32 %v7419, %v7582
      %v7655 = vadd.f32 %v7420, %v7585
      %v7656 = vadd.f32 %v7421, %v7587
      %v7657 = vadd.f32 %v7422, %v7590
      %v7658 = vadd.f32 %v7423, %v7592
      %v7659 = vadd.f32 %v7424, %v7595
      %v7660 = vadd.f32 %v7425, %v7597
      %v7661 = vadd.f32 %v7426, %v7600
      %v7662 = vadd.f32 %v7427, %v7602
      %v7663 = vadd.f32 %v7428, %v7605
      %v7664 = vadd.f32 %v7429, %v7607
      %v7665 = vadd.f32 %v7430, %v7610
      %v7666 = vadd.f32 %v7431, %v7612
      %v7667 = vadd.f32 %v7432, %v7615
      %v7668 = vadd.f32 %v7433, %v7617
      %v7669 = vadd.f32 %v7434, %v7620
      %v7670 = vadd.f32 %v7435, %v7622
      %v7671 = vadd.f32 %v7436, %v7625
      %v7672 = vadd.f32 %v7437, %v7627
      %v7673 = vadd.f32 %v7438, %v7630
      %v7674 = vadd.f32 %v7439, %v7632
      %v7675 = vadd.f32 %v7440, %v7635
      %v7676 = vadd.f32 %v7441, %v7637
      %v7677 = vadd.f32 %v7442, %v7640
      %v7678 = vadd.f32 %v7443, %v7642
      %v7679 = vadd.f32 %v7444, %v7645
      %v7680 = vadd.f32 %v7445, %v7647
      %v7681 = vld [vmem:[%s7446 + $0x1] sm:$0xff]
      %v7682 = vld [vmem:[%s7446 + $0x9] sm:$0xff]
      %v7683 = vld [vmem:[%s7446 + $0x19] sm:$0xff]
      %v7684 = vld [vmem:[%s7446 + $0x21] sm:$0xff]
      %v7685 = vld [vmem:[%s7446 + $0x31] sm:$0xff]
      %v7686 = vld [vmem:[%s7446 + $0x39] sm:$0xff]
      %v7687 = vld [vmem:[%s7446 + $0x49] sm:$0xff]
      %v7688 = vld [vmem:[%s7446 + $0x51] sm:$0xff]
      %v7689 = vld [vmem:[%s7446 + $0x61] sm:$0xff]
      %v7690 = vld [vmem:[%s7446 + $0x69] sm:$0xff]
      %v7691 = vld [vmem:[%s7446 + $0x79] sm:$0xff]
      %v7692 = vld [vmem:[%s7446 + $0x81] sm:$0xff]
      %v7693 = vld [vmem:[%s7446 + $0x91] sm:$0xff]
      %v7694 = vld [vmem:[%s7446 + $0x99] sm:$0xff]
      %v7695 = vld [vmem:[%s7446 + $0xa9] sm:$0xff]
      %v7696 = vld [vmem:[%s7446 + $0xb1] sm:$0xff]
      %v7697 = vld [vmem:[%s7446 + $0xc1] sm:$0xff]
      %v7698 = vld [vmem:[%s7446 + $0xc9] sm:$0xff]
      %v7699 = vld [vmem:[%s7446 + $0xd9] sm:$0xff]
      %v7700 = vld [vmem:[%s7446 + $0xe1] sm:$0xff]
      %v7701 = vld [vmem:[%s7446 + $0xf1] sm:$0xff]
      %v7702 = vld [vmem:[%s7446 + $0xf9] sm:$0xff]
      %v7703 = vld [vmem:[%s7446 + $0x109] sm:$0xff]
      %v7704 = vld [vmem:[%s7446 + $0x111] sm:$0xff]
      %v7705 = vld [vmem:[%s7446 + $0x121] sm:$0xff]
      %v7706 = vld [vmem:[%s7446 + $0x129] sm:$0xff]
      %v7707 = vld [vmem:[%s7446 + $0x139] sm:$0xff]
      %v7708 = vld [vmem:[%s7446 + $0x141] sm:$0xff]
      %v7709 = vld [vmem:[%s7446 + $0x151] sm:$0xff]
      %v7710 = vld [vmem:[%s7446 + $0x159] sm:$0xff]
      %v7711 = vld [vmem:[%s7446 + $0x169] sm:$0xff]
      %v7712 = vld [vmem:[%s7446 + $0x171] sm:$0xff]
      %v7713 = vpack.c.bf16 %v7682, %v7681
      %v7714 = vpack.c.bf16 %v7684, %v7683
      %v7715 = vpack.c.bf16 %v7686, %v7685
      %v7716 = vpack.c.bf16 %v7688, %v7687
      %v7717 = vpack.c.bf16 %v7690, %v7689
      %v7718 = vpack.c.bf16 %v7692, %v7691
      %v7719 = vpack.c.bf16 %v7694, %v7693
      %v7720 = vpack.c.bf16 %v7696, %v7695
      %v7721 = vpack.c.bf16 %v7698, %v7697
      %v7722 = vpack.c.bf16 %v7700, %v7699
      %v7723 = vpack.c.bf16 %v7702, %v7701
      %v7724 = vpack.c.bf16 %v7704, %v7703
      %v7725 = vpack.c.bf16 %v7706, %v7705
      %v7726 = vpack.c.bf16 %v7708, %v7707
      %v7727 = vpack.c.bf16 %v7710, %v7709
      %v7728 = vpack.c.bf16 %v7712, %v7711
      %s7729 = scalar_lea.vmem %s5, 448
      %v7730 = vld [vmem:[%s7729] sm:$0xf]
      %v7731 = vld [vmem:[%s7729 + $0x4] sm:$0xf]
      %v7732 = vld [vmem:[%s7729 + $0x8] sm:$0xf]
      %v7733 = vld [vmem:[%s7729 + $0xc] sm:$0xf]
      %v7734 = vld [vmem:[%s7729 + $0x10] sm:$0xf]
      %v7735 = vld [vmem:[%s7729 + $0x14] sm:$0xf]
      %v7736 = vld [vmem:[%s7729 + $0x18] sm:$0xf]
      %v7737 = vld [vmem:[%s7729 + $0x1c] sm:$0xf]
      %v7738 = vld [vmem:[%s7729 + $0x20] sm:$0xf]
      %v7739 = vld [vmem:[%s7729 + $0x24] sm:$0xf]
      %v7740 = vld [vmem:[%s7729 + $0x28] sm:$0xf]
      %v7741 = vld [vmem:[%s7729 + $0x2c] sm:$0xf]
      %v7742 = vld [vmem:[%s7729 + $0x30] sm:$0xf]
      %v7743 = vld [vmem:[%s7729 + $0x34] sm:$0xf]
      %v7744 = vld [vmem:[%s7729 + $0x38] sm:$0xf]
      %v7745 = vld [vmem:[%s7729 + $0x3c] sm:$0xf]
      %v7762 = vunpack.c.l.b16 %v7730
      %v7763 = vunpack.c.l.b16 %v7731
      %v7764 = vunpack.c.l.b16 %v7732
      %v7765 = vunpack.c.l.b16 %v7733
      %v7766 = vunpack.c.l.b16 %v7734
      %v7767 = vunpack.c.l.b16 %v7735
      %v7768 = vunpack.c.l.b16 %v7736
      %v7769 = vunpack.c.l.b16 %v7737
      %v7770 = vunpack.c.l.b16 %v7738
      %v7771 = vunpack.c.l.b16 %v7739
      %v7772 = vunpack.c.l.b16 %v7740
      %v7773 = vunpack.c.l.b16 %v7741
      %v7774 = vunpack.c.l.b16 %v7742
      %v7775 = vunpack.c.l.b16 %v7743
      %v7776 = vunpack.c.l.b16 %v7744
      %v7777 = vunpack.c.l.b16 %v7745
      %v7778 = vpack.c.b16 %v7763, %v7762
      %v7779 = vpack.c.b16 %v7765, %v7764
      %v7780 = vpack.c.b16 %v7767, %v7766
      %v7781 = vpack.c.b16 %v7769, %v7768
      %v7782 = vpack.c.b16 %v7771, %v7770
      %v7783 = vpack.c.b16 %v7773, %v7772
      %v7784 = vpack.c.b16 %v7775, %v7774
      %v7785 = vpack.c.b16 %v7777, %v7776
      %7794 = vmatpush.bf16.msra.mxu0 %v7785
      %7795 = vmatpush.bf16.msra.mxu0 %v7784
      %7796 = vmatpush.bf16.msra.mxu0 %v7783
      %7797 = vmatpush.bf16.msra.mxu0 %v7782
      %7798 = vmatpush.bf16.msra.mxu0 %v7781
      %7799 = vmatpush.bf16.msra.mxu0 %v7780
      %7800 = vmatpush.bf16.msra.mxu0 %v7779
      %7801 = vmatpush.bf16.msra.mxu0 %v7778
      %7802 = vmatmul.bf16.gmra.mxu0 %v7713
      %v7803 = vpop.f32.mrf.mxu0
      %v7804 = vadd.f32 0.0, %v7803
      %v7805 = vpop.f32.mrf.mxu0
      %v7806 = vadd.f32 0.0, %v7805
      %7807 = vmatmul.bf16.gmra.mxu0 %v7714
      %v7808 = vpop.f32.mrf.mxu0
      %v7809 = vadd.f32 0.0, %v7808
      %v7810 = vpop.f32.mrf.mxu0
      %v7811 = vadd.f32 0.0, %v7810
      %7812 = vmatmul.bf16.gmra.mxu0 %v7715
      %v7813 = vpop.f32.mrf.mxu0
      %v7814 = vadd.f32 0.0, %v7813
      %v7815 = vpop.f32.mrf.mxu0
      %v7816 = vadd.f32 0.0, %v7815
      %7817 = vmatmul.bf16.gmra.mxu0 %v7716
      %v7818 = vpop.f32.mrf.mxu0
      %v7819 = vadd.f32 0.0, %v7818
      %v7820 = vpop.f32.mrf.mxu0
      %v7821 = vadd.f32 0.0, %v7820
      %7822 = vmatmul.bf16.gmra.mxu0 %v7717
      %v7823 = vpop.f32.mrf.mxu0
      %v7824 = vadd.f32 0.0, %v7823
      %v7825 = vpop.f32.mrf.mxu0
      %v7826 = vadd.f32 0.0, %v7825
      %7827 = vmatmul.bf16.gmra.mxu0 %v7718
      %v7828 = vpop.f32.mrf.mxu0
      %v7829 = vadd.f32 0.0, %v7828
      %v7830 = vpop.f32.mrf.mxu0
      %v7831 = vadd.f32 0.0, %v7830
      %7832 = vmatmul.bf16.gmra.mxu0 %v7719
      %v7833 = vpop.f32.mrf.mxu0
      %v7834 = vadd.f32 0.0, %v7833
      %v7835 = vpop.f32.mrf.mxu0
      %v7836 = vadd.f32 0.0, %v7835
      %7837 = vmatmul.bf16.gmra.mxu0 %v7720
      %v7838 = vpop.f32.mrf.mxu0
      %v7839 = vadd.f32 0.0, %v7838
      %v7840 = vpop.f32.mrf.mxu0
      %v7841 = vadd.f32 0.0, %v7840
      %7842 = vmatmul.bf16.gmra.mxu0 %v7721
      %v7843 = vpop.f32.mrf.mxu0
      %v7844 = vadd.f32 0.0, %v7843
      %v7845 = vpop.f32.mrf.mxu0
      %v7846 = vadd.f32 0.0, %v7845
      %7847 = vmatmul.bf16.gmra.mxu0 %v7722
      %v7848 = vpop.f32.mrf.mxu0
      %v7849 = vadd.f32 0.0, %v7848
      %v7850 = vpop.f32.mrf.mxu0
      %v7851 = vadd.f32 0.0, %v7850
      %7852 = vmatmul.bf16.gmra.mxu0 %v7723
      %v7853 = vpop.f32.mrf.mxu0
      %v7854 = vadd.f32 0.0, %v7853
      %v7855 = vpop.f32.mrf.mxu0
      %v7856 = vadd.f32 0.0, %v7855
      %7857 = vmatmul.bf16.gmra.mxu0 %v7724
      %v7858 = vpop.f32.mrf.mxu0
      %v7859 = vadd.f32 0.0, %v7858
      %v7860 = vpop.f32.mrf.mxu0
      %v7861 = vadd.f32 0.0, %v7860
      %7862 = vmatmul.bf16.gmra.mxu0 %v7725
      %v7863 = vpop.f32.mrf.mxu0
      %v7864 = vadd.f32 0.0, %v7863
      %v7865 = vpop.f32.mrf.mxu0
      %v7866 = vadd.f32 0.0, %v7865
      %7867 = vmatmul.bf16.gmra.mxu0 %v7726
      %v7868 = vpop.f32.mrf.mxu0
      %v7869 = vadd.f32 0.0, %v7868
      %v7870 = vpop.f32.mrf.mxu0
      %v7871 = vadd.f32 0.0, %v7870
      %7872 = vmatmul.bf16.gmra.mxu0 %v7727
      %v7873 = vpop.f32.mrf.mxu0
      %v7874 = vadd.f32 0.0, %v7873
      %v7875 = vpop.f32.mrf.mxu0
      %v7876 = vadd.f32 0.0, %v7875
      %7877 = vmatmul.bf16.gmra.mxu0 %v7728
      %v7878 = vpop.f32.mrf.mxu0
      %v7879 = vadd.f32 0.0, %v7878
      %v7880 = vpop.f32.mrf.mxu0
      %v7881 = vadd.f32 0.0, %v7880
      %7882 = vdwg.mxu0
      %v7883 = vadd.f32 %v7649, %v7804
      %v7884 = vadd.f32 %v7650, %v7806
      %v7885 = vadd.f32 %v7651, %v7809
      %v7886 = vadd.f32 %v7652, %v7811
      %v7887 = vadd.f32 %v7653, %v7814
      %v7888 = vadd.f32 %v7654, %v7816
      %v7889 = vadd.f32 %v7655, %v7819
      %v7890 = vadd.f32 %v7656, %v7821
      %v7891 = vadd.f32 %v7657, %v7824
      %v7892 = vadd.f32 %v7658, %v7826
      %v7893 = vadd.f32 %v7659, %v7829
      %v7894 = vadd.f32 %v7660, %v7831
      %v7895 = vadd.f32 %v7661, %v7834
      %v7896 = vadd.f32 %v7662, %v7836
      %v7897 = vadd.f32 %v7663, %v7839
      %v7898 = vadd.f32 %v7664, %v7841
      %v7899 = vadd.f32 %v7665, %v7844
      %v7900 = vadd.f32 %v7666, %v7846
      %v7901 = vadd.f32 %v7667, %v7849
      %v7902 = vadd.f32 %v7668, %v7851
      %v7903 = vadd.f32 %v7669, %v7854
      %v7904 = vadd.f32 %v7670, %v7856
      %v7905 = vadd.f32 %v7671, %v7859
      %v7906 = vadd.f32 %v7672, %v7861
      %v7907 = vadd.f32 %v7673, %v7864
      %v7908 = vadd.f32 %v7674, %v7866
      %v7909 = vadd.f32 %v7675, %v7869
      %v7910 = vadd.f32 %v7676, %v7871
      %v7911 = vadd.f32 %v7677, %v7874
      %v7912 = vadd.f32 %v7678, %v7876
      %v7913 = vadd.f32 %v7679, %v7879
      %v7914 = vadd.f32 %v7680, %v7881
      %v7915 = vld [vmem:[%s7446 + $0x2] sm:$0xff]
      %v7916 = vld [vmem:[%s7446 + $0xa] sm:$0xff]
      %v7917 = vld [vmem:[%s7446 + $0x1a] sm:$0xff]
      %v7918 = vld [vmem:[%s7446 + $0x22] sm:$0xff]
      %v7919 = vld [vmem:[%s7446 + $0x32] sm:$0xff]
      %v7920 = vld [vmem:[%s7446 + $0x3a] sm:$0xff]
      %v7921 = vld [vmem:[%s7446 + $0x4a] sm:$0xff]
      %v7922 = vld [vmem:[%s7446 + $0x52] sm:$0xff]
      %v7923 = vld [vmem:[%s7446 + $0x62] sm:$0xff]
      %v7924 = vld [vmem:[%s7446 + $0x6a] sm:$0xff]
      %v7925 = vld [vmem:[%s7446 + $0x7a] sm:$0xff]
      %v7926 = vld [vmem:[%s7446 + $0x82] sm:$0xff]
      %v7927 = vld [vmem:[%s7446 + $0x92] sm:$0xff]
      %v7928 = vld [vmem:[%s7446 + $0x9a] sm:$0xff]
      %v7929 = vld [vmem:[%s7446 + $0xaa] sm:$0xff]
      %v7930 = vld [vmem:[%s7446 + $0xb2] sm:$0xff]
      %v7931 = vld [vmem:[%s7446 + $0xc2] sm:$0xff]
      %v7932 = vld [vmem:[%s7446 + $0xca] sm:$0xff]
      %v7933 = vld [vmem:[%s7446 + $0xda] sm:$0xff]
      %v7934 = vld [vmem:[%s7446 + $0xe2] sm:$0xff]
      %v7935 = vld [vmem:[%s7446 + $0xf2] sm:$0xff]
      %v7936 = vld [vmem:[%s7446 + $0xfa] sm:$0xff]
      %v7937 = vld [vmem:[%s7446 + $0x10a] sm:$0xff]
      %v7938 = vld [vmem:[%s7446 + $0x112] sm:$0xff]
      %v7939 = vld [vmem:[%s7446 + $0x122] sm:$0xff]
      %v7940 = vld [vmem:[%s7446 + $0x12a] sm:$0xff]
      %v7941 = vld [vmem:[%s7446 + $0x13a] sm:$0xff]
      %v7942 = vld [vmem:[%s7446 + $0x142] sm:$0xff]
      %v7943 = vld [vmem:[%s7446 + $0x152] sm:$0xff]
      %v7944 = vld [vmem:[%s7446 + $0x15a] sm:$0xff]
      %v7945 = vld [vmem:[%s7446 + $0x16a] sm:$0xff]
      %v7946 = vld [vmem:[%s7446 + $0x172] sm:$0xff]
      %v7947 = vpack.c.bf16 %v7916, %v7915
      %v7948 = vpack.c.bf16 %v7918, %v7917
      %v7949 = vpack.c.bf16 %v7920, %v7919
      %v7950 = vpack.c.bf16 %v7922, %v7921
      %v7951 = vpack.c.bf16 %v7924, %v7923
      %v7952 = vpack.c.bf16 %v7926, %v7925
      %v7953 = vpack.c.bf16 %v7928, %v7927
      %v7954 = vpack.c.bf16 %v7930, %v7929
      %v7955 = vpack.c.bf16 %v7932, %v7931
      %v7956 = vpack.c.bf16 %v7934, %v7933
      %v7957 = vpack.c.bf16 %v7936, %v7935
      %v7958 = vpack.c.bf16 %v7938, %v7937
      %v7959 = vpack.c.bf16 %v7940, %v7939
      %v7960 = vpack.c.bf16 %v7942, %v7941
      %v7961 = vpack.c.bf16 %v7944, %v7943
      %v7962 = vpack.c.bf16 %v7946, %v7945
      %s7963 = scalar_lea.vmem %s5, 512
      %v7964 = vld [vmem:[%s7963] sm:$0xf]
      %v7965 = vld [vmem:[%s7963 + $0x4] sm:$0xf]
      %v7966 = vld [vmem:[%s7963 + $0x8] sm:$0xf]
      %v7967 = vld [vmem:[%s7963 + $0xc] sm:$0xf]
      %v7968 = vld [vmem:[%s7963 + $0x10] sm:$0xf]
      %v7969 = vld [vmem:[%s7963 + $0x14] sm:$0xf]
      %v7970 = vld [vmem:[%s7963 + $0x18] sm:$0xf]
      %v7971 = vld [vmem:[%s7963 + $0x1c] sm:$0xf]
      %v7972 = vld [vmem:[%s7963 + $0x20] sm:$0xf]
      %v7973 = vld [vmem:[%s7963 + $0x24] sm:$0xf]
      %v7974 = vld [vmem:[%s7963 + $0x28] sm:$0xf]
      %v7975 = vld [vmem:[%s7963 + $0x2c] sm:$0xf]
      %v7976 = vld [vmem:[%s7963 + $0x30] sm:$0xf]
      %v7977 = vld [vmem:[%s7963 + $0x34] sm:$0xf]
      %v7978 = vld [vmem:[%s7963 + $0x38] sm:$0xf]
      %v7979 = vld [vmem:[%s7963 + $0x3c] sm:$0xf]
      %v7996 = vunpack.c.l.b16 %v7964
      %v7997 = vunpack.c.l.b16 %v7965
      %v7998 = vunpack.c.l.b16 %v7966
      %v7999 = vunpack.c.l.b16 %v7967
      %v8000 = vunpack.c.l.b16 %v7968
      %v8001 = vunpack.c.l.b16 %v7969
      %v8002 = vunpack.c.l.b16 %v7970
      %v8003 = vunpack.c.l.b16 %v7971
      %v8004 = vunpack.c.l.b16 %v7972
      %v8005 = vunpack.c.l.b16 %v7973
      %v8006 = vunpack.c.l.b16 %v7974
      %v8007 = vunpack.c.l.b16 %v7975
      %v8008 = vunpack.c.l.b16 %v7976
      %v8009 = vunpack.c.l.b16 %v7977
      %v8010 = vunpack.c.l.b16 %v7978
      %v8011 = vunpack.c.l.b16 %v7979
      %v8012 = vpack.c.b16 %v7997, %v7996
      %v8013 = vpack.c.b16 %v7999, %v7998
      %v8014 = vpack.c.b16 %v8001, %v8000
      %v8015 = vpack.c.b16 %v8003, %v8002
      %v8016 = vpack.c.b16 %v8005, %v8004
      %v8017 = vpack.c.b16 %v8007, %v8006
      %v8018 = vpack.c.b16 %v8009, %v8008
      %v8019 = vpack.c.b16 %v8011, %v8010
      %8028 = vmatpush.bf16.msra.mxu0 %v8019
      %8029 = vmatpush.bf16.msra.mxu0 %v8018
      %8030 = vmatpush.bf16.msra.mxu0 %v8017
      %8031 = vmatpush.bf16.msra.mxu0 %v8016
      %8032 = vmatpush.bf16.msra.mxu0 %v8015
      %8033 = vmatpush.bf16.msra.mxu0 %v8014
      %8034 = vmatpush.bf16.msra.mxu0 %v8013
      %8035 = vmatpush.bf16.msra.mxu0 %v8012
      %8036 = vmatmul.bf16.gmra.mxu0 %v7947
      %v8037 = vpop.f32.mrf.mxu0
      %v8038 = vadd.f32 0.0, %v8037
      %v8039 = vpop.f32.mrf.mxu0
      %v8040 = vadd.f32 0.0, %v8039
      %8041 = vmatmul.bf16.gmra.mxu0 %v7948
      %v8042 = vpop.f32.mrf.mxu0
      %v8043 = vadd.f32 0.0, %v8042
      %v8044 = vpop.f32.mrf.mxu0
      %v8045 = vadd.f32 0.0, %v8044
      %8046 = vmatmul.bf16.gmra.mxu0 %v7949
      %v8047 = vpop.f32.mrf.mxu0
      %v8048 = vadd.f32 0.0, %v8047
      %v8049 = vpop.f32.mrf.mxu0
      %v8050 = vadd.f32 0.0, %v8049
      %8051 = vmatmul.bf16.gmra.mxu0 %v7950
      %v8052 = vpop.f32.mrf.mxu0
      %v8053 = vadd.f32 0.0, %v8052
      %v8054 = vpop.f32.mrf.mxu0
      %v8055 = vadd.f32 0.0, %v8054
      %8056 = vmatmul.bf16.gmra.mxu0 %v7951
      %v8057 = vpop.f32.mrf.mxu0
      %v8058 = vadd.f32 0.0, %v8057
      %v8059 = vpop.f32.mrf.mxu0
      %v8060 = vadd.f32 0.0, %v8059
      %8061 = vmatmul.bf16.gmra.mxu0 %v7952
      %v8062 = vpop.f32.mrf.mxu0
      %v8063 = vadd.f32 0.0, %v8062
      %v8064 = vpop.f32.mrf.mxu0
      %v8065 = vadd.f32 0.0, %v8064
      %8066 = vmatmul.bf16.gmra.mxu0 %v7953
      %v8067 = vpop.f32.mrf.mxu0
      %v8068 = vadd.f32 0.0, %v8067
      %v8069 = vpop.f32.mrf.mxu0
      %v8070 = vadd.f32 0.0, %v8069
      %8071 = vmatmul.bf16.gmra.mxu0 %v7954
      %v8072 = vpop.f32.mrf.mxu0
      %v8073 = vadd.f32 0.0, %v8072
      %v8074 = vpop.f32.mrf.mxu0
      %v8075 = vadd.f32 0.0, %v8074
      %8076 = vmatmul.bf16.gmra.mxu0 %v7955
      %v8077 = vpop.f32.mrf.mxu0
      %v8078 = vadd.f32 0.0, %v8077
      %v8079 = vpop.f32.mrf.mxu0
      %v8080 = vadd.f32 0.0, %v8079
      %8081 = vmatmul.bf16.gmra.mxu0 %v7956
      %v8082 = vpop.f32.mrf.mxu0
      %v8083 = vadd.f32 0.0, %v8082
      %v8084 = vpop.f32.mrf.mxu0
      %v8085 = vadd.f32 0.0, %v8084
      %8086 = vmatmul.bf16.gmra.mxu0 %v7957
      %v8087 = vpop.f32.mrf.mxu0
      %v8088 = vadd.f32 0.0, %v8087
      %v8089 = vpop.f32.mrf.mxu0
      %v8090 = vadd.f32 0.0, %v8089
      %8091 = vmatmul.bf16.gmra.mxu0 %v7958
      %v8092 = vpop.f32.mrf.mxu0
      %v8093 = vadd.f32 0.0, %v8092
      %v8094 = vpop.f32.mrf.mxu0
      %v8095 = vadd.f32 0.0, %v8094
      %8096 = vmatmul.bf16.gmra.mxu0 %v7959
      %v8097 = vpop.f32.mrf.mxu0
      %v8098 = vadd.f32 0.0, %v8097
      %v8099 = vpop.f32.mrf.mxu0
      %v8100 = vadd.f32 0.0, %v8099
      %8101 = vmatmul.bf16.gmra.mxu0 %v7960
      %v8102 = vpop.f32.mrf.mxu0
      %v8103 = vadd.f32 0.0, %v8102
      %v8104 = vpop.f32.mrf.mxu0
      %v8105 = vadd.f32 0.0, %v8104
      %8106 = vmatmul.bf16.gmra.mxu0 %v7961
      %v8107 = vpop.f32.mrf.mxu0
      %v8108 = vadd.f32 0.0, %v8107
      %v8109 = vpop.f32.mrf.mxu0
      %v8110 = vadd.f32 0.0, %v8109
      %8111 = vmatmul.bf16.gmra.mxu0 %v7962
      %v8112 = vpop.f32.mrf.mxu0
      %v8113 = vadd.f32 0.0, %v8112
      %v8114 = vpop.f32.mrf.mxu0
      %v8115 = vadd.f32 0.0, %v8114
      %8116 = vdwg.mxu0
      %v8117 = vadd.f32 %v7883, %v8038
      %v8118 = vadd.f32 %v7884, %v8040
      %v8119 = vadd.f32 %v7885, %v8043
      %v8120 = vadd.f32 %v7886, %v8045
      %v8121 = vadd.f32 %v7887, %v8048
      %v8122 = vadd.f32 %v7888, %v8050
      %v8123 = vadd.f32 %v7889, %v8053
      %v8124 = vadd.f32 %v7890, %v8055
      %v8125 = vadd.f32 %v7891, %v8058
      %v8126 = vadd.f32 %v7892, %v8060
      %v8127 = vadd.f32 %v7893, %v8063
      %v8128 = vadd.f32 %v7894, %v8065
      %v8129 = vadd.f32 %v7895, %v8068
      %v8130 = vadd.f32 %v7896, %v8070
      %v8131 = vadd.f32 %v7897, %v8073
      %v8132 = vadd.f32 %v7898, %v8075
      %v8133 = vadd.f32 %v7899, %v8078
      %v8134 = vadd.f32 %v7900, %v8080
      %v8135 = vadd.f32 %v7901, %v8083
      %v8136 = vadd.f32 %v7902, %v8085
      %v8137 = vadd.f32 %v7903, %v8088
      %v8138 = vadd.f32 %v7904, %v8090
      %v8139 = vadd.f32 %v7905, %v8093
      %v8140 = vadd.f32 %v7906, %v8095
      %v8141 = vadd.f32 %v7907, %v8098
      %v8142 = vadd.f32 %v7908, %v8100
      %v8143 = vadd.f32 %v7909, %v8103
      %v8144 = vadd.f32 %v7910, %v8105
      %v8145 = vadd.f32 %v7911, %v8108
      %v8146 = vadd.f32 %v7912, %v8110
      %v8147 = vadd.f32 %v7913, %v8113
      %v8148 = vadd.f32 %v7914, %v8115
      %v8149 = vld [vmem:[%s6] sm:$0x1]
      %v8151 = vperm.slane %v8149, 0
      %v8153 = vadd.f32 %v8117, %v8151
      %v8154 = vadd.f32 %v8118, %v8151
      %v8155 = vadd.f32 %v8119, %v8151
      %v8156 = vadd.f32 %v8120, %v8151
      %v8157 = vadd.f32 %v8121, %v8151
      %v8158 = vadd.f32 %v8122, %v8151
      %v8159 = vadd.f32 %v8123, %v8151
      %v8160 = vadd.f32 %v8124, %v8151
      %v8161 = vadd.f32 %v8125, %v8151
      %v8162 = vadd.f32 %v8126, %v8151
      %v8163 = vadd.f32 %v8127, %v8151
      %v8164 = vadd.f32 %v8128, %v8151
      %v8165 = vadd.f32 %v8129, %v8151
      %v8166 = vadd.f32 %v8130, %v8151
      %v8167 = vadd.f32 %v8131, %v8151
      %v8168 = vadd.f32 %v8132, %v8151
      %v8169 = vadd.f32 %v8133, %v8151
      %v8170 = vadd.f32 %v8134, %v8151
      %v8171 = vadd.f32 %v8135, %v8151
      %v8172 = vadd.f32 %v8136, %v8151
      %v8173 = vadd.f32 %v8137, %v8151
      %v8174 = vadd.f32 %v8138, %v8151
      %v8175 = vadd.f32 %v8139, %v8151
      %v8176 = vadd.f32 %v8140, %v8151
      %v8177 = vadd.f32 %v8141, %v8151
      %v8178 = vadd.f32 %v8142, %v8151
      %v8179 = vadd.f32 %v8143, %v8151
      %v8180 = vadd.f32 %v8144, %v8151
      %v8181 = vadd.f32 %v8145, %v8151
      %v8182 = vadd.f32 %v8146, %v8151
      %v8183 = vadd.f32 %v8147, %v8151
      %v8184 = vadd.f32 %v8148, %v8151
      %v8185 = vmax.f32 %v8153, 0.0
      %v8186 = vmax.f32 %v8154, 0.0
      %v8187 = vmax.f32 %v8155, 0.0
      %v8188 = vmax.f32 %v8156, 0.0
      %v8189 = vmax.f32 %v8157, 0.0
      %v8190 = vmax.f32 %v8158, 0.0
      %v8191 = vmax.f32 %v8159, 0.0
      %v8192 = vmax.f32 %v8160, 0.0
      %v8193 = vmax.f32 %v8161, 0.0
      %v8194 = vmax.f32 %v8162, 0.0
      %v8195 = vmax.f32 %v8163, 0.0
      %v8196 = vmax.f32 %v8164, 0.0
      %v8197 = vmax.f32 %v8165, 0.0
      %v8198 = vmax.f32 %v8166, 0.0
      %v8199 = vmax.f32 %v8167, 0.0
      %v8200 = vmax.f32 %v8168, 0.0
      %v8201 = vmax.f32 %v8169, 0.0
      %v8202 = vmax.f32 %v8170, 0.0
      %v8203 = vmax.f32 %v8171, 0.0
      %v8204 = vmax.f32 %v8172, 0.0
      %v8205 = vmax.f32 %v8173, 0.0
      %v8206 = vmax.f32 %v8174, 0.0
      %v8207 = vmax.f32 %v8175, 0.0
      %v8208 = vmax.f32 %v8176, 0.0
      %v8209 = vmax.f32 %v8177, 0.0
      %v8210 = vmax.f32 %v8178, 0.0
      %v8211 = vmax.f32 %v8179, 0.0
      %v8212 = vmax.f32 %v8180, 0.0
      %v8213 = vmax.f32 %v8181, 0.0
      %v8214 = vmax.f32 %v8182, 0.0
      %v8215 = vmax.f32 %v8183, 0.0
      %v8216 = vmax.f32 %v8184, 0.0
      %s8217 = scalar_lea.vmem [#allocation4], 24
      %8218 = vst.msk [vmem:[%s8217 + $0x1] sm:$0xff] %vm334, %v8185
      %8219 = vst.msk [vmem:[%s8217 + $0x9] sm:$0xff] %vm334, %v8186
      %8220 = vst.msk [vmem:[%s8217 + $0x19] sm:$0xff] %vm334, %v8187
      %8221 = vst.msk [vmem:[%s8217 + $0x21] sm:$0xff] %vm334, %v8188
      %8222 = vst.msk [vmem:[%s8217 + $0x31] sm:$0xff] %vm334, %v8189
      %8223 = vst.msk [vmem:[%s8217 + $0x39] sm:$0xff] %vm334, %v8190
      %8224 = vst.msk [vmem:[%s8217 + $0x49] sm:$0xff] %vm334, %v8191
      %8225 = vst.msk [vmem:[%s8217 + $0x51] sm:$0xff] %vm334, %v8192
      %8226 = vst.msk [vmem:[%s8217 + $0x61] sm:$0xff] %vm334, %v8193
      %8227 = vst.msk [vmem:[%s8217 + $0x69] sm:$0xff] %vm334, %v8194
      %8228 = vst.msk [vmem:[%s8217 + $0x79] sm:$0xff] %vm334, %v8195
      %8229 = vst.msk [vmem:[%s8217 + $0x81] sm:$0xff] %vm334, %v8196
      %8230 = vst.msk [vmem:[%s8217 + $0x91] sm:$0xff] %vm334, %v8197
      %8231 = vst.msk [vmem:[%s8217 + $0x99] sm:$0xff] %vm334, %v8198
      %8232 = vst.msk [vmem:[%s8217 + $0xa9] sm:$0xff] %vm334, %v8199
      %8233 = vst.msk [vmem:[%s8217 + $0xb1] sm:$0xff] %vm334, %v8200
      %8234 = vst.msk [vmem:[%s8217 + $0xc1] sm:$0xff] %vm334, %v8201
      %8235 = vst.msk [vmem:[%s8217 + $0xc9] sm:$0xff] %vm334, %v8202
      %8236 = vst.msk [vmem:[%s8217 + $0xd9] sm:$0xff] %vm334, %v8203
      %8237 = vst.msk [vmem:[%s8217 + $0xe1] sm:$0xff] %vm334, %v8204
      %8238 = vst.msk [vmem:[%s8217 + $0xf1] sm:$0xff] %vm334, %v8205
      %8239 = vst.msk [vmem:[%s8217 + $0xf9] sm:$0xff] %vm334, %v8206
      %8240 = vst.msk [vmem:[%s8217 + $0x109] sm:$0xff] %vm334, %v8207
      %8241 = vst.msk [vmem:[%s8217 + $0x111] sm:$0xff] %vm334, %v8208
      %8242 = vst.msk [vmem:[%s8217 + $0x121] sm:$0xff] %vm334, %v8209
      %8243 = vst.msk [vmem:[%s8217 + $0x129] sm:$0xff] %vm334, %v8210
      %8244 = vst.msk [vmem:[%s8217 + $0x139] sm:$0xff] %vm334, %v8211
      %8245 = vst.msk [vmem:[%s8217 + $0x141] sm:$0xff] %vm334, %v8212
      %8246 = vst.msk [vmem:[%s8217 + $0x151] sm:$0xff] %vm334, %v8213
      %8247 = vst.msk [vmem:[%s8217 + $0x159] sm:$0xff] %vm334, %v8214
      %8248 = vst.msk [vmem:[%s8217 + $0x169] sm:$0xff] %vm334, %v8215
      %8249 = vst.msk [vmem:[%s8217 + $0x171] sm:$0xff] %vm334, %v8216
      %v8250 = vld [vmem:[#allocation4] sm:$0xff]
      %v8251 = vld [vmem:[#allocation4 + $0x8] sm:$0xff]
      %v8252 = vld [vmem:[#allocation4 + $0x18] sm:$0xff]
      %v8253 = vld [vmem:[#allocation4 + $0x20] sm:$0xff]
      %v8254 = vld [vmem:[#allocation4 + $0x30] sm:$0xff]
      %v8255 = vld [vmem:[#allocation4 + $0x38] sm:$0xff]
      %v8256 = vld [vmem:[#allocation4 + $0x48] sm:$0xff]
      %v8257 = vld [vmem:[#allocation4 + $0x50] sm:$0xff]
      %v8258 = vld [vmem:[#allocation4 + $0x60] sm:$0xff]
      %v8259 = vld [vmem:[#allocation4 + $0x68] sm:$0xff]
      %v8260 = vld [vmem:[#allocation4 + $0x78] sm:$0xff]
      %v8261 = vld [vmem:[#allocation4 + $0x80] sm:$0xff]
      %v8262 = vld [vmem:[#allocation4 + $0x90] sm:$0xff]
      %v8263 = vld [vmem:[#allocation4 + $0x98] sm:$0xff]
      %v8264 = vld [vmem:[#allocation4 + $0xa8] sm:$0xff]
      %v8265 = vld [vmem:[#allocation4 + $0xb0] sm:$0xff]
      %v8266 = vld [vmem:[#allocation4 + $0xc0] sm:$0xff]
      %v8267 = vld [vmem:[#allocation4 + $0xc8] sm:$0xff]
      %v8268 = vld [vmem:[#allocation4 + $0xd8] sm:$0xff]
      %v8269 = vld [vmem:[#allocation4 + $0xe0] sm:$0xff]
      %v8270 = vld [vmem:[#allocation4 + $0xf0] sm:$0xff]
      %v8271 = vld [vmem:[#allocation4 + $0xf8] sm:$0xff]
      %v8272 = vld [vmem:[#allocation4 + $0x108] sm:$0xff]
      %v8273 = vld [vmem:[#allocation4 + $0x110] sm:$0xff]
      %v8274 = vld [vmem:[#allocation4 + $0x120] sm:$0xff]
      %v8275 = vld [vmem:[#allocation4 + $0x128] sm:$0xff]
      %v8276 = vld [vmem:[#allocation4 + $0x138] sm:$0xff]
      %v8277 = vld [vmem:[#allocation4 + $0x140] sm:$0xff]
      %v8278 = vld [vmem:[#allocation4 + $0x150] sm:$0xff]
      %v8279 = vld [vmem:[#allocation4 + $0x158] sm:$0xff]
      %v8280 = vld [vmem:[#allocation4 + $0x168] sm:$0xff]
      %v8281 = vld [vmem:[#allocation4 + $0x170] sm:$0xff]
      %v8282 = vpack.c.bf16 %v8251, %v8250
      %v8283 = vpack.c.bf16 %v8253, %v8252
      %v8284 = vpack.c.bf16 %v8255, %v8254
      %v8285 = vpack.c.bf16 %v8257, %v8256
      %v8286 = vpack.c.bf16 %v8259, %v8258
      %v8287 = vpack.c.bf16 %v8261, %v8260
      %v8288 = vpack.c.bf16 %v8263, %v8262
      %v8289 = vpack.c.bf16 %v8265, %v8264
      %v8290 = vpack.c.bf16 %v8267, %v8266
      %v8291 = vpack.c.bf16 %v8269, %v8268
      %v8292 = vpack.c.bf16 %v8271, %v8270
      %v8293 = vpack.c.bf16 %v8273, %v8272
      %v8294 = vpack.c.bf16 %v8275, %v8274
      %v8295 = vpack.c.bf16 %v8277, %v8276
      %v8296 = vpack.c.bf16 %v8279, %v8278
      %v8297 = vpack.c.bf16 %v8281, %v8280
      %v8298 = vld [vmem:[%s7] sm:$0xf]
      %v8299 = vld [vmem:[%s7 + $0x4] sm:$0xf]
      %v8300 = vld [vmem:[%s7 + $0x8] sm:$0xf]
      %v8301 = vld [vmem:[%s7 + $0xc] sm:$0xf]
      %v8302 = vld [vmem:[%s7 + $0x10] sm:$0xf]
      %v8303 = vld [vmem:[%s7 + $0x14] sm:$0xf]
      %v8304 = vld [vmem:[%s7 + $0x18] sm:$0xf]
      %v8305 = vld [vmem:[%s7 + $0x1c] sm:$0xf]
      %v8306 = vld [vmem:[#allocation4 + $0x1] sm:$0xff]
      %v8307 = vld [vmem:[#allocation4 + $0x9] sm:$0xff]
      %v8308 = vld [vmem:[#allocation4 + $0x19] sm:$0xff]
      %v8309 = vld [vmem:[#allocation4 + $0x21] sm:$0xff]
      %v8310 = vld [vmem:[#allocation4 + $0x31] sm:$0xff]
      %v8311 = vld [vmem:[#allocation4 + $0x39] sm:$0xff]
      %v8312 = vld [vmem:[#allocation4 + $0x49] sm:$0xff]
      %v8313 = vld [vmem:[#allocation4 + $0x51] sm:$0xff]
      %v8314 = vld [vmem:[#allocation4 + $0x61] sm:$0xff]
      %v8315 = vld [vmem:[#allocation4 + $0x69] sm:$0xff]
      %v8316 = vld [vmem:[#allocation4 + $0x79] sm:$0xff]
      %v8317 = vld [vmem:[#allocation4 + $0x81] sm:$0xff]
      %v8318 = vld [vmem:[#allocation4 + $0x91] sm:$0xff]
      %v8319 = vld [vmem:[#allocation4 + $0x99] sm:$0xff]
      %v8320 = vld [vmem:[#allocation4 + $0xa9] sm:$0xff]
      %v8321 = vld [vmem:[#allocation4 + $0xb1] sm:$0xff]
      %v8322 = vld [vmem:[#allocation4 + $0xc1] sm:$0xff]
      %v8323 = vld [vmem:[#allocation4 + $0xc9] sm:$0xff]
      %v8324 = vld [vmem:[#allocation4 + $0xd9] sm:$0xff]
      %v8325 = vld [vmem:[#allocation4 + $0xe1] sm:$0xff]
      %v8326 = vld [vmem:[#allocation4 + $0xf1] sm:$0xff]
      %v8327 = vld [vmem:[#allocation4 + $0xf9] sm:$0xff]
      %v8328 = vld [vmem:[#allocation4 + $0x109] sm:$0xff]
      %v8329 = vld [vmem:[#allocation4 + $0x111] sm:$0xff]
      %v8330 = vld [vmem:[#allocation4 + $0x121] sm:$0xff]
      %v8331 = vld [vmem:[#allocation4 + $0x129] sm:$0xff]
      %v8332 = vld [vmem:[#allocation4 + $0x139] sm:$0xff]
      %v8333 = vld [vmem:[#allocation4 + $0x141] sm:$0xff]
      %v8334 = vld [vmem:[#allocation4 + $0x151] sm:$0xff]
      %v8335 = vld [vmem:[#allocation4 + $0x159] sm:$0xff]
      %v8336 = vld [vmem:[#allocation4 + $0x169] sm:$0xff]
      %v8337 = vld [vmem:[#allocation4 + $0x171] sm:$0xff]
      %v8338 = vpack.c.bf16 %v8307, %v8306
      %v8339 = vpack.c.bf16 %v8309, %v8308
      %v8340 = vpack.c.bf16 %v8311, %v8310
      %v8341 = vpack.c.bf16 %v8313, %v8312
      %v8342 = vpack.c.bf16 %v8315, %v8314
      %v8343 = vpack.c.bf16 %v8317, %v8316
      %v8344 = vpack.c.bf16 %v8319, %v8318
      %v8345 = vpack.c.bf16 %v8321, %v8320
      %v8346 = vpack.c.bf16 %v8323, %v8322
      %v8347 = vpack.c.bf16 %v8325, %v8324
      %v8348 = vpack.c.bf16 %v8327, %v8326
      %v8349 = vpack.c.bf16 %v8329, %v8328
      %v8350 = vpack.c.bf16 %v8331, %v8330
      %v8351 = vpack.c.bf16 %v8333, %v8332
      %v8352 = vpack.c.bf16 %v8335, %v8334
      %v8353 = vpack.c.bf16 %v8337, %v8336
      %s8354 = scalar_lea.vmem %s7, 32
      %v8355 = vld [vmem:[%s8354] sm:$0xf]
      %v8356 = vld [vmem:[%s8354 + $0x4] sm:$0xf]
      %v8357 = vld [vmem:[%s8354 + $0x8] sm:$0xf]
      %v8358 = vld [vmem:[%s8354 + $0xc] sm:$0xf]
      %v8359 = vld [vmem:[%s8354 + $0x10] sm:$0xf]
      %v8360 = vld [vmem:[%s8354 + $0x14] sm:$0xf]
      %v8361 = vld [vmem:[%s8354 + $0x18] sm:$0xf]
      %v8362 = vld [vmem:[%s8354 + $0x1c] sm:$0xf]
      %v8371 = vunpack.c.l.b16 %v8355
      %v8372 = vunpack.c.l.b16 %v8356
      %v8373 = vunpack.c.l.b16 %v8357
      %v8374 = vunpack.c.l.b16 %v8358
      %v8375 = vunpack.c.l.b16 %v8359
      %v8376 = vunpack.c.l.b16 %v8360
      %v8377 = vunpack.c.l.b16 %v8361
      %v8378 = vunpack.c.l.b16 %v8362
      %v8379 = vpack.c.b16 %v8372, %v8371
      %v8380 = vpack.c.b16 %v8374, %v8373
      %v8381 = vpack.c.b16 %v8376, %v8375
      %v8382 = vpack.c.b16 %v8378, %v8377
      %v8388 = vsel %vm334, %v8338, 0
      %v8391 = vsel %vm334, %v8339, 0
      %v8394 = vsel %vm334, %v8340, 0
      %v8397 = vsel %vm334, %v8341, 0
      %v8400 = vsel %vm334, %v8342, 0
      %v8403 = vsel %vm334, %v8343, 0
      %v8406 = vsel %vm334, %v8344, 0
      %v8409 = vsel %vm334, %v8345, 0
      %v8412 = vsel %vm334, %v8346, 0
      %v8415 = vsel %vm334, %v8347, 0
      %v8418 = vsel %vm334, %v8348, 0
      %v8421 = vsel %vm334, %v8349, 0
      %v8424 = vsel %vm334, %v8350, 0
      %v8427 = vsel %vm334, %v8351, 0
      %v8430 = vsel %vm334, %v8352, 0
      %v8433 = vsel %vm334, %v8353, 0
      %8435 = vmatpush.bf16.msra.mxu0 0
      %8436 = vmatpush.bf16.msra.mxu0 0
      %8437 = vmatpush.bf16.msra.mxu0 0
      %8438 = vmatpush.bf16.msra.mxu0 0
      %8439 = vmatpush.bf16.msra.mxu0 %v8382
      %8440 = vmatpush.bf16.msra.mxu0 %v8381
      %8441 = vmatpush.bf16.msra.mxu0 %v8380
      %8442 = vmatpush.bf16.msra.mxu0 %v8379
      %8443 = vmatmul.bf16.gmra.mxu0 %v8388
      %v8444 = vpop.f32.mrf.mxu0
      %v8445 = vadd.f32 0.0, %v8444
      %v8446 = vpop.f32.mrf.mxu0
      %v8447 = vadd.f32 0.0, %v8446
      %8448 = vmatmul.bf16.gmra.mxu0 %v8391
      %v8449 = vpop.f32.mrf.mxu0
      %v8450 = vadd.f32 0.0, %v8449
      %v8451 = vpop.f32.mrf.mxu0
      %v8452 = vadd.f32 0.0, %v8451
      %8453 = vmatmul.bf16.gmra.mxu0 %v8394
      %v8454 = vpop.f32.mrf.mxu0
      %v8455 = vadd.f32 0.0, %v8454
      %v8456 = vpop.f32.mrf.mxu0
      %v8457 = vadd.f32 0.0, %v8456
      %8458 = vmatmul.bf16.gmra.mxu0 %v8397
      %v8459 = vpop.f32.mrf.mxu0
      %v8460 = vadd.f32 0.0, %v8459
      %v8461 = vpop.f32.mrf.mxu0
      %v8462 = vadd.f32 0.0, %v8461
      %8463 = vmatmul.bf16.gmra.mxu0 %v8400
      %v8464 = vpop.f32.mrf.mxu0
      %v8465 = vadd.f32 0.0, %v8464
      %v8466 = vpop.f32.mrf.mxu0
      %v8467 = vadd.f32 0.0, %v8466
      %8468 = vmatmul.bf16.gmra.mxu0 %v8403
      %v8469 = vpop.f32.mrf.mxu0
      %v8470 = vadd.f32 0.0, %v8469
      %v8471 = vpop.f32.mrf.mxu0
      %v8472 = vadd.f32 0.0, %v8471
      %8473 = vmatmul.bf16.gmra.mxu0 %v8406
      %v8474 = vpop.f32.mrf.mxu0
      %v8475 = vadd.f32 0.0, %v8474
      %v8476 = vpop.f32.mrf.mxu0
      %v8477 = vadd.f32 0.0, %v8476
      %8478 = vmatmul.bf16.gmra.mxu0 %v8409
      %v8479 = vpop.f32.mrf.mxu0
      %v8480 = vadd.f32 0.0, %v8479
      %v8481 = vpop.f32.mrf.mxu0
      %v8482 = vadd.f32 0.0, %v8481
      %8483 = vmatmul.bf16.gmra.mxu0 %v8412
      %v8484 = vpop.f32.mrf.mxu0
      %v8485 = vadd.f32 0.0, %v8484
      %v8486 = vpop.f32.mrf.mxu0
      %v8487 = vadd.f32 0.0, %v8486
      %8488 = vmatmul.bf16.gmra.mxu0 %v8415
      %v8489 = vpop.f32.mrf.mxu0
      %v8490 = vadd.f32 0.0, %v8489
      %v8491 = vpop.f32.mrf.mxu0
      %v8492 = vadd.f32 0.0, %v8491
      %8493 = vmatmul.bf16.gmra.mxu0 %v8418
      %v8494 = vpop.f32.mrf.mxu0
      %v8495 = vadd.f32 0.0, %v8494
      %v8496 = vpop.f32.mrf.mxu0
      %v8497 = vadd.f32 0.0, %v8496
      %8498 = vmatmul.bf16.gmra.mxu0 %v8421
      %v8499 = vpop.f32.mrf.mxu0
      %v8500 = vadd.f32 0.0, %v8499
      %v8501 = vpop.f32.mrf.mxu0
      %v8502 = vadd.f32 0.0, %v8501
      %8503 = vmatmul.bf16.gmra.mxu0 %v8424
      %v8504 = vpop.f32.mrf.mxu0
      %v8505 = vadd.f32 0.0, %v8504
      %v8506 = vpop.f32.mrf.mxu0
      %v8507 = vadd.f32 0.0, %v8506
      %8508 = vmatmul.bf16.gmra.mxu0 %v8427
      %v8509 = vpop.f32.mrf.mxu0
      %v8510 = vadd.f32 0.0, %v8509
      %v8511 = vpop.f32.mrf.mxu0
      %v8512 = vadd.f32 0.0, %v8511
      %8513 = vmatmul.bf16.gmra.mxu0 %v8430
      %v8514 = vpop.f32.mrf.mxu0
      %v8515 = vadd.f32 0.0, %v8514
      %v8516 = vpop.f32.mrf.mxu0
      %v8517 = vadd.f32 0.0, %v8516
      %8518 = vmatmul.bf16.gmra.mxu0 %v8433
      %v8519 = vpop.f32.mrf.mxu0
      %v8520 = vadd.f32 0.0, %v8519
      %v8521 = vpop.f32.mrf.mxu0
      %v8522 = vadd.f32 0.0, %v8521
      %8523 = vdwg.mxu0
      %v8532 = vunpack.c.l.b16 %v8298
      %v8533 = vunpack.c.l.b16 %v8299
      %v8534 = vunpack.c.l.b16 %v8300
      %v8535 = vunpack.c.l.b16 %v8301
      %v8536 = vunpack.c.l.b16 %v8302
      %v8537 = vunpack.c.l.b16 %v8303
      %v8538 = vunpack.c.l.b16 %v8304
      %v8539 = vunpack.c.l.b16 %v8305
      %v8540 = vpack.c.b16 %v8533, %v8532
      %v8541 = vpack.c.b16 %v8535, %v8534
      %v8542 = vpack.c.b16 %v8537, %v8536
      %v8543 = vpack.c.b16 %v8539, %v8538
      %v8549 = vsel %vm334, %v8282, 0
      %v8552 = vsel %vm334, %v8283, 0
      %v8555 = vsel %vm334, %v8284, 0
      %v8558 = vsel %vm334, %v8285, 0
      %v8561 = vsel %vm334, %v8286, 0
      %v8564 = vsel %vm334, %v8287, 0
      %v8567 = vsel %vm334, %v8288, 0
      %v8570 = vsel %vm334, %v8289, 0
      %v8573 = vsel %vm334, %v8290, 0
      %v8576 = vsel %vm334, %v8291, 0
      %v8579 = vsel %vm334, %v8292, 0
      %v8582 = vsel %vm334, %v8293, 0
      %v8585 = vsel %vm334, %v8294, 0
      %v8588 = vsel %vm334, %v8295, 0
      %v8591 = vsel %vm334, %v8296, 0
      %v8594 = vsel %vm334, %v8297, 0
      %8596 = vmatpush.bf16.msra.mxu0 0
      %8597 = vmatpush.bf16.msra.mxu0 0
      %8598 = vmatpush.bf16.msra.mxu0 0
      %8599 = vmatpush.bf16.msra.mxu0 0
      %8600 = vmatpush.bf16.msra.mxu0 %v8543
      %8601 = vmatpush.bf16.msra.mxu0 %v8542
      %8602 = vmatpush.bf16.msra.mxu0 %v8541
      %8603 = vmatpush.bf16.msra.mxu0 %v8540
      %8604 = vmatmul.bf16.gmra.mxu0 %v8549
      %v8605 = vpop.f32.mrf.mxu0
      %v8606 = vadd.f32 %v8445, %v8605
      %v8607 = vpop.f32.mrf.mxu0
      %v8608 = vadd.f32 %v8447, %v8607
      %8609 = vmatmul.bf16.gmra.mxu0 %v8552
      %v8610 = vpop.f32.mrf.mxu0
      %v8611 = vadd.f32 %v8450, %v8610
      %v8612 = vpop.f32.mrf.mxu0
      %v8613 = vadd.f32 %v8452, %v8612
      %8614 = vmatmul.bf16.gmra.mxu0 %v8555
      %v8615 = vpop.f32.mrf.mxu0
      %v8616 = vadd.f32 %v8455, %v8615
      %v8617 = vpop.f32.mrf.mxu0
      %v8618 = vadd.f32 %v8457, %v8617
      %8619 = vmatmul.bf16.gmra.mxu0 %v8558
      %v8620 = vpop.f32.mrf.mxu0
      %v8621 = vadd.f32 %v8460, %v8620
      %v8622 = vpop.f32.mrf.mxu0
      %v8623 = vadd.f32 %v8462, %v8622
      %8624 = vmatmul.bf16.gmra.mxu0 %v8561
      %v8625 = vpop.f32.mrf.mxu0
      %v8626 = vadd.f32 %v8465, %v8625
      %v8627 = vpop.f32.mrf.mxu0
      %v8628 = vadd.f32 %v8467, %v8627
      %8629 = vmatmul.bf16.gmra.mxu0 %v8564
      %v8630 = vpop.f32.mrf.mxu0
      %v8631 = vadd.f32 %v8470, %v8630
      %v8632 = vpop.f32.mrf.mxu0
      %v8633 = vadd.f32 %v8472, %v8632
      %8634 = vmatmul.bf16.gmra.mxu0 %v8567
      %v8635 = vpop.f32.mrf.mxu0
      %v8636 = vadd.f32 %v8475, %v8635
      %v8637 = vpop.f32.mrf.mxu0
      %v8638 = vadd.f32 %v8477, %v8637
      %8639 = vmatmul.bf16.gmra.mxu0 %v8570
      %v8640 = vpop.f32.mrf.mxu0
      %v8641 = vadd.f32 %v8480, %v8640
      %v8642 = vpop.f32.mrf.mxu0
      %v8643 = vadd.f32 %v8482, %v8642
      %8644 = vmatmul.bf16.gmra.mxu0 %v8573
      %v8645 = vpop.f32.mrf.mxu0
      %v8646 = vadd.f32 %v8485, %v8645
      %v8647 = vpop.f32.mrf.mxu0
      %v8648 = vadd.f32 %v8487, %v8647
      %8649 = vmatmul.bf16.gmra.mxu0 %v8576
      %v8650 = vpop.f32.mrf.mxu0
      %v8651 = vadd.f32 %v8490, %v8650
      %v8652 = vpop.f32.mrf.mxu0
      %v8653 = vadd.f32 %v8492, %v8652
      %8654 = vmatmul.bf16.gmra.mxu0 %v8579
      %v8655 = vpop.f32.mrf.mxu0
      %v8656 = vadd.f32 %v8495, %v8655
      %v8657 = vpop.f32.mrf.mxu0
      %v8658 = vadd.f32 %v8497, %v8657
      %8659 = vmatmul.bf16.gmra.mxu0 %v8582
      %v8660 = vpop.f32.mrf.mxu0
      %v8661 = vadd.f32 %v8500, %v8660
      %v8662 = vpop.f32.mrf.mxu0
      %v8663 = vadd.f32 %v8502, %v8662
      %8664 = vmatmul.bf16.gmra.mxu0 %v8585
      %v8665 = vpop.f32.mrf.mxu0
      %v8666 = vadd.f32 %v8505, %v8665
      %v8667 = vpop.f32.mrf.mxu0
      %v8668 = vadd.f32 %v8507, %v8667
      %8669 = vmatmul.bf16.gmra.mxu0 %v8588
      %v8670 = vpop.f32.mrf.mxu0
      %v8671 = vadd.f32 %v8510, %v8670
      %v8672 = vpop.f32.mrf.mxu0
      %v8673 = vadd.f32 %v8512, %v8672
      %8674 = vmatmul.bf16.gmra.mxu0 %v8591
      %v8675 = vpop.f32.mrf.mxu0
      %v8676 = vadd.f32 %v8515, %v8675
      %v8677 = vpop.f32.mrf.mxu0
      %v8678 = vadd.f32 %v8517, %v8677
      %8679 = vmatmul.bf16.gmra.mxu0 %v8594
      %v8680 = vpop.f32.mrf.mxu0
      %v8681 = vadd.f32 %v8520, %v8680
      %v8682 = vpop.f32.mrf.mxu0
      %v8683 = vadd.f32 %v8522, %v8682
      %8684 = vdwg.mxu0
      %v8685 = vld [vmem:[#allocation4 + $0x2] sm:$0xff]
      %v8686 = vld [vmem:[#allocation4 + $0xa] sm:$0xff]
      %v8687 = vld [vmem:[#allocation4 + $0x1a] sm:$0xff]
      %v8688 = vld [vmem:[#allocation4 + $0x22] sm:$0xff]
      %v8689 = vld [vmem:[#allocation4 + $0x32] sm:$0xff]
      %v8690 = vld [vmem:[#allocation4 + $0x3a] sm:$0xff]
      %v8691 = vld [vmem:[#allocation4 + $0x4a] sm:$0xff]
      %v8692 = vld [vmem:[#allocation4 + $0x52] sm:$0xff]
      %v8693 = vld [vmem:[#allocation4 + $0x62] sm:$0xff]
      %v8694 = vld [vmem:[#allocation4 + $0x6a] sm:$0xff]
      %v8695 = vld [vmem:[#allocation4 + $0x7a] sm:$0xff]
      %v8696 = vld [vmem:[#allocation4 + $0x82] sm:$0xff]
      %v8697 = vld [vmem:[#allocation4 + $0x92] sm:$0xff]
      %v8698 = vld [vmem:[#allocation4 + $0x9a] sm:$0xff]
      %v8699 = vld [vmem:[#allocation4 + $0xaa] sm:$0xff]
      %v8700 = vld [vmem:[#allocation4 + $0xb2] sm:$0xff]
      %v8701 = vld [vmem:[#allocation4 + $0xc2] sm:$0xff]
      %v8702 = vld [vmem:[#allocation4 + $0xca] sm:$0xff]
      %v8703 = vld [vmem:[#allocation4 + $0xda] sm:$0xff]
      %v8704 = vld [vmem:[#allocation4 + $0xe2] sm:$0xff]
      %v8705 = vld [vmem:[#allocation4 + $0xf2] sm:$0xff]
      %v8706 = vld [vmem:[#allocation4 + $0xfa] sm:$0xff]
      %v8707 = vld [vmem:[#allocation4 + $0x10a] sm:$0xff]
      %v8708 = vld [vmem:[#allocation4 + $0x112] sm:$0xff]
      %v8709 = vld [vmem:[#allocation4 + $0x122] sm:$0xff]
      %v8710 = vld [vmem:[#allocation4 + $0x12a] sm:$0xff]
      %v8711 = vld [vmem:[#allocation4 + $0x13a] sm:$0xff]
      %v8712 = vld [vmem:[#allocation4 + $0x142] sm:$0xff]
      %v8713 = vld [vmem:[#allocation4 + $0x152] sm:$0xff]
      %v8714 = vld [vmem:[#allocation4 + $0x15a] sm:$0xff]
      %v8715 = vld [vmem:[#allocation4 + $0x16a] sm:$0xff]
      %v8716 = vld [vmem:[#allocation4 + $0x172] sm:$0xff]
      %v8717 = vpack.c.bf16 %v8686, %v8685
      %v8718 = vpack.c.bf16 %v8688, %v8687
      %v8719 = vpack.c.bf16 %v8690, %v8689
      %v8720 = vpack.c.bf16 %v8692, %v8691
      %v8721 = vpack.c.bf16 %v8694, %v8693
      %v8722 = vpack.c.bf16 %v8696, %v8695
      %v8723 = vpack.c.bf16 %v8698, %v8697
      %v8724 = vpack.c.bf16 %v8700, %v8699
      %v8725 = vpack.c.bf16 %v8702, %v8701
      %v8726 = vpack.c.bf16 %v8704, %v8703
      %v8727 = vpack.c.bf16 %v8706, %v8705
      %v8728 = vpack.c.bf16 %v8708, %v8707
      %v8729 = vpack.c.bf16 %v8710, %v8709
      %v8730 = vpack.c.bf16 %v8712, %v8711
      %v8731 = vpack.c.bf16 %v8714, %v8713
      %v8732 = vpack.c.bf16 %v8716, %v8715
      %s8733 = scalar_lea.vmem %s7, 64
      %v8734 = vld [vmem:[%s8733] sm:$0xf]
      %v8735 = vld [vmem:[%s8733 + $0x4] sm:$0xf]
      %v8736 = vld [vmem:[%s8733 + $0x8] sm:$0xf]
      %v8737 = vld [vmem:[%s8733 + $0xc] sm:$0xf]
      %v8738 = vld [vmem:[%s8733 + $0x10] sm:$0xf]
      %v8739 = vld [vmem:[%s8733 + $0x14] sm:$0xf]
      %v8740 = vld [vmem:[%s8733 + $0x18] sm:$0xf]
      %v8741 = vld [vmem:[%s8733 + $0x1c] sm:$0xf]
      %v8750 = vunpack.c.l.b16 %v8734
      %v8751 = vunpack.c.l.b16 %v8735
      %v8752 = vunpack.c.l.b16 %v8736
      %v8753 = vunpack.c.l.b16 %v8737
      %v8754 = vunpack.c.l.b16 %v8738
      %v8755 = vunpack.c.l.b16 %v8739
      %v8756 = vunpack.c.l.b16 %v8740
      %v8757 = vunpack.c.l.b16 %v8741
      %v8758 = vpack.c.b16 %v8751, %v8750
      %v8759 = vpack.c.b16 %v8753, %v8752
      %v8760 = vpack.c.b16 %v8755, %v8754
      %v8761 = vpack.c.b16 %v8757, %v8756
      %v8767 = vsel %vm334, %v8717, 0
      %v8770 = vsel %vm334, %v8718, 0
      %v8773 = vsel %vm334, %v8719, 0
      %v8776 = vsel %vm334, %v8720, 0
      %v8779 = vsel %vm334, %v8721, 0
      %v8782 = vsel %vm334, %v8722, 0
      %v8785 = vsel %vm334, %v8723, 0
      %v8788 = vsel %vm334, %v8724, 0
      %v8791 = vsel %vm334, %v8725, 0
      %v8794 = vsel %vm334, %v8726, 0
      %v8797 = vsel %vm334, %v8727, 0
      %v8800 = vsel %vm334, %v8728, 0
      %v8803 = vsel %vm334, %v8729, 0
      %v8806 = vsel %vm334, %v8730, 0
      %v8809 = vsel %vm334, %v8731, 0
      %v8812 = vsel %vm334, %v8732, 0
      %8814 = vmatpush.bf16.msra.mxu0 0
      %8815 = vmatpush.bf16.msra.mxu0 0
      %8816 = vmatpush.bf16.msra.mxu0 0
      %8817 = vmatpush.bf16.msra.mxu0 0
      %8818 = vmatpush.bf16.msra.mxu0 %v8761
      %8819 = vmatpush.bf16.msra.mxu0 %v8760
      %8820 = vmatpush.bf16.msra.mxu0 %v8759
      %8821 = vmatpush.bf16.msra.mxu0 %v8758
      %8822 = vmatmul.bf16.gmra.mxu0 %v8767
      %v8823 = vpop.f32.mrf.mxu0
      %v8824 = vadd.f32 0.0, %v8823
      %v8825 = vpop.f32.mrf.mxu0
      %v8826 = vadd.f32 0.0, %v8825
      %8827 = vmatmul.bf16.gmra.mxu0 %v8770
      %v8828 = vpop.f32.mrf.mxu0
      %v8829 = vadd.f32 0.0, %v8828
      %v8830 = vpop.f32.mrf.mxu0
      %v8831 = vadd.f32 0.0, %v8830
      %8832 = vmatmul.bf16.gmra.mxu0 %v8773
      %v8833 = vpop.f32.mrf.mxu0
      %v8834 = vadd.f32 0.0, %v8833
      %v8835 = vpop.f32.mrf.mxu0
      %v8836 = vadd.f32 0.0, %v8835
      %8837 = vmatmul.bf16.gmra.mxu0 %v8776
      %v8838 = vpop.f32.mrf.mxu0
      %v8839 = vadd.f32 0.0, %v8838
      %v8840 = vpop.f32.mrf.mxu0
      %v8841 = vadd.f32 0.0, %v8840
      %8842 = vmatmul.bf16.gmra.mxu0 %v8779
      %v8843 = vpop.f32.mrf.mxu0
      %v8844 = vadd.f32 0.0, %v8843
      %v8845 = vpop.f32.mrf.mxu0
      %v8846 = vadd.f32 0.0, %v8845
      %8847 = vmatmul.bf16.gmra.mxu0 %v8782
      %v8848 = vpop.f32.mrf.mxu0
      %v8849 = vadd.f32 0.0, %v8848
      %v8850 = vpop.f32.mrf.mxu0
      %v8851 = vadd.f32 0.0, %v8850
      %8852 = vmatmul.bf16.gmra.mxu0 %v8785
      %v8853 = vpop.f32.mrf.mxu0
      %v8854 = vadd.f32 0.0, %v8853
      %v8855 = vpop.f32.mrf.mxu0
      %v8856 = vadd.f32 0.0, %v8855
      %8857 = vmatmul.bf16.gmra.mxu0 %v8788
      %v8858 = vpop.f32.mrf.mxu0
      %v8859 = vadd.f32 0.0, %v8858
      %v8860 = vpop.f32.mrf.mxu0
      %v8861 = vadd.f32 0.0, %v8860
      %8862 = vmatmul.bf16.gmra.mxu0 %v8791
      %v8863 = vpop.f32.mrf.mxu0
      %v8864 = vadd.f32 0.0, %v8863
      %v8865 = vpop.f32.mrf.mxu0
      %v8866 = vadd.f32 0.0, %v8865
      %8867 = vmatmul.bf16.gmra.mxu0 %v8794
      %v8868 = vpop.f32.mrf.mxu0
      %v8869 = vadd.f32 0.0, %v8868
      %v8870 = vpop.f32.mrf.mxu0
      %v8871 = vadd.f32 0.0, %v8870
      %8872 = vmatmul.bf16.gmra.mxu0 %v8797
      %v8873 = vpop.f32.mrf.mxu0
      %v8874 = vadd.f32 0.0, %v8873
      %v8875 = vpop.f32.mrf.mxu0
      %v8876 = vadd.f32 0.0, %v8875
      %8877 = vmatmul.bf16.gmra.mxu0 %v8800
      %v8878 = vpop.f32.mrf.mxu0
      %v8879 = vadd.f32 0.0, %v8878
      %v8880 = vpop.f32.mrf.mxu0
      %v8881 = vadd.f32 0.0, %v8880
      %8882 = vmatmul.bf16.gmra.mxu0 %v8803
      %v8883 = vpop.f32.mrf.mxu0
      %v8884 = vadd.f32 0.0, %v8883
      %v8885 = vpop.f32.mrf.mxu0
      %v8886 = vadd.f32 0.0, %v8885
      %8887 = vmatmul.bf16.gmra.mxu0 %v8806
      %v8888 = vpop.f32.mrf.mxu0
      %v8889 = vadd.f32 0.0, %v8888
      %v8890 = vpop.f32.mrf.mxu0
      %v8891 = vadd.f32 0.0, %v8890
      %8892 = vmatmul.bf16.gmra.mxu0 %v8809
      %v8893 = vpop.f32.mrf.mxu0
      %v8894 = vadd.f32 0.0, %v8893
      %v8895 = vpop.f32.mrf.mxu0
      %v8896 = vadd.f32 0.0, %v8895
      %8897 = vmatmul.bf16.gmra.mxu0 %v8812
      %v8898 = vpop.f32.mrf.mxu0
      %v8899 = vadd.f32 0.0, %v8898
      %v8900 = vpop.f32.mrf.mxu0
      %v8901 = vadd.f32 0.0, %v8900
      %8902 = vdwg.mxu0
      %v8903 = vadd.f32 %v8606, %v8824
      %v8904 = vadd.f32 %v8608, %v8826
      %v8905 = vadd.f32 %v8611, %v8829
      %v8906 = vadd.f32 %v8613, %v8831
      %v8907 = vadd.f32 %v8616, %v8834
      %v8908 = vadd.f32 %v8618, %v8836
      %v8909 = vadd.f32 %v8621, %v8839
      %v8910 = vadd.f32 %v8623, %v8841
      %v8911 = vadd.f32 %v8626, %v8844
      %v8912 = vadd.f32 %v8628, %v8846
      %v8913 = vadd.f32 %v8631, %v8849
      %v8914 = vadd.f32 %v8633, %v8851
      %v8915 = vadd.f32 %v8636, %v8854
      %v8916 = vadd.f32 %v8638, %v8856
      %v8917 = vadd.f32 %v8641, %v8859
      %v8918 = vadd.f32 %v8643, %v8861
      %v8919 = vadd.f32 %v8646, %v8864
      %v8920 = vadd.f32 %v8648, %v8866
      %v8921 = vadd.f32 %v8651, %v8869
      %v8922 = vadd.f32 %v8653, %v8871
      %v8923 = vadd.f32 %v8656, %v8874
      %v8924 = vadd.f32 %v8658, %v8876
      %v8925 = vadd.f32 %v8661, %v8879
      %v8926 = vadd.f32 %v8663, %v8881
      %v8927 = vadd.f32 %v8666, %v8884
      %v8928 = vadd.f32 %v8668, %v8886
      %v8929 = vadd.f32 %v8671, %v8889
      %v8930 = vadd.f32 %v8673, %v8891
      %v8931 = vadd.f32 %v8676, %v8894
      %v8932 = vadd.f32 %v8678, %v8896
      %v8933 = vadd.f32 %v8681, %v8899
      %v8934 = vadd.f32 %v8683, %v8901
      %v8935 = vld [vmem:[%s8217] sm:$0xff]
      %v8936 = vld [vmem:[%s8217 + $0x8] sm:$0xff]
      %v8937 = vld [vmem:[%s8217 + $0x18] sm:$0xff]
      %v8938 = vld [vmem:[%s8217 + $0x20] sm:$0xff]
      %v8939 = vld [vmem:[%s8217 + $0x30] sm:$0xff]
      %v8940 = vld [vmem:[%s8217 + $0x38] sm:$0xff]
      %v8941 = vld [vmem:[%s8217 + $0x48] sm:$0xff]
      %v8942 = vld [vmem:[%s8217 + $0x50] sm:$0xff]
      %v8943 = vld [vmem:[%s8217 + $0x60] sm:$0xff]
      %v8944 = vld [vmem:[%s8217 + $0x68] sm:$0xff]
      %v8945 = vld [vmem:[%s8217 + $0x78] sm:$0xff]
      %v8946 = vld [vmem:[%s8217 + $0x80] sm:$0xff]
      %v8947 = vld [vmem:[%s8217 + $0x90] sm:$0xff]
      %v8948 = vld [vmem:[%s8217 + $0x98] sm:$0xff]
      %v8949 = vld [vmem:[%s8217 + $0xa8] sm:$0xff]
      %v8950 = vld [vmem:[%s8217 + $0xb0] sm:$0xff]
      %v8951 = vld [vmem:[%s8217 + $0xc0] sm:$0xff]
      %v8952 = vld [vmem:[%s8217 + $0xc8] sm:$0xff]
      %v8953 = vld [vmem:[%s8217 + $0xd8] sm:$0xff]
      %v8954 = vld [vmem:[%s8217 + $0xe0] sm:$0xff]
      %v8955 = vld [vmem:[%s8217 + $0xf0] sm:$0xff]
      %v8956 = vld [vmem:[%s8217 + $0xf8] sm:$0xff]
      %v8957 = vld [vmem:[%s8217 + $0x108] sm:$0xff]
      %v8958 = vld [vmem:[%s8217 + $0x110] sm:$0xff]
      %v8959 = vld [vmem:[%s8217 + $0x120] sm:$0xff]
      %v8960 = vld [vmem:[%s8217 + $0x128] sm:$0xff]
      %v8961 = vld [vmem:[%s8217 + $0x138] sm:$0xff]
      %v8962 = vld [vmem:[%s8217 + $0x140] sm:$0xff]
      %v8963 = vld [vmem:[%s8217 + $0x150] sm:$0xff]
      %v8964 = vld [vmem:[%s8217 + $0x158] sm:$0xff]
      %v8965 = vld [vmem:[%s8217 + $0x168] sm:$0xff]
      %v8966 = vld [vmem:[%s8217 + $0x170] sm:$0xff]
      %v8967 = vpack.c.bf16 %v8936, %v8935
      %v8968 = vpack.c.bf16 %v8938, %v8937
      %v8969 = vpack.c.bf16 %v8940, %v8939
      %v8970 = vpack.c.bf16 %v8942, %v8941
      %v8971 = vpack.c.bf16 %v8944, %v8943
      %v8972 = vpack.c.bf16 %v8946, %v8945
      %v8973 = vpack.c.bf16 %v8948, %v8947
      %v8974 = vpack.c.bf16 %v8950, %v8949
      %v8975 = vpack.c.bf16 %v8952, %v8951
      %v8976 = vpack.c.bf16 %v8954, %v8953
      %v8977 = vpack.c.bf16 %v8956, %v8955
      %v8978 = vpack.c.bf16 %v8958, %v8957
      %v8979 = vpack.c.bf16 %v8960, %v8959
      %v8980 = vpack.c.bf16 %v8962, %v8961
      %v8981 = vpack.c.bf16 %v8964, %v8963
      %v8982 = vpack.c.bf16 %v8966, %v8965
      %s8983 = scalar_lea.vmem %s7, 96
      %v8984 = vld [vmem:[%s8983] sm:$0xf]
      %v8985 = vld [vmem:[%s8983 + $0x4] sm:$0xf]
      %v8986 = vld [vmem:[%s8983 + $0x8] sm:$0xf]
      %v8987 = vld [vmem:[%s8983 + $0xc] sm:$0xf]
      %v8988 = vld [vmem:[%s8983 + $0x10] sm:$0xf]
      %v8989 = vld [vmem:[%s8983 + $0x14] sm:$0xf]
      %v8990 = vld [vmem:[%s8983 + $0x18] sm:$0xf]
      %v8991 = vld [vmem:[%s8983 + $0x1c] sm:$0xf]
      %v9000 = vunpack.c.l.b16 %v8984
      %v9001 = vunpack.c.l.b16 %v8985
      %v9002 = vunpack.c.l.b16 %v8986
      %v9003 = vunpack.c.l.b16 %v8987
      %v9004 = vunpack.c.l.b16 %v8988
      %v9005 = vunpack.c.l.b16 %v8989
      %v9006 = vunpack.c.l.b16 %v8990
      %v9007 = vunpack.c.l.b16 %v8991
      %v9008 = vpack.c.b16 %v9001, %v9000
      %v9009 = vpack.c.b16 %v9003, %v9002
      %v9010 = vpack.c.b16 %v9005, %v9004
      %v9011 = vpack.c.b16 %v9007, %v9006
      %v9017 = vsel %vm334, %v8967, 0
      %v9020 = vsel %vm334, %v8968, 0
      %v9023 = vsel %vm334, %v8969, 0
      %v9026 = vsel %vm334, %v8970, 0
      %v9029 = vsel %vm334, %v8971, 0
      %v9032 = vsel %vm334, %v8972, 0
      %v9035 = vsel %vm334, %v8973, 0
      %v9038 = vsel %vm334, %v8974, 0
      %v9041 = vsel %vm334, %v8975, 0
      %v9044 = vsel %vm334, %v8976, 0
      %v9047 = vsel %vm334, %v8977, 0
      %v9050 = vsel %vm334, %v8978, 0
      %v9053 = vsel %vm334, %v8979, 0
      %v9056 = vsel %vm334, %v8980, 0
      %v9059 = vsel %vm334, %v8981, 0
      %v9062 = vsel %vm334, %v8982, 0
      %9064 = vmatpush.bf16.msra.mxu0 0
      %9065 = vmatpush.bf16.msra.mxu0 0
      %9066 = vmatpush.bf16.msra.mxu0 0
      %9067 = vmatpush.bf16.msra.mxu0 0
      %9068 = vmatpush.bf16.msra.mxu0 %v9011
      %9069 = vmatpush.bf16.msra.mxu0 %v9010
      %9070 = vmatpush.bf16.msra.mxu0 %v9009
      %9071 = vmatpush.bf16.msra.mxu0 %v9008
      %9072 = vmatmul.bf16.gmra.mxu0 %v9017
      %v9073 = vpop.f32.mrf.mxu0
      %v9074 = vadd.f32 0.0, %v9073
      %v9075 = vpop.f32.mrf.mxu0
      %v9076 = vadd.f32 0.0, %v9075
      %9077 = vmatmul.bf16.gmra.mxu0 %v9020
      %v9078 = vpop.f32.mrf.mxu0
      %v9079 = vadd.f32 0.0, %v9078
      %v9080 = vpop.f32.mrf.mxu0
      %v9081 = vadd.f32 0.0, %v9080
      %9082 = vmatmul.bf16.gmra.mxu0 %v9023
      %v9083 = vpop.f32.mrf.mxu0
      %v9084 = vadd.f32 0.0, %v9083
      %v9085 = vpop.f32.mrf.mxu0
      %v9086 = vadd.f32 0.0, %v9085
      %9087 = vmatmul.bf16.gmra.mxu0 %v9026
      %v9088 = vpop.f32.mrf.mxu0
      %v9089 = vadd.f32 0.0, %v9088
      %v9090 = vpop.f32.mrf.mxu0
      %v9091 = vadd.f32 0.0, %v9090
      %9092 = vmatmul.bf16.gmra.mxu0 %v9029
      %v9093 = vpop.f32.mrf.mxu0
      %v9094 = vadd.f32 0.0, %v9093
      %v9095 = vpop.f32.mrf.mxu0
      %v9096 = vadd.f32 0.0, %v9095
      %9097 = vmatmul.bf16.gmra.mxu0 %v9032
      %v9098 = vpop.f32.mrf.mxu0
      %v9099 = vadd.f32 0.0, %v9098
      %v9100 = vpop.f32.mrf.mxu0
      %v9101 = vadd.f32 0.0, %v9100
      %9102 = vmatmul.bf16.gmra.mxu0 %v9035
      %v9103 = vpop.f32.mrf.mxu0
      %v9104 = vadd.f32 0.0, %v9103
      %v9105 = vpop.f32.mrf.mxu0
      %v9106 = vadd.f32 0.0, %v9105
      %9107 = vmatmul.bf16.gmra.mxu0 %v9038
      %v9108 = vpop.f32.mrf.mxu0
      %v9109 = vadd.f32 0.0, %v9108
      %v9110 = vpop.f32.mrf.mxu0
      %v9111 = vadd.f32 0.0, %v9110
      %9112 = vmatmul.bf16.gmra.mxu0 %v9041
      %v9113 = vpop.f32.mrf.mxu0
      %v9114 = vadd.f32 0.0, %v9113
      %v9115 = vpop.f32.mrf.mxu0
      %v9116 = vadd.f32 0.0, %v9115
      %9117 = vmatmul.bf16.gmra.mxu0 %v9044
      %v9118 = vpop.f32.mrf.mxu0
      %v9119 = vadd.f32 0.0, %v9118
      %v9120 = vpop.f32.mrf.mxu0
      %v9121 = vadd.f32 0.0, %v9120
      %9122 = vmatmul.bf16.gmra.mxu0 %v9047
      %v9123 = vpop.f32.mrf.mxu0
      %v9124 = vadd.f32 0.0, %v9123
      %v9125 = vpop.f32.mrf.mxu0
      %v9126 = vadd.f32 0.0, %v9125
      %9127 = vmatmul.bf16.gmra.mxu0 %v9050
      %v9128 = vpop.f32.mrf.mxu0
      %v9129 = vadd.f32 0.0, %v9128
      %v9130 = vpop.f32.mrf.mxu0
      %v9131 = vadd.f32 0.0, %v9130
      %9132 = vmatmul.bf16.gmra.mxu0 %v9053
      %v9133 = vpop.f32.mrf.mxu0
      %v9134 = vadd.f32 0.0, %v9133
      %v9135 = vpop.f32.mrf.mxu0
      %v9136 = vadd.f32 0.0, %v9135
      %9137 = vmatmul.bf16.gmra.mxu0 %v9056
      %v9138 = vpop.f32.mrf.mxu0
      %v9139 = vadd.f32 0.0, %v9138
      %v9140 = vpop.f32.mrf.mxu0
      %v9141 = vadd.f32 0.0, %v9140
      %9142 = vmatmul.bf16.gmra.mxu0 %v9059
      %v9143 = vpop.f32.mrf.mxu0
      %v9144 = vadd.f32 0.0, %v9143
      %v9145 = vpop.f32.mrf.mxu0
      %v9146 = vadd.f32 0.0, %v9145
      %9147 = vmatmul.bf16.gmra.mxu0 %v9062
      %v9148 = vpop.f32.mrf.mxu0
      %v9149 = vadd.f32 0.0, %v9148
      %v9150 = vpop.f32.mrf.mxu0
      %v9151 = vadd.f32 0.0, %v9150
      %9152 = vdwg.mxu0
      %v9153 = vadd.f32 %v8903, %v9074
      %v9154 = vadd.f32 %v8904, %v9076
      %v9155 = vadd.f32 %v8905, %v9079
      %v9156 = vadd.f32 %v8906, %v9081
      %v9157 = vadd.f32 %v8907, %v9084
      %v9158 = vadd.f32 %v8908, %v9086
      %v9159 = vadd.f32 %v8909, %v9089
      %v9160 = vadd.f32 %v8910, %v9091
      %v9161 = vadd.f32 %v8911, %v9094
      %v9162 = vadd.f32 %v8912, %v9096
      %v9163 = vadd.f32 %v8913, %v9099
      %v9164 = vadd.f32 %v8914, %v9101
      %v9165 = vadd.f32 %v8915, %v9104
      %v9166 = vadd.f32 %v8916, %v9106
      %v9167 = vadd.f32 %v8917, %v9109
      %v9168 = vadd.f32 %v8918, %v9111
      %v9169 = vadd.f32 %v8919, %v9114
      %v9170 = vadd.f32 %v8920, %v9116
      %v9171 = vadd.f32 %v8921, %v9119
      %v9172 = vadd.f32 %v8922, %v9121
      %v9173 = vadd.f32 %v8923, %v9124
      %v9174 = vadd.f32 %v8924, %v9126
      %v9175 = vadd.f32 %v8925, %v9129
      %v9176 = vadd.f32 %v8926, %v9131
      %v9177 = vadd.f32 %v8927, %v9134
      %v9178 = vadd.f32 %v8928, %v9136
      %v9179 = vadd.f32 %v8929, %v9139
      %v9180 = vadd.f32 %v8930, %v9141
      %v9181 = vadd.f32 %v8931, %v9144
      %v9182 = vadd.f32 %v8932, %v9146
      %v9183 = vadd.f32 %v8933, %v9149
      %v9184 = vadd.f32 %v8934, %v9151
      %v9185 = vld [vmem:[%s8217 + $0x1] sm:$0xff]
      %v9186 = vld [vmem:[%s8217 + $0x9] sm:$0xff]
      %v9187 = vld [vmem:[%s8217 + $0x19] sm:$0xff]
      %v9188 = vld [vmem:[%s8217 + $0x21] sm:$0xff]
      %v9189 = vld [vmem:[%s8217 + $0x31] sm:$0xff]
      %v9190 = vld [vmem:[%s8217 + $0x39] sm:$0xff]
      %v9191 = vld [vmem:[%s8217 + $0x49] sm:$0xff]
      %v9192 = vld [vmem:[%s8217 + $0x51] sm:$0xff]
      %v9193 = vld [vmem:[%s8217 + $0x61] sm:$0xff]
      %v9194 = vld [vmem:[%s8217 + $0x69] sm:$0xff]
      %v9195 = vld [vmem:[%s8217 + $0x79] sm:$0xff]
      %v9196 = vld [vmem:[%s8217 + $0x81] sm:$0xff]
      %v9197 = vld [vmem:[%s8217 + $0x91] sm:$0xff]
      %v9198 = vld [vmem:[%s8217 + $0x99] sm:$0xff]
      %v9199 = vld [vmem:[%s8217 + $0xa9] sm:$0xff]
      %v9200 = vld [vmem:[%s8217 + $0xb1] sm:$0xff]
      %v9201 = vld [vmem:[%s8217 + $0xc1] sm:$0xff]
      %v9202 = vld [vmem:[%s8217 + $0xc9] sm:$0xff]
      %v9203 = vld [vmem:[%s8217 + $0xd9] sm:$0xff]
      %v9204 = vld [vmem:[%s8217 + $0xe1] sm:$0xff]
      %v9205 = vld [vmem:[%s8217 + $0xf1] sm:$0xff]
      %v9206 = vld [vmem:[%s8217 + $0xf9] sm:$0xff]
      %v9207 = vld [vmem:[%s8217 + $0x109] sm:$0xff]
      %v9208 = vld [vmem:[%s8217 + $0x111] sm:$0xff]
      %v9209 = vld [vmem:[%s8217 + $0x121] sm:$0xff]
      %v9210 = vld [vmem:[%s8217 + $0x129] sm:$0xff]
      %v9211 = vld [vmem:[%s8217 + $0x139] sm:$0xff]
      %v9212 = vld [vmem:[%s8217 + $0x141] sm:$0xff]
      %v9213 = vld [vmem:[%s8217 + $0x151] sm:$0xff]
      %v9214 = vld [vmem:[%s8217 + $0x159] sm:$0xff]
      %v9215 = vld [vmem:[%s8217 + $0x169] sm:$0xff]
      %v9216 = vld [vmem:[%s8217 + $0x171] sm:$0xff]
      %v9217 = vpack.c.bf16 %v9186, %v9185
      %v9218 = vpack.c.bf16 %v9188, %v9187
      %v9219 = vpack.c.bf16 %v9190, %v9189
      %v9220 = vpack.c.bf16 %v9192, %v9191
      %v9221 = vpack.c.bf16 %v9194, %v9193
      %v9222 = vpack.c.bf16 %v9196, %v9195
      %v9223 = vpack.c.bf16 %v9198, %v9197
      %v9224 = vpack.c.bf16 %v9200, %v9199
      %v9225 = vpack.c.bf16 %v9202, %v9201
      %v9226 = vpack.c.bf16 %v9204, %v9203
      %v9227 = vpack.c.bf16 %v9206, %v9205
      %v9228 = vpack.c.bf16 %v9208, %v9207
      %v9229 = vpack.c.bf16 %v9210, %v9209
      %v9230 = vpack.c.bf16 %v9212, %v9211
      %v9231 = vpack.c.bf16 %v9214, %v9213
      %v9232 = vpack.c.bf16 %v9216, %v9215
      %s9233 = scalar_lea.vmem %s7, 128
      %v9234 = vld [vmem:[%s9233] sm:$0xf]
      %v9235 = vld [vmem:[%s9233 + $0x4] sm:$0xf]
      %v9236 = vld [vmem:[%s9233 + $0x8] sm:$0xf]
      %v9237 = vld [vmem:[%s9233 + $0xc] sm:$0xf]
      %v9238 = vld [vmem:[%s9233 + $0x10] sm:$0xf]
      %v9239 = vld [vmem:[%s9233 + $0x14] sm:$0xf]
      %v9240 = vld [vmem:[%s9233 + $0x18] sm:$0xf]
      %v9241 = vld [vmem:[%s9233 + $0x1c] sm:$0xf]
      %v9250 = vunpack.c.l.b16 %v9234
      %v9251 = vunpack.c.l.b16 %v9235
      %v9252 = vunpack.c.l.b16 %v9236
      %v9253 = vunpack.c.l.b16 %v9237
      %v9254 = vunpack.c.l.b16 %v9238
      %v9255 = vunpack.c.l.b16 %v9239
      %v9256 = vunpack.c.l.b16 %v9240
      %v9257 = vunpack.c.l.b16 %v9241
      %v9258 = vpack.c.b16 %v9251, %v9250
      %v9259 = vpack.c.b16 %v9253, %v9252
      %v9260 = vpack.c.b16 %v9255, %v9254
      %v9261 = vpack.c.b16 %v9257, %v9256
      %v9267 = vsel %vm334, %v9217, 0
      %v9270 = vsel %vm334, %v9218, 0
      %v9273 = vsel %vm334, %v9219, 0
      %v9276 = vsel %vm334, %v9220, 0
      %v9279 = vsel %vm334, %v9221, 0
      %v9282 = vsel %vm334, %v9222, 0
      %v9285 = vsel %vm334, %v9223, 0
      %v9288 = vsel %vm334, %v9224, 0
      %v9291 = vsel %vm334, %v9225, 0
      %v9294 = vsel %vm334, %v9226, 0
      %v9297 = vsel %vm334, %v9227, 0
      %v9300 = vsel %vm334, %v9228, 0
      %v9303 = vsel %vm334, %v9229, 0
      %v9306 = vsel %vm334, %v9230, 0
      %v9309 = vsel %vm334, %v9231, 0
      %v9312 = vsel %vm334, %v9232, 0
      %9314 = vmatpush.bf16.msra.mxu0 0
      %9315 = vmatpush.bf16.msra.mxu0 0
      %9316 = vmatpush.bf16.msra.mxu0 0
      %9317 = vmatpush.bf16.msra.mxu0 0
      %9318 = vmatpush.bf16.msra.mxu0 %v9261
      %9319 = vmatpush.bf16.msra.mxu0 %v9260
      %9320 = vmatpush.bf16.msra.mxu0 %v9259
      %9321 = vmatpush.bf16.msra.mxu0 %v9258
      %9322 = vmatmul.bf16.gmra.mxu0 %v9267
      %v9323 = vpop.f32.mrf.mxu0
      %v9324 = vadd.f32 0.0, %v9323
      %v9325 = vpop.f32.mrf.mxu0
      %v9326 = vadd.f32 0.0, %v9325
      %9327 = vmatmul.bf16.gmra.mxu0 %v9270
      %v9328 = vpop.f32.mrf.mxu0
      %v9329 = vadd.f32 0.0, %v9328
      %v9330 = vpop.f32.mrf.mxu0
      %v9331 = vadd.f32 0.0, %v9330
      %9332 = vmatmul.bf16.gmra.mxu0 %v9273
      %v9333 = vpop.f32.mrf.mxu0
      %v9334 = vadd.f32 0.0, %v9333
      %v9335 = vpop.f32.mrf.mxu0
      %v9336 = vadd.f32 0.0, %v9335
      %9337 = vmatmul.bf16.gmra.mxu0 %v9276
      %v9338 = vpop.f32.mrf.mxu0
      %v9339 = vadd.f32 0.0, %v9338
      %v9340 = vpop.f32.mrf.mxu0
      %v9341 = vadd.f32 0.0, %v9340
      %9342 = vmatmul.bf16.gmra.mxu0 %v9279
      %v9343 = vpop.f32.mrf.mxu0
      %v9344 = vadd.f32 0.0, %v9343
      %v9345 = vpop.f32.mrf.mxu0
      %v9346 = vadd.f32 0.0, %v9345
      %9347 = vmatmul.bf16.gmra.mxu0 %v9282
      %v9348 = vpop.f32.mrf.mxu0
      %v9349 = vadd.f32 0.0, %v9348
      %v9350 = vpop.f32.mrf.mxu0
      %v9351 = vadd.f32 0.0, %v9350
      %9352 = vmatmul.bf16.gmra.mxu0 %v9285
      %v9353 = vpop.f32.mrf.mxu0
      %v9354 = vadd.f32 0.0, %v9353
      %v9355 = vpop.f32.mrf.mxu0
      %v9356 = vadd.f32 0.0, %v9355
      %9357 = vmatmul.bf16.gmra.mxu0 %v9288
      %v9358 = vpop.f32.mrf.mxu0
      %v9359 = vadd.f32 0.0, %v9358
      %v9360 = vpop.f32.mrf.mxu0
      %v9361 = vadd.f32 0.0, %v9360
      %9362 = vmatmul.bf16.gmra.mxu0 %v9291
      %v9363 = vpop.f32.mrf.mxu0
      %v9364 = vadd.f32 0.0, %v9363
      %v9365 = vpop.f32.mrf.mxu0
      %v9366 = vadd.f32 0.0, %v9365
      %9367 = vmatmul.bf16.gmra.mxu0 %v9294
      %v9368 = vpop.f32.mrf.mxu0
      %v9369 = vadd.f32 0.0, %v9368
      %v9370 = vpop.f32.mrf.mxu0
      %v9371 = vadd.f32 0.0, %v9370
      %9372 = vmatmul.bf16.gmra.mxu0 %v9297
      %v9373 = vpop.f32.mrf.mxu0
      %v9374 = vadd.f32 0.0, %v9373
      %v9375 = vpop.f32.mrf.mxu0
      %v9376 = vadd.f32 0.0, %v9375
      %9377 = vmatmul.bf16.gmra.mxu0 %v9300
      %v9378 = vpop.f32.mrf.mxu0
      %v9379 = vadd.f32 0.0, %v9378
      %v9380 = vpop.f32.mrf.mxu0
      %v9381 = vadd.f32 0.0, %v9380
      %9382 = vmatmul.bf16.gmra.mxu0 %v9303
      %v9383 = vpop.f32.mrf.mxu0
      %v9384 = vadd.f32 0.0, %v9383
      %v9385 = vpop.f32.mrf.mxu0
      %v9386 = vadd.f32 0.0, %v9385
      %9387 = vmatmul.bf16.gmra.mxu0 %v9306
      %v9388 = vpop.f32.mrf.mxu0
      %v9389 = vadd.f32 0.0, %v9388
      %v9390 = vpop.f32.mrf.mxu0
      %v9391 = vadd.f32 0.0, %v9390
      %9392 = vmatmul.bf16.gmra.mxu0 %v9309
      %v9393 = vpop.f32.mrf.mxu0
      %v9394 = vadd.f32 0.0, %v9393
      %v9395 = vpop.f32.mrf.mxu0
      %v9396 = vadd.f32 0.0, %v9395
      %9397 = vmatmul.bf16.gmra.mxu0 %v9312
      %v9398 = vpop.f32.mrf.mxu0
      %v9399 = vadd.f32 0.0, %v9398
      %v9400 = vpop.f32.mrf.mxu0
      %v9401 = vadd.f32 0.0, %v9400
      %9402 = vdwg.mxu0
      %v9403 = vadd.f32 %v9153, %v9324
      %v9404 = vadd.f32 %v9154, %v9326
      %v9405 = vadd.f32 %v9155, %v9329
      %v9406 = vadd.f32 %v9156, %v9331
      %v9407 = vadd.f32 %v9157, %v9334
      %v9408 = vadd.f32 %v9158, %v9336
      %v9409 = vadd.f32 %v9159, %v9339
      %v9410 = vadd.f32 %v9160, %v9341
      %v9411 = vadd.f32 %v9161, %v9344
      %v9412 = vadd.f32 %v9162, %v9346
      %v9413 = vadd.f32 %v9163, %v9349
      %v9414 = vadd.f32 %v9164, %v9351
      %v9415 = vadd.f32 %v9165, %v9354
      %v9416 = vadd.f32 %v9166, %v9356
      %v9417 = vadd.f32 %v9167, %v9359
      %v9418 = vadd.f32 %v9168, %v9361
      %v9419 = vadd.f32 %v9169, %v9364
      %v9420 = vadd.f32 %v9170, %v9366
      %v9421 = vadd.f32 %v9171, %v9369
      %v9422 = vadd.f32 %v9172, %v9371
      %v9423 = vadd.f32 %v9173, %v9374
      %v9424 = vadd.f32 %v9174, %v9376
      %v9425 = vadd.f32 %v9175, %v9379
      %v9426 = vadd.f32 %v9176, %v9381
      %v9427 = vadd.f32 %v9177, %v9384
      %v9428 = vadd.f32 %v9178, %v9386
      %v9429 = vadd.f32 %v9179, %v9389
      %v9430 = vadd.f32 %v9180, %v9391
      %v9431 = vadd.f32 %v9181, %v9394
      %v9432 = vadd.f32 %v9182, %v9396
      %v9433 = vadd.f32 %v9183, %v9399
      %v9434 = vadd.f32 %v9184, %v9401
      %v9435 = vld [vmem:[%s8217 + $0x2] sm:$0xff]
      %v9436 = vld [vmem:[%s8217 + $0xa] sm:$0xff]
      %v9437 = vld [vmem:[%s8217 + $0x1a] sm:$0xff]
      %v9438 = vld [vmem:[%s8217 + $0x22] sm:$0xff]
      %v9439 = vld [vmem:[%s8217 + $0x32] sm:$0xff]
      %v9440 = vld [vmem:[%s8217 + $0x3a] sm:$0xff]
      %v9441 = vld [vmem:[%s8217 + $0x4a] sm:$0xff]
      %v9442 = vld [vmem:[%s8217 + $0x52] sm:$0xff]
      %v9443 = vld [vmem:[%s8217 + $0x62] sm:$0xff]
      %v9444 = vld [vmem:[%s8217 + $0x6a] sm:$0xff]
      %v9445 = vld [vmem:[%s8217 + $0x7a] sm:$0xff]
      %v9446 = vld [vmem:[%s8217 + $0x82] sm:$0xff]
      %v9447 = vld [vmem:[%s8217 + $0x92] sm:$0xff]
      %v9448 = vld [vmem:[%s8217 + $0x9a] sm:$0xff]
      %v9449 = vld [vmem:[%s8217 + $0xaa] sm:$0xff]
      %v9450 = vld [vmem:[%s8217 + $0xb2] sm:$0xff]
      %v9451 = vld [vmem:[%s8217 + $0xc2] sm:$0xff]
      %v9452 = vld [vmem:[%s8217 + $0xca] sm:$0xff]
      %v9453 = vld [vmem:[%s8217 + $0xda] sm:$0xff]
      %v9454 = vld [vmem:[%s8217 + $0xe2] sm:$0xff]
      %v9455 = vld [vmem:[%s8217 + $0xf2] sm:$0xff]
      %v9456 = vld [vmem:[%s8217 + $0xfa] sm:$0xff]
      %v9457 = vld [vmem:[%s8217 + $0x10a] sm:$0xff]
      %v9458 = vld [vmem:[%s8217 + $0x112] sm:$0xff]
      %v9459 = vld [vmem:[%s8217 + $0x122] sm:$0xff]
      %v9460 = vld [vmem:[%s8217 + $0x12a] sm:$0xff]
      %v9461 = vld [vmem:[%s8217 + $0x13a] sm:$0xff]
      %v9462 = vld [vmem:[%s8217 + $0x142] sm:$0xff]
      %v9463 = vld [vmem:[%s8217 + $0x152] sm:$0xff]
      %v9464 = vld [vmem:[%s8217 + $0x15a] sm:$0xff]
      %v9465 = vld [vmem:[%s8217 + $0x16a] sm:$0xff]
      %v9466 = vld [vmem:[%s8217 + $0x172] sm:$0xff]
      %v9467 = vpack.c.bf16 %v9436, %v9435
      %v9468 = vpack.c.bf16 %v9438, %v9437
      %v9469 = vpack.c.bf16 %v9440, %v9439
      %v9470 = vpack.c.bf16 %v9442, %v9441
      %v9471 = vpack.c.bf16 %v9444, %v9443
      %v9472 = vpack.c.bf16 %v9446, %v9445
      %v9473 = vpack.c.bf16 %v9448, %v9447
      %v9474 = vpack.c.bf16 %v9450, %v9449
      %v9475 = vpack.c.bf16 %v9452, %v9451
      %v9476 = vpack.c.bf16 %v9454, %v9453
      %v9477 = vpack.c.bf16 %v9456, %v9455
      %v9478 = vpack.c.bf16 %v9458, %v9457
      %v9479 = vpack.c.bf16 %v9460, %v9459
      %v9480 = vpack.c.bf16 %v9462, %v9461
      %v9481 = vpack.c.bf16 %v9464, %v9463
      %v9482 = vpack.c.bf16 %v9466, %v9465
      %s9483 = scalar_lea.vmem %s7, 160
      %v9484 = vld [vmem:[%s9483] sm:$0xf]
      %v9485 = vld [vmem:[%s9483 + $0x4] sm:$0xf]
      %v9486 = vld [vmem:[%s9483 + $0x8] sm:$0xf]
      %v9487 = vld [vmem:[%s9483 + $0xc] sm:$0xf]
      %v9488 = vld [vmem:[%s9483 + $0x10] sm:$0xf]
      %v9489 = vld [vmem:[%s9483 + $0x14] sm:$0xf]
      %v9490 = vld [vmem:[%s9483 + $0x18] sm:$0xf]
      %v9491 = vld [vmem:[%s9483 + $0x1c] sm:$0xf]
      %v9500 = vunpack.c.l.b16 %v9484
      %v9501 = vunpack.c.l.b16 %v9485
      %v9502 = vunpack.c.l.b16 %v9486
      %v9503 = vunpack.c.l.b16 %v9487
      %v9504 = vunpack.c.l.b16 %v9488
      %v9505 = vunpack.c.l.b16 %v9489
      %v9506 = vunpack.c.l.b16 %v9490
      %v9507 = vunpack.c.l.b16 %v9491
      %v9508 = vpack.c.b16 %v9501, %v9500
      %v9509 = vpack.c.b16 %v9503, %v9502
      %v9510 = vpack.c.b16 %v9505, %v9504
      %v9511 = vpack.c.b16 %v9507, %v9506
      %v9517 = vsel %vm334, %v9467, 0
      %v9520 = vsel %vm334, %v9468, 0
      %v9523 = vsel %vm334, %v9469, 0
      %v9526 = vsel %vm334, %v9470, 0
      %v9529 = vsel %vm334, %v9471, 0
      %v9532 = vsel %vm334, %v9472, 0
      %v9535 = vsel %vm334, %v9473, 0
      %v9538 = vsel %vm334, %v9474, 0
      %v9541 = vsel %vm334, %v9475, 0
      %v9544 = vsel %vm334, %v9476, 0
      %v9547 = vsel %vm334, %v9477, 0
      %v9550 = vsel %vm334, %v9478, 0
      %v9553 = vsel %vm334, %v9479, 0
      %v9556 = vsel %vm334, %v9480, 0
      %v9559 = vsel %vm334, %v9481, 0
      %v9562 = vsel %vm334, %v9482, 0
      %9564 = vmatpush.bf16.msra.mxu0 0
      %9565 = vmatpush.bf16.msra.mxu0 0
      %9566 = vmatpush.bf16.msra.mxu0 0
      %9567 = vmatpush.bf16.msra.mxu0 0
      %9568 = vmatpush.bf16.msra.mxu0 %v9511
      %9569 = vmatpush.bf16.msra.mxu0 %v9510
      %9570 = vmatpush.bf16.msra.mxu0 %v9509
      %9571 = vmatpush.bf16.msra.mxu0 %v9508
      %9572 = vmatmul.bf16.gmra.mxu0 %v9517
      %v9573 = vpop.f32.mrf.mxu0
      %v9574 = vadd.f32 0.0, %v9573
      %v9575 = vpop.f32.mrf.mxu0
      %v9576 = vadd.f32 0.0, %v9575
      %9577 = vmatmul.bf16.gmra.mxu0 %v9520
      %v9578 = vpop.f32.mrf.mxu0
      %v9579 = vadd.f32 0.0, %v9578
      %v9580 = vpop.f32.mrf.mxu0
      %v9581 = vadd.f32 0.0, %v9580
      %9582 = vmatmul.bf16.gmra.mxu0 %v9523
      %v9583 = vpop.f32.mrf.mxu0
      %v9584 = vadd.f32 0.0, %v9583
      %v9585 = vpop.f32.mrf.mxu0
      %v9586 = vadd.f32 0.0, %v9585
      %9587 = vmatmul.bf16.gmra.mxu0 %v9526
      %v9588 = vpop.f32.mrf.mxu0
      %v9589 = vadd.f32 0.0, %v9588
      %v9590 = vpop.f32.mrf.mxu0
      %v9591 = vadd.f32 0.0, %v9590
      %9592 = vmatmul.bf16.gmra.mxu0 %v9529
      %v9593 = vpop.f32.mrf.mxu0
      %v9594 = vadd.f32 0.0, %v9593
      %v9595 = vpop.f32.mrf.mxu0
      %v9596 = vadd.f32 0.0, %v9595
      %9597 = vmatmul.bf16.gmra.mxu0 %v9532
      %v9598 = vpop.f32.mrf.mxu0
      %v9599 = vadd.f32 0.0, %v9598
      %v9600 = vpop.f32.mrf.mxu0
      %v9601 = vadd.f32 0.0, %v9600
      %9602 = vmatmul.bf16.gmra.mxu0 %v9535
      %v9603 = vpop.f32.mrf.mxu0
      %v9604 = vadd.f32 0.0, %v9603
      %v9605 = vpop.f32.mrf.mxu0
      %v9606 = vadd.f32 0.0, %v9605
      %9607 = vmatmul.bf16.gmra.mxu0 %v9538
      %v9608 = vpop.f32.mrf.mxu0
      %v9609 = vadd.f32 0.0, %v9608
      %v9610 = vpop.f32.mrf.mxu0
      %v9611 = vadd.f32 0.0, %v9610
      %9612 = vmatmul.bf16.gmra.mxu0 %v9541
      %v9613 = vpop.f32.mrf.mxu0
      %v9614 = vadd.f32 0.0, %v9613
      %v9615 = vpop.f32.mrf.mxu0
      %v9616 = vadd.f32 0.0, %v9615
      %9617 = vmatmul.bf16.gmra.mxu0 %v9544
      %v9618 = vpop.f32.mrf.mxu0
      %v9619 = vadd.f32 0.0, %v9618
      %v9620 = vpop.f32.mrf.mxu0
      %v9621 = vadd.f32 0.0, %v9620
      %9622 = vmatmul.bf16.gmra.mxu0 %v9547
      %v9623 = vpop.f32.mrf.mxu0
      %v9624 = vadd.f32 0.0, %v9623
      %v9625 = vpop.f32.mrf.mxu0
      %v9626 = vadd.f32 0.0, %v9625
      %9627 = vmatmul.bf16.gmra.mxu0 %v9550
      %v9628 = vpop.f32.mrf.mxu0
      %v9629 = vadd.f32 0.0, %v9628
      %v9630 = vpop.f32.mrf.mxu0
      %v9631 = vadd.f32 0.0, %v9630
      %9632 = vmatmul.bf16.gmra.mxu0 %v9553
      %v9633 = vpop.f32.mrf.mxu0
      %v9634 = vadd.f32 0.0, %v9633
      %v9635 = vpop.f32.mrf.mxu0
      %v9636 = vadd.f32 0.0, %v9635
      %9637 = vmatmul.bf16.gmra.mxu0 %v9556
      %v9638 = vpop.f32.mrf.mxu0
      %v9639 = vadd.f32 0.0, %v9638
      %v9640 = vpop.f32.mrf.mxu0
      %v9641 = vadd.f32 0.0, %v9640
      %9642 = vmatmul.bf16.gmra.mxu0 %v9559
      %v9643 = vpop.f32.mrf.mxu0
      %v9644 = vadd.f32 0.0, %v9643
      %v9645 = vpop.f32.mrf.mxu0
      %v9646 = vadd.f32 0.0, %v9645
      %9647 = vmatmul.bf16.gmra.mxu0 %v9562
      %v9648 = vpop.f32.mrf.mxu0
      %v9649 = vadd.f32 0.0, %v9648
      %v9650 = vpop.f32.mrf.mxu0
      %v9651 = vadd.f32 0.0, %v9650
      %9652 = vdwg.mxu0
      %v9653 = vadd.f32 %v9403, %v9574
      %v9654 = vadd.f32 %v9404, %v9576
      %v9655 = vadd.f32 %v9405, %v9579
      %v9656 = vadd.f32 %v9406, %v9581
      %v9657 = vadd.f32 %v9407, %v9584
      %v9658 = vadd.f32 %v9408, %v9586
      %v9659 = vadd.f32 %v9409, %v9589
      %v9660 = vadd.f32 %v9410, %v9591
      %v9661 = vadd.f32 %v9411, %v9594
      %v9662 = vadd.f32 %v9412, %v9596
      %v9663 = vadd.f32 %v9413, %v9599
      %v9664 = vadd.f32 %v9414, %v9601
      %v9665 = vadd.f32 %v9415, %v9604
      %v9666 = vadd.f32 %v9416, %v9606
      %v9667 = vadd.f32 %v9417, %v9609
      %v9668 = vadd.f32 %v9418, %v9611
      %v9669 = vadd.f32 %v9419, %v9614
      %v9670 = vadd.f32 %v9420, %v9616
      %v9671 = vadd.f32 %v9421, %v9619
      %v9672 = vadd.f32 %v9422, %v9621
      %v9673 = vadd.f32 %v9423, %v9624
      %v9674 = vadd.f32 %v9424, %v9626
      %v9675 = vadd.f32 %v9425, %v9629
      %v9676 = vadd.f32 %v9426, %v9631
      %v9677 = vadd.f32 %v9427, %v9634
      %v9678 = vadd.f32 %v9428, %v9636
      %v9679 = vadd.f32 %v9429, %v9639
      %v9680 = vadd.f32 %v9430, %v9641
      %v9681 = vadd.f32 %v9431, %v9644
      %v9682 = vadd.f32 %v9432, %v9646
      %v9683 = vadd.f32 %v9433, %v9649
      %v9684 = vadd.f32 %v9434, %v9651
      %s9685 = scalar_lea.vmem [#allocation4], 48
      %v9686 = vld [vmem:[%s9685] sm:$0xff]
      %v9687 = vld [vmem:[%s9685 + $0x8] sm:$0xff]
      %v9688 = vld [vmem:[%s9685 + $0x18] sm:$0xff]
      %v9689 = vld [vmem:[%s9685 + $0x20] sm:$0xff]
      %v9690 = vld [vmem:[%s9685 + $0x30] sm:$0xff]
      %v9691 = vld [vmem:[%s9685 + $0x38] sm:$0xff]
      %v9692 = vld [vmem:[%s9685 + $0x48] sm:$0xff]
      %v9693 = vld [vmem:[%s9685 + $0x50] sm:$0xff]
      %v9694 = vld [vmem:[%s9685 + $0x60] sm:$0xff]
      %v9695 = vld [vmem:[%s9685 + $0x68] sm:$0xff]
      %v9696 = vld [vmem:[%s9685 + $0x78] sm:$0xff]
      %v9697 = vld [vmem:[%s9685 + $0x80] sm:$0xff]
      %v9698 = vld [vmem:[%s9685 + $0x90] sm:$0xff]
      %v9699 = vld [vmem:[%s9685 + $0x98] sm:$0xff]
      %v9700 = vld [vmem:[%s9685 + $0xa8] sm:$0xff]
      %v9701 = vld [vmem:[%s9685 + $0xb0] sm:$0xff]
      %v9702 = vld [vmem:[%s9685 + $0xc0] sm:$0xff]
      %v9703 = vld [vmem:[%s9685 + $0xc8] sm:$0xff]
      %v9704 = vld [vmem:[%s9685 + $0xd8] sm:$0xff]
      %v9705 = vld [vmem:[%s9685 + $0xe0] sm:$0xff]
      %v9706 = vld [vmem:[%s9685 + $0xf0] sm:$0xff]
      %v9707 = vld [vmem:[%s9685 + $0xf8] sm:$0xff]
      %v9708 = vld [vmem:[%s9685 + $0x108] sm:$0xff]
      %v9709 = vld [vmem:[%s9685 + $0x110] sm:$0xff]
      %v9710 = vld [vmem:[%s9685 + $0x120] sm:$0xff]
      %v9711 = vld [vmem:[%s9685 + $0x128] sm:$0xff]
      %v9712 = vld [vmem:[%s9685 + $0x138] sm:$0xff]
      %v9713 = vld [vmem:[%s9685 + $0x140] sm:$0xff]
      %v9714 = vld [vmem:[%s9685 + $0x150] sm:$0xff]
      %v9715 = vld [vmem:[%s9685 + $0x158] sm:$0xff]
      %v9716 = vld [vmem:[%s9685 + $0x168] sm:$0xff]
      %v9717 = vld [vmem:[%s9685 + $0x170] sm:$0xff]
      %v9718 = vpack.c.bf16 %v9687, %v9686
      %v9719 = vpack.c.bf16 %v9689, %v9688
      %v9720 = vpack.c.bf16 %v9691, %v9690
      %v9721 = vpack.c.bf16 %v9693, %v9692
      %v9722 = vpack.c.bf16 %v9695, %v9694
      %v9723 = vpack.c.bf16 %v9697, %v9696
      %v9724 = vpack.c.bf16 %v9699, %v9698
      %v9725 = vpack.c.bf16 %v9701, %v9700
      %v9726 = vpack.c.bf16 %v9703, %v9702
      %v9727 = vpack.c.bf16 %v9705, %v9704
      %v9728 = vpack.c.bf16 %v9707, %v9706
      %v9729 = vpack.c.bf16 %v9709, %v9708
      %v9730 = vpack.c.bf16 %v9711, %v9710
      %v9731 = vpack.c.bf16 %v9713, %v9712
      %v9732 = vpack.c.bf16 %v9715, %v9714
      %v9733 = vpack.c.bf16 %v9717, %v9716
      %s9734 = scalar_lea.vmem %s7, 192
      %v9735 = vld [vmem:[%s9734] sm:$0xf]
      %v9736 = vld [vmem:[%s9734 + $0x4] sm:$0xf]
      %v9737 = vld [vmem:[%s9734 + $0x8] sm:$0xf]
      %v9738 = vld [vmem:[%s9734 + $0xc] sm:$0xf]
      %v9739 = vld [vmem:[%s9734 + $0x10] sm:$0xf]
      %v9740 = vld [vmem:[%s9734 + $0x14] sm:$0xf]
      %v9741 = vld [vmem:[%s9734 + $0x18] sm:$0xf]
      %v9742 = vld [vmem:[%s9734 + $0x1c] sm:$0xf]
      %v9751 = vunpack.c.l.b16 %v9735
      %v9752 = vunpack.c.l.b16 %v9736
      %v9753 = vunpack.c.l.b16 %v9737
      %v9754 = vunpack.c.l.b16 %v9738
      %v9755 = vunpack.c.l.b16 %v9739
      %v9756 = vunpack.c.l.b16 %v9740
      %v9757 = vunpack.c.l.b16 %v9741
      %v9758 = vunpack.c.l.b16 %v9742
      %v9759 = vpack.c.b16 %v9752, %v9751
      %v9760 = vpack.c.b16 %v9754, %v9753
      %v9761 = vpack.c.b16 %v9756, %v9755
      %v9762 = vpack.c.b16 %v9758, %v9757
      %v9768 = vsel %vm334, %v9718, 0
      %v9771 = vsel %vm334, %v9719, 0
      %v9774 = vsel %vm334, %v9720, 0
      %v9777 = vsel %vm334, %v9721, 0
      %v9780 = vsel %vm334, %v9722, 0
      %v9783 = vsel %vm334, %v9723, 0
      %v9786 = vsel %vm334, %v9724, 0
      %v9789 = vsel %vm334, %v9725, 0
      %v9792 = vsel %vm334, %v9726, 0
      %v9795 = vsel %vm334, %v9727, 0
      %v9798 = vsel %vm334, %v9728, 0
      %v9801 = vsel %vm334, %v9729, 0
      %v9804 = vsel %vm334, %v9730, 0
      %v9807 = vsel %vm334, %v9731, 0
      %v9810 = vsel %vm334, %v9732, 0
      %v9813 = vsel %vm334, %v9733, 0
      %9815 = vmatpush.bf16.msra.mxu0 0
      %9816 = vmatpush.bf16.msra.mxu0 0
      %9817 = vmatpush.bf16.msra.mxu0 0
      %9818 = vmatpush.bf16.msra.mxu0 0
      %9819 = vmatpush.bf16.msra.mxu0 %v9762
      %9820 = vmatpush.bf16.msra.mxu0 %v9761
      %9821 = vmatpush.bf16.msra.mxu0 %v9760
      %9822 = vmatpush.bf16.msra.mxu0 %v9759
      %9823 = vmatmul.bf16.gmra.mxu0 %v9768
      %v9824 = vpop.f32.mrf.mxu0
      %v9825 = vadd.f32 0.0, %v9824
      %v9826 = vpop.f32.mrf.mxu0
      %v9827 = vadd.f32 0.0, %v9826
      %9828 = vmatmul.bf16.gmra.mxu0 %v9771
      %v9829 = vpop.f32.mrf.mxu0
      %v9830 = vadd.f32 0.0, %v9829
      %v9831 = vpop.f32.mrf.mxu0
      %v9832 = vadd.f32 0.0, %v9831
      %9833 = vmatmul.bf16.gmra.mxu0 %v9774
      %v9834 = vpop.f32.mrf.mxu0
      %v9835 = vadd.f32 0.0, %v9834
      %v9836 = vpop.f32.mrf.mxu0
      %v9837 = vadd.f32 0.0, %v9836
      %9838 = vmatmul.bf16.gmra.mxu0 %v9777
      %v9839 = vpop.f32.mrf.mxu0
      %v9840 = vadd.f32 0.0, %v9839
      %v9841 = vpop.f32.mrf.mxu0
      %v9842 = vadd.f32 0.0, %v9841
      %9843 = vmatmul.bf16.gmra.mxu0 %v9780
      %v9844 = vpop.f32.mrf.mxu0
      %v9845 = vadd.f32 0.0, %v9844
      %v9846 = vpop.f32.mrf.mxu0
      %v9847 = vadd.f32 0.0, %v9846
      %9848 = vmatmul.bf16.gmra.mxu0 %v9783
      %v9849 = vpop.f32.mrf.mxu0
      %v9850 = vadd.f32 0.0, %v9849
      %v9851 = vpop.f32.mrf.mxu0
      %v9852 = vadd.f32 0.0, %v9851
      %9853 = vmatmul.bf16.gmra.mxu0 %v9786
      %v9854 = vpop.f32.mrf.mxu0
      %v9855 = vadd.f32 0.0, %v9854
      %v9856 = vpop.f32.mrf.mxu0
      %v9857 = vadd.f32 0.0, %v9856
      %9858 = vmatmul.bf16.gmra.mxu0 %v9789
      %v9859 = vpop.f32.mrf.mxu0
      %v9860 = vadd.f32 0.0, %v9859
      %v9861 = vpop.f32.mrf.mxu0
      %v9862 = vadd.f32 0.0, %v9861
      %9863 = vmatmul.bf16.gmra.mxu0 %v9792
      %v9864 = vpop.f32.mrf.mxu0
      %v9865 = vadd.f32 0.0, %v9864
      %v9866 = vpop.f32.mrf.mxu0
      %v9867 = vadd.f32 0.0, %v9866
      %9868 = vmatmul.bf16.gmra.mxu0 %v9795
      %v9869 = vpop.f32.mrf.mxu0
      %v9870 = vadd.f32 0.0, %v9869
      %v9871 = vpop.f32.mrf.mxu0
      %v9872 = vadd.f32 0.0, %v9871
      %9873 = vmatmul.bf16.gmra.mxu0 %v9798
      %v9874 = vpop.f32.mrf.mxu0
      %v9875 = vadd.f32 0.0, %v9874
      %v9876 = vpop.f32.mrf.mxu0
      %v9877 = vadd.f32 0.0, %v9876
      %9878 = vmatmul.bf16.gmra.mxu0 %v9801
      %v9879 = vpop.f32.mrf.mxu0
      %v9880 = vadd.f32 0.0, %v9879
      %v9881 = vpop.f32.mrf.mxu0
      %v9882 = vadd.f32 0.0, %v9881
      %9883 = vmatmul.bf16.gmra.mxu0 %v9804
      %v9884 = vpop.f32.mrf.mxu0
      %v9885 = vadd.f32 0.0, %v9884
      %v9886 = vpop.f32.mrf.mxu0
      %v9887 = vadd.f32 0.0, %v9886
      %9888 = vmatmul.bf16.gmra.mxu0 %v9807
      %v9889 = vpop.f32.mrf.mxu0
      %v9890 = vadd.f32 0.0, %v9889
      %v9891 = vpop.f32.mrf.mxu0
      %v9892 = vadd.f32 0.0, %v9891
      %9893 = vmatmul.bf16.gmra.mxu0 %v9810
      %v9894 = vpop.f32.mrf.mxu0
      %v9895 = vadd.f32 0.0, %v9894
      %v9896 = vpop.f32.mrf.mxu0
      %v9897 = vadd.f32 0.0, %v9896
      %9898 = vmatmul.bf16.gmra.mxu0 %v9813
      %v9899 = vpop.f32.mrf.mxu0
      %v9900 = vadd.f32 0.0, %v9899
      %v9901 = vpop.f32.mrf.mxu0
      %v9902 = vadd.f32 0.0, %v9901
      %9903 = vdwg.mxu0
      %v9904 = vadd.f32 %v9653, %v9825
      %v9905 = vadd.f32 %v9654, %v9827
      %v9906 = vadd.f32 %v9655, %v9830
      %v9907 = vadd.f32 %v9656, %v9832
      %v9908 = vadd.f32 %v9657, %v9835
      %v9909 = vadd.f32 %v9658, %v9837
      %v9910 = vadd.f32 %v9659, %v9840
      %v9911 = vadd.f32 %v9660, %v9842
      %v9912 = vadd.f32 %v9661, %v9845
      %v9913 = vadd.f32 %v9662, %v9847
      %v9914 = vadd.f32 %v9663, %v9850
      %v9915 = vadd.f32 %v9664, %v9852
      %v9916 = vadd.f32 %v9665, %v9855
      %v9917 = vadd.f32 %v9666, %v9857
      %v9918 = vadd.f32 %v9667, %v9860
      %v9919 = vadd.f32 %v9668, %v9862
      %v9920 = vadd.f32 %v9669, %v9865
      %v9921 = vadd.f32 %v9670, %v9867
      %v9922 = vadd.f32 %v9671, %v9870
      %v9923 = vadd.f32 %v9672, %v9872
      %v9924 = vadd.f32 %v9673, %v9875
      %v9925 = vadd.f32 %v9674, %v9877
      %v9926 = vadd.f32 %v9675, %v9880
      %v9927 = vadd.f32 %v9676, %v9882
      %v9928 = vadd.f32 %v9677, %v9885
      %v9929 = vadd.f32 %v9678, %v9887
      %v9930 = vadd.f32 %v9679, %v9890
      %v9931 = vadd.f32 %v9680, %v9892
      %v9932 = vadd.f32 %v9681, %v9895
      %v9933 = vadd.f32 %v9682, %v9897
      %v9934 = vadd.f32 %v9683, %v9900
      %v9935 = vadd.f32 %v9684, %v9902
      %v9936 = vld [vmem:[%s9685 + $0x1] sm:$0xff]
      %v9937 = vld [vmem:[%s9685 + $0x9] sm:$0xff]
      %v9938 = vld [vmem:[%s9685 + $0x19] sm:$0xff]
      %v9939 = vld [vmem:[%s9685 + $0x21] sm:$0xff]
      %v9940 = vld [vmem:[%s9685 + $0x31] sm:$0xff]
      %v9941 = vld [vmem:[%s9685 + $0x39] sm:$0xff]
      %v9942 = vld [vmem:[%s9685 + $0x49] sm:$0xff]
      %v9943 = vld [vmem:[%s9685 + $0x51] sm:$0xff]
      %v9944 = vld [vmem:[%s9685 + $0x61] sm:$0xff]
      %v9945 = vld [vmem:[%s9685 + $0x69] sm:$0xff]
      %v9946 = vld [vmem:[%s9685 + $0x79] sm:$0xff]
      %v9947 = vld [vmem:[%s9685 + $0x81] sm:$0xff]
      %v9948 = vld [vmem:[%s9685 + $0x91] sm:$0xff]
      %v9949 = vld [vmem:[%s9685 + $0x99] sm:$0xff]
      %v9950 = vld [vmem:[%s9685 + $0xa9] sm:$0xff]
      %v9951 = vld [vmem:[%s9685 + $0xb1] sm:$0xff]
      %v9952 = vld [vmem:[%s9685 + $0xc1] sm:$0xff]
      %v9953 = vld [vmem:[%s9685 + $0xc9] sm:$0xff]
      %v9954 = vld [vmem:[%s9685 + $0xd9] sm:$0xff]
      %v9955 = vld [vmem:[%s9685 + $0xe1] sm:$0xff]
      %v9956 = vld [vmem:[%s9685 + $0xf1] sm:$0xff]
      %v9957 = vld [vmem:[%s9685 + $0xf9] sm:$0xff]
      %v9958 = vld [vmem:[%s9685 + $0x109] sm:$0xff]
      %v9959 = vld [vmem:[%s9685 + $0x111] sm:$0xff]
      %v9960 = vld [vmem:[%s9685 + $0x121] sm:$0xff]
      %v9961 = vld [vmem:[%s9685 + $0x129] sm:$0xff]
      %v9962 = vld [vmem:[%s9685 + $0x139] sm:$0xff]
      %v9963 = vld [vmem:[%s9685 + $0x141] sm:$0xff]
      %v9964 = vld [vmem:[%s9685 + $0x151] sm:$0xff]
      %v9965 = vld [vmem:[%s9685 + $0x159] sm:$0xff]
      %v9966 = vld [vmem:[%s9685 + $0x169] sm:$0xff]
      %v9967 = vld [vmem:[%s9685 + $0x171] sm:$0xff]
      %v9968 = vpack.c.bf16 %v9937, %v9936
      %v9969 = vpack.c.bf16 %v9939, %v9938
      %v9970 = vpack.c.bf16 %v9941, %v9940
      %v9971 = vpack.c.bf16 %v9943, %v9942
      %v9972 = vpack.c.bf16 %v9945, %v9944
      %v9973 = vpack.c.bf16 %v9947, %v9946
      %v9974 = vpack.c.bf16 %v9949, %v9948
      %v9975 = vpack.c.bf16 %v9951, %v9950
      %v9976 = vpack.c.bf16 %v9953, %v9952
      %v9977 = vpack.c.bf16 %v9955, %v9954
      %v9978 = vpack.c.bf16 %v9957, %v9956
      %v9979 = vpack.c.bf16 %v9959, %v9958
      %v9980 = vpack.c.bf16 %v9961, %v9960
      %v9981 = vpack.c.bf16 %v9963, %v9962
      %v9982 = vpack.c.bf16 %v9965, %v9964
      %v9983 = vpack.c.bf16 %v9967, %v9966
      %s9984 = scalar_lea.vmem %s7, 224
      %v9985 = vld [vmem:[%s9984] sm:$0xf]
      %v9986 = vld [vmem:[%s9984 + $0x4] sm:$0xf]
      %v9987 = vld [vmem:[%s9984 + $0x8] sm:$0xf]
      %v9988 = vld [vmem:[%s9984 + $0xc] sm:$0xf]
      %v9989 = vld [vmem:[%s9984 + $0x10] sm:$0xf]
      %v9990 = vld [vmem:[%s9984 + $0x14] sm:$0xf]
      %v9991 = vld [vmem:[%s9984 + $0x18] sm:$0xf]
      %v9992 = vld [vmem:[%s9984 + $0x1c] sm:$0xf]
      %v10001 = vunpack.c.l.b16 %v9985
      %v10002 = vunpack.c.l.b16 %v9986
      %v10003 = vunpack.c.l.b16 %v9987
      %v10004 = vunpack.c.l.b16 %v9988
      %v10005 = vunpack.c.l.b16 %v9989
      %v10006 = vunpack.c.l.b16 %v9990
      %v10007 = vunpack.c.l.b16 %v9991
      %v10008 = vunpack.c.l.b16 %v9992
      %v10009 = vpack.c.b16 %v10002, %v10001
      %v10010 = vpack.c.b16 %v10004, %v10003
      %v10011 = vpack.c.b16 %v10006, %v10005
      %v10012 = vpack.c.b16 %v10008, %v10007
      %v10018 = vsel %vm334, %v9968, 0
      %v10021 = vsel %vm334, %v9969, 0
      %v10024 = vsel %vm334, %v9970, 0
      %v10027 = vsel %vm334, %v9971, 0
      %v10030 = vsel %vm334, %v9972, 0
      %v10033 = vsel %vm334, %v9973, 0
      %v10036 = vsel %vm334, %v9974, 0
      %v10039 = vsel %vm334, %v9975, 0
      %v10042 = vsel %vm334, %v9976, 0
      %v10045 = vsel %vm334, %v9977, 0
      %v10048 = vsel %vm334, %v9978, 0
      %v10051 = vsel %vm334, %v9979, 0
      %v10054 = vsel %vm334, %v9980, 0
      %v10057 = vsel %vm334, %v9981, 0
      %v10060 = vsel %vm334, %v9982, 0
      %v10063 = vsel %vm334, %v9983, 0
      %10065 = vmatpush.bf16.msra.mxu0 0
      %10066 = vmatpush.bf16.msra.mxu0 0
      %10067 = vmatpush.bf16.msra.mxu0 0
      %10068 = vmatpush.bf16.msra.mxu0 0
      %10069 = vmatpush.bf16.msra.mxu0 %v10012
      %10070 = vmatpush.bf16.msra.mxu0 %v10011
      %10071 = vmatpush.bf16.msra.mxu0 %v10010
      %10072 = vmatpush.bf16.msra.mxu0 %v10009
      %10073 = vmatmul.bf16.gmra.mxu0 %v10018
      %v10074 = vpop.f32.mrf.mxu0
      %v10075 = vadd.f32 0.0, %v10074
      %v10076 = vpop.f32.mrf.mxu0
      %v10077 = vadd.f32 0.0, %v10076
      %10078 = vmatmul.bf16.gmra.mxu0 %v10021
      %v10079 = vpop.f32.mrf.mxu0
      %v10080 = vadd.f32 0.0, %v10079
      %v10081 = vpop.f32.mrf.mxu0
      %v10082 = vadd.f32 0.0, %v10081
      %10083 = vmatmul.bf16.gmra.mxu0 %v10024
      %v10084 = vpop.f32.mrf.mxu0
      %v10085 = vadd.f32 0.0, %v10084
      %v10086 = vpop.f32.mrf.mxu0
      %v10087 = vadd.f32 0.0, %v10086
      %10088 = vmatmul.bf16.gmra.mxu0 %v10027
      %v10089 = vpop.f32.mrf.mxu0
      %v10090 = vadd.f32 0.0, %v10089
      %v10091 = vpop.f32.mrf.mxu0
      %v10092 = vadd.f32 0.0, %v10091
      %10093 = vmatmul.bf16.gmra.mxu0 %v10030
      %v10094 = vpop.f32.mrf.mxu0
      %v10095 = vadd.f32 0.0, %v10094
      %v10096 = vpop.f32.mrf.mxu0
      %v10097 = vadd.f32 0.0, %v10096
      %10098 = vmatmul.bf16.gmra.mxu0 %v10033
      %v10099 = vpop.f32.mrf.mxu0
      %v10100 = vadd.f32 0.0, %v10099
      %v10101 = vpop.f32.mrf.mxu0
      %v10102 = vadd.f32 0.0, %v10101
      %10103 = vmatmul.bf16.gmra.mxu0 %v10036
      %v10104 = vpop.f32.mrf.mxu0
      %v10105 = vadd.f32 0.0, %v10104
      %v10106 = vpop.f32.mrf.mxu0
      %v10107 = vadd.f32 0.0, %v10106
      %10108 = vmatmul.bf16.gmra.mxu0 %v10039
      %v10109 = vpop.f32.mrf.mxu0
      %v10110 = vadd.f32 0.0, %v10109
      %v10111 = vpop.f32.mrf.mxu0
      %v10112 = vadd.f32 0.0, %v10111
      %10113 = vmatmul.bf16.gmra.mxu0 %v10042
      %v10114 = vpop.f32.mrf.mxu0
      %v10115 = vadd.f32 0.0, %v10114
      %v10116 = vpop.f32.mrf.mxu0
      %v10117 = vadd.f32 0.0, %v10116
      %10118 = vmatmul.bf16.gmra.mxu0 %v10045
      %v10119 = vpop.f32.mrf.mxu0
      %v10120 = vadd.f32 0.0, %v10119
      %v10121 = vpop.f32.mrf.mxu0
      %v10122 = vadd.f32 0.0, %v10121
      %10123 = vmatmul.bf16.gmra.mxu0 %v10048
      %v10124 = vpop.f32.mrf.mxu0
      %v10125 = vadd.f32 0.0, %v10124
      %v10126 = vpop.f32.mrf.mxu0
      %v10127 = vadd.f32 0.0, %v10126
      %10128 = vmatmul.bf16.gmra.mxu0 %v10051
      %v10129 = vpop.f32.mrf.mxu0
      %v10130 = vadd.f32 0.0, %v10129
      %v10131 = vpop.f32.mrf.mxu0
      %v10132 = vadd.f32 0.0, %v10131
      %10133 = vmatmul.bf16.gmra.mxu0 %v10054
      %v10134 = vpop.f32.mrf.mxu0
      %v10135 = vadd.f32 0.0, %v10134
      %v10136 = vpop.f32.mrf.mxu0
      %v10137 = vadd.f32 0.0, %v10136
      %10138 = vmatmul.bf16.gmra.mxu0 %v10057
      %v10139 = vpop.f32.mrf.mxu0
      %v10140 = vadd.f32 0.0, %v10139
      %v10141 = vpop.f32.mrf.mxu0
      %v10142 = vadd.f32 0.0, %v10141
      %10143 = vmatmul.bf16.gmra.mxu0 %v10060
      %v10144 = vpop.f32.mrf.mxu0
      %v10145 = vadd.f32 0.0, %v10144
      %v10146 = vpop.f32.mrf.mxu0
      %v10147 = vadd.f32 0.0, %v10146
      %10148 = vmatmul.bf16.gmra.mxu0 %v10063
      %v10149 = vpop.f32.mrf.mxu0
      %v10150 = vadd.f32 0.0, %v10149
      %v10151 = vpop.f32.mrf.mxu0
      %v10152 = vadd.f32 0.0, %v10151
      %10153 = vdwg.mxu0
      %v10154 = vadd.f32 %v9904, %v10075
      %v10155 = vadd.f32 %v9905, %v10077
      %v10156 = vadd.f32 %v9906, %v10080
      %v10157 = vadd.f32 %v9907, %v10082
      %v10158 = vadd.f32 %v9908, %v10085
      %v10159 = vadd.f32 %v9909, %v10087
      %v10160 = vadd.f32 %v9910, %v10090
      %v10161 = vadd.f32 %v9911, %v10092
      %v10162 = vadd.f32 %v9912, %v10095
      %v10163 = vadd.f32 %v9913, %v10097
      %v10164 = vadd.f32 %v9914, %v10100
      %v10165 = vadd.f32 %v9915, %v10102
      %v10166 = vadd.f32 %v9916, %v10105
      %v10167 = vadd.f32 %v9917, %v10107
      %v10168 = vadd.f32 %v9918, %v10110
      %v10169 = vadd.f32 %v9919, %v10112
      %v10170 = vadd.f32 %v9920, %v10115
      %v10171 = vadd.f32 %v9921, %v10117
      %v10172 = vadd.f32 %v9922, %v10120
      %v10173 = vadd.f32 %v9923, %v10122
      %v10174 = vadd.f32 %v9924, %v10125
      %v10175 = vadd.f32 %v9925, %v10127
      %v10176 = vadd.f32 %v9926, %v10130
      %v10177 = vadd.f32 %v9927, %v10132
      %v10178 = vadd.f32 %v9928, %v10135
      %v10179 = vadd.f32 %v9929, %v10137
      %v10180 = vadd.f32 %v9930, %v10140
      %v10181 = vadd.f32 %v9931, %v10142
      %v10182 = vadd.f32 %v9932, %v10145
      %v10183 = vadd.f32 %v9933, %v10147
      %v10184 = vadd.f32 %v9934, %v10150
      %v10185 = vadd.f32 %v9935, %v10152
      %v10186 = vld [vmem:[%s9685 + $0x2] sm:$0xff]
      %v10187 = vld [vmem:[%s9685 + $0xa] sm:$0xff]
      %v10188 = vld [vmem:[%s9685 + $0x1a] sm:$0xff]
      %v10189 = vld [vmem:[%s9685 + $0x22] sm:$0xff]
      %v10190 = vld [vmem:[%s9685 + $0x32] sm:$0xff]
      %v10191 = vld [vmem:[%s9685 + $0x3a] sm:$0xff]
      %v10192 = vld [vmem:[%s9685 + $0x4a] sm:$0xff]
      %v10193 = vld [vmem:[%s9685 + $0x52] sm:$0xff]
      %v10194 = vld [vmem:[%s9685 + $0x62] sm:$0xff]
      %v10195 = vld [vmem:[%s9685 + $0x6a] sm:$0xff]
      %v10196 = vld [vmem:[%s9685 + $0x7a] sm:$0xff]
      %v10197 = vld [vmem:[%s9685 + $0x82] sm:$0xff]
      %v10198 = vld [vmem:[%s9685 + $0x92] sm:$0xff]
      %v10199 = vld [vmem:[%s9685 + $0x9a] sm:$0xff]
      %v10200 = vld [vmem:[%s9685 + $0xaa] sm:$0xff]
      %v10201 = vld [vmem:[%s9685 + $0xb2] sm:$0xff]
      %v10202 = vld [vmem:[%s9685 + $0xc2] sm:$0xff]
      %v10203 = vld [vmem:[%s9685 + $0xca] sm:$0xff]
      %v10204 = vld [vmem:[%s9685 + $0xda] sm:$0xff]
      %v10205 = vld [vmem:[%s9685 + $0xe2] sm:$0xff]
      %v10206 = vld [vmem:[%s9685 + $0xf2] sm:$0xff]
      %v10207 = vld [vmem:[%s9685 + $0xfa] sm:$0xff]
      %v10208 = vld [vmem:[%s9685 + $0x10a] sm:$0xff]
      %v10209 = vld [vmem:[%s9685 + $0x112] sm:$0xff]
      %v10210 = vld [vmem:[%s9685 + $0x122] sm:$0xff]
      %v10211 = vld [vmem:[%s9685 + $0x12a] sm:$0xff]
      %v10212 = vld [vmem:[%s9685 + $0x13a] sm:$0xff]
      %v10213 = vld [vmem:[%s9685 + $0x142] sm:$0xff]
      %v10214 = vld [vmem:[%s9685 + $0x152] sm:$0xff]
      %v10215 = vld [vmem:[%s9685 + $0x15a] sm:$0xff]
      %v10216 = vld [vmem:[%s9685 + $0x16a] sm:$0xff]
      %v10217 = vld [vmem:[%s9685 + $0x172] sm:$0xff]
      %v10218 = vpack.c.bf16 %v10187, %v10186
      %v10219 = vpack.c.bf16 %v10189, %v10188
      %v10220 = vpack.c.bf16 %v10191, %v10190
      %v10221 = vpack.c.bf16 %v10193, %v10192
      %v10222 = vpack.c.bf16 %v10195, %v10194
      %v10223 = vpack.c.bf16 %v10197, %v10196
      %v10224 = vpack.c.bf16 %v10199, %v10198
      %v10225 = vpack.c.bf16 %v10201, %v10200
      %v10226 = vpack.c.bf16 %v10203, %v10202
      %v10227 = vpack.c.bf16 %v10205, %v10204
      %v10228 = vpack.c.bf16 %v10207, %v10206
      %v10229 = vpack.c.bf16 %v10209, %v10208
      %v10230 = vpack.c.bf16 %v10211, %v10210
      %v10231 = vpack.c.bf16 %v10213, %v10212
      %v10232 = vpack.c.bf16 %v10215, %v10214
      %v10233 = vpack.c.bf16 %v10217, %v10216
      %s10234 = scalar_lea.vmem %s7, 256
      %v10235 = vld [vmem:[%s10234] sm:$0xf]
      %v10236 = vld [vmem:[%s10234 + $0x4] sm:$0xf]
      %v10237 = vld [vmem:[%s10234 + $0x8] sm:$0xf]
      %v10238 = vld [vmem:[%s10234 + $0xc] sm:$0xf]
      %v10239 = vld [vmem:[%s10234 + $0x10] sm:$0xf]
      %v10240 = vld [vmem:[%s10234 + $0x14] sm:$0xf]
      %v10241 = vld [vmem:[%s10234 + $0x18] sm:$0xf]
      %v10242 = vld [vmem:[%s10234 + $0x1c] sm:$0xf]
      %v10251 = vunpack.c.l.b16 %v10235
      %v10252 = vunpack.c.l.b16 %v10236
      %v10253 = vunpack.c.l.b16 %v10237
      %v10254 = vunpack.c.l.b16 %v10238
      %v10255 = vunpack.c.l.b16 %v10239
      %v10256 = vunpack.c.l.b16 %v10240
      %v10257 = vunpack.c.l.b16 %v10241
      %v10258 = vunpack.c.l.b16 %v10242
      %v10259 = vpack.c.b16 %v10252, %v10251
      %v10260 = vpack.c.b16 %v10254, %v10253
      %v10261 = vpack.c.b16 %v10256, %v10255
      %v10262 = vpack.c.b16 %v10258, %v10257
      %v10268 = vsel %vm334, %v10218, 0
      %v10271 = vsel %vm334, %v10219, 0
      %v10274 = vsel %vm334, %v10220, 0
      %v10277 = vsel %vm334, %v10221, 0
      %v10280 = vsel %vm334, %v10222, 0
      %v10283 = vsel %vm334, %v10223, 0
      %v10286 = vsel %vm334, %v10224, 0
      %v10289 = vsel %vm334, %v10225, 0
      %v10292 = vsel %vm334, %v10226, 0
      %v10295 = vsel %vm334, %v10227, 0
      %v10298 = vsel %vm334, %v10228, 0
      %v10301 = vsel %vm334, %v10229, 0
      %v10304 = vsel %vm334, %v10230, 0
      %v10307 = vsel %vm334, %v10231, 0
      %v10310 = vsel %vm334, %v10232, 0
      %v10313 = vsel %vm334, %v10233, 0
      %10315 = vmatpush.bf16.msra.mxu0 0
      %10316 = vmatpush.bf16.msra.mxu0 0
      %10317 = vmatpush.bf16.msra.mxu0 0
      %10318 = vmatpush.bf16.msra.mxu0 0
      %10319 = vmatpush.bf16.msra.mxu0 %v10262
      %10320 = vmatpush.bf16.msra.mxu0 %v10261
      %10321 = vmatpush.bf16.msra.mxu0 %v10260
      %10322 = vmatpush.bf16.msra.mxu0 %v10259
      %10323 = vmatmul.bf16.gmra.mxu0 %v10268
      %v10324 = vpop.f32.mrf.mxu0
      %v10325 = vadd.f32 0.0, %v10324
      %v10326 = vpop.f32.mrf.mxu0
      %v10327 = vadd.f32 0.0, %v10326
      %10328 = vmatmul.bf16.gmra.mxu0 %v10271
      %v10329 = vpop.f32.mrf.mxu0
      %v10330 = vadd.f32 0.0, %v10329
      %v10331 = vpop.f32.mrf.mxu0
      %v10332 = vadd.f32 0.0, %v10331
      %10333 = vmatmul.bf16.gmra.mxu0 %v10274
      %v10334 = vpop.f32.mrf.mxu0
      %v10335 = vadd.f32 0.0, %v10334
      %v10336 = vpop.f32.mrf.mxu0
      %v10337 = vadd.f32 0.0, %v10336
      %10338 = vmatmul.bf16.gmra.mxu0 %v10277
      %v10339 = vpop.f32.mrf.mxu0
      %v10340 = vadd.f32 0.0, %v10339
      %v10341 = vpop.f32.mrf.mxu0
      %v10342 = vadd.f32 0.0, %v10341
      %10343 = vmatmul.bf16.gmra.mxu0 %v10280
      %v10344 = vpop.f32.mrf.mxu0
      %v10345 = vadd.f32 0.0, %v10344
      %v10346 = vpop.f32.mrf.mxu0
      %v10347 = vadd.f32 0.0, %v10346
      %10348 = vmatmul.bf16.gmra.mxu0 %v10283
      %v10349 = vpop.f32.mrf.mxu0
      %v10350 = vadd.f32 0.0, %v10349
      %v10351 = vpop.f32.mrf.mxu0
      %v10352 = vadd.f32 0.0, %v10351
      %10353 = vmatmul.bf16.gmra.mxu0 %v10286
      %v10354 = vpop.f32.mrf.mxu0
      %v10355 = vadd.f32 0.0, %v10354
      %v10356 = vpop.f32.mrf.mxu0
      %v10357 = vadd.f32 0.0, %v10356
      %10358 = vmatmul.bf16.gmra.mxu0 %v10289
      %v10359 = vpop.f32.mrf.mxu0
      %v10360 = vadd.f32 0.0, %v10359
      %v10361 = vpop.f32.mrf.mxu0
      %v10362 = vadd.f32 0.0, %v10361
      %10363 = vmatmul.bf16.gmra.mxu0 %v10292
      %v10364 = vpop.f32.mrf.mxu0
      %v10365 = vadd.f32 0.0, %v10364
      %v10366 = vpop.f32.mrf.mxu0
      %v10367 = vadd.f32 0.0, %v10366
      %10368 = vmatmul.bf16.gmra.mxu0 %v10295
      %v10369 = vpop.f32.mrf.mxu0
      %v10370 = vadd.f32 0.0, %v10369
      %v10371 = vpop.f32.mrf.mxu0
      %v10372 = vadd.f32 0.0, %v10371
      %10373 = vmatmul.bf16.gmra.mxu0 %v10298
      %v10374 = vpop.f32.mrf.mxu0
      %v10375 = vadd.f32 0.0, %v10374
      %v10376 = vpop.f32.mrf.mxu0
      %v10377 = vadd.f32 0.0, %v10376
      %10378 = vmatmul.bf16.gmra.mxu0 %v10301
      %v10379 = vpop.f32.mrf.mxu0
      %v10380 = vadd.f32 0.0, %v10379
      %v10381 = vpop.f32.mrf.mxu0
      %v10382 = vadd.f32 0.0, %v10381
      %10383 = vmatmul.bf16.gmra.mxu0 %v10304
      %v10384 = vpop.f32.mrf.mxu0
      %v10385 = vadd.f32 0.0, %v10384
      %v10386 = vpop.f32.mrf.mxu0
      %v10387 = vadd.f32 0.0, %v10386
      %10388 = vmatmul.bf16.gmra.mxu0 %v10307
      %v10389 = vpop.f32.mrf.mxu0
      %v10390 = vadd.f32 0.0, %v10389
      %v10391 = vpop.f32.mrf.mxu0
      %v10392 = vadd.f32 0.0, %v10391
      %10393 = vmatmul.bf16.gmra.mxu0 %v10310
      %v10394 = vpop.f32.mrf.mxu0
      %v10395 = vadd.f32 0.0, %v10394
      %v10396 = vpop.f32.mrf.mxu0
      %v10397 = vadd.f32 0.0, %v10396
      %10398 = vmatmul.bf16.gmra.mxu0 %v10313
      %v10399 = vpop.f32.mrf.mxu0
      %v10400 = vadd.f32 0.0, %v10399
      %v10401 = vpop.f32.mrf.mxu0
      %v10402 = vadd.f32 0.0, %v10401
      %10403 = vdwg.mxu0
      %v10404 = vadd.f32 %v10154, %v10325
      %v10405 = vadd.f32 %v10155, %v10327
      %v10406 = vadd.f32 %v10156, %v10330
      %v10407 = vadd.f32 %v10157, %v10332
      %v10408 = vadd.f32 %v10158, %v10335
      %v10409 = vadd.f32 %v10159, %v10337
      %v10410 = vadd.f32 %v10160, %v10340
      %v10411 = vadd.f32 %v10161, %v10342
      %v10412 = vadd.f32 %v10162, %v10345
      %v10413 = vadd.f32 %v10163, %v10347
      %v10414 = vadd.f32 %v10164, %v10350
      %v10415 = vadd.f32 %v10165, %v10352
      %v10416 = vadd.f32 %v10166, %v10355
      %v10417 = vadd.f32 %v10167, %v10357
      %v10418 = vadd.f32 %v10168, %v10360
      %v10419 = vadd.f32 %v10169, %v10362
      %v10420 = vadd.f32 %v10170, %v10365
      %v10421 = vadd.f32 %v10171, %v10367
      %v10422 = vadd.f32 %v10172, %v10370
      %v10423 = vadd.f32 %v10173, %v10372
      %v10424 = vadd.f32 %v10174, %v10375
      %v10425 = vadd.f32 %v10175, %v10377
      %v10426 = vadd.f32 %v10176, %v10380
      %v10427 = vadd.f32 %v10177, %v10382
      %v10428 = vadd.f32 %v10178, %v10385
      %v10429 = vadd.f32 %v10179, %v10387
      %v10430 = vadd.f32 %v10180, %v10390
      %v10431 = vadd.f32 %v10181, %v10392
      %v10432 = vadd.f32 %v10182, %v10395
      %v10433 = vadd.f32 %v10183, %v10397
      %v10434 = vadd.f32 %v10184, %v10400
      %v10435 = vadd.f32 %v10185, %v10402
      %v10436 = vld [vmem:[#allocation5] sm:$0x1]
      %v10438 = vperm.slane %v10436, 0
      %v10440 = vadd.f32 %v10404, %v10438
      %v10441 = vadd.f32 %v10405, %v10438
      %v10442 = vadd.f32 %v10406, %v10438
      %v10443 = vadd.f32 %v10407, %v10438
      %v10444 = vadd.f32 %v10408, %v10438
      %v10445 = vadd.f32 %v10409, %v10438
      %v10446 = vadd.f32 %v10410, %v10438
      %v10447 = vadd.f32 %v10411, %v10438
      %v10448 = vadd.f32 %v10412, %v10438
      %v10449 = vadd.f32 %v10413, %v10438
      %v10450 = vadd.f32 %v10414, %v10438
      %v10451 = vadd.f32 %v10415, %v10438
      %v10452 = vadd.f32 %v10416, %v10438
      %v10453 = vadd.f32 %v10417, %v10438
      %v10454 = vadd.f32 %v10418, %v10438
      %v10455 = vadd.f32 %v10419, %v10438
      %v10456 = vadd.f32 %v10420, %v10438
      %v10457 = vadd.f32 %v10421, %v10438
      %v10458 = vadd.f32 %v10422, %v10438
      %v10459 = vadd.f32 %v10423, %v10438
      %v10460 = vadd.f32 %v10424, %v10438
      %v10461 = vadd.f32 %v10425, %v10438
      %v10462 = vadd.f32 %v10426, %v10438
      %v10463 = vadd.f32 %v10427, %v10438
      %v10464 = vadd.f32 %v10428, %v10438
      %v10465 = vadd.f32 %v10429, %v10438
      %v10466 = vadd.f32 %v10430, %v10438
      %v10467 = vadd.f32 %v10431, %v10438
      %v10468 = vadd.f32 %v10432, %v10438
      %v10469 = vadd.f32 %v10433, %v10438
      %v10470 = vadd.f32 %v10434, %v10438
      %v10471 = vadd.f32 %v10435, %v10438
      %v10472 = vxor.u32 %v10440, 2147483648
      %v10473 = vxor.u32 %v10441, 2147483648
      %v10474 = vxor.u32 %v10442, 2147483648
      %v10475 = vxor.u32 %v10443, 2147483648
      %v10476 = vxor.u32 %v10444, 2147483648
      %v10477 = vxor.u32 %v10445, 2147483648
      %v10478 = vxor.u32 %v10446, 2147483648
      %v10479 = vxor.u32 %v10447, 2147483648
      %v10480 = vxor.u32 %v10448, 2147483648
      %v10481 = vxor.u32 %v10449, 2147483648
      %v10482 = vxor.u32 %v10450, 2147483648
      %v10483 = vxor.u32 %v10451, 2147483648
      %v10484 = vxor.u32 %v10452, 2147483648
      %v10485 = vxor.u32 %v10453, 2147483648
      %v10486 = vxor.u32 %v10454, 2147483648
      %v10487 = vxor.u32 %v10455, 2147483648
      %v10488 = vxor.u32 %v10456, 2147483648
      %v10489 = vxor.u32 %v10457, 2147483648
      %v10490 = vxor.u32 %v10458, 2147483648
      %v10491 = vxor.u32 %v10459, 2147483648
      %v10492 = vxor.u32 %v10460, 2147483648
      %v10493 = vxor.u32 %v10461, 2147483648
      %v10494 = vxor.u32 %v10462, 2147483648
      %v10495 = vxor.u32 %v10463, 2147483648
      %v10496 = vxor.u32 %v10464, 2147483648
      %v10497 = vxor.u32 %v10465, 2147483648
      %v10498 = vxor.u32 %v10466, 2147483648
      %v10499 = vxor.u32 %v10467, 2147483648
      %v10500 = vxor.u32 %v10468, 2147483648
      %v10501 = vxor.u32 %v10469, 2147483648
      %v10502 = vxor.u32 %v10470, 2147483648
      %v10503 = vxor.u32 %v10471, 2147483648
      %v10504 = vmul.f32 %v10472, 1.442695
      %v10505 = vpow.pop %v10504
      %v10506 = vmul.f32 %v10473, 1.442695
      %v10507 = vpow.pop %v10506
      %v10508 = vmul.f32 %v10474, 1.442695
      %v10509 = vpow.pop %v10508
      %v10510 = vmul.f32 %v10475, 1.442695
      %v10511 = vpow.pop %v10510
      %v10512 = vmul.f32 %v10476, 1.442695
      %v10513 = vpow.pop %v10512
      %v10514 = vmul.f32 %v10477, 1.442695
      %v10515 = vpow.pop %v10514
      %v10516 = vmul.f32 %v10478, 1.442695
      %v10517 = vpow.pop %v10516
      %v10518 = vmul.f32 %v10479, 1.442695
      %v10519 = vpow.pop %v10518
      %v10520 = vmul.f32 %v10480, 1.442695
      %v10521 = vpow.pop %v10520
      %v10522 = vmul.f32 %v10481, 1.442695
      %v10523 = vpow.pop %v10522
      %v10524 = vmul.f32 %v10482, 1.442695
      %v10525 = vpow.pop %v10524
      %v10526 = vmul.f32 %v10483, 1.442695
      %v10527 = vpow.pop %v10526
      %v10528 = vmul.f32 %v10484, 1.442695
      %v10529 = vpow.pop %v10528
      %v10530 = vmul.f32 %v10485, 1.442695
      %v10531 = vpow.pop %v10530
      %v10532 = vmul.f32 %v10486, 1.442695
      %v10533 = vpow.pop %v10532
      %v10534 = vmul.f32 %v10487, 1.442695
      %v10535 = vpow.pop %v10534
      %v10536 = vmul.f32 %v10488, 1.442695
      %v10537 = vpow.pop %v10536
      %v10538 = vmul.f32 %v10489, 1.442695
      %v10539 = vpow.pop %v10538
      %v10540 = vmul.f32 %v10490, 1.442695
      %v10541 = vpow.pop %v10540
      %v10542 = vmul.f32 %v10491, 1.442695
      %v10543 = vpow.pop %v10542
      %v10544 = vmul.f32 %v10492, 1.442695
      %v10545 = vpow.pop %v10544
      %v10546 = vmul.f32 %v10493, 1.442695
      %v10547 = vpow.pop %v10546
      %v10548 = vmul.f32 %v10494, 1.442695
      %v10549 = vpow.pop %v10548
      %v10550 = vmul.f32 %v10495, 1.442695
      %v10551 = vpow.pop %v10550
      %v10552 = vmul.f32 %v10496, 1.442695
      %v10553 = vpow.pop %v10552
      %v10554 = vmul.f32 %v10497, 1.442695
      %v10555 = vpow.pop %v10554
      %v10556 = vmul.f32 %v10498, 1.442695
      %v10557 = vpow.pop %v10556
      %v10558 = vmul.f32 %v10499, 1.442695
      %v10559 = vpow.pop %v10558
      %v10560 = vmul.f32 %v10500, 1.442695
      %v10561 = vpow.pop %v10560
      %v10562 = vmul.f32 %v10501, 1.442695
      %v10563 = vpow.pop %v10562
      %v10564 = vmul.f32 %v10502, 1.442695
      %v10565 = vpow.pop %v10564
      %v10566 = vmul.f32 %v10503, 1.442695
      %v10567 = vpow.pop %v10566
      %v10568 = vadd.f32 %v10505, 1.0
      %v10569 = vadd.f32 %v10507, 1.0
      %v10570 = vadd.f32 %v10509, 1.0
      %v10571 = vadd.f32 %v10511, 1.0
      %v10572 = vadd.f32 %v10513, 1.0
      %v10573 = vadd.f32 %v10515, 1.0
      %v10574 = vadd.f32 %v10517, 1.0
      %v10575 = vadd.f32 %v10519, 1.0
      %v10576 = vadd.f32 %v10521, 1.0
      %v10577 = vadd.f32 %v10523, 1.0
      %v10578 = vadd.f32 %v10525, 1.0
      %v10579 = vadd.f32 %v10527, 1.0
      %v10580 = vadd.f32 %v10529, 1.0
      %v10581 = vadd.f32 %v10531, 1.0
      %v10582 = vadd.f32 %v10533, 1.0
      %v10583 = vadd.f32 %v10535, 1.0
      %v10584 = vadd.f32 %v10537, 1.0
      %v10585 = vadd.f32 %v10539, 1.0
      %v10586 = vadd.f32 %v10541, 1.0
      %v10587 = vadd.f32 %v10543, 1.0
      %v10588 = vadd.f32 %v10545, 1.0
      %v10589 = vadd.f32 %v10547, 1.0
      %v10590 = vadd.f32 %v10549, 1.0
      %v10591 = vadd.f32 %v10551, 1.0
      %v10592 = vadd.f32 %v10553, 1.0
      %v10593 = vadd.f32 %v10555, 1.0
      %v10594 = vadd.f32 %v10557, 1.0
      %v10595 = vadd.f32 %v10559, 1.0
      %v10596 = vadd.f32 %v10561, 1.0
      %v10597 = vadd.f32 %v10563, 1.0
      %v10598 = vadd.f32 %v10565, 1.0
      %v10599 = vadd.f32 %v10567, 1.0
      %v10600 = vrcp.pop %v10568
      %v10601 = vmul.f32 %v10568, %v10600
      %v10602 = vsub.f32 1.0, %v10601
      %v10603 = vmul.f32 %v10600, %v10602
      %v10604 = vadd.f32 %v10600, %v10603
      %vm10605 = vweird.f32 %v10568
      %vm10606 = vweird.f32 %v10600
      %vm10607 = vmor %vm10605, %vm10606
      %v10608 = vsel %vm10607, %v10600, %v10604
      %v10609 = vand.u32 2147483647, %v10568
      %vm10610 = vcmp.eq.f32.partialorder %v10609, 8.507059e+37
      %v10611 = vand.u32 %v10568, 2147483648
      %v10612 = vor.u32 1.1754944e-38, %v10611
      %v10613 = vsel %vm10610, %v10612, %v10608
      %v10614 = vmul.f32 1.0, %v10613
      %v10615 = vrcp.pop %v10569
      %v10616 = vmul.f32 %v10569, %v10615
      %v10617 = vsub.f32 1.0, %v10616
      %v10618 = vmul.f32 %v10615, %v10617
      %v10619 = vadd.f32 %v10615, %v10618
      %vm10620 = vweird.f32 %v10569
      %vm10621 = vweird.f32 %v10615
      %vm10622 = vmor %vm10620, %vm10621
      %v10623 = vsel %vm10622, %v10615, %v10619
      %v10624 = vand.u32 2147483647, %v10569
      %vm10625 = vcmp.eq.f32.partialorder %v10624, 8.507059e+37
      %v10626 = vand.u32 %v10569, 2147483648
      %v10627 = vor.u32 1.1754944e-38, %v10626
      %v10628 = vsel %vm10625, %v10627, %v10623
      %v10629 = vmul.f32 1.0, %v10628
      %v10630 = vrcp.pop %v10570
      %v10631 = vmul.f32 %v10570, %v10630
      %v10632 = vsub.f32 1.0, %v10631
      %v10633 = vmul.f32 %v10630, %v10632
      %v10634 = vadd.f32 %v10630, %v10633
      %vm10635 = vweird.f32 %v10570
      %vm10636 = vweird.f32 %v10630
      %vm10637 = vmor %vm10635, %vm10636
      %v10638 = vsel %vm10637, %v10630, %v10634
      %v10639 = vand.u32 2147483647, %v10570
      %vm10640 = vcmp.eq.f32.partialorder %v10639, 8.507059e+37
      %v10641 = vand.u32 %v10570, 2147483648
      %v10642 = vor.u32 1.1754944e-38, %v10641
      %v10643 = vsel %vm10640, %v10642, %v10638
      %v10644 = vmul.f32 1.0, %v10643
      %v10645 = vrcp.pop %v10571
      %v10646 = vmul.f32 %v10571, %v10645
      %v10647 = vsub.f32 1.0, %v10646
      %v10648 = vmul.f32 %v10645, %v10647
      %v10649 = vadd.f32 %v10645, %v10648
      %vm10650 = vweird.f32 %v10571
      %vm10651 = vweird.f32 %v10645
      %vm10652 = vmor %vm10650, %vm10651
      %v10653 = vsel %vm10652, %v10645, %v10649
      %v10654 = vand.u32 2147483647, %v10571
      %vm10655 = vcmp.eq.f32.partialorder %v10654, 8.507059e+37
      %v10656 = vand.u32 %v10571, 2147483648
      %v10657 = vor.u32 1.1754944e-38, %v10656
      %v10658 = vsel %vm10655, %v10657, %v10653
      %v10659 = vmul.f32 1.0, %v10658
      %v10660 = vrcp.pop %v10572
      %v10661 = vmul.f32 %v10572, %v10660
      %v10662 = vsub.f32 1.0, %v10661
      %v10663 = vmul.f32 %v10660, %v10662
      %v10664 = vadd.f32 %v10660, %v10663
      %vm10665 = vweird.f32 %v10572
      %vm10666 = vweird.f32 %v10660
      %vm10667 = vmor %vm10665, %vm10666
      %v10668 = vsel %vm10667, %v10660, %v10664
      %v10669 = vand.u32 2147483647, %v10572
      %vm10670 = vcmp.eq.f32.partialorder %v10669, 8.507059e+37
      %v10671 = vand.u32 %v10572, 2147483648
      %v10672 = vor.u32 1.1754944e-38, %v10671
      %v10673 = vsel %vm10670, %v10672, %v10668
      %v10674 = vmul.f32 1.0, %v10673
      %v10675 = vrcp.pop %v10573
      %v10676 = vmul.f32 %v10573, %v10675
      %v10677 = vsub.f32 1.0, %v10676
      %v10678 = vmul.f32 %v10675, %v10677
      %v10679 = vadd.f32 %v10675, %v10678
      %vm10680 = vweird.f32 %v10573
      %vm10681 = vweird.f32 %v10675
      %vm10682 = vmor %vm10680, %vm10681
      %v10683 = vsel %vm10682, %v10675, %v10679
      %v10684 = vand.u32 2147483647, %v10573
      %vm10685 = vcmp.eq.f32.partialorder %v10684, 8.507059e+37
      %v10686 = vand.u32 %v10573, 2147483648
      %v10687 = vor.u32 1.1754944e-38, %v10686
      %v10688 = vsel %vm10685, %v10687, %v10683
      %v10689 = vmul.f32 1.0, %v10688
      %v10690 = vrcp.pop %v10574
      %v10691 = vmul.f32 %v10574, %v10690
      %v10692 = vsub.f32 1.0, %v10691
      %v10693 = vmul.f32 %v10690, %v10692
      %v10694 = vadd.f32 %v10690, %v10693
      %vm10695 = vweird.f32 %v10574
      %vm10696 = vweird.f32 %v10690
      %vm10697 = vmor %vm10695, %vm10696
      %v10698 = vsel %vm10697, %v10690, %v10694
      %v10699 = vand.u32 2147483647, %v10574
      %vm10700 = vcmp.eq.f32.partialorder %v10699, 8.507059e+37
      %v10701 = vand.u32 %v10574, 2147483648
      %v10702 = vor.u32 1.1754944e-38, %v10701
      %v10703 = vsel %vm10700, %v10702, %v10698
      %v10704 = vmul.f32 1.0, %v10703
      %v10705 = vrcp.pop %v10575
      %v10706 = vmul.f32 %v10575, %v10705
      %v10707 = vsub.f32 1.0, %v10706
      %v10708 = vmul.f32 %v10705, %v10707
      %v10709 = vadd.f32 %v10705, %v10708
      %vm10710 = vweird.f32 %v10575
      %vm10711 = vweird.f32 %v10705
      %vm10712 = vmor %vm10710, %vm10711
      %v10713 = vsel %vm10712, %v10705, %v10709
      %v10714 = vand.u32 2147483647, %v10575
      %vm10715 = vcmp.eq.f32.partialorder %v10714, 8.507059e+37
      %v10716 = vand.u32 %v10575, 2147483648
      %v10717 = vor.u32 1.1754944e-38, %v10716
      %v10718 = vsel %vm10715, %v10717, %v10713
      %v10719 = vmul.f32 1.0, %v10718
      %v10720 = vrcp.pop %v10576
      %v10721 = vmul.f32 %v10576, %v10720
      %v10722 = vsub.f32 1.0, %v10721
      %v10723 = vmul.f32 %v10720, %v10722
      %v10724 = vadd.f32 %v10720, %v10723
      %vm10725 = vweird.f32 %v10576
      %vm10726 = vweird.f32 %v10720
      %vm10727 = vmor %vm10725, %vm10726
      %v10728 = vsel %vm10727, %v10720, %v10724
      %v10729 = vand.u32 2147483647, %v10576
      %vm10730 = vcmp.eq.f32.partialorder %v10729, 8.507059e+37
      %v10731 = vand.u32 %v10576, 2147483648
      %v10732 = vor.u32 1.1754944e-38, %v10731
      %v10733 = vsel %vm10730, %v10732, %v10728
      %v10734 = vmul.f32 1.0, %v10733
      %v10735 = vrcp.pop %v10577
      %v10736 = vmul.f32 %v10577, %v10735
      %v10737 = vsub.f32 1.0, %v10736
      %v10738 = vmul.f32 %v10735, %v10737
      %v10739 = vadd.f32 %v10735, %v10738
      %vm10740 = vweird.f32 %v10577
      %vm10741 = vweird.f32 %v10735
      %vm10742 = vmor %vm10740, %vm10741
      %v10743 = vsel %vm10742, %v10735, %v10739
      %v10744 = vand.u32 2147483647, %v10577
      %vm10745 = vcmp.eq.f32.partialorder %v10744, 8.507059e+37
      %v10746 = vand.u32 %v10577, 2147483648
      %v10747 = vor.u32 1.1754944e-38, %v10746
      %v10748 = vsel %vm10745, %v10747, %v10743
      %v10749 = vmul.f32 1.0, %v10748
      %v10750 = vrcp.pop %v10578
      %v10751 = vmul.f32 %v10578, %v10750
      %v10752 = vsub.f32 1.0, %v10751
      %v10753 = vmul.f32 %v10750, %v10752
      %v10754 = vadd.f32 %v10750, %v10753
      %vm10755 = vweird.f32 %v10578
      %vm10756 = vweird.f32 %v10750
      %vm10757 = vmor %vm10755, %vm10756
      %v10758 = vsel %vm10757, %v10750, %v10754
      %v10759 = vand.u32 2147483647, %v10578
      %vm10760 = vcmp.eq.f32.partialorder %v10759, 8.507059e+37
      %v10761 = vand.u32 %v10578, 2147483648
      %v10762 = vor.u32 1.1754944e-38, %v10761
      %v10763 = vsel %vm10760, %v10762, %v10758
      %v10764 = vmul.f32 1.0, %v10763
      %v10765 = vrcp.pop %v10579
      %v10766 = vmul.f32 %v10579, %v10765
      %v10767 = vsub.f32 1.0, %v10766
      %v10768 = vmul.f32 %v10765, %v10767
      %v10769 = vadd.f32 %v10765, %v10768
      %vm10770 = vweird.f32 %v10579
      %vm10771 = vweird.f32 %v10765
      %vm10772 = vmor %vm10770, %vm10771
      %v10773 = vsel %vm10772, %v10765, %v10769
      %v10774 = vand.u32 2147483647, %v10579
      %vm10775 = vcmp.eq.f32.partialorder %v10774, 8.507059e+37
      %v10776 = vand.u32 %v10579, 2147483648
      %v10777 = vor.u32 1.1754944e-38, %v10776
      %v10778 = vsel %vm10775, %v10777, %v10773
      %v10779 = vmul.f32 1.0, %v10778
      %v10780 = vrcp.pop %v10580
      %v10781 = vmul.f32 %v10580, %v10780
      %v10782 = vsub.f32 1.0, %v10781
      %v10783 = vmul.f32 %v10780, %v10782
      %v10784 = vadd.f32 %v10780, %v10783
      %vm10785 = vweird.f32 %v10580
      %vm10786 = vweird.f32 %v10780
      %vm10787 = vmor %vm10785, %vm10786
      %v10788 = vsel %vm10787, %v10780, %v10784
      %v10789 = vand.u32 2147483647, %v10580
      %vm10790 = vcmp.eq.f32.partialorder %v10789, 8.507059e+37
      %v10791 = vand.u32 %v10580, 2147483648
      %v10792 = vor.u32 1.1754944e-38, %v10791
      %v10793 = vsel %vm10790, %v10792, %v10788
      %v10794 = vmul.f32 1.0, %v10793
      %v10795 = vrcp.pop %v10581
      %v10796 = vmul.f32 %v10581, %v10795
      %v10797 = vsub.f32 1.0, %v10796
      %v10798 = vmul.f32 %v10795, %v10797
      %v10799 = vadd.f32 %v10795, %v10798
      %vm10800 = vweird.f32 %v10581
      %vm10801 = vweird.f32 %v10795
      %vm10802 = vmor %vm10800, %vm10801
      %v10803 = vsel %vm10802, %v10795, %v10799
      %v10804 = vand.u32 2147483647, %v10581
      %vm10805 = vcmp.eq.f32.partialorder %v10804, 8.507059e+37
      %v10806 = vand.u32 %v10581, 2147483648
      %v10807 = vor.u32 1.1754944e-38, %v10806
      %v10808 = vsel %vm10805, %v10807, %v10803
      %v10809 = vmul.f32 1.0, %v10808
      %v10810 = vrcp.pop %v10582
      %v10811 = vmul.f32 %v10582, %v10810
      %v10812 = vsub.f32 1.0, %v10811
      %v10813 = vmul.f32 %v10810, %v10812
      %v10814 = vadd.f32 %v10810, %v10813
      %vm10815 = vweird.f32 %v10582
      %vm10816 = vweird.f32 %v10810
      %vm10817 = vmor %vm10815, %vm10816
      %v10818 = vsel %vm10817, %v10810, %v10814
      %v10819 = vand.u32 2147483647, %v10582
      %vm10820 = vcmp.eq.f32.partialorder %v10819, 8.507059e+37
      %v10821 = vand.u32 %v10582, 2147483648
      %v10822 = vor.u32 1.1754944e-38, %v10821
      %v10823 = vsel %vm10820, %v10822, %v10818
      %v10824 = vmul.f32 1.0, %v10823
      %v10825 = vrcp.pop %v10583
      %v10826 = vmul.f32 %v10583, %v10825
      %v10827 = vsub.f32 1.0, %v10826
      %v10828 = vmul.f32 %v10825, %v10827
      %v10829 = vadd.f32 %v10825, %v10828
      %vm10830 = vweird.f32 %v10583
      %vm10831 = vweird.f32 %v10825
      %vm10832 = vmor %vm10830, %vm10831
      %v10833 = vsel %vm10832, %v10825, %v10829
      %v10834 = vand.u32 2147483647, %v10583
      %vm10835 = vcmp.eq.f32.partialorder %v10834, 8.507059e+37
      %v10836 = vand.u32 %v10583, 2147483648
      %v10837 = vor.u32 1.1754944e-38, %v10836
      %v10838 = vsel %vm10835, %v10837, %v10833
      %v10839 = vmul.f32 1.0, %v10838
      %v10840 = vrcp.pop %v10584
      %v10841 = vmul.f32 %v10584, %v10840
      %v10842 = vsub.f32 1.0, %v10841
      %v10843 = vmul.f32 %v10840, %v10842
      %v10844 = vadd.f32 %v10840, %v10843
      %vm10845 = vweird.f32 %v10584
      %vm10846 = vweird.f32 %v10840
      %vm10847 = vmor %vm10845, %vm10846
      %v10848 = vsel %vm10847, %v10840, %v10844
      %v10849 = vand.u32 2147483647, %v10584
      %vm10850 = vcmp.eq.f32.partialorder %v10849, 8.507059e+37
      %v10851 = vand.u32 %v10584, 2147483648
      %v10852 = vor.u32 1.1754944e-38, %v10851
      %v10853 = vsel %vm10850, %v10852, %v10848
      %v10854 = vmul.f32 1.0, %v10853
      %v10855 = vrcp.pop %v10585
      %v10856 = vmul.f32 %v10585, %v10855
      %v10857 = vsub.f32 1.0, %v10856
      %v10858 = vmul.f32 %v10855, %v10857
      %v10859 = vadd.f32 %v10855, %v10858
      %vm10860 = vweird.f32 %v10585
      %vm10861 = vweird.f32 %v10855
      %vm10862 = vmor %vm10860, %vm10861
      %v10863 = vsel %vm10862, %v10855, %v10859
      %v10864 = vand.u32 2147483647, %v10585
      %vm10865 = vcmp.eq.f32.partialorder %v10864, 8.507059e+37
      %v10866 = vand.u32 %v10585, 2147483648
      %v10867 = vor.u32 1.1754944e-38, %v10866
      %v10868 = vsel %vm10865, %v10867, %v10863
      %v10869 = vmul.f32 1.0, %v10868
      %v10870 = vrcp.pop %v10586
      %v10871 = vmul.f32 %v10586, %v10870
      %v10872 = vsub.f32 1.0, %v10871
      %v10873 = vmul.f32 %v10870, %v10872
      %v10874 = vadd.f32 %v10870, %v10873
      %vm10875 = vweird.f32 %v10586
      %vm10876 = vweird.f32 %v10870
      %vm10877 = vmor %vm10875, %vm10876
      %v10878 = vsel %vm10877, %v10870, %v10874
      %v10879 = vand.u32 2147483647, %v10586
      %vm10880 = vcmp.eq.f32.partialorder %v10879, 8.507059e+37
      %v10881 = vand.u32 %v10586, 2147483648
      %v10882 = vor.u32 1.1754944e-38, %v10881
      %v10883 = vsel %vm10880, %v10882, %v10878
      %v10884 = vmul.f32 1.0, %v10883
      %v10885 = vrcp.pop %v10587
      %v10886 = vmul.f32 %v10587, %v10885
      %v10887 = vsub.f32 1.0, %v10886
      %v10888 = vmul.f32 %v10885, %v10887
      %v10889 = vadd.f32 %v10885, %v10888
      %vm10890 = vweird.f32 %v10587
      %vm10891 = vweird.f32 %v10885
      %vm10892 = vmor %vm10890, %vm10891
      %v10893 = vsel %vm10892, %v10885, %v10889
      %v10894 = vand.u32 2147483647, %v10587
      %vm10895 = vcmp.eq.f32.partialorder %v10894, 8.507059e+37
      %v10896 = vand.u32 %v10587, 2147483648
      %v10897 = vor.u32 1.1754944e-38, %v10896
      %v10898 = vsel %vm10895, %v10897, %v10893
      %v10899 = vmul.f32 1.0, %v10898
      %v10900 = vrcp.pop %v10588
      %v10901 = vmul.f32 %v10588, %v10900
      %v10902 = vsub.f32 1.0, %v10901
      %v10903 = vmul.f32 %v10900, %v10902
      %v10904 = vadd.f32 %v10900, %v10903
      %vm10905 = vweird.f32 %v10588
      %vm10906 = vweird.f32 %v10900
      %vm10907 = vmor %vm10905, %vm10906
      %v10908 = vsel %vm10907, %v10900, %v10904
      %v10909 = vand.u32 2147483647, %v10588
      %vm10910 = vcmp.eq.f32.partialorder %v10909, 8.507059e+37
      %v10911 = vand.u32 %v10588, 2147483648
      %v10912 = vor.u32 1.1754944e-38, %v10911
      %v10913 = vsel %vm10910, %v10912, %v10908
      %v10914 = vmul.f32 1.0, %v10913
      %v10915 = vrcp.pop %v10589
      %v10916 = vmul.f32 %v10589, %v10915
      %v10917 = vsub.f32 1.0, %v10916
      %v10918 = vmul.f32 %v10915, %v10917
      %v10919 = vadd.f32 %v10915, %v10918
      %vm10920 = vweird.f32 %v10589
      %vm10921 = vweird.f32 %v10915
      %vm10922 = vmor %vm10920, %vm10921
      %v10923 = vsel %vm10922, %v10915, %v10919
      %v10924 = vand.u32 2147483647, %v10589
      %vm10925 = vcmp.eq.f32.partialorder %v10924, 8.507059e+37
      %v10926 = vand.u32 %v10589, 2147483648
      %v10927 = vor.u32 1.1754944e-38, %v10926
      %v10928 = vsel %vm10925, %v10927, %v10923
      %v10929 = vmul.f32 1.0, %v10928
      %v10930 = vrcp.pop %v10590
      %v10931 = vmul.f32 %v10590, %v10930
      %v10932 = vsub.f32 1.0, %v10931
      %v10933 = vmul.f32 %v10930, %v10932
      %v10934 = vadd.f32 %v10930, %v10933
      %vm10935 = vweird.f32 %v10590
      %vm10936 = vweird.f32 %v10930
      %vm10937 = vmor %vm10935, %vm10936
      %v10938 = vsel %vm10937, %v10930, %v10934
      %v10939 = vand.u32 2147483647, %v10590
      %vm10940 = vcmp.eq.f32.partialorder %v10939, 8.507059e+37
      %v10941 = vand.u32 %v10590, 2147483648
      %v10942 = vor.u32 1.1754944e-38, %v10941
      %v10943 = vsel %vm10940, %v10942, %v10938
      %v10944 = vmul.f32 1.0, %v10943
      %v10945 = vrcp.pop %v10591
      %v10946 = vmul.f32 %v10591, %v10945
      %v10947 = vsub.f32 1.0, %v10946
      %v10948 = vmul.f32 %v10945, %v10947
      %v10949 = vadd.f32 %v10945, %v10948
      %vm10950 = vweird.f32 %v10591
      %vm10951 = vweird.f32 %v10945
      %vm10952 = vmor %vm10950, %vm10951
      %v10953 = vsel %vm10952, %v10945, %v10949
      %v10954 = vand.u32 2147483647, %v10591
      %vm10955 = vcmp.eq.f32.partialorder %v10954, 8.507059e+37
      %v10956 = vand.u32 %v10591, 2147483648
      %v10957 = vor.u32 1.1754944e-38, %v10956
      %v10958 = vsel %vm10955, %v10957, %v10953
      %v10959 = vmul.f32 1.0, %v10958
      %v10960 = vrcp.pop %v10592
      %v10961 = vmul.f32 %v10592, %v10960
      %v10962 = vsub.f32 1.0, %v10961
      %v10963 = vmul.f32 %v10960, %v10962
      %v10964 = vadd.f32 %v10960, %v10963
      %vm10965 = vweird.f32 %v10592
      %vm10966 = vweird.f32 %v10960
      %vm10967 = vmor %vm10965, %vm10966
      %v10968 = vsel %vm10967, %v10960, %v10964
      %v10969 = vand.u32 2147483647, %v10592
      %vm10970 = vcmp.eq.f32.partialorder %v10969, 8.507059e+37
      %v10971 = vand.u32 %v10592, 2147483648
      %v10972 = vor.u32 1.1754944e-38, %v10971
      %v10973 = vsel %vm10970, %v10972, %v10968
      %v10974 = vmul.f32 1.0, %v10973
      %v10975 = vrcp.pop %v10593
      %v10976 = vmul.f32 %v10593, %v10975
      %v10977 = vsub.f32 1.0, %v10976
      %v10978 = vmul.f32 %v10975, %v10977
      %v10979 = vadd.f32 %v10975, %v10978
      %vm10980 = vweird.f32 %v10593
      %vm10981 = vweird.f32 %v10975
      %vm10982 = vmor %vm10980, %vm10981
      %v10983 = vsel %vm10982, %v10975, %v10979
      %v10984 = vand.u32 2147483647, %v10593
      %vm10985 = vcmp.eq.f32.partialorder %v10984, 8.507059e+37
      %v10986 = vand.u32 %v10593, 2147483648
      %v10987 = vor.u32 1.1754944e-38, %v10986
      %v10988 = vsel %vm10985, %v10987, %v10983
      %v10989 = vmul.f32 1.0, %v10988
      %v10990 = vrcp.pop %v10594
      %v10991 = vmul.f32 %v10594, %v10990
      %v10992 = vsub.f32 1.0, %v10991
      %v10993 = vmul.f32 %v10990, %v10992
      %v10994 = vadd.f32 %v10990, %v10993
      %vm10995 = vweird.f32 %v10594
      %vm10996 = vweird.f32 %v10990
      %vm10997 = vmor %vm10995, %vm10996
      %v10998 = vsel %vm10997, %v10990, %v10994
      %v10999 = vand.u32 2147483647, %v10594
      %vm11000 = vcmp.eq.f32.partialorder %v10999, 8.507059e+37
      %v11001 = vand.u32 %v10594, 2147483648
      %v11002 = vor.u32 1.1754944e-38, %v11001
      %v11003 = vsel %vm11000, %v11002, %v10998
      %v11004 = vmul.f32 1.0, %v11003
      %v11005 = vrcp.pop %v10595
      %v11006 = vmul.f32 %v10595, %v11005
      %v11007 = vsub.f32 1.0, %v11006
      %v11008 = vmul.f32 %v11005, %v11007
      %v11009 = vadd.f32 %v11005, %v11008
      %vm11010 = vweird.f32 %v10595
      %vm11011 = vweird.f32 %v11005
      %vm11012 = vmor %vm11010, %vm11011
      %v11013 = vsel %vm11012, %v11005, %v11009
      %v11014 = vand.u32 2147483647, %v10595
      %vm11015 = vcmp.eq.f32.partialorder %v11014, 8.507059e+37
      %v11016 = vand.u32 %v10595, 2147483648
      %v11017 = vor.u32 1.1754944e-38, %v11016
      %v11018 = vsel %vm11015, %v11017, %v11013
      %v11019 = vmul.f32 1.0, %v11018
      %v11020 = vrcp.pop %v10596
      %v11021 = vmul.f32 %v10596, %v11020
      %v11022 = vsub.f32 1.0, %v11021
      %v11023 = vmul.f32 %v11020, %v11022
      %v11024 = vadd.f32 %v11020, %v11023
      %vm11025 = vweird.f32 %v10596
      %vm11026 = vweird.f32 %v11020
      %vm11027 = vmor %vm11025, %vm11026
      %v11028 = vsel %vm11027, %v11020, %v11024
      %v11029 = vand.u32 2147483647, %v10596
      %vm11030 = vcmp.eq.f32.partialorder %v11029, 8.507059e+37
      %v11031 = vand.u32 %v10596, 2147483648
      %v11032 = vor.u32 1.1754944e-38, %v11031
      %v11033 = vsel %vm11030, %v11032, %v11028
      %v11034 = vmul.f32 1.0, %v11033
      %v11035 = vrcp.pop %v10597
      %v11036 = vmul.f32 %v10597, %v11035
      %v11037 = vsub.f32 1.0, %v11036
      %v11038 = vmul.f32 %v11035, %v11037
      %v11039 = vadd.f32 %v11035, %v11038
      %vm11040 = vweird.f32 %v10597
      %vm11041 = vweird.f32 %v11035
      %vm11042 = vmor %vm11040, %vm11041
      %v11043 = vsel %vm11042, %v11035, %v11039
      %v11044 = vand.u32 2147483647, %v10597
      %vm11045 = vcmp.eq.f32.partialorder %v11044, 8.507059e+37
      %v11046 = vand.u32 %v10597, 2147483648
      %v11047 = vor.u32 1.1754944e-38, %v11046
      %v11048 = vsel %vm11045, %v11047, %v11043
      %v11049 = vmul.f32 1.0, %v11048
      %v11050 = vrcp.pop %v10598
      %v11051 = vmul.f32 %v10598, %v11050
      %v11052 = vsub.f32 1.0, %v11051
      %v11053 = vmul.f32 %v11050, %v11052
      %v11054 = vadd.f32 %v11050, %v11053
      %vm11055 = vweird.f32 %v10598
      %vm11056 = vweird.f32 %v11050
      %vm11057 = vmor %vm11055, %vm11056
      %v11058 = vsel %vm11057, %v11050, %v11054
      %v11059 = vand.u32 2147483647, %v10598
      %vm11060 = vcmp.eq.f32.partialorder %v11059, 8.507059e+37
      %v11061 = vand.u32 %v10598, 2147483648
      %v11062 = vor.u32 1.1754944e-38, %v11061
      %v11063 = vsel %vm11060, %v11062, %v11058
      %v11064 = vmul.f32 1.0, %v11063
      %v11065 = vrcp.pop %v10599
      %v11066 = vmul.f32 %v10599, %v11065
      %v11067 = vsub.f32 1.0, %v11066
      %v11068 = vmul.f32 %v11065, %v11067
      %v11069 = vadd.f32 %v11065, %v11068
      %vm11070 = vweird.f32 %v10599
      %vm11071 = vweird.f32 %v11065
      %vm11072 = vmor %vm11070, %vm11071
      %v11073 = vsel %vm11072, %v11065, %v11069
      %v11074 = vand.u32 2147483647, %v10599
      %vm11075 = vcmp.eq.f32.partialorder %v11074, 8.507059e+37
      %v11076 = vand.u32 %v10599, 2147483648
      %v11077 = vor.u32 1.1754944e-38, %v11076
      %v11078 = vsel %vm11075, %v11077, %v11073
      %v11079 = vmul.f32 1.0, %v11078
      %11080 = vxpose.xlu0.b32.start [1/16] %v10614, 128
      %11081 = vxpose.xlu0.b32.cont [2/16] %v10629, 128
      %11082 = vxpose.xlu0.b32.cont [3/16] %v10644, 128
      %11083 = vxpose.xlu0.b32.cont [4/16] %v10659, 128
      %11084 = vxpose.xlu0.b32.cont [5/16] %v10674, 128
      %11085 = vxpose.xlu0.b32.cont [6/16] %v10689, 128
      %11086 = vxpose.xlu0.b32.cont [7/16] %v10704, 128
      %11087 = vxpose.xlu0.b32.cont [8/16] %v10719, 128
      %11088 = vxpose.xlu0.b32.cont [9/16] %v10734, 128
      %11089 = vxpose.xlu0.b32.cont [10/16] %v10749, 128
      %11090 = vxpose.xlu0.b32.cont [11/16] %v10764, 128
      %11091 = vxpose.xlu0.b32.cont [12/16] %v10779, 128
      %11092 = vxpose.xlu0.b32.cont [13/16] %v10794, 128
      %11093 = vxpose.xlu0.b32.cont [14/16] %v10809, 128
      %11094 = vxpose.xlu0.b32.cont [15/16] %v10824, 128
      %11095 = vxpose.xlu0.b32.end [16/16] %v10839, 128
      %v11096 = vpop.trf.xlu0
      %v11097 = vpop.trf.xlu0
      %v11098 = vpop.trf.xlu0
      %v11099 = vpop.trf.xlu0
      %v11100 = vpop.trf.xlu0
      %v11101 = vpop.trf.xlu0
      %v11102 = vpop.trf.xlu0
      %v11103 = vpop.trf.xlu0
      %v11104 = vpop.trf.xlu0
      %v11105 = vpop.trf.xlu0
      %v11106 = vpop.trf.xlu0
      %v11107 = vpop.trf.xlu0
      %v11108 = vpop.trf.xlu0
      %v11109 = vpop.trf.xlu0
      %v11110 = vpop.trf.xlu0
      %v11111 = vpop.trf.xlu0
      %11112 = vxpose.xlu0.b32.start [1/16] %v10854, 128
      %11113 = vxpose.xlu0.b32.cont [2/16] %v10869, 128
      %11114 = vxpose.xlu0.b32.cont [3/16] %v10884, 128
      %11115 = vxpose.xlu0.b32.cont [4/16] %v10899, 128
      %11116 = vxpose.xlu0.b32.cont [5/16] %v10914, 128
      %11117 = vxpose.xlu0.b32.cont [6/16] %v10929, 128
      %11118 = vxpose.xlu0.b32.cont [7/16] %v10944, 128
      %11119 = vxpose.xlu0.b32.cont [8/16] %v10959, 128
      %11120 = vxpose.xlu0.b32.cont [9/16] %v10974, 128
      %11121 = vxpose.xlu0.b32.cont [10/16] %v10989, 128
      %11122 = vxpose.xlu0.b32.cont [11/16] %v11004, 128
      %11123 = vxpose.xlu0.b32.cont [12/16] %v11019, 128
      %11124 = vxpose.xlu0.b32.cont [13/16] %v11034, 128
      %11125 = vxpose.xlu0.b32.cont [14/16] %v11049, 128
      %11126 = vxpose.xlu0.b32.cont [15/16] %v11064, 128
      %11127 = vxpose.xlu0.b32.end [16/16] %v11079, 128
      %v11128 = vpop.trf.xlu0
      %v11129 = vpop.trf.xlu0
      %v11130 = vpop.trf.xlu0
      %v11131 = vpop.trf.xlu0
      %v11132 = vpop.trf.xlu0
      %v11133 = vpop.trf.xlu0
      %v11134 = vpop.trf.xlu0
      %v11135 = vpop.trf.xlu0
      %v11136 = vpop.trf.xlu0
      %v11137 = vpop.trf.xlu0
      %v11138 = vpop.trf.xlu0
      %v11139 = vpop.trf.xlu0
      %v11140 = vpop.trf.xlu0
      %v11141 = vpop.trf.xlu0
      %v11142 = vpop.trf.xlu0
      %v11143 = vpop.trf.xlu0
      %v11146 = vrot.slane %v11128, 7
      %v11147 = vsel %vm614, %v11096, %v11146
      %v11149 = vlaneseq
      %vm11150 = vcmp.ge.s32.totalorder %v11149, 0
      %vm11151 = vcmp.lt.s32.totalorder %v11149, 256
      %vm11152 = vmand %vm11150, %vm11151
      %11153 = vst.msk [vmem:[%s332] sm:$0x3] %vm11152, %v11147
      %p11154 = scmp.lt.s32.totalorder %s22, 1
      %s11155 = scalar_select %p11154, %s22, 1
      %s11156 = smul.addr %s11155, 2
      %s11157 = scalar_lea.vmem %s9, %s11156
      // Predicated region
      $region57: #{unet_forward.1} parent=55 // pred_check
        %p11158 = pneg %p234
      $region58: #{unet_forward.1} parent=55 // pred_check_branch
        %11160 = sbr.rel (%p11158) target = $region60
      $region59: #{unet_forward.1} parent=55 // pred_region
        _
      $region60: #{unet_forward.1} parent=55 // pred_fallthru
        _
    $region56: #{unet_forward.1} parent=5 // pred_fallthru
      _
    %p11161 = scmp.le.s32.totalorder 2, %s17
    // Predicated region
    $region61: #{unet_forward.1} parent=5 // pred_check
      %p11162 = pneg %p11161
    $region62: #{unet_forward.1} parent=5 // pred_check_branch
      %11164 = sbr.rel (%p11162) target = $region64
    $region63: #{unet_forward.1} parent=5 // pred_region
      %s11165 = ssub.s32 %s17, 2
      // Predicated region
      $region65: #{unet_forward.1} parent=63 // pred_check
        %p11166 = pneg %p240
      $region66: #{unet_forward.1} parent=63 // pred_check_branch
        %11168 = sbr.rel (%p11166) target = $region68
      $region67: #{unet_forward.1} parent=63 // pred_region
        %p11169 = scmp.lt.s32.totalorder %s23, 1
        %s11170 = scalar_select %p11169, %s23, 1
        %s11171 = smul.addr %s11170, 2
        %s11172 = scalar_lea.vmem %s9, %s11171
      $region68: #{unet_forward.1} parent=63 // pred_fallthru
        _
    $region64: #{unet_forward.1} parent=5 // pred_fallthru
      _
  $region6: #{unet_forward.1} parent=0 // loop_footer
    %s21 = sadd.s32 1, %s17
  $region7: #{unet_forward.1} parent=0 // loop_footer_branch
    %16 = sbr.rel target = $region3
  $region8: #{unet_forward.1} parent=0 // loop_exit
    _

</llo_original>
